<compile_context>
chip_gen: v7x
topology: tpu7x:2x2x1
jax: 0.10.0
libtpu: 0.0.40
codegen_flags: <defaults>
</compile_context>

<pallas_src>
import math

import numpy as np
import jax
import jax.numpy as jnp
from jax.experimental import pallas as pl
from jax.experimental.pallas import tpu as pltpu

# Electrode index sets from the reference model (BiHDM.forward only uses id[0]/id[1]).
L_H = np.asarray([3, 2, 4, 5, 6, 8, 7, 9, 10, 11, 13, 12])
R_H = np.asarray([29, 28, 25, 26, 27, 24, 23, 19, 20, 21, 18, 17])

EPS = 1e-5
C_DIM, F_DIM, T_DIM = 30, 5, 20          # channels / freq bands / time steps (fixed)
N_HEMI = 12                              # electrodes per hemisphere (BiHDM seq length)
H_HEMI, H_MAIN = 32, 128                 # hemisphere RNN hidden / main RNN hidden
BF16, F32 = jnp.bfloat16, jnp.float32


# ----------------------------------------------------------------------------------
# The fused kernel (whole forward, grid-less, everything VMEM resident)
# ----------------------------------------------------------------------------------
def _tot_rnn_kernel(sc2_ref,                                  # SMEM (12,)  BN2 scale
                    xs_ref, xf_ref, xt_ref,                   # branch inputs
                    w1_ref, b1_ref, whh1_ref,                 # BiHDM stage 1
                    w2_ref, bias2_ref, whh2_ref,              # BiHDM stage 2
                    wf_ref, bf_ref, whhf_ref,                 # f_RNN
                    wt_ref, bt_ref, whht_ref,                 # t_RNN
                    w1c_ref, b1c_ref, w2c_ref, b2c_ref,       # classifier
                    out_ref,
                    xp1_ref, s12_ref, xp2_ref, xpf_ref, xpt_ref):
    B = out_ref.shape[0]
    T1 = xs_ref.shape[0] // B            # 12
    TF = xf_ref.shape[0] // B            # 5
    TT = xt_ref.shape[0] // B            # 20
    H1 = 4 * H_HEMI                      # 128: packed [lh|lv|rh|rv] hemisphere hidden
    H2 = 2 * H_MAIN                      # 256: packed [h|v] main hidden

    # ---- All three branches' input projections: 3 lane-dense GEMMs up front. ----
    xp1_ref[...] = jnp.dot(xs_ref[...].astype(BF16), w1_ref[...],
                           preferred_element_type=F32) + b1_ref[...]
    xpf_ref[...] = jnp.dot(xf_ref[...].astype(BF16), wf_ref[...],
                           preferred_element_type=F32) + bf_ref[...]
    xpt_ref[...] = jnp.dot(xt_ref[...].astype(BF16), wt_ref[...],
                           preferred_element_type=F32) + bt_ref[...]

    # ---- Stage 1: 4 hemisphere bi-RNNs.  fwd+bwd state packed into one (B,256) value,
    #      one 256-wide block-diagonal hidden matmul per step.  Stores are full
    #      128-lane unmasked writes; the left-right diff is folded into w2, BN2's scale
    #      is applied here as a scalar multiply (SMEM table). ----
    h1 = jnp.zeros((B, 2 * H1), F32)
    for t in range(T1):                  # fully unrolled; <~16 live vregs/step, no spill
        tb = T1 - 1 - t
        m1 = jnp.dot(h1.astype(BF16), whh1_ref[...], preferred_element_type=F32)
        hf = jnp.tanh(xp1_ref[t * B:(t + 1) * B, 0:H1] + m1[:, 0:H1])
        hb = jnp.tanh(xp1_ref[tb * B:(tb + 1) * B, H1:2 * H1] + m1[:, H1:2 * H1])
        s12_ref[t * B:(t + 1) * B, 0:H1] = hf * sc2_ref[t]
        s12_ref[tb * B:(tb + 1) * B, H1:2 * H1] = hb * sc2_ref[tb]
        h1 = jnp.concatenate([hf, hb], axis=1)

    # ---- Stage 2: RNN_h + RNN_v.  One packed projection GEMM (diff + BN2 scale already
    #      folded); the per-electrode bias carries BN2's shift (rank-1) + RNN biases. ----
    xp2_ref[...] = jnp.dot(s12_ref[...].astype(BF16), w2_ref[...],
                           preferred_element_type=F32)
    h2 = jnp.zeros((B, H2), F32)
    for t in range(T1):
        x2f = xp2_ref[t * B:(t + 1) * B, 0:H2] + bias2_ref[t:t + 1, 0:H2]
        h2 = jnp.tanh(x2f + jnp.dot(h2.astype(BF16), whh2_ref[...],
                                    preferred_element_type=F32))
    x2b = xp2_ref[(T1 - 1) * B:T1 * B, H2:2 * H2] + bias2_ref[T1 - 1:T1, H2:2 * H2]
    hb2 = jnp.tanh(x2b)                  # backward output at the last position (h0 = 0)
    # s = s_v[-1] + s_h[-1]  ->  [fwd_h + fwd_v | bwd_h + bwd_v]
    h_spat = jnp.concatenate([h2[:, 0:H_MAIN] + h2[:, H_MAIN:H2],
                              hb2[:, 0:H_MAIN] + hb2[:, H_MAIN:H2]], axis=1)

    # ---- f_RNN branch: only output[-1] is needed (fwd recurrence + one tanh for bwd).
    hfw = jnp.zeros((B, H_MAIN), F32)
    for t in range(TF):
        hfw = jnp.tanh(xpf_ref[t * B:(t + 1) * B, 0:H_MAIN]
                       + jnp.dot(hfw.astype(BF16), whhf_ref[...],
                                 preferred_element_type=F32))
    hfb = jnp.tanh(xpf_ref[(TF - 1) * B:TF * B, H_MAIN:2 * H_MAIN])
    h_freq = jnp.concatenate([hfw, hfb], axis=1)

    # ---- t_RNN branch. ----
    htw = jnp.zeros((B, H_MAIN), F32)
    for t in range(TT):
        htw = jnp.tanh(xpt_ref[t * B:(t + 1) * B, 0:H_MAIN]
                       + jnp.dot(htw.astype(BF16), whht_ref[...],
                                 preferred_element_type=F32))
    htb = jnp.tanh(xpt_ref[(TT - 1) * B:TT * B, H_MAIN:2 * H_MAIN])
    h_temp = jnp.concatenate([htw, htb], axis=1)

    # ---- Classifier: Linear(768,64) (+Dropout=id) + ReLU + Linear(64,2) + Softmax.
    #      cat([h_spat,h_freq,h_temp]) folded into 3 partial matmuls; hidden/logits are
    #      padded to 128 lanes, padded logits carry a -1e30 bias so softmax ignores them.
    z = (jnp.dot(h_spat.astype(BF16), w1c_ref[0:H2, :], preferred_element_type=F32)
         + jnp.dot(h_freq.astype(BF16), w1c_ref[H2:2 * H2, :], preferred_element_type=F32)
         + jnp.dot(h_temp.astype(BF16), w1c_ref[2 * H2:3 * H2, :], preferred_element_type=F32)
         + b1c_ref[...])
    z = jnp.maximum(z, 0.0)
    logits = (jnp.dot(z.astype(BF16), w2c_ref[...], preferred_element_type=F32)
              + b2c_ref[...])
    mx = jnp.max(logits, axis=-1, keepdims=True)
    e = jnp.exp(logits - mx)
    probs = e / jnp.sum(e, axis=-1, keepdims=True)
    out_ref[...] = probs[:, 0:out_ref.shape[1]].astype(out_ref.dtype)


# ----------------------------------------------------------------------------------
# pallas_call wrapper (single launch per forward)
# ----------------------------------------------------------------------------------
def tot_rnn_pallas(x_cat, freq_seq, temp_seq, packed, *, batch):
    args = (packed["sc2"], x_cat, freq_seq, temp_seq) + tuple(packed["weights"])
    vmem = pltpu.MemorySpace.VMEM
    return pl.pallas_call(
        _tot_rnn_kernel,
        out_shape=jax.ShapeDtypeStruct((batch, 2), jnp.float32),
        in_specs=([pl.BlockSpec(memory_space=pltpu.MemorySpace.SMEM)]
                  + [pl.BlockSpec(memory_space=vmem) for _ in range(len(args) - 1)]),
        out_specs=pl.BlockSpec(memory_space=vmem),
        scratch_shapes=[
            pltpu.VMEM((N_HEMI * batch, 2 * H_MAIN), jnp.float32),   # xp1  (12B, 256)
            pltpu.VMEM((N_HEMI * batch, 2 * H_MAIN), jnp.float32),   # s12  (12B, 256)
            pltpu.VMEM((N_HEMI * batch, 4 * H_MAIN), jnp.float32),   # xp2  (12B, 512)
            pltpu.VMEM((F_DIM * batch, 2 * H_MAIN), jnp.float32),    # xpf  (5B,  256)
            pltpu.VMEM((T_DIM * batch, 2 * H_MAIN), jnp.float32),    # xpt  (20B, 256)
        ],
    )(*args)


# ----------------------------------------------------------------------------------
# Parameters (PyTorch-equivalent shapes) and one-time packing into kernel layouts
# ----------------------------------------------------------------------------------
def _uniform(key, shape, scale):
    return jax.random.uniform(key, shape, jnp.float32, -scale, scale)


def make_rnn_params(key, input_size, hidden_size):
    ks = jax.random.split(key, 8)
    s = 1.0 / math.sqrt(hidden_size)
    names = ["wih_f", "whh_f", "bih_f", "bhh_f", "wih_b", "whh_b", "bih_b", "bhh_b"]
    shapes = [(hidden_size, input_size), (hidden_size, hidden_size),
              (hidden_size,), (hidden_size,)] * 2
    return {n: _uniform(k, sh, s) for n, k, sh in zip(names, ks, shapes)}


def make_bn_params(key, num_features):
    k1, k2, k3, k4 = jax.random.split(key, 4)
    return dict(gamma=1.0 + 0.1 * jax.random.normal(k1, (num_features,), jnp.float32),
                beta=0.1 * jax.random.normal(k2, (num_features,), jnp.float32),
                mean=0.1 * jax.random.normal(k3, (num_features,), jnp.float32),
                var=1.0 + 0.1 * jnp.abs(jax.random.normal(k4, (num_features,), jnp.float32)))


def make_linear_params(key, in_features, out_features):
    k1, k2 = jax.random.split(key)
    s = 1.0 / math.sqrt(in_features)
    return dict(w=_uniform(k1, (out_features, in_features), s),
                b=_uniform(k2, (out_features,), s))


def make_tot_rnn_params(key):
    ks = jax.random.split(key, 12)
    return dict(
        bn1=make_bn_params(ks[0], C_DIM),                       # BatchNorm1d(30)
        bn2=make_bn_params(ks[1], N_HEMI),                      # BatchNorm1d(12)
        rnn_lh=make_rnn_params(ks[2], F_DIM * T_DIM, H_HEMI),
        rnn_rh=make_rnn_params(ks[3], F_DIM * T_DIM, H_HEMI),
        rnn_lv=make_rnn_params(ks[4], F_DIM * T_DIM, H_HEMI),
        rnn_rv=make_rnn_params(ks[5], F_DIM * T_DIM, H_HEMI),
        rnn_h=make_rnn_params(ks[6], 2 * H_HEMI, H_MAIN),
        rnn_v=make_rnn_params(ks[7], 2 * H_HEMI, H_MAIN),
        f_rnn=make_rnn_params(ks[8], C_DIM * T_DIM, H_MAIN),    # 600 -> 128
        t_rnn=make_rnn_params(ks[9], F_DIM * C_DIM, H_MAIN),    # 150 -> 128
        cls1=make_linear_params(ks[10], 3 * 2 * H_MAIN, 64),    # 768 -> 64
        cls2=make_linear_params(ks[11], 64, 2),
    )


def _bn_affine(bn):
    inv = bn["gamma"] / jnp.sqrt(bn["var"] + EPS)
    return inv, bn["beta"] - bn["mean"] * inv


def _pack_birnn_last(p):
    w = jnp.concatenate([p["wih_f"].T, p["wih_b"].T], axis=1)              # (D, 2H)
    b = jnp.concatenate([p["bih_f"] + p["bhh_f"],
                         p["bih_b"] + p["bhh_b"]]).reshape(1, -1)          # (1, 2H)
    return w, b, p["whh_f"].T


def pack_params(p):
    """One-time packing of PyTorch-layout parameters into the fused kernel's layouts."""
    inv1, off1 = _bn_affine(p["bn1"])     # BN1d(30): folded into x preprocessing
    inv2, off2 = _bn_affine(p["bn2"])     # BN1d(12): scale -> SMEM, shift -> bias2

    lh, lv, rh, rv = p["rnn_lh"], p["rnn_lv"], p["rnn_rh"], p["rnn_rv"]
    # Stage 1 input projection: rows = [x_left(100) | x_right(100)],
    # cols = [lh_f, lv_f, rh_f, rv_f | lh_b, lv_b, rh_b, rv_b] (8 x 32).
    w1 = jnp.zeros((200, 8 * H_HEMI), jnp.float32)
    for j, (q, half) in enumerate([(lh, 0), (lv, 0), (rh, 1), (rv, 1)]):
        r0 = half * 100
        w1 = w1.at[r0:r0 + 100, j * H_HEMI:(j + 1) * H_HEMI].set(q["wih_f"].T)
        w1 = w1.at[r0:r0 + 100, (4 + j) * H_HEMI:(5 + j) * H_HEMI].set(q["wih_b"].T)
    b1 = jnp.concatenate([q["bih_f"] + q["bhh_f"] for q in (lh, lv, rh, rv)]
                         + [q["bih_b"] + q["bhh_b"] for q in (lh, lv, rh, rv)]).reshape(1, -1)
    # Merged fwd+bwd 256-wide block-diagonal hidden weight (one MXU pass per step).
    whh1 = jax.scipy.linalg.block_diag(*([q["whh_f"].T for q in (lh, lv, rh, rv)]
                                         + [q["whh_b"].T for q in (lh, lv, rh, rv)]))

    # Stage 2: pack RNN_h / RNN_v input weights over [s_h_f, s_v_f, s_h_b, s_v_b] rows,
    # cols = [h_f(128), v_f(128), h_b(128), v_b(128)] ...
    h, v = p["rnn_h"], p["rnn_v"]
    w2o = jnp.zeros((4 * H_HEMI, 4 * H_MAIN), jnp.float32)
    for j, q in enumerate([h, v]):
        wfT, wbT = q["wih_f"].T, q["wih_b"].T                              # (64, 128)
        cf = slice(j * H_MAIN, (j + 1) * H_MAIN)
        cb = slice((2 + j) * H_MAIN, (3 + j) * H_MAIN)
        w2o = w2o.at[j * H_HEMI:(j + 1) * H_HEMI, cf].set(wfT[:H_HEMI])
        w2o = w2o.at[(2 + j) * H_HEMI:(3 + j) * H_HEMI, cf].set(wfT[H_HEMI:])
        w2o = w2o.at[j * H_HEMI:(j + 1) * H_HEMI, cb].set(wbT[:H_HEMI])
        w2o = w2o.at[(2 + j) * H_HEMI:(3 + j) * H_HEMI, cb].set(wbT[H_HEMI:])
    # ... then expand rows to the raw packed hemisphere state so the left-right diff is
    # folded into the weights.  s_all col layout: [lh_f,lv_f,rh_f,rv_f | lh_b,lv_b,rh_b,rv_b].
    w2x = jnp.concatenate([w2o[:2 * H_HEMI], -w2o[:2 * H_HEMI],
                           w2o[2 * H_HEMI:], -w2o[2 * H_HEMI:]], axis=0)   # (256, 512)
    b2 = jnp.concatenate([h["bih_f"] + h["bhh_f"], v["bih_f"] + v["bhh_f"],
                          h["bih_b"] + h["bhh_b"], v["bih_b"] + v["bhh_b"]]).reshape(1, -1)
    # BN2's shift commutes through the GEMM as a rank-1 per-electrode bias term.
    bias2 = off2[:, None] * jnp.sum(w2o, axis=0, keepdims=True) + b2        # (12, 512)
    whh2 = jax.scipy.linalg.block_diag(h["whh_f"].T, v["whh_f"].T)          # (256, 256)

    wf, bfr, whhf = _pack_birnn_last(p["f_rnn"])
    wt, btr, whht = _pack_birnn_last(p["t_rnn"])

    # Classifier padded to 128 lanes; padded logits get a -1e30 bias so softmax ignores them.
    w1c = jnp.zeros((3 * 2 * H_MAIN, 128), jnp.float32).at[:, :64].set(p["cls1"]["w"].T)
    b1c = jnp.zeros((1, 128), jnp.float32).at[0, :64].set(p["cls1"]["b"])
    w2c = jnp.zeros((128, 128), jnp.float32).at[:64, :2].set(p["cls2"]["w"].T)
    b2c = jnp.full((1, 128), -1e30, jnp.float32).at[0, :2].set(p["cls2"]["b"])

    return dict(
        bn1_inv=inv1, bn1_off=off1,
        sc2=inv2,                                                  # (12,) f32 -> SMEM
        weights=(
            # big matrices streamed as bf16 (f32 accumulation); biases stay f32
            w1.astype(BF16), b1, whh1.astype(BF16),
            w2x.astype(BF16), bias2, whh2.astype(BF16),
            wf.astype(BF16), bfr, whhf.astype(BF16),
            wt.astype(BF16), btr, whht.astype(BF16),
            w1c.astype(BF16), b1c, w2c.astype(BF16), b2c,
        ),
    )


# ----------------------------------------------------------------------------------
# Forward pass (1 pallas_call total)
# ----------------------------------------------------------------------------------
@jax.jit
def tot_rnn_forward(x, packed):
    """Pallas forward of tot_RNN.  x: (B, 5, 30, 20) -> (B, 2).  B must be a multiple of 8."""
    B = x.shape[0]
    assert B % 8 == 0, "pad batch to a multiple of 8 (f32 sublane alignment)"
    xc = jnp.transpose(x, (0, 2, 1, 3))                                         # (B,30,5,20)
    spatial_x = xc.reshape(B, C_DIM, F_DIM * T_DIM)                             # (B,30,100)
    # Eval-mode BatchNorm1d(30) folded into the tiny, fused XLA preprocessing
    # (no (12B,200) scale/shift buffers materialized in HBM).
    spatial_x = (spatial_x * packed["bn1_inv"][None, :, None]
                 + packed["bn1_off"][None, :, None])
    xl = jnp.transpose(spatial_x[:, L_H, :], (1, 0, 2))                         # (12,B,100)
    xr = jnp.transpose(spatial_x[:, R_H, :], (1, 0, 2))
    x_cat = jnp.concatenate([xl, xr], axis=-1).reshape(N_HEMI * B, 200)         # (12B,200)

    freq_seq = jnp.transpose(
        jnp.transpose(xc, (0, 2, 1, 3)).reshape(B, F_DIM, C_DIM * T_DIM),
        (1, 0, 2)).reshape(F_DIM * B, C_DIM * T_DIM)                            # (5B, 600)
    temp_seq = jnp.transpose(
        jnp.transpose(xc, (0, 3, 2, 1)).reshape(B, T_DIM, F_DIM * C_DIM),
        (1, 0, 2)).reshape(T_DIM * B, F_DIM * C_DIM)                            # (20B,150)

    return tot_rnn_pallas(x_cat, freq_seq, temp_seq, packed, batch=B)


# ----------------------------------------------------------------------------------
# Plain-JAX reference (mirrors the PyTorch forward, inference mode)
# ----------------------------------------------------------------------------------
def _bn1d_eval_ref(x, bn):
    g, b = bn["gamma"][None, :, None], bn["beta"][None, :, None]
    m, v = bn["mean"][None, :, None], bn["var"][None, :, None]
    return (x - m) / jnp.sqrt(v + EPS) * g + b


def _birnn_ref(x, p):
    T, B, _ = x.shape
    H = p["wih_f"].shape[0]
    hp = jax.lax.Precision.HIGHEST

    def cell(h, xt, wih, whh, bih, bhh):
        return jnp.tanh(jnp.dot(xt, wih.T, precision=hp) + bih
                        + jnp.dot(h, whh.T, precision=hp) + bhh)

    h = jnp.zeros((B, H), jnp.float32)
    outs_f = []
    for t in range(T):
        h = cell(h, x[t], p["wih_f"], p["whh_f"], p["bih_f"], p["bhh_f"])
        outs_f.append(h)
    h = jnp.zeros((B, H), jnp.float32)
    outs_b = [None] * T
    for t in range(T - 1, -1, -1):
        h = cell(h, x[t], p["wih_b"], p["whh_b"], p["bih_b"], p["bhh_b"])
        outs_b[t] = h
    return jnp.stack([jnp.concatenate([outs_f[t], outs_b[t]], axis=-1) for t in range(T)])


def tot_rnn_reference(x, p):
    hp = jax.lax.Precision.HIGHEST
    B = x.shape[0]
    xc = jnp.transpose(x, (0, 2, 1, 3))
    spatial_x = xc.reshape(B, C_DIM, F_DIM * T_DIM)
    freq_x = jnp.transpose(xc, (0, 2, 1, 3)).reshape(B, F_DIM, C_DIM * T_DIM)
    temp_x = jnp.transpose(xc, (0, 3, 2, 1)).reshape(B, T_DIM, F_DIM * C_DIM)

    xs = _bn1d_eval_ref(spatial_x, p["bn1"])
    xl = jnp.transpose(xs[:, L_H, :], (1, 0, 2))
    xr = jnp.transpose(xs[:, R_H, :], (1, 0, 2))
    s_lh, s_rh = _birnn_ref(xl, p["rnn_lh"]), _birnn_ref(xr, p["rnn_rh"])
    s_lv, s_rv = _birnn_ref(xl, p["rnn_lv"]), _birnn_ref(xr, p["rnn_rv"])
    s_h, s_v = s_lh - s_rh, s_lv - s_rv
    s_h = jnp.transpose(_bn1d_eval_ref(jnp.transpose(s_h, (1, 0, 2)), p["bn2"]), (1, 0, 2))
    s_v = jnp.transpose(_bn1d_eval_ref(jnp.transpose(s_v, (1, 0, 2)), p["bn2"]), (1, 0, 2))
    o_h, o_v = _birnn_ref(s_h, p["rnn_h"]), _birnn_ref(s_v, p["rnn_v"])
    h_spat = o_v[-1] + o_h[-1]

    h_freq = _birnn_ref(jnp.transpose(freq_x, (1, 0, 2)), p["f_rnn"])[-1]
    h_temp = _birnn_ref(jnp.transpose(temp_x, (1, 0, 2)), p["t_rnn"])[-1]

    hidden = jnp.concatenate([h_spat, h_freq, h_temp], axis=1)
    z = jnp.maximum(jnp.dot(hidden, p["cls1"]["w"].T, precision=hp) + p["cls1"]["b"], 0.0)
    logits = jnp.dot(z, p["cls2"]["w"].T, precision=hp) + p["cls2"]["b"]
    return jax.nn.softmax(logits, axis=1)


if __name__ == "__main__":
    B = 8  # batch (multiple of 8); freq=5, channels=30, time=20 are fixed by the module
    key = jax.random.PRNGKey(0)
    kx, kp = jax.random.split(key)
    x = jax.random.normal(kx, (B, F_DIM, C_DIM, T_DIM), dtype=jnp.float32)
    params = make_tot_rnn_params(kp)
    packed = pack_params(params)

    out = jax.block_until_ready(tot_rnn_forward(x, packed))
    ref = tot_rnn_reference(x, params)

    assert out.shape == (B, 2), out.shape
    assert bool(jnp.all(jnp.isfinite(out)))
    # Kernel uses bf16 MXU operands (same as default f32 matmul precision on TPU);
    # reference uses Precision.HIGHEST -> small deviation over 12-20 recurrent steps.
    assert jnp.allclose(out, ref, atol=3e-3, rtol=3e-3), float(jnp.max(jnp.abs(out - ref)))

    print("KERNEL_OK")
</pallas_src>

<mosaic_0001>
module attributes {stable_mosaic.version = 11 : i64} {
  func.func @_tot_rnn_kernel(%arg0: memref<12xf32, #tpu.memory_space<smem>>, %arg1: memref<96x200xf32, #tpu.memory_space<vmem>>, %arg2: memref<40x600xf32, #tpu.memory_space<vmem>>, %arg3: memref<160x150xf32, #tpu.memory_space<vmem>>, %arg4: memref<200x256xbf16, #tpu.memory_space<vmem>>, %arg5: memref<1x256xf32, #tpu.memory_space<vmem>>, %arg6: memref<256x256xbf16, #tpu.memory_space<vmem>>, %arg7: memref<256x512xbf16, #tpu.memory_space<vmem>>, %arg8: memref<12x512xf32, #tpu.memory_space<vmem>>, %arg9: memref<256x256xbf16, #tpu.memory_space<vmem>>, %arg10: memref<600x256xbf16, #tpu.memory_space<vmem>>, %arg11: memref<1x256xf32, #tpu.memory_space<vmem>>, %arg12: memref<128x128xbf16, #tpu.memory_space<vmem>>, %arg13: memref<150x256xbf16, #tpu.memory_space<vmem>>, %arg14: memref<1x256xf32, #tpu.memory_space<vmem>>, %arg15: memref<128x128xbf16, #tpu.memory_space<vmem>>, %arg16: memref<768x128xbf16, #tpu.memory_space<vmem>>, %arg17: memref<1x128xf32, #tpu.memory_space<vmem>>, %arg18: memref<128x128xbf16, #tpu.memory_space<vmem>>, %arg19: memref<1x128xf32, #tpu.memory_space<vmem>>, %arg20: memref<8x2xf32, #tpu.memory_space<vmem>>, %arg21: memref<96x256xf32, #tpu.memory_space<vmem>>, %arg22: memref<96x256xf32, #tpu.memory_space<vmem>>, %arg23: memref<96x512xf32, #tpu.memory_space<vmem>>, %arg24: memref<40x256xf32, #tpu.memory_space<vmem>>, %arg25: memref<160x256xf32, #tpu.memory_space<vmem>>) attributes {dimension_semantics = [], scalar_prefetch = 0 : i64, scratch_operands = 5 : i64, tpu.core_type = #tpu.core_type<tc>} {
    %c0 = arith.constant 0 : index
    %c0_0 = arith.constant 0 : index
    %0 = vector.load %arg1[%c0, %c0_0] : memref<96x200xf32, #tpu.memory_space<vmem>>, vector<96x200xf32>
    %1 = arith.truncf %0 : vector<96x200xf32> to vector<96x200xbf16>
    %c0_1 = arith.constant 0 : index
    %c0_2 = arith.constant 0 : index
    %2 = vector.load %arg4[%c0_1, %c0_2] : memref<200x256xbf16, #tpu.memory_space<vmem>>, vector<200x256xbf16>
    %cst = arith.constant dense<0.000000e+00> : vector<96x256xf32>
    %3 = tpu.matmul %1, %2, %cst {dimension_numbers = #tpu.dot_dimension_numbers<[1], [0], [0], [1], [0, 0, 1, 1], [], []>} : vector<96x200xbf16>, vector<200x256xbf16>, vector<96x256xf32> -> vector<96x256xf32>
    %c0_3 = arith.constant 0 : index
    %c0_4 = arith.constant 0 : index
    %4 = vector.load %arg5[%c0_3, %c0_4] : memref<1x256xf32, #tpu.memory_space<vmem>>, vector<1x256xf32>
    %5 = vector.broadcast %4 : vector<1x256xf32> to vector<96x256xf32>
    %6 = arith.addf %3, %5 : vector<96x256xf32>
    %c0_5 = arith.constant 0 : index
    %c0_6 = arith.constant 0 : index
    %7 = vector.load %arg21[%c0_5, %c0_6] : memref<96x256xf32, #tpu.memory_space<vmem>>, vector<96x256xf32>
    tpu.vector_store %arg21[%c0_5, %c0_6], %6 {strides = array<i32>} : memref<96x256xf32, #tpu.memory_space<vmem>>, vector<96x256xf32>,
    %c0_7 = arith.constant 0 : index
    %c0_8 = arith.constant 0 : index
    %8 = vector.load %arg2[%c0_7, %c0_8] : memref<40x600xf32, #tpu.memory_space<vmem>>, vector<40x600xf32>
    %9 = arith.truncf %8 : vector<40x600xf32> to vector<40x600xbf16>
    %c0_9 = arith.constant 0 : index
    %c0_10 = arith.constant 0 : index
    %10 = vector.load %arg10[%c0_9, %c0_10] : memref<600x256xbf16, #tpu.memory_space<vmem>>, vector<600x256xbf16>
    %cst_11 = arith.constant dense<0.000000e+00> : vector<40x256xf32>
    %11 = tpu.matmul %9, %10, %cst_11 {dimension_numbers = #tpu.dot_dimension_numbers<[1], [0], [0], [1], [0, 0, 1, 1], [], []>} : vector<40x600xbf16>, vector<600x256xbf16>, vector<40x256xf32> -> vector<40x256xf32>
    %c0_12 = arith.constant 0 : index
    %c0_13 = arith.constant 0 : index
    %12 = vector.load %arg11[%c0_12, %c0_13] : memref<1x256xf32, #tpu.memory_space<vmem>>, vector<1x256xf32>
    %13 = vector.broadcast %12 : vector<1x256xf32> to vector<40x256xf32>
    %14 = arith.addf %11, %13 : vector<40x256xf32>
    %c0_14 = arith.constant 0 : index
    %c0_15 = arith.constant 0 : index
    %15 = vector.load %arg24[%c0_14, %c0_15] : memref<40x256xf32, #tpu.memory_space<vmem>>, vector<40x256xf32>
    tpu.vector_store %arg24[%c0_14, %c0_15], %14 {strides = array<i32>} : memref<40x256xf32, #tpu.memory_space<vmem>>, vector<40x256xf32>,
    %c0_16 = arith.constant 0 : index
    %c0_17 = arith.constant 0 : index
    %16 = vector.load %arg3[%c0_16, %c0_17] : memref<160x150xf32, #tpu.memory_space<vmem>>, vector<160x150xf32>
    %17 = arith.truncf %16 : vector<160x150xf32> to vector<160x150xbf16>
    %c0_18 = arith.constant 0 : index
    %c0_19 = arith.constant 0 : index
    %18 = vector.load %arg13[%c0_18, %c0_19] : memref<150x256xbf16, #tpu.memory_space<vmem>>, vector<150x256xbf16>
    %cst_20 = arith.constant dense<0.000000e+00> : vector<160x256xf32>
    %19 = tpu.matmul %17, %18, %cst_20 {dimension_numbers = #tpu.dot_dimension_numbers<[1], [0], [0], [1], [0, 0, 1, 1], [], []>} : vector<160x150xbf16>, vector<150x256xbf16>, vector<160x256xf32> -> vector<160x256xf32>
    %c0_21 = arith.constant 0 : index
    %c0_22 = arith.constant 0 : index
    %20 = vector.load %arg14[%c0_21, %c0_22] : memref<1x256xf32, #tpu.memory_space<vmem>>, vector<1x256xf32>
    %21 = vector.broadcast %20 : vector<1x256xf32> to vector<160x256xf32>
    %22 = arith.addf %19, %21 : vector<160x256xf32>
    %c0_23 = arith.constant 0 : index
    %c0_24 = arith.constant 0 : index
    %23 = vector.load %arg25[%c0_23, %c0_24] : memref<160x256xf32, #tpu.memory_space<vmem>>, vector<160x256xf32>
    tpu.vector_store %arg25[%c0_23, %c0_24], %22 {strides = array<i32>} : memref<160x256xf32, #tpu.memory_space<vmem>>, vector<160x256xf32>,
    %cst_25 = arith.constant 0.000000e+00 : f32
    %24 = vector.broadcast %cst_25 : f32 to vector<8x256xf32>
    %25 = arith.truncf %24 : vector<8x256xf32> to vector<8x256xbf16>
    %c0_26 = arith.constant 0 : index
    %c0_27 = arith.constant 0 : index
    %26 = vector.load %arg6[%c0_26, %c0_27] : memref<256x256xbf16, #tpu.memory_space<vmem>>, vector<256x256xbf16>
    %cst_28 = arith.constant dense<0.000000e+00> : vector<8x256xf32>
    %27 = tpu.matmul %25, %26, %cst_28 {dimension_numbers = #tpu.dot_dimension_numbers<[1], [0], [0], [1], [0, 0, 1, 1], [], []>} : vector<8x256xbf16>, vector<256x256xbf16>, vector<8x256xf32> -> vector<8x256xf32>
    %c0_29 = arith.constant 0 : index
    %c0_30 = arith.constant 0 : index
    %28 = vector.load %arg21[%c0_29, %c0_30] : memref<96x256xf32, #tpu.memory_space<vmem>>, vector<8x128xf32>
    %29 = vector.extract_strided_slice %27 {offsets = [0, 0], sizes = [8, 128], strides = [1, 1]} : vector<8x256xf32> to vector<8x128xf32>
    %30 = arith.addf %28, %29 : vector<8x128xf32>
    %31 = math.tanh %30 : vector<8x128xf32>
    %c88 = arith.constant 88 : index
    %c128 = arith.constant 128 : index
    %32 = vector.load %arg21[%c88, %c128] : memref<96x256xf32, #tpu.memory_space<vmem>>, vector<8x128xf32>
    %33 = vector.extract_strided_slice %27 {offsets = [0, 128], sizes = [8, 128], strides = [1, 1]} : vector<8x256xf32> to vector<8x128xf32>
    %34 = arith.addf %32, %33 : vector<8x128xf32>
    %35 = math.tanh %34 : vector<8x128xf32>
    %c0_31 = arith.constant 0 : index
    %36 = memref.load %arg0[%c0_31] : memref<12xf32, #tpu.memory_space<smem>>
    %37 = vector.broadcast %36 : f32 to vector<8x128xf32>
    %38 = arith.mulf %31, %37 : vector<8x128xf32>
    %c0_32 = arith.constant 0 : index
    %c0_33 = arith.constant 0 : index
    %39 = vector.load %arg22[%c0_32, %c0_33] : memref<96x256xf32, #tpu.memory_space<vmem>>, vector<8x128xf32>
    tpu.vector_store %arg22[%c0_32, %c0_33], %38 {strides = array<i32>} : memref<96x256xf32, #tpu.memory_space<vmem>>, vector<8x128xf32>,
    %c11 = arith.constant 11 : index
    %40 = memref.load %arg0[%c11] : memref<12xf32, #tpu.memory_space<smem>>
    %41 = vector.broadcast %40 : f32 to vector<8x128xf32>
    %42 = arith.mulf %35, %41 : vector<8x128xf32>
    %c88_34 = arith.constant 88 : index
    %c128_35 = arith.constant 128 : index
    %43 = vector.load %arg22[%c88_34, %c128_35] : memref<96x256xf32, #tpu.memory_space<vmem>>, vector<8x128xf32>
    tpu.vector_store %arg22[%c88_34, %c128_35], %42 {strides = array<i32>} : memref<96x256xf32, #tpu.memory_space<vmem>>, vector<8x128xf32>,
    %44 = tpu.concatenate %31, %35 in 1 : vector<8x128xf32>, vector<8x128xf32> -> vector<8x256xf32>
    %45 = arith.truncf %44 : vector<8x256xf32> to vector<8x256xbf16>
    %c0_36 = arith.constant 0 : index
    %c0_37 = arith.constant 0 : index
    %46 = vector.load %arg6[%c0_36, %c0_37] : memref<256x256xbf16, #tpu.memory_space<vmem>>, vector<256x256xbf16>
    %cst_38 = arith.constant dense<0.000000e+00> : vector<8x256xf32>
    %47 = tpu.matmul %45, %46, %cst_38 {dimension_numbers = #tpu.dot_dimension_numbers<[1], [0], [0], [1], [0, 0, 1, 1], [], []>} : vector<8x256xbf16>, vector<256x256xbf16>, vector<8x256xf32> -> vector<8x256xf32>
    %c8 = arith.constant 8 : index
    %c0_39 = arith.constant 0 : index
    %48 = vector.load %arg21[%c8, %c0_39] : memref<96x256xf32, #tpu.memory_space<vmem>>, vector<8x128xf32>
    %49 = vector.extract_strided_slice %47 {offsets = [0, 0], sizes = [8, 128], strides = [1, 1]} : vector<8x256xf32> to vector<8x128xf32>
    %50 = arith.addf %48, %49 : vector<8x128xf32>
    %51 = math.tanh %50 : vector<8x128xf32>
    %c80 = arith.constant 80 : index
    %c128_40 = arith.constant 128 : index
    %52 = vector.load %arg21[%c80, %c128_40] : memref<96x256xf32, #tpu.memory_space<vmem>>, vector<8x128xf32>
    %53 = vector.extract_strided_slice %47 {offsets = [0, 128], sizes = [8, 128], strides = [1, 1]} : vector<8x256xf32> to vector<8x128xf32>
    %54 = arith.addf %52, %53 : vector<8x128xf32>
    %55 = math.tanh %54 : vector<8x128xf32>
    %c1 = arith.constant 1 : index
    %56 = memref.load %arg0[%c1] : memref<12xf32, #tpu.memory_space<smem>>
    %57 = vector.broadcast %56 : f32 to vector<8x128xf32>
    %58 = arith.mulf %51, %57 : vector<8x128xf32>
    %c8_41 = arith.constant 8 : index
    %c0_42 = arith.constant 0 : index
    %59 = vector.load %arg22[%c8_41, %c0_42] : memref<96x256xf32, #tpu.memory_space<vmem>>, vector<8x128xf32>
    tpu.vector_store %arg22[%c8_41, %c0_42], %58 {strides = array<i32>} : memref<96x256xf32, #tpu.memory_space<vmem>>, vector<8x128xf32>,
    %c10 = arith.constant 10 : index
    %60 = memref.load %arg0[%c10] : memref<12xf32, #tpu.memory_space<smem>>
    %61 = vector.broadcast %60 : f32 to vector<8x128xf32>
    %62 = arith.mulf %55, %61 : vector<8x128xf32>
    %c80_43 = arith.constant 80 : index
    %c128_44 = arith.constant 128 : index
    %63 = vector.load %arg22[%c80_43, %c128_44] : memref<96x256xf32, #tpu.memory_space<vmem>>, vector<8x128xf32>
    tpu.vector_store %arg22[%c80_43, %c128_44], %62 {strides = array<i32>} : memref<96x256xf32, #tpu.memory_space<vmem>>, vector<8x128xf32>,
    %64 = tpu.concatenate %51, %55 in 1 : vector<8x128xf32>, vector<8x128xf32> -> vector<8x256xf32>
    %65 = arith.truncf %64 : vector<8x256xf32> to vector<8x256xbf16>
    %c0_45 = arith.constant 0 : index
    %c0_46 = arith.constant 0 : index
    %66 = vector.load %arg6[%c0_45, %c0_46] : memref<256x256xbf16, #tpu.memory_space<vmem>>, vector<256x256xbf16>
    %cst_47 = arith.constant dense<0.000000e+00> : vector<8x256xf32>
    %67 = tpu.matmul %65, %66, %cst_47 {dimension_numbers = #tpu.dot_dimension_numbers<[1], [0], [0], [1], [0, 0, 1, 1], [], []>} : vector<8x256xbf16>, vector<256x256xbf16>, vector<8x256xf32> -> vector<8x256xf32>
    %c16 = arith.constant 16 : index
    %c0_48 = arith.constant 0 : index
    %68 = vector.load %arg21[%c16, %c0_48] : memref<96x256xf32, #tpu.memory_space<vmem>>, vector<8x128xf32>
    %69 = vector.extract_strided_slice %67 {offsets = [0, 0], sizes = [8, 128], strides = [1, 1]} : vector<8x256xf32> to vector<8x128xf32>
    %70 = arith.addf %68, %69 : vector<8x128xf32>
    %71 = math.tanh %70 : vector<8x128xf32>
    %c72 = arith.constant 72 : index
    %c128_49 = arith.constant 128 : index
    %72 = vector.load %arg21[%c72, %c128_49] : memref<96x256xf32, #tpu.memory_space<vmem>>, vector<8x128xf32>
    %73 = vector.extract_strided_slice %67 {offsets = [0, 128], sizes = [8, 128], strides = [1, 1]} : vector<8x256xf32> to vector<8x128xf32>
    %74 = arith.addf %72, %73 : vector<8x128xf32>
    %75 = math.tanh %74 : vector<8x128xf32>
    %c2 = arith.constant 2 : index
    %76 = memref.load %arg0[%c2] : memref<12xf32, #tpu.memory_space<smem>>
    %77 = vector.broadcast %76 : f32 to vector<8x128xf32>
    %78 = arith.mulf %71, %77 : vector<8x128xf32>
    %c16_50 = arith.constant 16 : index
    %c0_51 = arith.constant 0 : index
    %79 = vector.load %arg22[%c16_50, %c0_51] : memref<96x256xf32, #tpu.memory_space<vmem>>, vector<8x128xf32>
    tpu.vector_store %arg22[%c16_50, %c0_51], %78 {strides = array<i32>} : memref<96x256xf32, #tpu.memory_space<vmem>>, vector<8x128xf32>,
    %c9 = arith.constant 9 : index
    %80 = memref.load %arg0[%c9] : memref<12xf32, #tpu.memory_space<smem>>
    %81 = vector.broadcast %80 : f32 to vector<8x128xf32>
    %82 = arith.mulf %75, %81 : vector<8x128xf32>
    %c72_52 = arith.constant 72 : index
    %c128_53 = arith.constant 128 : index
    %83 = vector.load %arg22[%c72_52, %c128_53] : memref<96x256xf32, #tpu.memory_space<vmem>>, vector<8x128xf32>
    tpu.vector_store %arg22[%c72_52, %c128_53], %82 {strides = array<i32>} : memref<96x256xf32, #tpu.memory_space<vmem>>, vector<8x128xf32>,
    %84 = tpu.concatenate %71, %75 in 1 : vector<8x128xf32>, vector<8x128xf32> -> vector<8x256xf32>
    %85 = arith.truncf %84 : vector<8x256xf32> to vector<8x256xbf16>
    %c0_54 = arith.constant 0 : index
    %c0_55 = arith.constant 0 : index
    %86 = vector.load %arg6[%c0_54, %c0_55] : memref<256x256xbf16, #tpu.memory_space<vmem>>, vector<256x256xbf16>
    %cst_56 = arith.constant dense<0.000000e+00> : vector<8x256xf32>
    %87 = tpu.matmul %85, %86, %cst_56 {dimension_numbers = #tpu.dot_dimension_numbers<[1], [0], [0], [1], [0, 0, 1, 1], [], []>} : vector<8x256xbf16>, vector<256x256xbf16>, vector<8x256xf32> -> vector<8x256xf32>
    %c24 = arith.constant 24 : index
    %c0_57 = arith.constant 0 : index
    %88 = vector.load %arg21[%c24, %c0_57] : memref<96x256xf32, #tpu.memory_space<vmem>>, vector<8x128xf32>
    %89 = vector.extract_strided_slice %87 {offsets = [0, 0], sizes = [8, 128], strides = [1, 1]} : vector<8x256xf32> to vector<8x128xf32>
    %90 = arith.addf %88, %89 : vector<8x128xf32>
    %91 = math.tanh %90 : vector<8x128xf32>
    %c64 = arith.constant 64 : index
    %c128_58 = arith.constant 128 : index
    %92 = vector.load %arg21[%c64, %c128_58] : memref<96x256xf32, #tpu.memory_space<vmem>>, vector<8x128xf32>
    %93 = vector.extract_strided_slice %87 {offsets = [0, 128], sizes = [8, 128], strides = [1, 1]} : vector<8x256xf32> to vector<8x128xf32>
    %94 = arith.addf %92, %93 : vector<8x128xf32>
    %95 = math.tanh %94 : vector<8x128xf32>
    %c3 = arith.constant 3 : index
    %96 = memref.load %arg0[%c3] : memref<12xf32, #tpu.memory_space<smem>>
    %97 = vector.broadcast %96 : f32 to vector<8x128xf32>
    %98 = arith.mulf %91, %97 : vector<8x128xf32>
    %c24_59 = arith.constant 24 : index
    %c0_60 = arith.constant 0 : index
    %99 = vector.load %arg22[%c24_59, %c0_60] : memref<96x256xf32, #tpu.memory_space<vmem>>, vector<8x128xf32>
    tpu.vector_store %arg22[%c24_59, %c0_60], %98 {strides = array<i32>} : memref<96x256xf32, #tpu.memory_space<vmem>>, vector<8x128xf32>,
    %c8_61 = arith.constant 8 : index
    %100 = memref.load %arg0[%c8_61] : memref<12xf32, #tpu.memory_space<smem>>
    %101 = vector.broadcast %100 : f32 to vector<8x128xf32>
    %102 = arith.mulf %95, %101 : vector<8x128xf32>
    %c64_62 = arith.constant 64 : index
    %c128_63 = arith.constant 128 : index
    %103 = vector.load %arg22[%c64_62, %c128_63] : memref<96x256xf32, #tpu.memory_space<vmem>>, vector<8x128xf32>
    tpu.vector_store %arg22[%c64_62, %c128_63], %102 {strides = array<i32>} : memref<96x256xf32, #tpu.memory_space<vmem>>, vector<8x128xf32>,
    %104 = tpu.concatenate %91, %95 in 1 : vector<8x128xf32>, vector<8x128xf32> -> vector<8x256xf32>
    %105 = arith.truncf %104 : vector<8x256xf32> to vector<8x256xbf16>
    %c0_64 = arith.constant 0 : index
    %c0_65 = arith.constant 0 : index
    %106 = vector.load %arg6[%c0_64, %c0_65] : memref<256x256xbf16, #tpu.memory_space<vmem>>, vector<256x256xbf16>
    %cst_66 = arith.constant dense<0.000000e+00> : vector<8x256xf32>
    %107 = tpu.matmul %105, %106, %cst_66 {dimension_numbers = #tpu.dot_dimension_numbers<[1], [0], [0], [1], [0, 0, 1, 1], [], []>} : vector<8x256xbf16>, vector<256x256xbf16>, vector<8x256xf32> -> vector<8x256xf32>
    %c32 = arith.constant 32 : index
    %c0_67 = arith.constant 0 : index
    %108 = vector.load %arg21[%c32, %c0_67] : memref<96x256xf32, #tpu.memory_space<vmem>>, vector<8x128xf32>
    %109 = vector.extract_strided_slice %107 {offsets = [0, 0], sizes = [8, 128], strides = [1, 1]} : vector<8x256xf32> to vector<8x128xf32>
    %110 = arith.addf %108, %109 : vector<8x128xf32>
    %111 = math.tanh %110 : vector<8x128xf32>
    %c56 = arith.constant 56 : index
    %c128_68 = arith.constant 128 : index
    %112 = vector.load %arg21[%c56, %c128_68] : memref<96x256xf32, #tpu.memory_space<vmem>>, vector<8x128xf32>
    %113 = vector.extract_strided_slice %107 {offsets = [0, 128], sizes = [8, 128], strides = [1, 1]} : vector<8x256xf32> to vector<8x128xf32>
    %114 = arith.addf %112, %113 : vector<8x128xf32>
    %115 = math.tanh %114 : vector<8x128xf32>
    %c4 = arith.constant 4 : index
    %116 = memref.load %arg0[%c4] : memref<12xf32, #tpu.memory_space<smem>>
    %117 = vector.broadcast %116 : f32 to vector<8x128xf32>
    %118 = arith.mulf %111, %117 : vector<8x128xf32>
    %c32_69 = arith.constant 32 : index
    %c0_70 = arith.constant 0 : index
    %119 = vector.load %arg22[%c32_69, %c0_70] : memref<96x256xf32, #tpu.memory_space<vmem>>, vector<8x128xf32>
    tpu.vector_store %arg22[%c32_69, %c0_70], %118 {strides = array<i32>} : memref<96x256xf32, #tpu.memory_space<vmem>>, vector<8x128xf32>,
    %c7 = arith.constant 7 : index
    %120 = memref.load %arg0[%c7] : memref<12xf32, #tpu.memory_space<smem>>
    %121 = vector.broadcast %120 : f32 to vector<8x128xf32>
    %122 = arith.mulf %115, %121 : vector<8x128xf32>
    %c56_71 = arith.constant 56 : index
    %c128_72 = arith.constant 128 : index
    %123 = vector.load %arg22[%c56_71, %c128_72] : memref<96x256xf32, #tpu.memory_space<vmem>>, vector<8x128xf32>
    tpu.vector_store %arg22[%c56_71, %c128_72], %122 {strides = array<i32>} : memref<96x256xf32, #tpu.memory_space<vmem>>, vector<8x128xf32>,
    %124 = tpu.concatenate %111, %115 in 1 : vector<8x128xf32>, vector<8x128xf32> -> vector<8x256xf32>
    %125 = arith.truncf %124 : vector<8x256xf32> to vector<8x256xbf16>
    %c0_73 = arith.constant 0 : index
    %c0_74 = arith.constant 0 : index
    %126 = vector.load %arg6[%c0_73, %c0_74] : memref<256x256xbf16, #tpu.memory_space<vmem>>, vector<256x256xbf16>
    %cst_75 = arith.constant dense<0.000000e+00> : vector<8x256xf32>
    %127 = tpu.matmul %125, %126, %cst_75 {dimension_numbers = #tpu.dot_dimension_numbers<[1], [0], [0], [1], [0, 0, 1, 1], [], []>} : vector<8x256xbf16>, vector<256x256xbf16>, vector<8x256xf32> -> vector<8x256xf32>
    %c40 = arith.constant 40 : index
    %c0_76 = arith.constant 0 : index
    %128 = vector.load %arg21[%c40, %c0_76] : memref<96x256xf32, #tpu.memory_space<vmem>>, vector<8x128xf32>
    %129 = vector.extract_strided_slice %127 {offsets = [0, 0], sizes = [8, 128], strides = [1, 1]} : vector<8x256xf32> to vector<8x128xf32>
    %130 = arith.addf %128, %129 : vector<8x128xf32>
    %131 = math.tanh %130 : vector<8x128xf32>
    %c48 = arith.constant 48 : index
    %c128_77 = arith.constant 128 : index
    %132 = vector.load %arg21[%c48, %c128_77] : memref<96x256xf32, #tpu.memory_space<vmem>>, vector<8x128xf32>
    %133 = vector.extract_strided_slice %127 {offsets = [0, 128], sizes = [8, 128], strides = [1, 1]} : vector<8x256xf32> to vector<8x128xf32>
    %134 = arith.addf %132, %133 : vector<8x128xf32>
    %135 = math.tanh %134 : vector<8x128xf32>
    %c5 = arith.constant 5 : index
    %136 = memref.load %arg0[%c5] : memref<12xf32, #tpu.memory_space<smem>>
    %137 = vector.broadcast %136 : f32 to vector<8x128xf32>
    %138 = arith.mulf %131, %137 : vector<8x128xf32>
    %c40_78 = arith.constant 40 : index
    %c0_79 = arith.constant 0 : index
    %139 = vector.load %arg22[%c40_78, %c0_79] : memref<96x256xf32, #tpu.memory_space<vmem>>, vector<8x128xf32>
    tpu.vector_store %arg22[%c40_78, %c0_79], %138 {strides = array<i32>} : memref<96x256xf32, #tpu.memory_space<vmem>>, vector<8x128xf32>,
    %c6 = arith.constant 6 : index
    %140 = memref.load %arg0[%c6] : memref<12xf32, #tpu.memory_space<smem>>
    %141 = vector.broadcast %140 : f32 to vector<8x128xf32>
    %142 = arith.mulf %135, %141 : vector<8x128xf32>
    %c48_80 = arith.constant 48 : index
    %c128_81 = arith.constant 128 : index
    %143 = vector.load %arg22[%c48_80, %c128_81] : memref<96x256xf32, #tpu.memory_space<vmem>>, vector<8x128xf32>
    tpu.vector_store %arg22[%c48_80, %c128_81], %142 {strides = array<i32>} : memref<96x256xf32, #tpu.memory_space<vmem>>, vector<8x128xf32>,
    %144 = tpu.concatenate %131, %135 in 1 : vector<8x128xf32>, vector<8x128xf32> -> vector<8x256xf32>
    %145 = arith.truncf %144 : vector<8x256xf32> to vector<8x256xbf16>
    %c0_82 = arith.constant 0 : index
    %c0_83 = arith.constant 0 : index
    %146 = vector.load %arg6[%c0_82, %c0_83] : memref<256x256xbf16, #tpu.memory_space<vmem>>, vector<256x256xbf16>
    %cst_84 = arith.constant dense<0.000000e+00> : vector<8x256xf32>
    %147 = tpu.matmul %145, %146, %cst_84 {dimension_numbers = #tpu.dot_dimension_numbers<[1], [0], [0], [1], [0, 0, 1, 1], [], []>} : vector<8x256xbf16>, vector<256x256xbf16>, vector<8x256xf32> -> vector<8x256xf32>
    %c48_85 = arith.constant 48 : index
    %c0_86 = arith.constant 0 : index
    %148 = vector.load %arg21[%c48_85, %c0_86] : memref<96x256xf32, #tpu.memory_space<vmem>>, vector<8x128xf32>
    %149 = vector.extract_strided_slice %147 {offsets = [0, 0], sizes = [8, 128], strides = [1, 1]} : vector<8x256xf32> to vector<8x128xf32>
    %150 = arith.addf %148, %149 : vector<8x128xf32>
    %151 = math.tanh %150 : vector<8x128xf32>
    %c40_87 = arith.constant 40 : index
    %c128_88 = arith.constant 128 : index
    %152 = vector.load %arg21[%c40_87, %c128_88] : memref<96x256xf32, #tpu.memory_space<vmem>>, vector<8x128xf32>
    %153 = vector.extract_strided_slice %147 {offsets = [0, 128], sizes = [8, 128], strides = [1, 1]} : vector<8x256xf32> to vector<8x128xf32>
    %154 = arith.addf %152, %153 : vector<8x128xf32>
    %155 = math.tanh %154 : vector<8x128xf32>
    %c6_89 = arith.constant 6 : index
    %156 = memref.load %arg0[%c6_89] : memref<12xf32, #tpu.memory_space<smem>>
    %157 = vector.broadcast %156 : f32 to vector<8x128xf32>
    %158 = arith.mulf %151, %157 : vector<8x128xf32>
    %c48_90 = arith.constant 48 : index
    %c0_91 = arith.constant 0 : index
    %159 = vector.load %arg22[%c48_90, %c0_91] : memref<96x256xf32, #tpu.memory_space<vmem>>, vector<8x128xf32>
    tpu.vector_store %arg22[%c48_90, %c0_91], %158 {strides = array<i32>} : memref<96x256xf32, #tpu.memory_space<vmem>>, vector<8x128xf32>,
    %c5_92 = arith.constant 5 : index
    %160 = memref.load %arg0[%c5_92] : memref<12xf32, #tpu.memory_space<smem>>
    %161 = vector.broadcast %160 : f32 to vector<8x128xf32>
    %162 = arith.mulf %155, %161 : vector<8x128xf32>
    %c40_93 = arith.constant 40 : index
    %c128_94 = arith.constant 128 : index
    %163 = vector.load %arg22[%c40_93, %c128_94] : memref<96x256xf32, #tpu.memory_space<vmem>>, vector<8x128xf32>
    tpu.vector_store %arg22[%c40_93, %c128_94], %162 {strides = array<i32>} : memref<96x256xf32, #tpu.memory_space<vmem>>, vector<8x128xf32>,
    %164 = tpu.concatenate %151, %155 in 1 : vector<8x128xf32>, vector<8x128xf32> -> vector<8x256xf32>
    %165 = arith.truncf %164 : vector<8x256xf32> to vector<8x256xbf16>
    %c0_95 = arith.constant 0 : index
    %c0_96 = arith.constant 0 : index
    %166 = vector.load %arg6[%c0_95, %c0_96] : memref<256x256xbf16, #tpu.memory_space<vmem>>, vector<256x256xbf16>
    %cst_97 = arith.constant dense<0.000000e+00> : vector<8x256xf32>
    %167 = tpu.matmul %165, %166, %cst_97 {dimension_numbers = #tpu.dot_dimension_numbers<[1], [0], [0], [1], [0, 0, 1, 1], [], []>} : vector<8x256xbf16>, vector<256x256xbf16>, vector<8x256xf32> -> vector<8x256xf32>
    %c56_98 = arith.constant 56 : index
    %c0_99 = arith.constant 0 : index
    %168 = vector.load %arg21[%c56_98, %c0_99] : memref<96x256xf32, #tpu.memory_space<vmem>>, vector<8x128xf32>
    %169 = vector.extract_strided_slice %167 {offsets = [0, 0], sizes = [8, 128], strides = [1, 1]} : vector<8x256xf32> to vector<8x128xf32>
    %170 = arith.addf %168, %169 : vector<8x128xf32>
    %171 = math.tanh %170 : vector<8x128xf32>
    %c32_100 = arith.constant 32 : index
    %c128_101 = arith.constant 128 : index
    %172 = vector.load %arg21[%c32_100, %c128_101] : memref<96x256xf32, #tpu.memory_space<vmem>>, vector<8x128xf32>
    %173 = vector.extract_strided_slice %167 {offsets = [0, 128], sizes = [8, 128], strides = [1, 1]} : vector<8x256xf32> to vector<8x128xf32>
    %174 = arith.addf %172, %173 : vector<8x128xf32>
    %175 = math.tanh %174 : vector<8x128xf32>
    %c7_102 = arith.constant 7 : index
    %176 = memref.load %arg0[%c7_102] : memref<12xf32, #tpu.memory_space<smem>>
    %177 = vector.broadcast %176 : f32 to vector<8x128xf32>
    %178 = arith.mulf %171, %177 : vector<8x128xf32>
    %c56_103 = arith.constant 56 : index
    %c0_104 = arith.constant 0 : index
    %179 = vector.load %arg22[%c56_103, %c0_104] : memref<96x256xf32, #tpu.memory_space<vmem>>, vector<8x128xf32>
    tpu.vector_store %arg22[%c56_103, %c0_104], %178 {strides = array<i32>} : memref<96x256xf32, #tpu.memory_space<vmem>>, vector<8x128xf32>,
    %c4_105 = arith.constant 4 : index
    %180 = memref.load %arg0[%c4_105] : memref<12xf32, #tpu.memory_space<smem>>
    %181 = vector.broadcast %180 : f32 to vector<8x128xf32>
    %182 = arith.mulf %175, %181 : vector<8x128xf32>
    %c32_106 = arith.constant 32 : index
    %c128_107 = arith.constant 128 : index
    %183 = vector.load %arg22[%c32_106, %c128_107] : memref<96x256xf32, #tpu.memory_space<vmem>>, vector<8x128xf32>
    tpu.vector_store %arg22[%c32_106, %c128_107], %182 {strides = array<i32>} : memref<96x256xf32, #tpu.memory_space<vmem>>, vector<8x128xf32>,
    %184 = tpu.concatenate %171, %175 in 1 : vector<8x128xf32>, vector<8x128xf32> -> vector<8x256xf32>
    %185 = arith.truncf %184 : vector<8x256xf32> to vector<8x256xbf16>
    %c0_108 = arith.constant 0 : index
    %c0_109 = arith.constant 0 : index
    %186 = vector.load %arg6[%c0_108, %c0_109] : memref<256x256xbf16, #tpu.memory_space<vmem>>, vector<256x256xbf16>
    %cst_110 = arith.constant dense<0.000000e+00> : vector<8x256xf32>
    %187 = tpu.matmul %185, %186, %cst_110 {dimension_numbers = #tpu.dot_dimension_numbers<[1], [0], [0], [1], [0, 0, 1, 1], [], []>} : vector<8x256xbf16>, vector<256x256xbf16>, vector<8x256xf32> -> vector<8x256xf32>
    %c64_111 = arith.constant 64 : index
    %c0_112 = arith.constant 0 : index
    %188 = vector.load %arg21[%c64_111, %c0_112] : memref<96x256xf32, #tpu.memory_space<vmem>>, vector<8x128xf32>
    %189 = vector.extract_strided_slice %187 {offsets = [0, 0], sizes = [8, 128], strides = [1, 1]} : vector<8x256xf32> to vector<8x128xf32>
    %190 = arith.addf %188, %189 : vector<8x128xf32>
    %191 = math.tanh %190 : vector<8x128xf32>
    %c24_113 = arith.constant 24 : index
    %c128_114 = arith.constant 128 : index
    %192 = vector.load %arg21[%c24_113, %c128_114] : memref<96x256xf32, #tpu.memory_space<vmem>>, vector<8x128xf32>
    %193 = vector.extract_strided_slice %187 {offsets = [0, 128], sizes = [8, 128], strides = [1, 1]} : vector<8x256xf32> to vector<8x128xf32>
    %194 = arith.addf %192, %193 : vector<8x128xf32>
    %195 = math.tanh %194 : vector<8x128xf32>
    %c8_115 = arith.constant 8 : index
    %196 = memref.load %arg0[%c8_115] : memref<12xf32, #tpu.memory_space<smem>>
    %197 = vector.broadcast %196 : f32 to vector<8x128xf32>
    %198 = arith.mulf %191, %197 : vector<8x128xf32>
    %c64_116 = arith.constant 64 : index
    %c0_117 = arith.constant 0 : index
    %199 = vector.load %arg22[%c64_116, %c0_117] : memref<96x256xf32, #tpu.memory_space<vmem>>, vector<8x128xf32>
    tpu.vector_store %arg22[%c64_116, %c0_117], %198 {strides = array<i32>} : memref<96x256xf32, #tpu.memory_space<vmem>>, vector<8x128xf32>,
    %c3_118 = arith.constant 3 : index
    %200 = memref.load %arg0[%c3_118] : memref<12xf32, #tpu.memory_space<smem>>
    %201 = vector.broadcast %200 : f32 to vector<8x128xf32>
    %202 = arith.mulf %195, %201 : vector<8x128xf32>
    %c24_119 = arith.constant 24 : index
    %c128_120 = arith.constant 128 : index
    %203 = vector.load %arg22[%c24_119, %c128_120] : memref<96x256xf32, #tpu.memory_space<vmem>>, vector<8x128xf32>
    tpu.vector_store %arg22[%c24_119, %c128_120], %202 {strides = array<i32>} : memref<96x256xf32, #tpu.memory_space<vmem>>, vector<8x128xf32>,
    %204 = tpu.concatenate %191, %195 in 1 : vector<8x128xf32>, vector<8x128xf32> -> vector<8x256xf32>
    %205 = arith.truncf %204 : vector<8x256xf32> to vector<8x256xbf16>
    %c0_121 = arith.constant 0 : index
    %c0_122 = arith.constant 0 : index
    %206 = vector.load %arg6[%c0_121, %c0_122] : memref<256x256xbf16, #tpu.memory_space<vmem>>, vector<256x256xbf16>
    %cst_123 = arith.constant dense<0.000000e+00> : vector<8x256xf32>
    %207 = tpu.matmul %205, %206, %cst_123 {dimension_numbers = #tpu.dot_dimension_numbers<[1], [0], [0], [1], [0, 0, 1, 1], [], []>} : vector<8x256xbf16>, vector<256x256xbf16>, vector<8x256xf32> -> vector<8x256xf32>
    %c72_124 = arith.constant 72 : index
    %c0_125 = arith.constant 0 : index
    %208 = vector.load %arg21[%c72_124, %c0_125] : memref<96x256xf32, #tpu.memory_space<vmem>>, vector<8x128xf32>
    %209 = vector.extract_strided_slice %207 {offsets = [0, 0], sizes = [8, 128], strides = [1, 1]} : vector<8x256xf32> to vector<8x128xf32>
    %210 = arith.addf %208, %209 : vector<8x128xf32>
    %211 = math.tanh %210 : vector<8x128xf32>
    %c16_126 = arith.constant 16 : index
    %c128_127 = arith.constant 128 : index
    %212 = vector.load %arg21[%c16_126, %c128_127] : memref<96x256xf32, #tpu.memory_space<vmem>>, vector<8x128xf32>
    %213 = vector.extract_strided_slice %207 {offsets = [0, 128], sizes = [8, 128], strides = [1, 1]} : vector<8x256xf32> to vector<8x128xf32>
    %214 = arith.addf %212, %213 : vector<8x128xf32>
    %215 = math.tanh %214 : vector<8x128xf32>
    %c9_128 = arith.constant 9 : index
    %216 = memref.load %arg0[%c9_128] : memref<12xf32, #tpu.memory_space<smem>>
    %217 = vector.broadcast %216 : f32 to vector<8x128xf32>
    %218 = arith.mulf %211, %217 : vector<8x128xf32>
    %c72_129 = arith.constant 72 : index
    %c0_130 = arith.constant 0 : index
    %219 = vector.load %arg22[%c72_129, %c0_130] : memref<96x256xf32, #tpu.memory_space<vmem>>, vector<8x128xf32>
    tpu.vector_store %arg22[%c72_129, %c0_130], %218 {strides = array<i32>} : memref<96x256xf32, #tpu.memory_space<vmem>>, vector<8x128xf32>,
    %c2_131 = arith.constant 2 : index
    %220 = memref.load %arg0[%c2_131] : memref<12xf32, #tpu.memory_space<smem>>
    %221 = vector.broadcast %220 : f32 to vector<8x128xf32>
    %222 = arith.mulf %215, %221 : vector<8x128xf32>
    %c16_132 = arith.constant 16 : index
    %c128_133 = arith.constant 128 : index
    %223 = vector.load %arg22[%c16_132, %c128_133] : memref<96x256xf32, #tpu.memory_space<vmem>>, vector<8x128xf32>
    tpu.vector_store %arg22[%c16_132, %c128_133], %222 {strides = array<i32>} : memref<96x256xf32, #tpu.memory_space<vmem>>, vector<8x128xf32>,
    %224 = tpu.concatenate %211, %215 in 1 : vector<8x128xf32>, vector<8x128xf32> -> vector<8x256xf32>
    %225 = arith.truncf %224 : vector<8x256xf32> to vector<8x256xbf16>
    %c0_134 = arith.constant 0 : index
    %c0_135 = arith.constant 0 : index
    %226 = vector.load %arg6[%c0_134, %c0_135] : memref<256x256xbf16, #tpu.memory_space<vmem>>, vector<256x256xbf16>
    %cst_136 = arith.constant dense<0.000000e+00> : vector<8x256xf32>
    %227 = tpu.matmul %225, %226, %cst_136 {dimension_numbers = #tpu.dot_dimension_numbers<[1], [0], [0], [1], [0, 0, 1, 1], [], []>} : vector<8x256xbf16>, vector<256x256xbf16>, vector<8x256xf32> -> vector<8x256xf32>
    %c80_137 = arith.constant 80 : index
    %c0_138 = arith.constant 0 : index
    %228 = vector.load %arg21[%c80_137, %c0_138] : memref<96x256xf32, #tpu.memory_space<vmem>>, vector<8x128xf32>
    %229 = vector.extract_strided_slice %227 {offsets = [0, 0], sizes = [8, 128], strides = [1, 1]} : vector<8x256xf32> to vector<8x128xf32>
    %230 = arith.addf %228, %229 : vector<8x128xf32>
    %231 = math.tanh %230 : vector<8x128xf32>
    %c8_139 = arith.constant 8 : index
    %c128_140 = arith.constant 128 : index
    %232 = vector.load %arg21[%c8_139, %c128_140] : memref<96x256xf32, #tpu.memory_space<vmem>>, vector<8x128xf32>
    %233 = vector.extract_strided_slice %227 {offsets = [0, 128], sizes = [8, 128], strides = [1, 1]} : vector<8x256xf32> to vector<8x128xf32>
    %234 = arith.addf %232, %233 : vector<8x128xf32>
    %235 = math.tanh %234 : vector<8x128xf32>
    %c10_141 = arith.constant 10 : index
    %236 = memref.load %arg0[%c10_141] : memref<12xf32, #tpu.memory_space<smem>>
    %237 = vector.broadcast %236 : f32 to vector<8x128xf32>
    %238 = arith.mulf %231, %237 : vector<8x128xf32>
    %c80_142 = arith.constant 80 : index
    %c0_143 = arith.constant 0 : index
    %239 = vector.load %arg22[%c80_142, %c0_143] : memref<96x256xf32, #tpu.memory_space<vmem>>, vector<8x128xf32>
    tpu.vector_store %arg22[%c80_142, %c0_143], %238 {strides = array<i32>} : memref<96x256xf32, #tpu.memory_space<vmem>>, vector<8x128xf32>,
    %c1_144 = arith.constant 1 : index
    %240 = memref.load %arg0[%c1_144] : memref<12xf32, #tpu.memory_space<smem>>
    %241 = vector.broadcast %240 : f32 to vector<8x128xf32>
    %242 = arith.mulf %235, %241 : vector<8x128xf32>
    %c8_145 = arith.constant 8 : index
    %c128_146 = arith.constant 128 : index
    %243 = vector.load %arg22[%c8_145, %c128_146] : memref<96x256xf32, #tpu.memory_space<vmem>>, vector<8x128xf32>
    tpu.vector_store %arg22[%c8_145, %c128_146], %242 {strides = array<i32>} : memref<96x256xf32, #tpu.memory_space<vmem>>, vector<8x128xf32>,
    %244 = tpu.concatenate %231, %235 in 1 : vector<8x128xf32>, vector<8x128xf32> -> vector<8x256xf32>
    %245 = arith.truncf %244 : vector<8x256xf32> to vector<8x256xbf16>
    %c0_147 = arith.constant 0 : index
    %c0_148 = arith.constant 0 : index
    %246 = vector.load %arg6[%c0_147, %c0_148] : memref<256x256xbf16, #tpu.memory_space<vmem>>, vector<256x256xbf16>
    %cst_149 = arith.constant dense<0.000000e+00> : vector<8x256xf32>
    %247 = tpu.matmul %245, %246, %cst_149 {dimension_numbers = #tpu.dot_dimension_numbers<[1], [0], [0], [1], [0, 0, 1, 1], [], []>} : vector<8x256xbf16>, vector<256x256xbf16>, vector<8x256xf32> -> vector<8x256xf32>
    %c88_150 = arith.constant 88 : index
    %c0_151 = arith.constant 0 : index
    %248 = vector.load %arg21[%c88_150, %c0_151] : memref<96x256xf32, #tpu.memory_space<vmem>>, vector<8x128xf32>
    %249 = vector.extract_strided_slice %247 {offsets = [0, 0], sizes = [8, 128], strides = [1, 1]} : vector<8x256xf32> to vector<8x128xf32>
    %250 = arith.addf %248, %249 : vector<8x128xf32>
    %251 = math.tanh %250 : vector<8x128xf32>
    %c0_152 = arith.constant 0 : index
    %c128_153 = arith.constant 128 : index
    %252 = vector.load %arg21[%c0_152, %c128_153] : memref<96x256xf32, #tpu.memory_space<vmem>>, vector<8x128xf32>
    %253 = vector.extract_strided_slice %247 {offsets = [0, 128], sizes = [8, 128], strides = [1, 1]} : vector<8x256xf32> to vector<8x128xf32>
    %254 = arith.addf %252, %253 : vector<8x128xf32>
    %255 = math.tanh %254 : vector<8x128xf32>
    %c11_154 = arith.constant 11 : index
    %256 = memref.load %arg0[%c11_154] : memref<12xf32, #tpu.memory_space<smem>>
    %257 = vector.broadcast %256 : f32 to vector<8x128xf32>
    %258 = arith.mulf %251, %257 : vector<8x128xf32>
    %c88_155 = arith.constant 88 : index
    %c0_156 = arith.constant 0 : index
    %259 = vector.load %arg22[%c88_155, %c0_156] : memref<96x256xf32, #tpu.memory_space<vmem>>, vector<8x128xf32>
    tpu.vector_store %arg22[%c88_155, %c0_156], %258 {strides = array<i32>} : memref<96x256xf32, #tpu.memory_space<vmem>>, vector<8x128xf32>,
    %c0_157 = arith.constant 0 : index
    %260 = memref.load %arg0[%c0_157] : memref<12xf32, #tpu.memory_space<smem>>
    %261 = vector.broadcast %260 : f32 to vector<8x128xf32>
    %262 = arith.mulf %255, %261 : vector<8x128xf32>
    %c0_158 = arith.constant 0 : index
    %c128_159 = arith.constant 128 : index
    %263 = vector.load %arg22[%c0_158, %c128_159] : memref<96x256xf32, #tpu.memory_space<vmem>>, vector<8x128xf32>
    tpu.vector_store %arg22[%c0_158, %c128_159], %262 {strides = array<i32>} : memref<96x256xf32, #tpu.memory_space<vmem>>, vector<8x128xf32>,
    %c0_160 = arith.constant 0 : index
    %c0_161 = arith.constant 0 : index
    %264 = vector.load %arg22[%c0_160, %c0_161] : memref<96x256xf32, #tpu.memory_space<vmem>>, vector<96x256xf32>
    %265 = arith.truncf %264 : vector<96x256xf32> to vector<96x256xbf16>
    %c0_162 = arith.constant 0 : index
    %c0_163 = arith.constant 0 : index
    %266 = vector.load %arg7[%c0_162, %c0_163] : memref<256x512xbf16, #tpu.memory_space<vmem>>, vector<256x512xbf16>
    %cst_164 = arith.constant dense<0.000000e+00> : vector<96x512xf32>
    %267 = tpu.matmul %265, %266, %cst_164 {dimension_numbers = #tpu.dot_dimension_numbers<[1], [0], [0], [1], [0, 0, 1, 1], [], []>} : vector<96x256xbf16>, vector<256x512xbf16>, vector<96x512xf32> -> vector<96x512xf32>
    %c0_165 = arith.constant 0 : index
    %c0_166 = arith.constant 0 : index
    %268 = vector.load %arg23[%c0_165, %c0_166] : memref<96x512xf32, #tpu.memory_space<vmem>>, vector<96x512xf32>
    tpu.vector_store %arg23[%c0_165, %c0_166], %267 {strides = array<i32>} : memref<96x512xf32, #tpu.memory_space<vmem>>, vector<96x512xf32>,
    %cst_167 = arith.constant 0.000000e+00 : f32
    %269 = vector.broadcast %cst_167 : f32 to vector<8x256xf32>
    %c0_168 = arith.constant 0 : index
    %c0_169 = arith.constant 0 : index
    %270 = vector.load %arg23[%c0_168, %c0_169] : memref<96x512xf32, #tpu.memory_space<vmem>>, vector<8x256xf32>
    %c0_170 = arith.constant 0 : index
    %c0_171 = arith.constant 0 : index
    %271 = vector.load %arg8[%c0_170, %c0_171] : memref<12x512xf32, #tpu.memory_space<vmem>>, vector<1x256xf32>
    %272 = vector.broadcast %271 : vector<1x256xf32> to vector<8x256xf32>
    %273 = arith.addf %270, %272 : vector<8x256xf32>
    %274 = arith.truncf %269 : vector<8x256xf32> to vector<8x256xbf16>
    %c0_172 = arith.constant 0 : index
    %c0_173 = arith.constant 0 : index
    %275 = vector.load %arg9[%c0_172, %c0_173] : memref<256x256xbf16, #tpu.memory_space<vmem>>, vector<256x256xbf16>
    %cst_174 = arith.constant dense<0.000000e+00> : vector<8x256xf32>
    %276 = tpu.matmul %274, %275, %cst_174 {dimension_numbers = #tpu.dot_dimension_numbers<[1], [0], [0], [1], [0, 0, 1, 1], [], []>} : vector<8x256xbf16>, vector<256x256xbf16>, vector<8x256xf32> -> vector<8x256xf32>
    %277 = arith.addf %273, %276 : vector<8x256xf32>
    %278 = math.tanh %277 : vector<8x256xf32>
    %c8_175 = arith.constant 8 : index
    %c0_176 = arith.constant 0 : index
    %279 = vector.load %arg23[%c8_175, %c0_176] : memref<96x512xf32, #tpu.memory_space<vmem>>, vector<8x256xf32>
    %c1_177 = arith.constant 1 : index
    %c0_178 = arith.constant 0 : index
    %280 = vector.load %arg8[%c1_177, %c0_178] : memref<12x512xf32, #tpu.memory_space<vmem>>, vector<1x256xf32>
    %281 = vector.broadcast %280 : vector<1x256xf32> to vector<8x256xf32>
    %282 = arith.addf %279, %281 : vector<8x256xf32>
    %283 = arith.truncf %278 : vector<8x256xf32> to vector<8x256xbf16>
    %c0_179 = arith.constant 0 : index
    %c0_180 = arith.constant 0 : index
    %284 = vector.load %arg9[%c0_179, %c0_180] : memref<256x256xbf16, #tpu.memory_space<vmem>>, vector<256x256xbf16>
    %cst_181 = arith.constant dense<0.000000e+00> : vector<8x256xf32>
    %285 = tpu.matmul %283, %284, %cst_181 {dimension_numbers = #tpu.dot_dimension_numbers<[1], [0], [0], [1], [0, 0, 1, 1], [], []>} : vector<8x256xbf16>, vector<256x256xbf16>, vector<8x256xf32> -> vector<8x256xf32>
    %286 = arith.addf %282, %285 : vector<8x256xf32>
    %287 = math.tanh %286 : vector<8x256xf32>
    %c16_182 = arith.constant 16 : index
    %c0_183 = arith.constant 0 : index
    %288 = vector.load %arg23[%c16_182, %c0_183] : memref<96x512xf32, #tpu.memory_space<vmem>>, vector<8x256xf32>
    %c2_184 = arith.constant 2 : index
    %c0_185 = arith.constant 0 : index
    %289 = vector.load %arg8[%c2_184, %c0_185] : memref<12x512xf32, #tpu.memory_space<vmem>>, vector<1x256xf32>
    %290 = vector.broadcast %289 : vector<1x256xf32> to vector<8x256xf32>
    %291 = arith.addf %288, %290 : vector<8x256xf32>
    %292 = arith.truncf %287 : vector<8x256xf32> to vector<8x256xbf16>
    %c0_186 = arith.constant 0 : index
    %c0_187 = arith.constant 0 : index
    %293 = vector.load %arg9[%c0_186, %c0_187] : memref<256x256xbf16, #tpu.memory_space<vmem>>, vector<256x256xbf16>
    %cst_188 = arith.constant dense<0.000000e+00> : vector<8x256xf32>
    %294 = tpu.matmul %292, %293, %cst_188 {dimension_numbers = #tpu.dot_dimension_numbers<[1], [0], [0], [1], [0, 0, 1, 1], [], []>} : vector<8x256xbf16>, vector<256x256xbf16>, vector<8x256xf32> -> vector<8x256xf32>
    %295 = arith.addf %291, %294 : vector<8x256xf32>
    %296 = math.tanh %295 : vector<8x256xf32>
    %c24_189 = arith.constant 24 : index
    %c0_190 = arith.constant 0 : index
    %297 = vector.load %arg23[%c24_189, %c0_190] : memref<96x512xf32, #tpu.memory_space<vmem>>, vector<8x256xf32>
    %c3_191 = arith.constant 3 : index
    %c0_192 = arith.constant 0 : index
    %298 = vector.load %arg8[%c3_191, %c0_192] : memref<12x512xf32, #tpu.memory_space<vmem>>, vector<1x256xf32>
    %299 = vector.broadcast %298 : vector<1x256xf32> to vector<8x256xf32>
    %300 = arith.addf %297, %299 : vector<8x256xf32>
    %301 = arith.truncf %296 : vector<8x256xf32> to vector<8x256xbf16>
    %c0_193 = arith.constant 0 : index
    %c0_194 = arith.constant 0 : index
    %302 = vector.load %arg9[%c0_193, %c0_194] : memref<256x256xbf16, #tpu.memory_space<vmem>>, vector<256x256xbf16>
    %cst_195 = arith.constant dense<0.000000e+00> : vector<8x256xf32>
    %303 = tpu.matmul %301, %302, %cst_195 {dimension_numbers = #tpu.dot_dimension_numbers<[1], [0], [0], [1], [0, 0, 1, 1], [], []>} : vector<8x256xbf16>, vector<256x256xbf16>, vector<8x256xf32> -> vector<8x256xf32>
    %304 = arith.addf %300, %303 : vector<8x256xf32>
    %305 = math.tanh %304 : vector<8x256xf32>
    %c32_196 = arith.constant 32 : index
    %c0_197 = arith.constant 0 : index
    %306 = vector.load %arg23[%c32_196, %c0_197] : memref<96x512xf32, #tpu.memory_space<vmem>>, vector<8x256xf32>
    %c4_198 = arith.constant 4 : index
    %c0_199 = arith.constant 0 : index
    %307 = vector.load %arg8[%c4_198, %c0_199] : memref<12x512xf32, #tpu.memory_space<vmem>>, vector<1x256xf32>
    %308 = vector.broadcast %307 : vector<1x256xf32> to vector<8x256xf32>
    %309 = arith.addf %306, %308 : vector<8x256xf32>
    %310 = arith.truncf %305 : vector<8x256xf32> to vector<8x256xbf16>
    %c0_200 = arith.constant 0 : index
    %c0_201 = arith.constant 0 : index
    %311 = vector.load %arg9[%c0_200, %c0_201] : memref<256x256xbf16, #tpu.memory_space<vmem>>, vector<256x256xbf16>
    %cst_202 = arith.constant dense<0.000000e+00> : vector<8x256xf32>
    %312 = tpu.matmul %310, %311, %cst_202 {dimension_numbers = #tpu.dot_dimension_numbers<[1], [0], [0], [1], [0, 0, 1, 1], [], []>} : vector<8x256xbf16>, vector<256x256xbf16>, vector<8x256xf32> -> vector<8x256xf32>
    %313 = arith.addf %309, %312 : vector<8x256xf32>
    %314 = math.tanh %313 : vector<8x256xf32>
    %c40_203 = arith.constant 40 : index
    %c0_204 = arith.constant 0 : index
    %315 = vector.load %arg23[%c40_203, %c0_204] : memref<96x512xf32, #tpu.memory_space<vmem>>, vector<8x256xf32>
    %c5_205 = arith.constant 5 : index
    %c0_206 = arith.constant 0 : index
    %316 = vector.load %arg8[%c5_205, %c0_206] : memref<12x512xf32, #tpu.memory_space<vmem>>, vector<1x256xf32>
    %317 = vector.broadcast %316 : vector<1x256xf32> to vector<8x256xf32>
    %318 = arith.addf %315, %317 : vector<8x256xf32>
    %319 = arith.truncf %314 : vector<8x256xf32> to vector<8x256xbf16>
    %c0_207 = arith.constant 0 : index
    %c0_208 = arith.constant 0 : index
    %320 = vector.load %arg9[%c0_207, %c0_208] : memref<256x256xbf16, #tpu.memory_space<vmem>>, vector<256x256xbf16>
    %cst_209 = arith.constant dense<0.000000e+00> : vector<8x256xf32>
    %321 = tpu.matmul %319, %320, %cst_209 {dimension_numbers = #tpu.dot_dimension_numbers<[1], [0], [0], [1], [0, 0, 1, 1], [], []>} : vector<8x256xbf16>, vector<256x256xbf16>, vector<8x256xf32> -> vector<8x256xf32>
    %322 = arith.addf %318, %321 : vector<8x256xf32>
    %323 = math.tanh %322 : vector<8x256xf32>
    %c48_210 = arith.constant 48 : index
    %c0_211 = arith.constant 0 : index
    %324 = vector.load %arg23[%c48_210, %c0_211] : memref<96x512xf32, #tpu.memory_space<vmem>>, vector<8x256xf32>
    %c6_212 = arith.constant 6 : index
    %c0_213 = arith.constant 0 : index
    %325 = vector.load %arg8[%c6_212, %c0_213] : memref<12x512xf32, #tpu.memory_space<vmem>>, vector<1x256xf32>
    %326 = vector.broadcast %325 : vector<1x256xf32> to vector<8x256xf32>
    %327 = arith.addf %324, %326 : vector<8x256xf32>
    %328 = arith.truncf %323 : vector<8x256xf32> to vector<8x256xbf16>
    %c0_214 = arith.constant 0 : index
    %c0_215 = arith.constant 0 : index
    %329 = vector.load %arg9[%c0_214, %c0_215] : memref<256x256xbf16, #tpu.memory_space<vmem>>, vector<256x256xbf16>
    %cst_216 = arith.constant dense<0.000000e+00> : vector<8x256xf32>
    %330 = tpu.matmul %328, %329, %cst_216 {dimension_numbers = #tpu.dot_dimension_numbers<[1], [0], [0], [1], [0, 0, 1, 1], [], []>} : vector<8x256xbf16>, vector<256x256xbf16>, vector<8x256xf32> -> vector<8x256xf32>
    %331 = arith.addf %327, %330 : vector<8x256xf32>
    %332 = math.tanh %331 : vector<8x256xf32>
    %c56_217 = arith.constant 56 : index
    %c0_218 = arith.constant 0 : index
    %333 = vector.load %arg23[%c56_217, %c0_218] : memref<96x512xf32, #tpu.memory_space<vmem>>, vector<8x256xf32>
    %c7_219 = arith.constant 7 : index
    %c0_220 = arith.constant 0 : index
    %334 = vector.load %arg8[%c7_219, %c0_220] : memref<12x512xf32, #tpu.memory_space<vmem>>, vector<1x256xf32>
    %335 = vector.broadcast %334 : vector<1x256xf32> to vector<8x256xf32>
    %336 = arith.addf %333, %335 : vector<8x256xf32>
    %337 = arith.truncf %332 : vector<8x256xf32> to vector<8x256xbf16>
    %c0_221 = arith.constant 0 : index
    %c0_222 = arith.constant 0 : index
    %338 = vector.load %arg9[%c0_221, %c0_222] : memref<256x256xbf16, #tpu.memory_space<vmem>>, vector<256x256xbf16>
    %cst_223 = arith.constant dense<0.000000e+00> : vector<8x256xf32>
    %339 = tpu.matmul %337, %338, %cst_223 {dimension_numbers = #tpu.dot_dimension_numbers<[1], [0], [0], [1], [0, 0, 1, 1], [], []>} : vector<8x256xbf16>, vector<256x256xbf16>, vector<8x256xf32> -> vector<8x256xf32>
    %340 = arith.addf %336, %339 : vector<8x256xf32>
    %341 = math.tanh %340 : vector<8x256xf32>
    %c64_224 = arith.constant 64 : index
    %c0_225 = arith.constant 0 : index
    %342 = vector.load %arg23[%c64_224, %c0_225] : memref<96x512xf32, #tpu.memory_space<vmem>>, vector<8x256xf32>
    %c8_226 = arith.constant 8 : index
    %c0_227 = arith.constant 0 : index
    %343 = vector.load %arg8[%c8_226, %c0_227] : memref<12x512xf32, #tpu.memory_space<vmem>>, vector<1x256xf32>
    %344 = vector.broadcast %343 : vector<1x256xf32> to vector<8x256xf32>
    %345 = arith.addf %342, %344 : vector<8x256xf32>
    %346 = arith.truncf %341 : vector<8x256xf32> to vector<8x256xbf16>
    %c0_228 = arith.constant 0 : index
    %c0_229 = arith.constant 0 : index
    %347 = vector.load %arg9[%c0_228, %c0_229] : memref<256x256xbf16, #tpu.memory_space<vmem>>, vector<256x256xbf16>
    %cst_230 = arith.constant dense<0.000000e+00> : vector<8x256xf32>
    %348 = tpu.matmul %346, %347, %cst_230 {dimension_numbers = #tpu.dot_dimension_numbers<[1], [0], [0], [1], [0, 0, 1, 1], [], []>} : vector<8x256xbf16>, vector<256x256xbf16>, vector<8x256xf32> -> vector<8x256xf32>
    %349 = arith.addf %345, %348 : vector<8x256xf32>
    %350 = math.tanh %349 : vector<8x256xf32>
    %c72_231 = arith.constant 72 : index
    %c0_232 = arith.constant 0 : index
    %351 = vector.load %arg23[%c72_231, %c0_232] : memref<96x512xf32, #tpu.memory_space<vmem>>, vector<8x256xf32>
    %c9_233 = arith.constant 9 : index
    %c0_234 = arith.constant 0 : index
    %352 = vector.load %arg8[%c9_233, %c0_234] : memref<12x512xf32, #tpu.memory_space<vmem>>, vector<1x256xf32>
    %353 = vector.broadcast %352 : vector<1x256xf32> to vector<8x256xf32>
    %354 = arith.addf %351, %353 : vector<8x256xf32>
    %355 = arith.truncf %350 : vector<8x256xf32> to vector<8x256xbf16>
    %c0_235 = arith.constant 0 : index
    %c0_236 = arith.constant 0 : index
    %356 = vector.load %arg9[%c0_235, %c0_236] : memref<256x256xbf16, #tpu.memory_space<vmem>>, vector<256x256xbf16>
    %cst_237 = arith.constant dense<0.000000e+00> : vector<8x256xf32>
    %357 = tpu.matmul %355, %356, %cst_237 {dimension_numbers = #tpu.dot_dimension_numbers<[1], [0], [0], [1], [0, 0, 1, 1], [], []>} : vector<8x256xbf16>, vector<256x256xbf16>, vector<8x256xf32> -> vector<8x256xf32>
    %358 = arith.addf %354, %357 : vector<8x256xf32>
    %359 = math.tanh %358 : vector<8x256xf32>
    %c80_238 = arith.constant 80 : index
    %c0_239 = arith.constant 0 : index
    %360 = vector.load %arg23[%c80_238, %c0_239] : memref<96x512xf32, #tpu.memory_space<vmem>>, vector<8x256xf32>
    %c10_240 = arith.constant 10 : index
    %c0_241 = arith.constant 0 : index
    %361 = vector.load %arg8[%c10_240, %c0_241] : memref<12x512xf32, #tpu.memory_space<vmem>>, vector<1x256xf32>
    %362 = vector.broadcast %361 : vector<1x256xf32> to vector<8x256xf32>
    %363 = arith.addf %360, %362 : vector<8x256xf32>
    %364 = arith.truncf %359 : vector<8x256xf32> to vector<8x256xbf16>
    %c0_242 = arith.constant 0 : index
    %c0_243 = arith.constant 0 : index
    %365 = vector.load %arg9[%c0_242, %c0_243] : memref<256x256xbf16, #tpu.memory_space<vmem>>, vector<256x256xbf16>
    %cst_244 = arith.constant dense<0.000000e+00> : vector<8x256xf32>
    %366 = tpu.matmul %364, %365, %cst_244 {dimension_numbers = #tpu.dot_dimension_numbers<[1], [0], [0], [1], [0, 0, 1, 1], [], []>} : vector<8x256xbf16>, vector<256x256xbf16>, vector<8x256xf32> -> vector<8x256xf32>
    %367 = arith.addf %363, %366 : vector<8x256xf32>
    %368 = math.tanh %367 : vector<8x256xf32>
    %c88_245 = arith.constant 88 : index
    %c0_246 = arith.constant 0 : index
    %369 = vector.load %arg23[%c88_245, %c0_246] : memref<96x512xf32, #tpu.memory_space<vmem>>, vector<8x256xf32>
    %c11_247 = arith.constant 11 : index
    %c0_248 = arith.constant 0 : index
    %370 = vector.load %arg8[%c11_247, %c0_248] : memref<12x512xf32, #tpu.memory_space<vmem>>, vector<1x256xf32>
    %371 = vector.broadcast %370 : vector<1x256xf32> to vector<8x256xf32>
    %372 = arith.addf %369, %371 : vector<8x256xf32>
    %373 = arith.truncf %368 : vector<8x256xf32> to vector<8x256xbf16>
    %c0_249 = arith.constant 0 : index
    %c0_250 = arith.constant 0 : index
    %374 = vector.load %arg9[%c0_249, %c0_250] : memref<256x256xbf16, #tpu.memory_space<vmem>>, vector<256x256xbf16>
    %cst_251 = arith.constant dense<0.000000e+00> : vector<8x256xf32>
    %375 = tpu.matmul %373, %374, %cst_251 {dimension_numbers = #tpu.dot_dimension_numbers<[1], [0], [0], [1], [0, 0, 1, 1], [], []>} : vector<8x256xbf16>, vector<256x256xbf16>, vector<8x256xf32> -> vector<8x256xf32>
    %376 = arith.addf %372, %375 : vector<8x256xf32>
    %377 = math.tanh %376 : vector<8x256xf32>
    %c88_252 = arith.constant 88 : index
    %c256 = arith.constant 256 : index
    %378 = vector.load %arg23[%c88_252, %c256] : memref<96x512xf32, #tpu.memory_space<vmem>>, vector<8x256xf32>
    %c11_253 = arith.constant 11 : index
    %c256_254 = arith.constant 256 : index
    %379 = vector.load %arg8[%c11_253, %c256_254] : memref<12x512xf32, #tpu.memory_space<vmem>>, vector<1x256xf32>
    %380 = vector.broadcast %379 : vector<1x256xf32> to vector<8x256xf32>
    %381 = arith.addf %378, %380 : vector<8x256xf32>
    %382 = math.tanh %381 : vector<8x256xf32>
    %383 = vector.extract_strided_slice %377 {offsets = [0, 0], sizes = [8, 128], strides = [1, 1]} : vector<8x256xf32> to vector<8x128xf32>
    %384 = vector.extract_strided_slice %377 {offsets = [0, 128], sizes = [8, 128], strides = [1, 1]} : vector<8x256xf32> to vector<8x128xf32>
    %385 = arith.addf %383, %384 : vector<8x128xf32>
    %386 = vector.extract_strided_slice %382 {offsets = [0, 0], sizes = [8, 128], strides = [1, 1]} : vector<8x256xf32> to vector<8x128xf32>
    %387 = vector.extract_strided_slice %382 {offsets = [0, 128], sizes = [8, 128], strides = [1, 1]} : vector<8x256xf32> to vector<8x128xf32>
    %388 = arith.addf %386, %387 : vector<8x128xf32>
    %389 = tpu.concatenate %385, %388 in 1 : vector<8x128xf32>, vector<8x128xf32> -> vector<8x256xf32>
    %cst_255 = arith.constant 0.000000e+00 : f32
    %390 = vector.broadcast %cst_255 : f32 to vector<8x128xf32>
    %c0_256 = arith.constant 0 : index
    %c0_257 = arith.constant 0 : index
    %391 = vector.load %arg24[%c0_256, %c0_257] : memref<40x256xf32, #tpu.memory_space<vmem>>, vector<8x128xf32>
    %392 = arith.truncf %390 : vector<8x128xf32> to vector<8x128xbf16>
    %c0_258 = arith.constant 0 : index
    %c0_259 = arith.constant 0 : index
    %393 = vector.load %arg12[%c0_258, %c0_259] : memref<128x128xbf16, #tpu.memory_space<vmem>>, vector<128x128xbf16>
    %cst_260 = arith.constant dense<0.000000e+00> : vector<8x128xf32>
    %394 = tpu.matmul %392, %393, %cst_260 {dimension_numbers = #tpu.dot_dimension_numbers<[1], [0], [0], [1], [0, 0, 1, 1], [], []>} : vector<8x128xbf16>, vector<128x128xbf16>, vector<8x128xf32> -> vector<8x128xf32>
    %395 = arith.addf %391, %394 : vector<8x128xf32>
    %396 = math.tanh %395 : vector<8x128xf32>
    %c8_261 = arith.constant 8 : index
    %c0_262 = arith.constant 0 : index
    %397 = vector.load %arg24[%c8_261, %c0_262] : memref<40x256xf32, #tpu.memory_space<vmem>>, vector<8x128xf32>
    %398 = arith.truncf %396 : vector<8x128xf32> to vector<8x128xbf16>
    %c0_263 = arith.constant 0 : index
    %c0_264 = arith.constant 0 : index
    %399 = vector.load %arg12[%c0_263, %c0_264] : memref<128x128xbf16, #tpu.memory_space<vmem>>, vector<128x128xbf16>
    %cst_265 = arith.constant dense<0.000000e+00> : vector<8x128xf32>
    %400 = tpu.matmul %398, %399, %cst_265 {dimension_numbers = #tpu.dot_dimension_numbers<[1], [0], [0], [1], [0, 0, 1, 1], [], []>} : vector<8x128xbf16>, vector<128x128xbf16>, vector<8x128xf32> -> vector<8x128xf32>
    %401 = arith.addf %397, %400 : vector<8x128xf32>
    %402 = math.tanh %401 : vector<8x128xf32>
    %c16_266 = arith.constant 16 : index
    %c0_267 = arith.constant 0 : index
    %403 = vector.load %arg24[%c16_266, %c0_267] : memref<40x256xf32, #tpu.memory_space<vmem>>, vector<8x128xf32>
    %404 = arith.truncf %402 : vector<8x128xf32> to vector<8x128xbf16>
    %c0_268 = arith.constant 0 : index
    %c0_269 = arith.constant 0 : index
    %405 = vector.load %arg12[%c0_268, %c0_269] : memref<128x128xbf16, #tpu.memory_space<vmem>>, vector<128x128xbf16>
    %cst_270 = arith.constant dense<0.000000e+00> : vector<8x128xf32>
    %406 = tpu.matmul %404, %405, %cst_270 {dimension_numbers = #tpu.dot_dimension_numbers<[1], [0], [0], [1], [0, 0, 1, 1], [], []>} : vector<8x128xbf16>, vector<128x128xbf16>, vector<8x128xf32> -> vector<8x128xf32>
    %407 = arith.addf %403, %406 : vector<8x128xf32>
    %408 = math.tanh %407 : vector<8x128xf32>
    %c24_271 = arith.constant 24 : index
    %c0_272 = arith.constant 0 : index
    %409 = vector.load %arg24[%c24_271, %c0_272] : memref<40x256xf32, #tpu.memory_space<vmem>>, vector<8x128xf32>
    %410 = arith.truncf %408 : vector<8x128xf32> to vector<8x128xbf16>
    %c0_273 = arith.constant 0 : index
    %c0_274 = arith.constant 0 : index
    %411 = vector.load %arg12[%c0_273, %c0_274] : memref<128x128xbf16, #tpu.memory_space<vmem>>, vector<128x128xbf16>
    %cst_275 = arith.constant dense<0.000000e+00> : vector<8x128xf32>
    %412 = tpu.matmul %410, %411, %cst_275 {dimension_numbers = #tpu.dot_dimension_numbers<[1], [0], [0], [1], [0, 0, 1, 1], [], []>} : vector<8x128xbf16>, vector<128x128xbf16>, vector<8x128xf32> -> vector<8x128xf32>
    %413 = arith.addf %409, %412 : vector<8x128xf32>
    %414 = math.tanh %413 : vector<8x128xf32>
    %c32_276 = arith.constant 32 : index
    %c0_277 = arith.constant 0 : index
    %415 = vector.load %arg24[%c32_276, %c0_277] : memref<40x256xf32, #tpu.memory_space<vmem>>, vector<8x128xf32>
    %416 = arith.truncf %414 : vector<8x128xf32> to vector<8x128xbf16>
    %c0_278 = arith.constant 0 : index
    %c0_279 = arith.constant 0 : index
    %417 = vector.load %arg12[%c0_278, %c0_279] : memref<128x128xbf16, #tpu.memory_space<vmem>>, vector<128x128xbf16>
    %cst_280 = arith.constant dense<0.000000e+00> : vector<8x128xf32>
    %418 = tpu.matmul %416, %417, %cst_280 {dimension_numbers = #tpu.dot_dimension_numbers<[1], [0], [0], [1], [0, 0, 1, 1], [], []>} : vector<8x128xbf16>, vector<128x128xbf16>, vector<8x128xf32> -> vector<8x128xf32>
    %419 = arith.addf %415, %418 : vector<8x128xf32>
    %420 = math.tanh %419 : vector<8x128xf32>
    %c32_281 = arith.constant 32 : index
    %c128_282 = arith.constant 128 : index
    %421 = vector.load %arg24[%c32_281, %c128_282] : memref<40x256xf32, #tpu.memory_space<vmem>>, vector<8x128xf32>
    %422 = math.tanh %421 : vector<8x128xf32>
    %423 = tpu.concatenate %420, %422 in 1 : vector<8x128xf32>, vector<8x128xf32> -> vector<8x256xf32>
    %cst_283 = arith.constant 0.000000e+00 : f32
    %424 = vector.broadcast %cst_283 : f32 to vector<8x128xf32>
    %c0_284 = arith.constant 0 : index
    %c0_285 = arith.constant 0 : index
    %425 = vector.load %arg25[%c0_284, %c0_285] : memref<160x256xf32, #tpu.memory_space<vmem>>, vector<8x128xf32>
    %426 = arith.truncf %424 : vector<8x128xf32> to vector<8x128xbf16>
    %c0_286 = arith.constant 0 : index
    %c0_287 = arith.constant 0 : index
    %427 = vector.load %arg15[%c0_286, %c0_287] : memref<128x128xbf16, #tpu.memory_space<vmem>>, vector<128x128xbf16>
    %cst_288 = arith.constant dense<0.000000e+00> : vector<8x128xf32>
    %428 = tpu.matmul %426, %427, %cst_288 {dimension_numbers = #tpu.dot_dimension_numbers<[1], [0], [0], [1], [0, 0, 1, 1], [], []>} : vector<8x128xbf16>, vector<128x128xbf16>, vector<8x128xf32> -> vector<8x128xf32>
    %429 = arith.addf %425, %428 : vector<8x128xf32>
    %430 = math.tanh %429 : vector<8x128xf32>
    %c8_289 = arith.constant 8 : index
    %c0_290 = arith.constant 0 : index
    %431 = vector.load %arg25[%c8_289, %c0_290] : memref<160x256xf32, #tpu.memory_space<vmem>>, vector<8x128xf32>
    %432 = arith.truncf %430 : vector<8x128xf32> to vector<8x128xbf16>
    %c0_291 = arith.constant 0 : index
    %c0_292 = arith.constant 0 : index
    %433 = vector.load %arg15[%c0_291, %c0_292] : memref<128x128xbf16, #tpu.memory_space<vmem>>, vector<128x128xbf16>
    %cst_293 = arith.constant dense<0.000000e+00> : vector<8x128xf32>
    %434 = tpu.matmul %432, %433, %cst_293 {dimension_numbers = #tpu.dot_dimension_numbers<[1], [0], [0], [1], [0, 0, 1, 1], [], []>} : vector<8x128xbf16>, vector<128x128xbf16>, vector<8x128xf32> -> vector<8x128xf32>
    %435 = arith.addf %431, %434 : vector<8x128xf32>
    %436 = math.tanh %435 : vector<8x128xf32>
    %c16_294 = arith.constant 16 : index
    %c0_295 = arith.constant 0 : index
    %437 = vector.load %arg25[%c16_294, %c0_295] : memref<160x256xf32, #tpu.memory_space<vmem>>, vector<8x128xf32>
    %438 = arith.truncf %436 : vector<8x128xf32> to vector<8x128xbf16>
    %c0_296 = arith.constant 0 : index
    %c0_297 = arith.constant 0 : index
    %439 = vector.load %arg15[%c0_296, %c0_297] : memref<128x128xbf16, #tpu.memory_space<vmem>>, vector<128x128xbf16>
    %cst_298 = arith.constant dense<0.000000e+00> : vector<8x128xf32>
    %440 = tpu.matmul %438, %439, %cst_298 {dimension_numbers = #tpu.dot_dimension_numbers<[1], [0], [0], [1], [0, 0, 1, 1], [], []>} : vector<8x128xbf16>, vector<128x128xbf16>, vector<8x128xf32> -> vector<8x128xf32>
    %441 = arith.addf %437, %440 : vector<8x128xf32>
    %442 = math.tanh %441 : vector<8x128xf32>
    %c24_299 = arith.constant 24 : index
    %c0_300 = arith.constant 0 : index
    %443 = vector.load %arg25[%c24_299, %c0_300] : memref<160x256xf32, #tpu.memory_space<vmem>>, vector<8x128xf32>
    %444 = arith.truncf %442 : vector<8x128xf32> to vector<8x128xbf16>
    %c0_301 = arith.constant 0 : index
    %c0_302 = arith.constant 0 : index
    %445 = vector.load %arg15[%c0_301, %c0_302] : memref<128x128xbf16, #tpu.memory_space<vmem>>, vector<128x128xbf16>
    %cst_303 = arith.constant dense<0.000000e+00> : vector<8x128xf32>
    %446 = tpu.matmul %444, %445, %cst_303 {dimension_numbers = #tpu.dot_dimension_numbers<[1], [0], [0], [1], [0, 0, 1, 1], [], []>} : vector<8x128xbf16>, vector<128x128xbf16>, vector<8x128xf32> -> vector<8x128xf32>
    %447 = arith.addf %443, %446 : vector<8x128xf32>
    %448 = math.tanh %447 : vector<8x128xf32>
    %c32_304 = arith.constant 32 : index
    %c0_305 = arith.constant 0 : index
    %449 = vector.load %arg25[%c32_304, %c0_305] : memref<160x256xf32, #tpu.memory_space<vmem>>, vector<8x128xf32>
    %450 = arith.truncf %448 : vector<8x128xf32> to vector<8x128xbf16>
    %c0_306 = arith.constant 0 : index
    %c0_307 = arith.constant 0 : index
    %451 = vector.load %arg15[%c0_306, %c0_307] : memref<128x128xbf16, #tpu.memory_space<vmem>>, vector<128x128xbf16>
    %cst_308 = arith.constant dense<0.000000e+00> : vector<8x128xf32>
    %452 = tpu.matmul %450, %451, %cst_308 {dimension_numbers = #tpu.dot_dimension_numbers<[1], [0], [0], [1], [0, 0, 1, 1], [], []>} : vector<8x128xbf16>, vector<128x128xbf16>, vector<8x128xf32> -> vector<8x128xf32>
    %453 = arith.addf %449, %452 : vector<8x128xf32>
    %454 = math.tanh %453 : vector<8x128xf32>
    %c40_309 = arith.constant 40 : index
    %c0_310 = arith.constant 0 : index
    %455 = vector.load %arg25[%c40_309, %c0_310] : memref<160x256xf32, #tpu.memory_space<vmem>>, vector<8x128xf32>
    %456 = arith.truncf %454 : vector<8x128xf32> to vector<8x128xbf16>
    %c0_311 = arith.constant 0 : index
    %c0_312 = arith.constant 0 : index
    %457 = vector.load %arg15[%c0_311, %c0_312] : memref<128x128xbf16, #tpu.memory_space<vmem>>, vector<128x128xbf16>
    %cst_313 = arith.constant dense<0.000000e+00> : vector<8x128xf32>
    %458 = tpu.matmul %456, %457, %cst_313 {dimension_numbers = #tpu.dot_dimension_numbers<[1], [0], [0], [1], [0, 0, 1, 1], [], []>} : vector<8x128xbf16>, vector<128x128xbf16>, vector<8x128xf32> -> vector<8x128xf32>
    %459 = arith.addf %455, %458 : vector<8x128xf32>
    %460 = math.tanh %459 : vector<8x128xf32>
    %c48_314 = arith.constant 48 : index
    %c0_315 = arith.constant 0 : index
    %461 = vector.load %arg25[%c48_314, %c0_315] : memref<160x256xf32, #tpu.memory_space<vmem>>, vector<8x128xf32>
    %462 = arith.truncf %460 : vector<8x128xf32> to vector<8x128xbf16>
    %c0_316 = arith.constant 0 : index
    %c0_317 = arith.constant 0 : index
    %463 = vector.load %arg15[%c0_316, %c0_317] : memref<128x128xbf16, #tpu.memory_space<vmem>>, vector<128x128xbf16>
    %cst_318 = arith.constant dense<0.000000e+00> : vector<8x128xf32>
    %464 = tpu.matmul %462, %463, %cst_318 {dimension_numbers = #tpu.dot_dimension_numbers<[1], [0], [0], [1], [0, 0, 1, 1], [], []>} : vector<8x128xbf16>, vector<128x128xbf16>, vector<8x128xf32> -> vector<8x128xf32>
    %465 = arith.addf %461, %464 : vector<8x128xf32>
    %466 = math.tanh %465 : vector<8x128xf32>
    %c56_319 = arith.constant 56 : index
    %c0_320 = arith.constant 0 : index
    %467 = vector.load %arg25[%c56_319, %c0_320] : memref<160x256xf32, #tpu.memory_space<vmem>>, vector<8x128xf32>
    %468 = arith.truncf %466 : vector<8x128xf32> to vector<8x128xbf16>
    %c0_321 = arith.constant 0 : index
    %c0_322 = arith.constant 0 : index
    %469 = vector.load %arg15[%c0_321, %c0_322] : memref<128x128xbf16, #tpu.memory_space<vmem>>, vector<128x128xbf16>
    %cst_323 = arith.constant dense<0.000000e+00> : vector<8x128xf32>
    %470 = tpu.matmul %468, %469, %cst_323 {dimension_numbers = #tpu.dot_dimension_numbers<[1], [0], [0], [1], [0, 0, 1, 1], [], []>} : vector<8x128xbf16>, vector<128x128xbf16>, vector<8x128xf32> -> vector<8x128xf32>
    %471 = arith.addf %467, %470 : vector<8x128xf32>
    %472 = math.tanh %471 : vector<8x128xf32>
    %c64_324 = arith.constant 64 : index
    %c0_325 = arith.constant 0 : index
    %473 = vector.load %arg25[%c64_324, %c0_325] : memref<160x256xf32, #tpu.memory_space<vmem>>, vector<8x128xf32>
    %474 = arith.truncf %472 : vector<8x128xf32> to vector<8x128xbf16>
    %c0_326 = arith.constant 0 : index
    %c0_327 = arith.constant 0 : index
    %475 = vector.load %arg15[%c0_326, %c0_327] : memref<128x128xbf16, #tpu.memory_space<vmem>>, vector<128x128xbf16>
    %cst_328 = arith.constant dense<0.000000e+00> : vector<8x128xf32>
    %476 = tpu.matmul %474, %475, %cst_328 {dimension_numbers = #tpu.dot_dimension_numbers<[1], [0], [0], [1], [0, 0, 1, 1], [], []>} : vector<8x128xbf16>, vector<128x128xbf16>, vector<8x128xf32> -> vector<8x128xf32>
    %477 = arith.addf %473, %476 : vector<8x128xf32>
    %478 = math.tanh %477 : vector<8x128xf32>
    %c72_329 = arith.constant 72 : index
    %c0_330 = arith.constant 0 : index
    %479 = vector.load %arg25[%c72_329, %c0_330] : memref<160x256xf32, #tpu.memory_space<vmem>>, vector<8x128xf32>
    %480 = arith.truncf %478 : vector<8x128xf32> to vector<8x128xbf16>
    %c0_331 = arith.constant 0 : index
    %c0_332 = arith.constant 0 : index
    %481 = vector.load %arg15[%c0_331, %c0_332] : memref<128x128xbf16, #tpu.memory_space<vmem>>, vector<128x128xbf16>
    %cst_333 = arith.constant dense<0.000000e+00> : vector<8x128xf32>
    %482 = tpu.matmul %480, %481, %cst_333 {dimension_numbers = #tpu.dot_dimension_numbers<[1], [0], [0], [1], [0, 0, 1, 1], [], []>} : vector<8x128xbf16>, vector<128x128xbf16>, vector<8x128xf32> -> vector<8x128xf32>
    %483 = arith.addf %479, %482 : vector<8x128xf32>
    %484 = math.tanh %483 : vector<8x128xf32>
    %c80_334 = arith.constant 80 : index
    %c0_335 = arith.constant 0 : index
    %485 = vector.load %arg25[%c80_334, %c0_335] : memref<160x256xf32, #tpu.memory_space<vmem>>, vector<8x128xf32>
    %486 = arith.truncf %484 : vector<8x128xf32> to vector<8x128xbf16>
    %c0_336 = arith.constant 0 : index
    %c0_337 = arith.constant 0 : index
    %487 = vector.load %arg15[%c0_336, %c0_337] : memref<128x128xbf16, #tpu.memory_space<vmem>>, vector<128x128xbf16>
    %cst_338 = arith.constant dense<0.000000e+00> : vector<8x128xf32>
    %488 = tpu.matmul %486, %487, %cst_338 {dimension_numbers = #tpu.dot_dimension_numbers<[1], [0], [0], [1], [0, 0, 1, 1], [], []>} : vector<8x128xbf16>, vector<128x128xbf16>, vector<8x128xf32> -> vector<8x128xf32>
    %489 = arith.addf %485, %488 : vector<8x128xf32>
    %490 = math.tanh %489 : vector<8x128xf32>
    %c88_339 = arith.constant 88 : index
    %c0_340 = arith.constant 0 : index
    %491 = vector.load %arg25[%c88_339, %c0_340] : memref<160x256xf32, #tpu.memory_space<vmem>>, vector<8x128xf32>
    %492 = arith.truncf %490 : vector<8x128xf32> to vector<8x128xbf16>
    %c0_341 = arith.constant 0 : index
    %c0_342 = arith.constant 0 : index
    %493 = vector.load %arg15[%c0_341, %c0_342] : memref<128x128xbf16, #tpu.memory_space<vmem>>, vector<128x128xbf16>
    %cst_343 = arith.constant dense<0.000000e+00> : vector<8x128xf32>
    %494 = tpu.matmul %492, %493, %cst_343 {dimension_numbers = #tpu.dot_dimension_numbers<[1], [0], [0], [1], [0, 0, 1, 1], [], []>} : vector<8x128xbf16>, vector<128x128xbf16>, vector<8x128xf32> -> vector<8x128xf32>
    %495 = arith.addf %491, %494 : vector<8x128xf32>
    %496 = math.tanh %495 : vector<8x128xf32>
    %c96 = arith.constant 96 : index
    %c0_344 = arith.constant 0 : index
    %497 = vector.load %arg25[%c96, %c0_344] : memref<160x256xf32, #tpu.memory_space<vmem>>, vector<8x128xf32>
    %498 = arith.truncf %496 : vector<8x128xf32> to vector<8x128xbf16>
    %c0_345 = arith.constant 0 : index
    %c0_346 = arith.constant 0 : index
    %499 = vector.load %arg15[%c0_345, %c0_346] : memref<128x128xbf16, #tpu.memory_space<vmem>>, vector<128x128xbf16>
    %cst_347 = arith.constant dense<0.000000e+00> : vector<8x128xf32>
    %500 = tpu.matmul %498, %499, %cst_347 {dimension_numbers = #tpu.dot_dimension_numbers<[1], [0], [0], [1], [0, 0, 1, 1], [], []>} : vector<8x128xbf16>, vector<128x128xbf16>, vector<8x128xf32> -> vector<8x128xf32>
    %501 = arith.addf %497, %500 : vector<8x128xf32>
    %502 = math.tanh %501 : vector<8x128xf32>
    %c104 = arith.constant 104 : index
    %c0_348 = arith.constant 0 : index
    %503 = vector.load %arg25[%c104, %c0_348] : memref<160x256xf32, #tpu.memory_space<vmem>>, vector<8x128xf32>
    %504 = arith.truncf %502 : vector<8x128xf32> to vector<8x128xbf16>
    %c0_349 = arith.constant 0 : index
    %c0_350 = arith.constant 0 : index
    %505 = vector.load %arg15[%c0_349, %c0_350] : memref<128x128xbf16, #tpu.memory_space<vmem>>, vector<128x128xbf16>
    %cst_351 = arith.constant dense<0.000000e+00> : vector<8x128xf32>
    %506 = tpu.matmul %504, %505, %cst_351 {dimension_numbers = #tpu.dot_dimension_numbers<[1], [0], [0], [1], [0, 0, 1, 1], [], []>} : vector<8x128xbf16>, vector<128x128xbf16>, vector<8x128xf32> -> vector<8x128xf32>
    %507 = arith.addf %503, %506 : vector<8x128xf32>
    %508 = math.tanh %507 : vector<8x128xf32>
    %c112 = arith.constant 112 : index
    %c0_352 = arith.constant 0 : index
    %509 = vector.load %arg25[%c112, %c0_352] : memref<160x256xf32, #tpu.memory_space<vmem>>, vector<8x128xf32>
    %510 = arith.truncf %508 : vector<8x128xf32> to vector<8x128xbf16>
    %c0_353 = arith.constant 0 : index
    %c0_354 = arith.constant 0 : index
    %511 = vector.load %arg15[%c0_353, %c0_354] : memref<128x128xbf16, #tpu.memory_space<vmem>>, vector<128x128xbf16>
    %cst_355 = arith.constant dense<0.000000e+00> : vector<8x128xf32>
    %512 = tpu.matmul %510, %511, %cst_355 {dimension_numbers = #tpu.dot_dimension_numbers<[1], [0], [0], [1], [0, 0, 1, 1], [], []>} : vector<8x128xbf16>, vector<128x128xbf16>, vector<8x128xf32> -> vector<8x128xf32>
    %513 = arith.addf %509, %512 : vector<8x128xf32>
    %514 = math.tanh %513 : vector<8x128xf32>
    %c120 = arith.constant 120 : index
    %c0_356 = arith.constant 0 : index
    %515 = vector.load %arg25[%c120, %c0_356] : memref<160x256xf32, #tpu.memory_space<vmem>>, vector<8x128xf32>
    %516 = arith.truncf %514 : vector<8x128xf32> to vector<8x128xbf16>
    %c0_357 = arith.constant 0 : index
    %c0_358 = arith.constant 0 : index
    %517 = vector.load %arg15[%c0_357, %c0_358] : memref<128x128xbf16, #tpu.memory_space<vmem>>, vector<128x128xbf16>
    %cst_359 = arith.constant dense<0.000000e+00> : vector<8x128xf32>
    %518 = tpu.matmul %516, %517, %cst_359 {dimension_numbers = #tpu.dot_dimension_numbers<[1], [0], [0], [1], [0, 0, 1, 1], [], []>} : vector<8x128xbf16>, vector<128x128xbf16>, vector<8x128xf32> -> vector<8x128xf32>
    %519 = arith.addf %515, %518 : vector<8x128xf32>
    %520 = math.tanh %519 : vector<8x128xf32>
    %c128_360 = arith.constant 128 : index
    %c0_361 = arith.constant 0 : index
    %521 = vector.load %arg25[%c128_360, %c0_361] : memref<160x256xf32, #tpu.memory_space<vmem>>, vector<8x128xf32>
    %522 = arith.truncf %520 : vector<8x128xf32> to vector<8x128xbf16>
    %c0_362 = arith.constant 0 : index
    %c0_363 = arith.constant 0 : index
    %523 = vector.load %arg15[%c0_362, %c0_363] : memref<128x128xbf16, #tpu.memory_space<vmem>>, vector<128x128xbf16>
    %cst_364 = arith.constant dense<0.000000e+00> : vector<8x128xf32>
    %524 = tpu.matmul %522, %523, %cst_364 {dimension_numbers = #tpu.dot_dimension_numbers<[1], [0], [0], [1], [0, 0, 1, 1], [], []>} : vector<8x128xbf16>, vector<128x128xbf16>, vector<8x128xf32> -> vector<8x128xf32>
    %525 = arith.addf %521, %524 : vector<8x128xf32>
    %526 = math.tanh %525 : vector<8x128xf32>
    %c136 = arith.constant 136 : index
    %c0_365 = arith.constant 0 : index
    %527 = vector.load %arg25[%c136, %c0_365] : memref<160x256xf32, #tpu.memory_space<vmem>>, vector<8x128xf32>
    %528 = arith.truncf %526 : vector<8x128xf32> to vector<8x128xbf16>
    %c0_366 = arith.constant 0 : index
    %c0_367 = arith.constant 0 : index
    %529 = vector.load %arg15[%c0_366, %c0_367] : memref<128x128xbf16, #tpu.memory_space<vmem>>, vector<128x128xbf16>
    %cst_368 = arith.constant dense<0.000000e+00> : vector<8x128xf32>
    %530 = tpu.matmul %528, %529, %cst_368 {dimension_numbers = #tpu.dot_dimension_numbers<[1], [0], [0], [1], [0, 0, 1, 1], [], []>} : vector<8x128xbf16>, vector<128x128xbf16>, vector<8x128xf32> -> vector<8x128xf32>
    %531 = arith.addf %527, %530 : vector<8x128xf32>
    %532 = math.tanh %531 : vector<8x128xf32>
    %c144 = arith.constant 144 : index
    %c0_369 = arith.constant 0 : index
    %533 = vector.load %arg25[%c144, %c0_369] : memref<160x256xf32, #tpu.memory_space<vmem>>, vector<8x128xf32>
    %534 = arith.truncf %532 : vector<8x128xf32> to vector<8x128xbf16>
    %c0_370 = arith.constant 0 : index
    %c0_371 = arith.constant 0 : index
    %535 = vector.load %arg15[%c0_370, %c0_371] : memref<128x128xbf16, #tpu.memory_space<vmem>>, vector<128x128xbf16>
    %cst_372 = arith.constant dense<0.000000e+00> : vector<8x128xf32>
    %536 = tpu.matmul %534, %535, %cst_372 {dimension_numbers = #tpu.dot_dimension_numbers<[1], [0], [0], [1], [0, 0, 1, 1], [], []>} : vector<8x128xbf16>, vector<128x128xbf16>, vector<8x128xf32> -> vector<8x128xf32>
    %537 = arith.addf %533, %536 : vector<8x128xf32>
    %538 = math.tanh %537 : vector<8x128xf32>
    %c152 = arith.constant 152 : index
    %c0_373 = arith.constant 0 : index
    %539 = vector.load %arg25[%c152, %c0_373] : memref<160x256xf32, #tpu.memory_space<vmem>>, vector<8x128xf32>
    %540 = arith.truncf %538 : vector<8x128xf32> to vector<8x128xbf16>
    %c0_374 = arith.constant 0 : index
    %c0_375 = arith.constant 0 : index
    %541 = vector.load %arg15[%c0_374, %c0_375] : memref<128x128xbf16, #tpu.memory_space<vmem>>, vector<128x128xbf16>
    %cst_376 = arith.constant dense<0.000000e+00> : vector<8x128xf32>
    %542 = tpu.matmul %540, %541, %cst_376 {dimension_numbers = #tpu.dot_dimension_numbers<[1], [0], [0], [1], [0, 0, 1, 1], [], []>} : vector<8x128xbf16>, vector<128x128xbf16>, vector<8x128xf32> -> vector<8x128xf32>
    %543 = arith.addf %539, %542 : vector<8x128xf32>
    %544 = math.tanh %543 : vector<8x128xf32>
    %c152_377 = arith.constant 152 : index
    %c128_378 = arith.constant 128 : index
    %545 = vector.load %arg25[%c152_377, %c128_378] : memref<160x256xf32, #tpu.memory_space<vmem>>, vector<8x128xf32>
    %546 = math.tanh %545 : vector<8x128xf32>
    %547 = tpu.concatenate %544, %546 in 1 : vector<8x128xf32>, vector<8x128xf32> -> vector<8x256xf32>
    %548 = arith.truncf %389 : vector<8x256xf32> to vector<8x256xbf16>
    %c0_379 = arith.constant 0 : index
    %c0_380 = arith.constant 0 : index
    %549 = vector.load %arg16[%c0_379, %c0_380] : memref<768x128xbf16, #tpu.memory_space<vmem>>, vector<256x128xbf16>
    %cst_381 = arith.constant dense<0.000000e+00> : vector<8x128xf32>
    %550 = tpu.matmul %548, %549, %cst_381 {dimension_numbers = #tpu.dot_dimension_numbers<[1], [0], [0], [1], [0, 0, 1, 1], [], []>} : vector<8x256xbf16>, vector<256x128xbf16>, vector<8x128xf32> -> vector<8x128xf32>
    %551 = arith.truncf %423 : vector<8x256xf32> to vector<8x256xbf16>
    %c256_382 = arith.constant 256 : index
    %c0_383 = arith.constant 0 : index
    %552 = vector.load %arg16[%c256_382, %c0_383] : memref<768x128xbf16, #tpu.memory_space<vmem>>, vector<256x128xbf16>
    %cst_384 = arith.constant dense<0.000000e+00> : vector<8x128xf32>
    %553 = tpu.matmul %551, %552, %cst_384 {dimension_numbers = #tpu.dot_dimension_numbers<[1], [0], [0], [1], [0, 0, 1, 1], [], []>} : vector<8x256xbf16>, vector<256x128xbf16>, vector<8x128xf32> -> vector<8x128xf32>
    %554 = arith.addf %550, %553 : vector<8x128xf32>
    %555 = arith.truncf %547 : vector<8x256xf32> to vector<8x256xbf16>
    %c512 = arith.constant 512 : index
    %c0_385 = arith.constant 0 : index
    %556 = vector.load %arg16[%c512, %c0_385] : memref<768x128xbf16, #tpu.memory_space<vmem>>, vector<256x128xbf16>
    %cst_386 = arith.constant dense<0.000000e+00> : vector<8x128xf32>
    %557 = tpu.matmul %555, %556, %cst_386 {dimension_numbers = #tpu.dot_dimension_numbers<[1], [0], [0], [1], [0, 0, 1, 1], [], []>} : vector<8x256xbf16>, vector<256x128xbf16>, vector<8x128xf32> -> vector<8x128xf32>
    %558 = arith.addf %554, %557 : vector<8x128xf32>
    %c0_387 = arith.constant 0 : index
    %c0_388 = arith.constant 0 : index
    %559 = vector.load %arg17[%c0_387, %c0_388] : memref<1x128xf32, #tpu.memory_space<vmem>>, vector<1x128xf32>
    %560 = vector.broadcast %559 : vector<1x128xf32> to vector<8x128xf32>
    %561 = arith.addf %558, %560 : vector<8x128xf32>
    %cst_389 = arith.constant 0.000000e+00 : f32
    %562 = vector.broadcast %cst_389 : f32 to vector<8x128xf32>
    %563 = arith.maximumf %561, %562 : vector<8x128xf32>
    %564 = arith.truncf %563 : vector<8x128xf32> to vector<8x128xbf16>
    %c0_390 = arith.constant 0 : index
    %c0_391 = arith.constant 0 : index
    %565 = vector.load %arg18[%c0_390, %c0_391] : memref<128x128xbf16, #tpu.memory_space<vmem>>, vector<128x128xbf16>
    %cst_392 = arith.constant dense<0.000000e+00> : vector<8x128xf32>
    %566 = tpu.matmul %564, %565, %cst_392 {dimension_numbers = #tpu.dot_dimension_numbers<[1], [0], [0], [1], [0, 0, 1, 1], [], []>} : vector<8x128xbf16>, vector<128x128xbf16>, vector<8x128xf32> -> vector<8x128xf32>
    %c0_393 = arith.constant 0 : index
    %c0_394 = arith.constant 0 : index
    %567 = vector.load %arg19[%c0_393, %c0_394] : memref<1x128xf32, #tpu.memory_space<vmem>>, vector<1x128xf32>
    %568 = vector.broadcast %567 : vector<1x128xf32> to vector<8x128xf32>
    %569 = arith.addf %566, %568 : vector<8x128xf32>
    %cst_395 = arith.constant dense<0xFF800000> : vector<8xf32>
    %570 = vector.multi_reduction <maximumf>, %569, %cst_395 [1] : vector<8x128xf32> to vector<8xf32>
    %571 = vector.shape_cast %570 : vector<8xf32> to vector<8x1xf32>
    %572 = vector.broadcast %571 : vector<8x1xf32> to vector<8x128xf32>
    %573 = arith.subf %569, %572 : vector<8x128xf32>
    %574 = math.exp %573 : vector<8x128xf32>
    %cst_396 = arith.constant dense<0.000000e+00> : vector<8xf32>
    %575 = vector.multi_reduction <add>, %574, %cst_396 [1] : vector<8x128xf32> to vector<8xf32>
    %576 = vector.shape_cast %575 : vector<8xf32> to vector<8x1xf32>
    %577 = vector.broadcast %576 : vector<8x1xf32> to vector<8x128xf32>
    %578 = arith.divf %574, %577 : vector<8x128xf32>
    %579 = vector.extract_strided_slice %578 {offsets = [0, 0], sizes = [8, 2], strides = [1, 1]} : vector<8x128xf32> to vector<8x2xf32>
    %c0_397 = arith.constant 0 : index
    %c0_398 = arith.constant 0 : index
    %580 = vector.load %arg20[%c0_397, %c0_398] : memref<8x2xf32, #tpu.memory_space<vmem>>, vector<8x2xf32>
    tpu.vector_store %arg20[%c0_397, %c0_398], %579 {strides = array<i32>} : memref<8x2xf32, #tpu.memory_space<vmem>>, vector<8x2xf32>,
    return
  }
}

</mosaic_0001>

<llo_original>
// kernel: tot_rnn_forward.1
$region0: #{tot_rnn_forward.1}
  #allocation0 [shape = 'u32[]', space=smem, size = 0x4, offset = 0x4, fixed_abs, tag = 'smem constant byte address 0x4 - core index']
  #allocation1 [shape = 'u32[144,128]{1,0:T(1,128)}', space=vmem, size = 0x12000, scoped, tag = 'internal scratch']
  #allocation2 [shape = 'f32[96,256]{1,0:T(8,128)}', space=vmem, size = 0x18000, scoped, tag = 'scratch operand']
  #allocation3 [shape = 'f32[96,256]{1,0:T(8,128)}', space=vmem, size = 0x18000, scoped, tag = 'scratch operand']
  #allocation4 [shape = 'f32[96,512]{1,0:T(8,128)}', space=vmem, size = 0x30000, scoped, tag = 'scratch operand']
  #allocation5 [shape = 'f32[40,256]{1,0:T(8,128)}', space=vmem, size = 0xa000, scoped, tag = 'scratch operand']
  #allocation6 [shape = 'f32[160,256]{1,0:T(8,128)}', space=vmem, size = 0x28000, scoped, tag = 'scratch operand']
  %s0 = inlined_call_operand.vmem [shape: f32[12], index: 0, kind: input, shape index: {}]
  %s1 = inlined_call_operand.vmem [shape: f32[96,200], index: 1, kind: input, shape index: {}]
  %s2 = inlined_call_operand.vmem [shape: f32[40,600], index: 2, kind: input, shape index: {}]
  %s3 = inlined_call_operand.vmem [shape: f32[160,150], index: 3, kind: input, shape index: {}]
  %s4 = inlined_call_operand.vmem [shape: bf16[200,256], index: 4, kind: input, shape index: {}]
  %s5 = inlined_call_operand.vmem [shape: f32[1,256], index: 5, kind: input, shape index: {}]
  %s6 = inlined_call_operand.vmem [shape: bf16[256,256], index: 6, kind: input, shape index: {}]
  %s7 = inlined_call_operand.vmem [shape: bf16[256,512], index: 7, kind: input, shape index: {}]
  %s8 = inlined_call_operand.vmem [shape: f32[12,512], index: 8, kind: input, shape index: {}]
  %s9 = inlined_call_operand.vmem [shape: bf16[256,256], index: 9, kind: input, shape index: {}]
  %s10 = inlined_call_operand.vmem [shape: bf16[600,256], index: 10, kind: input, shape index: {}]
  %s11 = inlined_call_operand.vmem [shape: f32[1,256], index: 11, kind: input, shape index: {}]
  %s12 = inlined_call_operand.vmem [shape: bf16[128,128], index: 12, kind: input, shape index: {}]
  %s13 = inlined_call_operand.vmem [shape: bf16[150,256], index: 13, kind: input, shape index: {}]
  %s14 = inlined_call_operand.vmem [shape: f32[1,256], index: 14, kind: input, shape index: {}]
  %s15 = inlined_call_operand.vmem [shape: bf16[128,128], index: 15, kind: input, shape index: {}]
  %s16 = inlined_call_operand.vmem [shape: bf16[768,128], index: 16, kind: input, shape index: {}]
  %s17 = inlined_call_operand.vmem [shape: f32[1,128], index: 17, kind: input, shape index: {}]
  %s18 = inlined_call_operand.vmem [shape: bf16[128,128], index: 18, kind: input, shape index: {}]
  %s19 = inlined_call_operand.vmem [shape: f32[1,128], index: 19, kind: input, shape index: {}]
  %s20 = inlined_call_operand.vmem [shape: f32[8,2], index: 20, kind: output, shape index: {}]
  %s21 = sld [smem:[#allocation0]]
  $region94: #{tot_rnn_forward.1} parent=0
    _
  %s23 = ssub.s32 1, %s21
  %s24 = scalar_select 0, %s23, %s21
  $region1: #{tot_rnn_forward.1} parent=0
    #allocation7 [shape = 'u8[512]{0}', space=smem, size = 0x200, scoped, tag = 'input window, operand 0, single buffered']
    #allocation8 [shape = 's32[1]{0}', space=sflag, size = 0x4, scoped, tag = 'scoped memory for tot_rnn_forward.1']
    %25 = vsyncpa [#allocation8], 0
    // Predicated region
    $region2: #{tot_rnn_forward.1} parent=1 // pred_check
      _
    $region3: #{tot_rnn_forward.1} parent=1 // pred_check_branch
      %27 = sbr.rel (0) target = $region5
    $region4: #{tot_rnn_forward.1} parent=1 // pred_region
      %s29 = ssub.s32 16, 16
      %30 = vsyncadd [#allocation8], %s29
      %s32 = sshll.u32 %s0, 4
      %s33 = int_to_ptr.vmem [resolvable:$true] %s32
      %35 = dma.vmem_to_smem %s33, 16, [#allocation7], [#allocation8]
    $region5: #{tot_rnn_forward.1} parent=1 // pred_fallthru
      _
    // Predicated region
    $region6: #{tot_rnn_forward.1} parent=1 // pred_check
      _
    $region7: #{tot_rnn_forward.1} parent=1 // pred_check_branch
      %37 = sbr.rel (0) target = $region9
    $region8: #{tot_rnn_forward.1} parent=1 // pred_region
      _
    $region9: #{tot_rnn_forward.1} parent=1 // pred_fallthru
      _
    // Predicated region
    $region10: #{tot_rnn_forward.1} parent=1 // pred_check
      _
    $region11: #{tot_rnn_forward.1} parent=1 // pred_check_branch
      %39 = sbr.rel (0) target = $region13
    $region12: #{tot_rnn_forward.1} parent=1 // pred_region
      _
    $region13: #{tot_rnn_forward.1} parent=1 // pred_fallthru
      _
    // Predicated region
    $region14: #{tot_rnn_forward.1} parent=1 // pred_check
      _
    $region15: #{tot_rnn_forward.1} parent=1 // pred_check_branch
      %41 = sbr.rel (0) target = $region17
    $region16: #{tot_rnn_forward.1} parent=1 // pred_region
      _
    $region17: #{tot_rnn_forward.1} parent=1 // pred_fallthru
      _
    // Predicated region
    $region18: #{tot_rnn_forward.1} parent=1 // pred_check
      _
    $region19: #{tot_rnn_forward.1} parent=1 // pred_check_branch
      %43 = sbr.rel (0) target = $region21
    $region20: #{tot_rnn_forward.1} parent=1 // pred_region
      _
    $region21: #{tot_rnn_forward.1} parent=1 // pred_fallthru
      _
    // Predicated region
    $region22: #{tot_rnn_forward.1} parent=1 // pred_check
      _
    $region23: #{tot_rnn_forward.1} parent=1 // pred_check_branch
      %45 = sbr.rel (0) target = $region25
    $region24: #{tot_rnn_forward.1} parent=1 // pred_region
      _
    $region25: #{tot_rnn_forward.1} parent=1 // pred_fallthru
      _
    // Predicated region
    $region26: #{tot_rnn_forward.1} parent=1 // pred_check
      _
    $region27: #{tot_rnn_forward.1} parent=1 // pred_check_branch
      %47 = sbr.rel (0) target = $region29
    $region28: #{tot_rnn_forward.1} parent=1 // pred_region
      _
    $region29: #{tot_rnn_forward.1} parent=1 // pred_fallthru
      _
    // Predicated region
    $region30: #{tot_rnn_forward.1} parent=1 // pred_check
      _
    $region31: #{tot_rnn_forward.1} parent=1 // pred_check_branch
      %49 = sbr.rel (0) target = $region33
    $region32: #{tot_rnn_forward.1} parent=1 // pred_region
      _
    $region33: #{tot_rnn_forward.1} parent=1 // pred_fallthru
      _
    // Predicated region
    $region34: #{tot_rnn_forward.1} parent=1 // pred_check
      _
    $region35: #{tot_rnn_forward.1} parent=1 // pred_check_branch
      %51 = sbr.rel (0) target = $region37
    $region36: #{tot_rnn_forward.1} parent=1 // pred_region
      _
    $region37: #{tot_rnn_forward.1} parent=1 // pred_fallthru
      _
    // Predicated region
    $region38: #{tot_rnn_forward.1} parent=1 // pred_check
      _
    $region39: #{tot_rnn_forward.1} parent=1 // pred_check_branch
      %53 = sbr.rel (0) target = $region41
    $region40: #{tot_rnn_forward.1} parent=1 // pred_region
      _
    $region41: #{tot_rnn_forward.1} parent=1 // pred_fallthru
      _
    // Predicated region
    $region42: #{tot_rnn_forward.1} parent=1 // pred_check
      _
    $region43: #{tot_rnn_forward.1} parent=1 // pred_check_branch
      %55 = sbr.rel (0) target = $region45
    $region44: #{tot_rnn_forward.1} parent=1 // pred_region
      _
    $region45: #{tot_rnn_forward.1} parent=1 // pred_fallthru
      _
    // Predicated region
    $region46: #{tot_rnn_forward.1} parent=1 // pred_check
      _
    $region47: #{tot_rnn_forward.1} parent=1 // pred_check_branch
      %57 = sbr.rel (0) target = $region49
    $region48: #{tot_rnn_forward.1} parent=1 // pred_region
      _
    $region49: #{tot_rnn_forward.1} parent=1 // pred_fallthru
      _
    // Predicated region
    $region50: #{tot_rnn_forward.1} parent=1 // pred_check
      _
    $region51: #{tot_rnn_forward.1} parent=1 // pred_check_branch
      %59 = sbr.rel (0) target = $region53
    $region52: #{tot_rnn_forward.1} parent=1 // pred_region
      _
    $region53: #{tot_rnn_forward.1} parent=1 // pred_fallthru
      _
    // Predicated region
    $region54: #{tot_rnn_forward.1} parent=1 // pred_check
      _
    $region55: #{tot_rnn_forward.1} parent=1 // pred_check_branch
      %61 = sbr.rel (0) target = $region57
    $region56: #{tot_rnn_forward.1} parent=1 // pred_region
      _
    $region57: #{tot_rnn_forward.1} parent=1 // pred_fallthru
      _
    // Predicated region
    $region58: #{tot_rnn_forward.1} parent=1 // pred_check
      _
    $region59: #{tot_rnn_forward.1} parent=1 // pred_check_branch
      %63 = sbr.rel (0) target = $region61
    $region60: #{tot_rnn_forward.1} parent=1 // pred_region
      _
    $region61: #{tot_rnn_forward.1} parent=1 // pred_fallthru
      _
    // Predicated region
    $region62: #{tot_rnn_forward.1} parent=1 // pred_check
      _
    $region63: #{tot_rnn_forward.1} parent=1 // pred_check_branch
      %65 = sbr.rel (0) target = $region65
    $region64: #{tot_rnn_forward.1} parent=1 // pred_region
      _
    $region65: #{tot_rnn_forward.1} parent=1 // pred_fallthru
      _
    // Predicated region
    $region66: #{tot_rnn_forward.1} parent=1 // pred_check
      _
    $region67: #{tot_rnn_forward.1} parent=1 // pred_check_branch
      %67 = sbr.rel (0) target = $region69
    $region68: #{tot_rnn_forward.1} parent=1 // pred_region
      _
    $region69: #{tot_rnn_forward.1} parent=1 // pred_fallthru
      _
    // Predicated region
    $region70: #{tot_rnn_forward.1} parent=1 // pred_check
      _
    $region71: #{tot_rnn_forward.1} parent=1 // pred_check_branch
      %69 = sbr.rel (0) target = $region73
    $region72: #{tot_rnn_forward.1} parent=1 // pred_region
      _
    $region73: #{tot_rnn_forward.1} parent=1 // pred_fallthru
      _
    // Predicated region
    $region74: #{tot_rnn_forward.1} parent=1 // pred_check
      _
    $region75: #{tot_rnn_forward.1} parent=1 // pred_check_branch
      %71 = sbr.rel (0) target = $region77
    $region76: #{tot_rnn_forward.1} parent=1 // pred_region
      _
    $region77: #{tot_rnn_forward.1} parent=1 // pred_fallthru
      _
    // Predicated region
    $region78: #{tot_rnn_forward.1} parent=1 // pred_check
      _
    $region79: #{tot_rnn_forward.1} parent=1 // pred_check_branch
      %73 = sbr.rel (0) target = $region81
    $region80: #{tot_rnn_forward.1} parent=1 // pred_region
      _
    $region81: #{tot_rnn_forward.1} parent=1 // pred_fallthru
      _
    // Predicated region
    $region82: #{tot_rnn_forward.1} parent=1 // pred_check
      _
    $region83: #{tot_rnn_forward.1} parent=1 // pred_check_branch
      %75 = sbr.rel (0) target = $region85
    $region84: #{tot_rnn_forward.1} parent=1 // pred_region
      %76 = dma.done [#allocation8], 16
    $region85: #{tot_rnn_forward.1} parent=1 // pred_fallthru
      _
    %77 = sfence
    %v79 = vld [vmem:[%s1] sm:$0xff]
    %v80 = vld [vmem:[%s1 + $0x8] sm:$0xff]
    %v81 = vld [vmem:[%s1 + $0x10] sm:$0xff]
    %v82 = vld [vmem:[%s1 + $0x18] sm:$0xff]
    %v83 = vld [vmem:[%s1 + $0x20] sm:$0xff]
    %v84 = vld [vmem:[%s1 + $0x28] sm:$0xff]
    %v85 = vld [vmem:[%s1 + $0x30] sm:$0xff]
    %v86 = vld [vmem:[%s1 + $0x38] sm:$0xff]
    %v87 = vld [vmem:[%s1 + $0x40] sm:$0xff]
    %v88 = vld [vmem:[%s1 + $0x48] sm:$0xff]
    %v89 = vld [vmem:[%s1 + $0x50] sm:$0xff]
    %v90 = vld [vmem:[%s1 + $0x58] sm:$0xff]
    %v91 = vld [vmem:[%s1 + $0x60] sm:$0xff]
    %v92 = vld [vmem:[%s1 + $0x68] sm:$0xff]
    %v93 = vld [vmem:[%s1 + $0x70] sm:$0xff]
    %v94 = vld [vmem:[%s1 + $0x78] sm:$0xff]
    %v95 = vld [vmem:[%s1 + $0x80] sm:$0xff]
    %v96 = vld [vmem:[%s1 + $0x88] sm:$0xff]
    %v97 = vld [vmem:[%s1 + $0x90] sm:$0xff]
    %v98 = vld [vmem:[%s1 + $0x98] sm:$0xff]
    %v99 = vld [vmem:[%s1 + $0xa0] sm:$0xff]
    %v100 = vld [vmem:[%s1 + $0xa8] sm:$0xff]
    %v101 = vld [vmem:[%s1 + $0xb0] sm:$0xff]
    %v102 = vld [vmem:[%s1 + $0xb8] sm:$0xff]
    %v103 = vpack.c.bf16 %v81, %v79
    %v104 = vpack.c.bf16 %v82, %v80
    %v105 = vpack.c.bf16 %v85, %v83
    %v106 = vpack.c.bf16 %v86, %v84
    %v107 = vpack.c.bf16 %v89, %v87
    %v108 = vpack.c.bf16 %v90, %v88
    %v109 = vpack.c.bf16 %v93, %v91
    %v110 = vpack.c.bf16 %v94, %v92
    %v111 = vpack.c.bf16 %v97, %v95
    %v112 = vpack.c.bf16 %v98, %v96
    %v113 = vpack.c.bf16 %v101, %v99
    %v114 = vpack.c.bf16 %v102, %v100
    %v115 = vld [vmem:[%s4] sm:$0xff]
    %v116 = vld [vmem:[%s4 + $0x8] sm:$0xff]
    %v117 = vld [vmem:[%s4 + $0x10] sm:$0xff]
    %v118 = vld [vmem:[%s4 + $0x18] sm:$0xff]
    %v119 = vld [vmem:[%s4 + $0x20] sm:$0xff]
    %v120 = vld [vmem:[%s4 + $0x28] sm:$0xff]
    %v121 = vld [vmem:[%s4 + $0x30] sm:$0xff]
    %v122 = vld [vmem:[%s4 + $0x38] sm:$0xff]
    %v123 = vld [vmem:[%s4 + $0x40] sm:$0xff]
    %v124 = vld [vmem:[%s4 + $0x48] sm:$0xff]
    %v125 = vld [vmem:[%s4 + $0x50] sm:$0xff]
    %v126 = vld [vmem:[%s4 + $0x58] sm:$0xff]
    %v127 = vld [vmem:[%s4 + $0x60] sm:$0xff]
    %v128 = vld [vmem:[%s4 + $0x68] sm:$0xff]
    %v129 = vld [vmem:[%s4 + $0x70] sm:$0xff]
    %v130 = vld [vmem:[%s4 + $0x78] sm:$0xff]
    %v131 = vld [vmem:[%s4 + $0x80] sm:$0xff]
    %v132 = vld [vmem:[%s4 + $0x88] sm:$0xff]
    %v133 = vld [vmem:[%s4 + $0x90] sm:$0xff]
    %v134 = vld [vmem:[%s4 + $0x98] sm:$0xff]
    %v135 = vld [vmem:[%s4 + $0xa0] sm:$0xff]
    %v136 = vld [vmem:[%s4 + $0xa8] sm:$0xff]
    %v137 = vld [vmem:[%s4 + $0xb0] sm:$0xff]
    %v138 = vld [vmem:[%s4 + $0xb8] sm:$0xff]
    %v139 = vld [vmem:[%s4 + $0xc0] sm:$0xff]
    %v140 = vld [vmem:[%s5] sm:$0x3]
    %v142 = vlaneseq
    %v143 = vshrl.u32 %v142, 7
    %v144 = vsub.s32 0, %v143
    %v145 = vrot.slane %v140, %v144
    %v146 = vlaneseq
    %v147 = vshrl.u32 %v146, 7
    %v148 = vsub.s32 1, %v147
    %v149 = vrot.slane %v140, %v148
    %v177 = vunpack.c.l.b16 %v115
    %v178 = vunpack.c.h.b16 %v115
    %v179 = vunpack.c.l.b16 %v116
    %v180 = vunpack.c.h.b16 %v116
    %v181 = vunpack.c.l.b16 %v117
    %v182 = vunpack.c.h.b16 %v117
    %v183 = vunpack.c.l.b16 %v118
    %v184 = vunpack.c.h.b16 %v118
    %v185 = vunpack.c.l.b16 %v119
    %v186 = vunpack.c.h.b16 %v119
    %v187 = vunpack.c.l.b16 %v120
    %v188 = vunpack.c.h.b16 %v120
    %v189 = vunpack.c.l.b16 %v121
    %v190 = vunpack.c.h.b16 %v121
    %v191 = vunpack.c.l.b16 %v122
    %v192 = vunpack.c.h.b16 %v122
    %v193 = vunpack.c.l.b16 %v123
    %v194 = vunpack.c.h.b16 %v123
    %v195 = vunpack.c.l.b16 %v124
    %v196 = vunpack.c.h.b16 %v124
    %v197 = vunpack.c.l.b16 %v125
    %v198 = vunpack.c.h.b16 %v125
    %v199 = vunpack.c.l.b16 %v126
    %v200 = vunpack.c.h.b16 %v126
    %v201 = vunpack.c.l.b16 %v127
    %v202 = vunpack.c.h.b16 %v127
    %v203 = vunpack.c.l.b16 %v128
    %v204 = vunpack.c.h.b16 %v128
    %v205 = vunpack.c.l.b16 %v129
    %v206 = vunpack.c.h.b16 %v129
    %v207 = vunpack.c.l.b16 %v130
    %v208 = vunpack.c.h.b16 %v130
    %v209 = vunpack.c.l.b16 %v131
    %v210 = vunpack.c.h.b16 %v131
    %v211 = vunpack.c.l.b16 %v132
    %v212 = vunpack.c.h.b16 %v132
    %v213 = vunpack.c.l.b16 %v133
    %v214 = vunpack.c.h.b16 %v133
    %v215 = vunpack.c.l.b16 %v134
    %v216 = vunpack.c.h.b16 %v134
    %v217 = vunpack.c.l.b16 %v135
    %v218 = vunpack.c.h.b16 %v135
    %v219 = vunpack.c.l.b16 %v136
    %v220 = vunpack.c.h.b16 %v136
    %v221 = vunpack.c.l.b16 %v137
    %v222 = vunpack.c.h.b16 %v137
    %v223 = vunpack.c.l.b16 %v138
    %v224 = vunpack.c.h.b16 %v138
    %v225 = vunpack.c.l.b16 %v139
    %v226 = vunpack.c.h.b16 %v139
    %v227 = vpack.c.b16 %v179, %v177
    %v228 = vpack.c.b16 %v180, %v178
    %v229 = vpack.c.b16 %v183, %v181
    %v230 = vpack.c.b16 %v184, %v182
    %v231 = vpack.c.b16 %v187, %v185
    %v232 = vpack.c.b16 %v188, %v186
    %v233 = vpack.c.b16 %v191, %v189
    %v234 = vpack.c.b16 %v192, %v190
    %v235 = vpack.c.b16 %v195, %v193
    %v236 = vpack.c.b16 %v196, %v194
    %v237 = vpack.c.b16 %v199, %v197
    %v238 = vpack.c.b16 %v200, %v198
    %v239 = vpack.c.b16 %v203, %v201
    %v240 = vpack.c.b16 %v204, %v202
    %v241 = vpack.c.b16 %v207, %v205
    %v242 = vpack.c.b16 %v208, %v206
    %v243 = vpack.c.b16 %v211, %v209
    %v244 = vpack.c.b16 %v212, %v210
    %v245 = vpack.c.b16 %v215, %v213
    %v246 = vpack.c.b16 %v216, %v214
    %v247 = vpack.c.b16 %v219, %v217
    %v248 = vpack.c.b16 %v220, %v218
    %v249 = vpack.c.b16 %v223, %v221
    %v250 = vpack.c.b16 %v224, %v222
    %v251 = vpack.c.b16 %v225, %v225
    %v252 = vpack.c.b16 %v226, %v226
    %vm277 = vcmask 588800
    %v279 = vsel %vm277, %v104, 0
    %v282 = vsel %vm277, %v106, 0
    %v285 = vsel %vm277, %v108, 0
    %v288 = vsel %vm277, %v110, 0
    %v291 = vsel %vm277, %v112, 0
    %v294 = vsel %vm277, %v114, 0
    %vm296 = vcmask 1043456
    %v298 = vsel %vm296, %v251, 0
    %v301 = vsel %vm296, %v252, 0
    %303 = vmatprep.subr.bf16.mxu0 %v228
    %304 = vmatpush1.bf16.msra.mxu0 %v227
    %305 = vmatprep.subr.bf16.mxu0 %v230
    %306 = vmatpush1.bf16.msra.mxu0 %v229
    %307 = vmatprep.subr.bf16.mxu0 %v232
    %308 = vmatpush1.bf16.msra.mxu0 %v231
    %309 = vmatprep.subr.bf16.mxu0 %v234
    %310 = vmatpush1.bf16.msra.mxu0 %v233
    %311 = vmatprep.subr.bf16.mxu0 %v236
    %312 = vmatpush1.bf16.msra.mxu0 %v235
    %313 = vmatprep.subr.bf16.mxu0 %v238
    %314 = vmatpush1.bf16.msra.mxu0 %v237
    %315 = vmatprep.subr.bf16.mxu0 %v240
    %316 = vmatpush1.bf16.msra.mxu0 %v239
    %317 = vmatprep.subr.bf16.mxu0 %v242
    %318 = vmatpush1.bf16.msra.mxu0 %v241
    %319 = vmatprep.subr.bf16.mxu0 %v244
    %320 = vmatpush1.bf16.msra.mxu0 %v243
    %321 = vmatprep.subr.bf16.mxu0 %v246
    %322 = vmatpush1.bf16.msra.mxu0 %v245
    %323 = vmatprep.subr.bf16.mxu0 %v248
    %324 = vmatpush1.bf16.msra.mxu0 %v247
    %325 = vmatprep.subr.bf16.mxu0 %v250
    %326 = vmatpush1.bf16.msra.mxu0 %v249
    %327 = vmatprep.subr.bf16.mxu0 %v301
    %328 = vmatpush1.bf16.msra.mxu0 %v298
    %329 = vmatprep.subr.bf16.mxu0 0
    %330 = vmatpush1.bf16.msra.mxu0 0
    %331 = vmatprep.subr.bf16.mxu0 0
    %332 = vmatpush1.bf16.msra.mxu0 0
    %333 = vmatprep.subr.bf16.mxu0 0
    %334 = vmatpush1.bf16.msra.mxu0 0
    %335 = vmatprep.mubr.bf16.mxu0 %v279
    %336 = vmatmul.mubr.bf16.gmra.mrb[0].mxu0 %v103
    %v337 = vpop.f32.mrb[0].mxu0
    %v338 = vadd.f32 %v145, %v337
    %v339 = vpop.f32.mrb[0].mxu0
    %v340 = vadd.f32 %v149, %v339
    %v341 = vpop.f32.mrb[0].mxu0
    %v342 = vadd.f32 %v145, %v341
    %v343 = vpop.f32.mrb[0].mxu0
    %v344 = vadd.f32 %v149, %v343
    %345 = vmatprep.mubr.bf16.mxu0 %v282
    %346 = vmatmul.mubr.bf16.gmra.mrb[0].mxu0 %v105
    %v347 = vpop.f32.mrb[0].mxu0
    %v348 = vadd.f32 %v145, %v347
    %v349 = vpop.f32.mrb[0].mxu0
    %v350 = vadd.f32 %v149, %v349
    %v351 = vpop.f32.mrb[0].mxu0
    %v352 = vadd.f32 %v145, %v351
    %v353 = vpop.f32.mrb[0].mxu0
    %v354 = vadd.f32 %v149, %v353
    %355 = vmatprep.mubr.bf16.mxu0 %v285
    %356 = vmatmul.mubr.bf16.gmra.mrb[0].mxu0 %v107
    %v357 = vpop.f32.mrb[0].mxu0
    %v358 = vadd.f32 %v145, %v357
    %v359 = vpop.f32.mrb[0].mxu0
    %v360 = vadd.f32 %v149, %v359
    %v361 = vpop.f32.mrb[0].mxu0
    %v362 = vadd.f32 %v145, %v361
    %v363 = vpop.f32.mrb[0].mxu0
    %v364 = vadd.f32 %v149, %v363
    %365 = vmatprep.mubr.bf16.mxu0 %v288
    %366 = vmatmul.mubr.bf16.gmra.mrb[0].mxu0 %v109
    %v367 = vpop.f32.mrb[0].mxu0
    %v368 = vadd.f32 %v145, %v367
    %v369 = vpop.f32.mrb[0].mxu0
    %v370 = vadd.f32 %v149, %v369
    %v371 = vpop.f32.mrb[0].mxu0
    %v372 = vadd.f32 %v145, %v371
    %v373 = vpop.f32.mrb[0].mxu0
    %v374 = vadd.f32 %v149, %v373
    %375 = vmatprep.mubr.bf16.mxu0 %v291
    %376 = vmatmul.mubr.bf16.gmra.mrb[0].mxu0 %v111
    %v377 = vpop.f32.mrb[0].mxu0
    %v378 = vadd.f32 %v145, %v377
    %v379 = vpop.f32.mrb[0].mxu0
    %v380 = vadd.f32 %v149, %v379
    %v381 = vpop.f32.mrb[0].mxu0
    %v382 = vadd.f32 %v145, %v381
    %v383 = vpop.f32.mrb[0].mxu0
    %v384 = vadd.f32 %v149, %v383
    %385 = vmatprep.mubr.bf16.mxu0 %v294
    %386 = vmatmul.mubr.bf16.gmra.mrb[0].mxu0 %v113
    %v387 = vpop.f32.mrb[0].mxu0
    %v388 = vadd.f32 %v145, %v387
    %v389 = vpop.f32.mrb[0].mxu0
    %v390 = vadd.f32 %v149, %v389
    %v391 = vpop.f32.mrb[0].mxu0
    %v392 = vadd.f32 %v145, %v391
    %v393 = vpop.f32.mrb[0].mxu0
    %v394 = vadd.f32 %v149, %v393
    %395 = vdwg.mxu0
    %396 = vst [vmem:[#allocation2] sm:$0xff] %v338
    %397 = vst [vmem:[#allocation2 + $0x8] sm:$0xff] %v340
    %398 = vst [vmem:[#allocation2 + $0x10] sm:$0xff] %v342
    %399 = vst [vmem:[#allocation2 + $0x18] sm:$0xff] %v344
    %400 = vst [vmem:[#allocation2 + $0x20] sm:$0xff] %v348
    %401 = vst [vmem:[#allocation2 + $0x28] sm:$0xff] %v350
    %402 = vst [vmem:[#allocation2 + $0x30] sm:$0xff] %v352
    %403 = vst [vmem:[#allocation2 + $0x38] sm:$0xff] %v354
    %404 = vst [vmem:[#allocation2 + $0x40] sm:$0xff] %v358
    %405 = vst [vmem:[#allocation2 + $0x48] sm:$0xff] %v360
    %406 = vst [vmem:[#allocation2 + $0x50] sm:$0xff] %v362
    %407 = vst [vmem:[#allocation2 + $0x58] sm:$0xff] %v364
    %408 = vst [vmem:[#allocation2 + $0x60] sm:$0xff] %v368
    %409 = vst [vmem:[#allocation2 + $0x68] sm:$0xff] %v370
    %410 = vst [vmem:[#allocation2 + $0x70] sm:$0xff] %v372
    %411 = vst [vmem:[#allocation2 + $0x78] sm:$0xff] %v374
    %412 = vst [vmem:[#allocation2 + $0x80] sm:$0xff] %v378
    %413 = vst [vmem:[#allocation2 + $0x88] sm:$0xff] %v380
    %414 = vst [vmem:[#allocation2 + $0x90] sm:$0xff] %v382
    %415 = vst [vmem:[#allocation2 + $0x98] sm:$0xff] %v384
    %416 = vst [vmem:[#allocation2 + $0xa0] sm:$0xff] %v388
    %417 = vst [vmem:[#allocation2 + $0xa8] sm:$0xff] %v390
    %418 = vst [vmem:[#allocation2 + $0xb0] sm:$0xff] %v392
    %419 = vst [vmem:[#allocation2 + $0xb8] sm:$0xff] %v394
    %v420 = vld [vmem:[%s2] sm:$0xff]
    %v421 = vld [vmem:[%s2 + $0x8] sm:$0xff]
    %v422 = vld [vmem:[%s2 + $0x10] sm:$0xff]
    %v423 = vld [vmem:[%s2 + $0x18] sm:$0xff]
    %v424 = vld [vmem:[%s2 + $0x20] sm:$0xff]
    %v425 = vld [vmem:[%s2 + $0x28] sm:$0xff]
    %v426 = vld [vmem:[%s2 + $0x30] sm:$0xff]
    %v427 = vld [vmem:[%s2 + $0x38] sm:$0xff]
    %v428 = vld [vmem:[%s2 + $0x40] sm:$0xff]
    %v429 = vld [vmem:[%s2 + $0x48] sm:$0xff]
    %v430 = vld [vmem:[%s2 + $0x50] sm:$0xff]
    %v431 = vld [vmem:[%s2 + $0x58] sm:$0xff]
    %v432 = vld [vmem:[%s2 + $0x60] sm:$0xff]
    %v433 = vld [vmem:[%s2 + $0x68] sm:$0xff]
    %v434 = vld [vmem:[%s2 + $0x70] sm:$0xff]
    %v435 = vld [vmem:[%s2 + $0x78] sm:$0xff]
    %v436 = vld [vmem:[%s2 + $0x80] sm:$0xff]
    %v437 = vld [vmem:[%s2 + $0x88] sm:$0xff]
    %v438 = vld [vmem:[%s2 + $0x90] sm:$0xff]
    %v439 = vld [vmem:[%s2 + $0x98] sm:$0xff]
    %v440 = vld [vmem:[%s2 + $0xa0] sm:$0xff]
    %v441 = vld [vmem:[%s2 + $0xa8] sm:$0xff]
    %v442 = vld [vmem:[%s2 + $0xb0] sm:$0xff]
    %v443 = vld [vmem:[%s2 + $0xb8] sm:$0xff]
    %v444 = vld [vmem:[%s2 + $0xc0] sm:$0xff]
    %v445 = vpack.c.bf16 %v425, %v420
    %v446 = vpack.c.bf16 %v426, %v421
    %v447 = vpack.c.bf16 %v427, %v422
    %v448 = vpack.c.bf16 %v428, %v423
    %v449 = vpack.c.bf16 %v429, %v424
    %v450 = vpack.c.bf16 %v435, %v430
    %v451 = vpack.c.bf16 %v436, %v431
    %v452 = vpack.c.bf16 %v437, %v432
    %v453 = vpack.c.bf16 %v438, %v433
    %v454 = vpack.c.bf16 %v439, %v434
    %v455 = vpack.c.bf16 %v440, %v440
    %v456 = vpack.c.bf16 %v441, %v441
    %v457 = vpack.c.bf16 %v442, %v442
    %v458 = vpack.c.bf16 %v443, %v443
    %v459 = vpack.c.bf16 %v444, %v444
    %v460 = vld [vmem:[%s10] sm:$0xff]
    %v461 = vld [vmem:[%s10 + $0x8] sm:$0xff]
    %v462 = vld [vmem:[%s10 + $0x10] sm:$0xff]
    %v463 = vld [vmem:[%s10 + $0x18] sm:$0xff]
    %v464 = vld [vmem:[%s10 + $0x20] sm:$0xff]
    %v465 = vld [vmem:[%s10 + $0x28] sm:$0xff]
    %v466 = vld [vmem:[%s10 + $0x30] sm:$0xff]
    %v467 = vld [vmem:[%s10 + $0x38] sm:$0xff]
    %v468 = vld [vmem:[%s10 + $0x40] sm:$0xff]
    %v469 = vld [vmem:[%s10 + $0x48] sm:$0xff]
    %v470 = vld [vmem:[%s10 + $0x50] sm:$0xff]
    %v471 = vld [vmem:[%s10 + $0x58] sm:$0xff]
    %v472 = vld [vmem:[%s10 + $0x60] sm:$0xff]
    %v473 = vld [vmem:[%s10 + $0x68] sm:$0xff]
    %v474 = vld [vmem:[%s10 + $0x70] sm:$0xff]
    %v475 = vld [vmem:[%s10 + $0x78] sm:$0xff]
    %v476 = vld [vmem:[%s10 + $0x80] sm:$0xff]
    %v477 = vld [vmem:[%s10 + $0x88] sm:$0xff]
    %v478 = vld [vmem:[%s10 + $0x90] sm:$0xff]
    %v479 = vld [vmem:[%s10 + $0x98] sm:$0xff]
    %v480 = vld [vmem:[%s10 + $0xa0] sm:$0xff]
    %v481 = vld [vmem:[%s10 + $0xa8] sm:$0xff]
    %v482 = vld [vmem:[%s10 + $0xb0] sm:$0xff]
    %v483 = vld [vmem:[%s10 + $0xb8] sm:$0xff]
    %v484 = vld [vmem:[%s10 + $0xc0] sm:$0xff]
    %v485 = vld [vmem:[%s10 + $0xc8] sm:$0xff]
    %v486 = vld [vmem:[%s10 + $0xd0] sm:$0xff]
    %v487 = vld [vmem:[%s10 + $0xd8] sm:$0xff]
    %v488 = vld [vmem:[%s10 + $0xe0] sm:$0xff]
    %v489 = vld [vmem:[%s10 + $0xe8] sm:$0xff]
    %v490 = vld [vmem:[%s10 + $0xf0] sm:$0xff]
    %v491 = vld [vmem:[%s10 + $0xf8] sm:$0xff]
    %v492 = vld [vmem:[%s10 + $0x100] sm:$0xff]
    %v493 = vld [vmem:[%s10 + $0x108] sm:$0xff]
    %v494 = vld [vmem:[%s10 + $0x110] sm:$0xff]
    %v495 = vld [vmem:[%s10 + $0x118] sm:$0xff]
    %v496 = vld [vmem:[%s10 + $0x120] sm:$0xff]
    %v497 = vld [vmem:[%s10 + $0x128] sm:$0xff]
    %v498 = vld [vmem:[%s10 + $0x130] sm:$0xff]
    %v499 = vld [vmem:[%s10 + $0x138] sm:$0xff]
    %v500 = vld [vmem:[%s10 + $0x140] sm:$0xff]
    %v501 = vld [vmem:[%s10 + $0x148] sm:$0xff]
    %v502 = vld [vmem:[%s10 + $0x150] sm:$0xff]
    %v503 = vld [vmem:[%s10 + $0x158] sm:$0xff]
    %v504 = vld [vmem:[%s10 + $0x160] sm:$0xff]
    %v505 = vld [vmem:[%s10 + $0x168] sm:$0xff]
    %v506 = vld [vmem:[%s10 + $0x170] sm:$0xff]
    %v507 = vld [vmem:[%s10 + $0x178] sm:$0xff]
    %v508 = vld [vmem:[%s10 + $0x180] sm:$0xff]
    %v509 = vld [vmem:[%s10 + $0x188] sm:$0xff]
    %v510 = vld [vmem:[%s10 + $0x190] sm:$0xff]
    %v511 = vld [vmem:[%s10 + $0x198] sm:$0xff]
    %v512 = vld [vmem:[%s10 + $0x1a0] sm:$0xff]
    %v513 = vld [vmem:[%s10 + $0x1a8] sm:$0xff]
    %v514 = vld [vmem:[%s10 + $0x1b0] sm:$0xff]
    %v515 = vld [vmem:[%s10 + $0x1b8] sm:$0xff]
    %v516 = vld [vmem:[%s10 + $0x1c0] sm:$0xff]
    %v517 = vld [vmem:[%s10 + $0x1c8] sm:$0xff]
    %v518 = vld [vmem:[%s10 + $0x1d0] sm:$0xff]
    %v519 = vld [vmem:[%s10 + $0x1d8] sm:$0xff]
    %v520 = vld [vmem:[%s10 + $0x1e0] sm:$0xff]
    %v521 = vld [vmem:[%s10 + $0x1e8] sm:$0xff]
    %v522 = vld [vmem:[%s10 + $0x1f0] sm:$0xff]
    %v523 = vld [vmem:[%s10 + $0x1f8] sm:$0xff]
    %v524 = vld [vmem:[%s10 + $0x200] sm:$0xff]
    %v525 = vld [vmem:[%s10 + $0x208] sm:$0xff]
    %v526 = vld [vmem:[%s10 + $0x210] sm:$0xff]
    %v527 = vld [vmem:[%s10 + $0x218] sm:$0xff]
    %v528 = vld [vmem:[%s10 + $0x220] sm:$0xff]
    %v529 = vld [vmem:[%s10 + $0x228] sm:$0xff]
    %v530 = vld [vmem:[%s10 + $0x230] sm:$0xff]
    %v531 = vld [vmem:[%s10 + $0x238] sm:$0xff]
    %v532 = vld [vmem:[%s10 + $0x240] sm:$0xff]
    %v533 = vld [vmem:[%s10 + $0x248] sm:$0xff]
    %v534 = vld [vmem:[%s10 + $0x250] sm:$0xff]
    %v535 = vld [vmem:[%s11] sm:$0x3]
    %v537 = vlaneseq
    %v538 = vshrl.u32 %v537, 7
    %v539 = vsub.s32 0, %v538
    %v540 = vrot.slane %v535, %v539
    %v541 = vlaneseq
    %v542 = vshrl.u32 %v541, 7
    %v543 = vsub.s32 1, %v542
    %v544 = vrot.slane %v535, %v543
    %v622 = vunpack.c.l.b16 %v460
    %v623 = vunpack.c.h.b16 %v460
    %v624 = vunpack.c.l.b16 %v461
    %v625 = vunpack.c.h.b16 %v461
    %v626 = vunpack.c.l.b16 %v462
    %v627 = vunpack.c.h.b16 %v462
    %v628 = vunpack.c.l.b16 %v463
    %v629 = vunpack.c.h.b16 %v463
    %v630 = vunpack.c.l.b16 %v464
    %v631 = vunpack.c.h.b16 %v464
    %v632 = vunpack.c.l.b16 %v465
    %v633 = vunpack.c.h.b16 %v465
    %v634 = vunpack.c.l.b16 %v466
    %v635 = vunpack.c.h.b16 %v466
    %v636 = vunpack.c.l.b16 %v467
    %v637 = vunpack.c.h.b16 %v467
    %v638 = vunpack.c.l.b16 %v468
    %v639 = vunpack.c.h.b16 %v468
    %v640 = vunpack.c.l.b16 %v469
    %v641 = vunpack.c.h.b16 %v469
    %v642 = vunpack.c.l.b16 %v470
    %v643 = vunpack.c.h.b16 %v470
    %v644 = vunpack.c.l.b16 %v471
    %v645 = vunpack.c.h.b16 %v471
    %v646 = vunpack.c.l.b16 %v472
    %v647 = vunpack.c.h.b16 %v472
    %v648 = vunpack.c.l.b16 %v473
    %v649 = vunpack.c.h.b16 %v473
    %v650 = vunpack.c.l.b16 %v474
    %v651 = vunpack.c.h.b16 %v474
    %v652 = vunpack.c.l.b16 %v475
    %v653 = vunpack.c.h.b16 %v475
    %v654 = vunpack.c.l.b16 %v476
    %v655 = vunpack.c.h.b16 %v476
    %v656 = vunpack.c.l.b16 %v477
    %v657 = vunpack.c.h.b16 %v477
    %v658 = vunpack.c.l.b16 %v478
    %v659 = vunpack.c.h.b16 %v478
    %v660 = vunpack.c.l.b16 %v479
    %v661 = vunpack.c.h.b16 %v479
    %v662 = vunpack.c.l.b16 %v480
    %v663 = vunpack.c.h.b16 %v480
    %v664 = vunpack.c.l.b16 %v481
    %v665 = vunpack.c.h.b16 %v481
    %v666 = vunpack.c.l.b16 %v482
    %v667 = vunpack.c.h.b16 %v482
    %v668 = vunpack.c.l.b16 %v483
    %v669 = vunpack.c.h.b16 %v483
    %v670 = vunpack.c.l.b16 %v484
    %v671 = vunpack.c.h.b16 %v484
    %v672 = vunpack.c.l.b16 %v485
    %v673 = vunpack.c.h.b16 %v485
    %v674 = vunpack.c.l.b16 %v486
    %v675 = vunpack.c.h.b16 %v486
    %v676 = vunpack.c.l.b16 %v487
    %v677 = vunpack.c.h.b16 %v487
    %v678 = vunpack.c.l.b16 %v488
    %v679 = vunpack.c.h.b16 %v488
    %v680 = vunpack.c.l.b16 %v489
    %v681 = vunpack.c.h.b16 %v489
    %v682 = vunpack.c.l.b16 %v490
    %v683 = vunpack.c.h.b16 %v490
    %v684 = vunpack.c.l.b16 %v491
    %v685 = vunpack.c.h.b16 %v491
    %v686 = vunpack.c.l.b16 %v492
    %v687 = vunpack.c.h.b16 %v492
    %v688 = vunpack.c.l.b16 %v493
    %v689 = vunpack.c.h.b16 %v493
    %v690 = vunpack.c.l.b16 %v494
    %v691 = vunpack.c.h.b16 %v494
    %v692 = vunpack.c.l.b16 %v495
    %v693 = vunpack.c.h.b16 %v495
    %v694 = vunpack.c.l.b16 %v496
    %v695 = vunpack.c.h.b16 %v496
    %v696 = vunpack.c.l.b16 %v497
    %v697 = vunpack.c.h.b16 %v497
    %v698 = vunpack.c.l.b16 %v498
    %v699 = vunpack.c.h.b16 %v498
    %v700 = vunpack.c.l.b16 %v499
    %v701 = vunpack.c.h.b16 %v499
    %v702 = vunpack.c.l.b16 %v500
    %v703 = vunpack.c.h.b16 %v500
    %v704 = vunpack.c.l.b16 %v501
    %v705 = vunpack.c.h.b16 %v501
    %v706 = vunpack.c.l.b16 %v502
    %v707 = vunpack.c.h.b16 %v502
    %v708 = vunpack.c.l.b16 %v503
    %v709 = vunpack.c.h.b16 %v503
    %v710 = vunpack.c.l.b16 %v504
    %v711 = vunpack.c.h.b16 %v504
    %v712 = vunpack.c.l.b16 %v505
    %v713 = vunpack.c.h.b16 %v505
    %v714 = vunpack.c.l.b16 %v506
    %v715 = vunpack.c.h.b16 %v506
    %v716 = vunpack.c.l.b16 %v507
    %v717 = vunpack.c.h.b16 %v507
    %v718 = vunpack.c.l.b16 %v508
    %v719 = vunpack.c.h.b16 %v508
    %v720 = vunpack.c.l.b16 %v509
    %v721 = vunpack.c.h.b16 %v509
    %v722 = vunpack.c.l.b16 %v510
    %v723 = vunpack.c.h.b16 %v510
    %v724 = vunpack.c.l.b16 %v511
    %v725 = vunpack.c.h.b16 %v511
    %v726 = vunpack.c.l.b16 %v512
    %v727 = vunpack.c.h.b16 %v512
    %v728 = vunpack.c.l.b16 %v513
    %v729 = vunpack.c.h.b16 %v513
    %v730 = vunpack.c.l.b16 %v514
    %v731 = vunpack.c.h.b16 %v514
    %v732 = vunpack.c.l.b16 %v515
    %v733 = vunpack.c.h.b16 %v515
    %v734 = vunpack.c.l.b16 %v516
    %v735 = vunpack.c.h.b16 %v516
    %v736 = vunpack.c.l.b16 %v517
    %v737 = vunpack.c.h.b16 %v517
    %v738 = vunpack.c.l.b16 %v518
    %v739 = vunpack.c.h.b16 %v518
    %v740 = vunpack.c.l.b16 %v519
    %v741 = vunpack.c.h.b16 %v519
    %v742 = vunpack.c.l.b16 %v520
    %v743 = vunpack.c.h.b16 %v520
    %v744 = vunpack.c.l.b16 %v521
    %v745 = vunpack.c.h.b16 %v521
    %v746 = vunpack.c.l.b16 %v522
    %v747 = vunpack.c.h.b16 %v522
    %v748 = vunpack.c.l.b16 %v523
    %v749 = vunpack.c.h.b16 %v523
    %v750 = vunpack.c.l.b16 %v524
    %v751 = vunpack.c.h.b16 %v524
    %v752 = vunpack.c.l.b16 %v525
    %v753 = vunpack.c.h.b16 %v525
    %v754 = vunpack.c.l.b16 %v526
    %v755 = vunpack.c.h.b16 %v526
    %v756 = vunpack.c.l.b16 %v527
    %v757 = vunpack.c.h.b16 %v527
    %v758 = vunpack.c.l.b16 %v528
    %v759 = vunpack.c.h.b16 %v528
    %v760 = vunpack.c.l.b16 %v529
    %v761 = vunpack.c.h.b16 %v529
    %v762 = vunpack.c.l.b16 %v530
    %v763 = vunpack.c.h.b16 %v530
    %v764 = vunpack.c.l.b16 %v531
    %v765 = vunpack.c.h.b16 %v531
    %v766 = vunpack.c.l.b16 %v532
    %v767 = vunpack.c.h.b16 %v532
    %v768 = vunpack.c.l.b16 %v533
    %v769 = vunpack.c.h.b16 %v533
    %v770 = vunpack.c.l.b16 %v534
    %v771 = vunpack.c.h.b16 %v534
    %v772 = vpack.c.b16 %v624, %v622
    %v773 = vpack.c.b16 %v625, %v623
    %v774 = vpack.c.b16 %v628, %v626
    %v775 = vpack.c.b16 %v629, %v627
    %v776 = vpack.c.b16 %v632, %v630
    %v777 = vpack.c.b16 %v633, %v631
    %v778 = vpack.c.b16 %v636, %v634
    %v779 = vpack.c.b16 %v637, %v635
    %v780 = vpack.c.b16 %v640, %v638
    %v781 = vpack.c.b16 %v641, %v639
    %v782 = vpack.c.b16 %v644, %v642
    %v783 = vpack.c.b16 %v645, %v643
    %v784 = vpack.c.b16 %v648, %v646
    %v785 = vpack.c.b16 %v649, %v647
    %v786 = vpack.c.b16 %v652, %v650
    %v787 = vpack.c.b16 %v653, %v651
    %v788 = vpack.c.b16 %v656, %v654
    %v789 = vpack.c.b16 %v657, %v655
    %v790 = vpack.c.b16 %v660, %v658
    %v791 = vpack.c.b16 %v661, %v659
    %v792 = vpack.c.b16 %v664, %v662
    %v793 = vpack.c.b16 %v665, %v663
    %v794 = vpack.c.b16 %v668, %v666
    %v795 = vpack.c.b16 %v669, %v667
    %v796 = vpack.c.b16 %v672, %v670
    %v797 = vpack.c.b16 %v673, %v671
    %v798 = vpack.c.b16 %v676, %v674
    %v799 = vpack.c.b16 %v677, %v675
    %v800 = vpack.c.b16 %v680, %v678
    %v801 = vpack.c.b16 %v681, %v679
    %v802 = vpack.c.b16 %v684, %v682
    %v803 = vpack.c.b16 %v685, %v683
    %v804 = vpack.c.b16 %v688, %v686
    %v805 = vpack.c.b16 %v689, %v687
    %v806 = vpack.c.b16 %v692, %v690
    %v807 = vpack.c.b16 %v693, %v691
    %v808 = vpack.c.b16 %v696, %v694
    %v809 = vpack.c.b16 %v697, %v695
    %v810 = vpack.c.b16 %v700, %v698
    %v811 = vpack.c.b16 %v701, %v699
    %v812 = vpack.c.b16 %v704, %v702
    %v813 = vpack.c.b16 %v705, %v703
    %v814 = vpack.c.b16 %v708, %v706
    %v815 = vpack.c.b16 %v709, %v707
    %v816 = vpack.c.b16 %v712, %v710
    %v817 = vpack.c.b16 %v713, %v711
    %v818 = vpack.c.b16 %v716, %v714
    %v819 = vpack.c.b16 %v717, %v715
    %v820 = vpack.c.b16 %v720, %v718
    %v821 = vpack.c.b16 %v721, %v719
    %v822 = vpack.c.b16 %v724, %v722
    %v823 = vpack.c.b16 %v725, %v723
    %v824 = vpack.c.b16 %v728, %v726
    %v825 = vpack.c.b16 %v729, %v727
    %v826 = vpack.c.b16 %v732, %v730
    %v827 = vpack.c.b16 %v733, %v731
    %v828 = vpack.c.b16 %v736, %v734
    %v829 = vpack.c.b16 %v737, %v735
    %v830 = vpack.c.b16 %v740, %v738
    %v831 = vpack.c.b16 %v741, %v739
    %v832 = vpack.c.b16 %v744, %v742
    %v833 = vpack.c.b16 %v745, %v743
    %v834 = vpack.c.b16 %v748, %v746
    %v835 = vpack.c.b16 %v749, %v747
    %v836 = vpack.c.b16 %v752, %v750
    %v837 = vpack.c.b16 %v753, %v751
    %v838 = vpack.c.b16 %v756, %v754
    %v839 = vpack.c.b16 %v757, %v755
    %v840 = vpack.c.b16 %v760, %v758
    %v841 = vpack.c.b16 %v761, %v759
    %v842 = vpack.c.b16 %v764, %v762
    %v843 = vpack.c.b16 %v765, %v763
    %v844 = vpack.c.b16 %v768, %v766
    %v845 = vpack.c.b16 %v769, %v767
    %v846 = vpack.c.b16 %v770, %v770
    %v847 = vpack.c.b16 %v771, %v771
    %vm922 = vcmask 719872
    %v924 = vsel %vm922, %v449, 0
    %v927 = vsel %vm922, %v454, 0
    %v930 = vsel %vm922, %v459, 0
    %v933 = vsel %vm296, %v846, 0
    %v936 = vsel %vm296, %v847, 0
    %938 = vmatprep.subr.bf16.mxu0 %v773
    %939 = vmatpush1.bf16.msra.mxu0 %v772
    %940 = vmatprep.subr.bf16.mxu0 %v775
    %941 = vmatpush1.bf16.msra.mxu0 %v774
    %942 = vmatprep.subr.bf16.mxu0 %v777
    %943 = vmatpush1.bf16.msra.mxu0 %v776
    %944 = vmatprep.subr.bf16.mxu0 %v779
    %945 = vmatpush1.bf16.msra.mxu0 %v778
    %946 = vmatprep.subr.bf16.mxu0 %v781
    %947 = vmatpush1.bf16.msra.mxu0 %v780
    %948 = vmatprep.subr.bf16.mxu0 %v783
    %949 = vmatpush1.bf16.msra.mxu0 %v782
    %950 = vmatprep.subr.bf16.mxu0 %v785
    %951 = vmatpush1.bf16.msra.mxu0 %v784
    %952 = vmatprep.subr.bf16.mxu0 %v787
    %953 = vmatpush1.bf16.msra.mxu0 %v786
    %954 = vmatprep.subr.bf16.mxu0 %v789
    %955 = vmatpush1.bf16.msra.mxu0 %v788
    %956 = vmatprep.subr.bf16.mxu0 %v791
    %957 = vmatpush1.bf16.msra.mxu0 %v790
    %958 = vmatprep.subr.bf16.mxu0 %v793
    %959 = vmatpush1.bf16.msra.mxu0 %v792
    %960 = vmatprep.subr.bf16.mxu0 %v795
    %961 = vmatpush1.bf16.msra.mxu0 %v794
    %962 = vmatprep.subr.bf16.mxu0 %v797
    %963 = vmatpush1.bf16.msra.mxu0 %v796
    %964 = vmatprep.subr.bf16.mxu0 %v799
    %965 = vmatpush1.bf16.msra.mxu0 %v798
    %966 = vmatprep.subr.bf16.mxu0 %v801
    %967 = vmatpush1.bf16.msra.mxu0 %v800
    %968 = vmatprep.subr.bf16.mxu0 %v803
    %969 = vmatpush1.bf16.msra.mxu0 %v802
    %970 = vmatprep.mubr.bf16.mxu0 %v446
    %971 = vmatmul.mubr.bf16.gmra.mrb[0].mxu0 %v445
    %v972 = vpop.f32.mrb[0].mxu0
    %v973 = vadd.f32 %v540, %v972
    %v974 = vpop.f32.mrb[0].mxu0
    %v975 = vadd.f32 %v544, %v974
    %v976 = vpop.f32.mrb[0].mxu0
    %v977 = vadd.f32 %v540, %v976
    %v978 = vpop.f32.mrb[0].mxu0
    %v979 = vadd.f32 %v544, %v978
    %980 = vmatprep.mubr.bf16.mxu0 %v451
    %981 = vmatmul.mubr.bf16.gmra.mrb[0].mxu0 %v450
    %v982 = vpop.f32.mrb[0].mxu0
    %v983 = vadd.f32 %v540, %v982
    %v984 = vpop.f32.mrb[0].mxu0
    %v985 = vadd.f32 %v544, %v984
    %v986 = vpop.f32.mrb[0].mxu0
    %v987 = vadd.f32 %v540, %v986
    %v988 = vpop.f32.mrb[0].mxu0
    %v989 = vadd.f32 %v544, %v988
    %990 = vmatprep.mubr.bf16.mxu0 %v456
    %991 = vmatmul.mubr.bf16.gmra.mrb[0].mxu0 %v455
    %v992 = vpop.f32.mrb[0].mxu0
    %v993 = vadd.f32 %v540, %v992
    %v994 = vpop.f32.mrb[0].mxu0
    %v995 = vadd.f32 %v544, %v994
    %v996 = vpop.f32.mrb[0].mxu0
    %v997 = vpop.f32.mrb[0].mxu0
    %998 = vdwg.mxu0
    %999 = vmatprep.subr.bf16.mxu0 %v805
    %1000 = vmatpush1.bf16.msra.mxu0 %v804
    %1001 = vmatprep.subr.bf16.mxu0 %v807
    %1002 = vmatpush1.bf16.msra.mxu0 %v806
    %1003 = vmatprep.subr.bf16.mxu0 %v809
    %1004 = vmatpush1.bf16.msra.mxu0 %v808
    %1005 = vmatprep.subr.bf16.mxu0 %v811
    %1006 = vmatpush1.bf16.msra.mxu0 %v810
    %1007 = vmatprep.subr.bf16.mxu0 %v813
    %1008 = vmatpush1.bf16.msra.mxu0 %v812
    %1009 = vmatprep.subr.bf16.mxu0 %v815
    %1010 = vmatpush1.bf16.msra.mxu0 %v814
    %1011 = vmatprep.subr.bf16.mxu0 %v817
    %1012 = vmatpush1.bf16.msra.mxu0 %v816
    %1013 = vmatprep.subr.bf16.mxu0 %v819
    %1014 = vmatpush1.bf16.msra.mxu0 %v818
    %1015 = vmatprep.subr.bf16.mxu0 %v821
    %1016 = vmatpush1.bf16.msra.mxu0 %v820
    %1017 = vmatprep.subr.bf16.mxu0 %v823
    %1018 = vmatpush1.bf16.msra.mxu0 %v822
    %1019 = vmatprep.subr.bf16.mxu0 %v825
    %1020 = vmatpush1.bf16.msra.mxu0 %v824
    %1021 = vmatprep.subr.bf16.mxu0 %v827
    %1022 = vmatpush1.bf16.msra.mxu0 %v826
    %1023 = vmatprep.subr.bf16.mxu0 %v829
    %1024 = vmatpush1.bf16.msra.mxu0 %v828
    %1025 = vmatprep.subr.bf16.mxu0 %v831
    %1026 = vmatpush1.bf16.msra.mxu0 %v830
    %1027 = vmatprep.subr.bf16.mxu0 %v833
    %1028 = vmatpush1.bf16.msra.mxu0 %v832
    %1029 = vmatprep.subr.bf16.mxu0 %v835
    %1030 = vmatpush1.bf16.msra.mxu0 %v834
    %1031 = vmatprep.mubr.bf16.mxu0 %v448
    %1032 = vmatmul.mubr.bf16.gmra.mrb[0].mxu0 %v447
    %v1033 = vpop.f32.mrb[0].mxu0
    %v1034 = vadd.f32 %v973, %v1033
    %v1035 = vpop.f32.mrb[0].mxu0
    %v1036 = vadd.f32 %v975, %v1035
    %v1037 = vpop.f32.mrb[0].mxu0
    %v1038 = vadd.f32 %v977, %v1037
    %v1039 = vpop.f32.mrb[0].mxu0
    %v1040 = vadd.f32 %v979, %v1039
    %1041 = vmatprep.mubr.bf16.mxu0 %v453
    %1042 = vmatmul.mubr.bf16.gmra.mrb[0].mxu0 %v452
    %v1043 = vpop.f32.mrb[0].mxu0
    %v1044 = vadd.f32 %v983, %v1043
    %v1045 = vpop.f32.mrb[0].mxu0
    %v1046 = vadd.f32 %v985, %v1045
    %v1047 = vpop.f32.mrb[0].mxu0
    %v1048 = vadd.f32 %v987, %v1047
    %v1049 = vpop.f32.mrb[0].mxu0
    %v1050 = vadd.f32 %v989, %v1049
    %1051 = vmatprep.mubr.bf16.mxu0 %v458
    %1052 = vmatmul.mubr.bf16.gmra.mrb[0].mxu0 %v457
    %v1053 = vpop.f32.mrb[0].mxu0
    %v1054 = vadd.f32 %v993, %v1053
    %v1055 = vpop.f32.mrb[0].mxu0
    %v1056 = vadd.f32 %v995, %v1055
    %v1057 = vpop.f32.mrb[0].mxu0
    %v1058 = vpop.f32.mrb[0].mxu0
    %1059 = vdwg.mxu0
    %1060 = vmatprep.subr.bf16.mxu0 %v837
    %1061 = vmatpush1.bf16.msra.mxu0 %v836
    %1062 = vmatprep.subr.bf16.mxu0 %v839
    %1063 = vmatpush1.bf16.msra.mxu0 %v838
    %1064 = vmatprep.subr.bf16.mxu0 %v841
    %1065 = vmatpush1.bf16.msra.mxu0 %v840
    %1066 = vmatprep.subr.bf16.mxu0 %v843
    %1067 = vmatpush1.bf16.msra.mxu0 %v842
    %1068 = vmatprep.subr.bf16.mxu0 %v845
    %1069 = vmatpush1.bf16.msra.mxu0 %v844
    %1070 = vmatprep.subr.bf16.mxu0 %v936
    %1071 = vmatpush1.bf16.msra.mxu0 %v933
    %1072 = vmatprep.subr.bf16.mxu0 0
    %1073 = vmatpush1.bf16.msra.mxu0 0
    %1074 = vmatprep.subr.bf16.mxu0 0
    %1075 = vmatpush1.bf16.msra.mxu0 0
    %1076 = vmatprep.subr.bf16.mxu0 0
    %1077 = vmatpush1.bf16.msra.mxu0 0
    %1078 = vmatprep.subr.bf16.mxu0 0
    %1079 = vmatpush1.bf16.msra.mxu0 0
    %1080 = vmatprep.subr.bf16.mxu0 0
    %1081 = vmatpush1.bf16.msra.mxu0 0
    %1082 = vmatprep.subr.bf16.mxu0 0
    %1083 = vmatpush1.bf16.msra.mxu0 0
    %1084 = vmatprep.subr.bf16.mxu0 0
    %1085 = vmatpush1.bf16.msra.mxu0 0
    %1086 = vmatprep.subr.bf16.mxu0 0
    %1087 = vmatpush1.bf16.msra.mxu0 0
    %1088 = vmatprep.subr.bf16.mxu0 0
    %1089 = vmatpush1.bf16.msra.mxu0 0
    %1090 = vmatprep.subr.bf16.mxu0 0
    %1091 = vmatpush1.bf16.msra.mxu0 0
    %1092 = vmatprep.mubr.bf16.mxu0 0
    %1093 = vmatmul.mubr.bf16.gmra.mrb[0].mxu0 %v924
    %v1094 = vpop.f32.mrb[0].mxu0
    %v1095 = vadd.f32 %v1034, %v1094
    %v1096 = vpop.f32.mrb[0].mxu0
    %v1097 = vadd.f32 %v1036, %v1096
    %v1098 = vpop.f32.mrb[0].mxu0
    %v1099 = vadd.f32 %v1038, %v1098
    %v1100 = vpop.f32.mrb[0].mxu0
    %v1101 = vadd.f32 %v1040, %v1100
    %1102 = vmatprep.mubr.bf16.mxu0 0
    %1103 = vmatmul.mubr.bf16.gmra.mrb[0].mxu0 %v927
    %v1104 = vpop.f32.mrb[0].mxu0
    %v1105 = vadd.f32 %v1044, %v1104
    %v1106 = vpop.f32.mrb[0].mxu0
    %v1107 = vadd.f32 %v1046, %v1106
    %v1108 = vpop.f32.mrb[0].mxu0
    %v1109 = vadd.f32 %v1048, %v1108
    %v1110 = vpop.f32.mrb[0].mxu0
    %v1111 = vadd.f32 %v1050, %v1110
    %1112 = vmatprep.mubr.bf16.mxu0 0
    %1113 = vmatmul.mubr.bf16.gmra.mrb[0].mxu0 %v930
    %v1114 = vpop.f32.mrb[0].mxu0
    %v1115 = vadd.f32 %v1054, %v1114
    %v1116 = vpop.f32.mrb[0].mxu0
    %v1117 = vadd.f32 %v1056, %v1116
    %v1118 = vpop.f32.mrb[0].mxu0
    %v1119 = vpop.f32.mrb[0].mxu0
    %1120 = vdwg.mxu0
    %1121 = vst [vmem:[#allocation5] sm:$0xff] %v1095
    %1122 = vst [vmem:[#allocation5 + $0x8] sm:$0xff] %v1097
    %1123 = vst [vmem:[#allocation5 + $0x10] sm:$0xff] %v1099
    %1124 = vst [vmem:[#allocation5 + $0x18] sm:$0xff] %v1101
    %1125 = vst [vmem:[#allocation5 + $0x20] sm:$0xff] %v1105
    %1126 = vst [vmem:[#allocation5 + $0x28] sm:$0xff] %v1107
    %1127 = vst [vmem:[#allocation5 + $0x30] sm:$0xff] %v1109
    %1128 = vst [vmem:[#allocation5 + $0x38] sm:$0xff] %v1111
    %1129 = vst [vmem:[#allocation5 + $0x40] sm:$0xff] %v1115
    %1130 = vst [vmem:[#allocation5 + $0x48] sm:$0xff] %v1117
    %v1131 = vld [vmem:[%s3] sm:$0xff]
    %v1132 = vld [vmem:[%s3 + $0x8] sm:$0xff]
    %v1133 = vld [vmem:[%s3 + $0x10] sm:$0xff]
    %v1134 = vld [vmem:[%s3 + $0x18] sm:$0xff]
    %v1135 = vld [vmem:[%s3 + $0x20] sm:$0xff]
    %v1136 = vld [vmem:[%s3 + $0x28] sm:$0xff]
    %v1137 = vld [vmem:[%s3 + $0x30] sm:$0xff]
    %v1138 = vld [vmem:[%s3 + $0x38] sm:$0xff]
    %v1139 = vld [vmem:[%s3 + $0x40] sm:$0xff]
    %v1140 = vld [vmem:[%s3 + $0x48] sm:$0xff]
    %v1141 = vld [vmem:[%s3 + $0x50] sm:$0xff]
    %v1142 = vld [vmem:[%s3 + $0x58] sm:$0xff]
    %v1143 = vld [vmem:[%s3 + $0x60] sm:$0xff]
    %v1144 = vld [vmem:[%s3 + $0x68] sm:$0xff]
    %v1145 = vld [vmem:[%s3 + $0x70] sm:$0xff]
    %v1146 = vld [vmem:[%s3 + $0x78] sm:$0xff]
    %v1147 = vld [vmem:[%s3 + $0x80] sm:$0xff]
    %v1148 = vld [vmem:[%s3 + $0x88] sm:$0xff]
    %v1149 = vld [vmem:[%s3 + $0x90] sm:$0xff]
    %v1150 = vld [vmem:[%s3 + $0x98] sm:$0xff]
    %v1151 = vld [vmem:[%s3 + $0xa0] sm:$0xff]
    %v1152 = vld [vmem:[%s3 + $0xa8] sm:$0xff]
    %v1153 = vld [vmem:[%s3 + $0xb0] sm:$0xff]
    %v1154 = vld [vmem:[%s3 + $0xb8] sm:$0xff]
    %v1155 = vld [vmem:[%s3 + $0xc0] sm:$0xff]
    %v1156 = vld [vmem:[%s3 + $0xc8] sm:$0xff]
    %v1157 = vld [vmem:[%s3 + $0xd0] sm:$0xff]
    %v1158 = vld [vmem:[%s3 + $0xd8] sm:$0xff]
    %v1159 = vld [vmem:[%s3 + $0xe0] sm:$0xff]
    %v1160 = vld [vmem:[%s3 + $0xe8] sm:$0xff]
    %v1161 = vld [vmem:[%s3 + $0xf0] sm:$0xff]
    %v1162 = vld [vmem:[%s3 + $0xf8] sm:$0xff]
    %v1163 = vld [vmem:[%s3 + $0x100] sm:$0xff]
    %v1164 = vld [vmem:[%s3 + $0x108] sm:$0xff]
    %v1165 = vld [vmem:[%s3 + $0x110] sm:$0xff]
    %v1166 = vld [vmem:[%s3 + $0x118] sm:$0xff]
    %v1167 = vld [vmem:[%s3 + $0x120] sm:$0xff]
    %v1168 = vld [vmem:[%s3 + $0x128] sm:$0xff]
    %v1169 = vld [vmem:[%s3 + $0x130] sm:$0xff]
    %v1170 = vld [vmem:[%s3 + $0x138] sm:$0xff]
    %v1171 = vpack.c.bf16 %v1133, %v1131
    %v1172 = vpack.c.bf16 %v1134, %v1132
    %v1173 = vpack.c.bf16 %v1137, %v1135
    %v1174 = vpack.c.bf16 %v1138, %v1136
    %v1175 = vpack.c.bf16 %v1141, %v1139
    %v1176 = vpack.c.bf16 %v1142, %v1140
    %v1177 = vpack.c.bf16 %v1145, %v1143
    %v1178 = vpack.c.bf16 %v1146, %v1144
    %v1179 = vpack.c.bf16 %v1149, %v1147
    %v1180 = vpack.c.bf16 %v1150, %v1148
    %v1181 = vpack.c.bf16 %v1153, %v1151
    %v1182 = vpack.c.bf16 %v1154, %v1152
    %v1183 = vpack.c.bf16 %v1157, %v1155
    %v1184 = vpack.c.bf16 %v1158, %v1156
    %v1185 = vpack.c.bf16 %v1161, %v1159
    %v1186 = vpack.c.bf16 %v1162, %v1160
    %v1187 = vpack.c.bf16 %v1165, %v1163
    %v1188 = vpack.c.bf16 %v1166, %v1164
    %v1189 = vpack.c.bf16 %v1169, %v1167
    %v1190 = vpack.c.bf16 %v1170, %v1168
    %v1191 = vld [vmem:[%s13] sm:$0xff]
    %v1192 = vld [vmem:[%s13 + $0x8] sm:$0xff]
    %v1193 = vld [vmem:[%s13 + $0x10] sm:$0xff]
    %v1194 = vld [vmem:[%s13 + $0x18] sm:$0xff]
    %v1195 = vld [vmem:[%s13 + $0x20] sm:$0xff]
    %v1196 = vld [vmem:[%s13 + $0x28] sm:$0xff]
    %v1197 = vld [vmem:[%s13 + $0x30] sm:$0xff]
    %v1198 = vld [vmem:[%s13 + $0x38] sm:$0xff]
    %v1199 = vld [vmem:[%s13 + $0x40] sm:$0xff]
    %v1200 = vld [vmem:[%s13 + $0x48] sm:$0xff]
    %v1201 = vld [vmem:[%s13 + $0x50] sm:$0xff]
    %v1202 = vld [vmem:[%s13 + $0x58] sm:$0xff]
    %v1203 = vld [vmem:[%s13 + $0x60] sm:$0xff]
    %v1204 = vld [vmem:[%s13 + $0x68] sm:$0xff]
    %v1205 = vld [vmem:[%s13 + $0x70] sm:$0xff]
    %v1206 = vld [vmem:[%s13 + $0x78] sm:$0xff]
    %v1207 = vld [vmem:[%s13 + $0x80] sm:$0xff]
    %v1208 = vld [vmem:[%s13 + $0x88] sm:$0xff]
    %v1209 = vld [vmem:[%s13 + $0x90] sm:$0x77]
    %v1210 = vld [vmem:[%s14] sm:$0x3]
    %v1212 = vlaneseq
    %v1213 = vshrl.u32 %v1212, 7
    %v1214 = vsub.s32 0, %v1213
    %v1215 = vrot.slane %v1210, %v1214
    %v1216 = vlaneseq
    %v1217 = vshrl.u32 %v1216, 7
    %v1218 = vsub.s32 1, %v1217
    %v1219 = vrot.slane %v1210, %v1218
    %v1241 = vunpack.c.l.b16 %v1191
    %v1242 = vunpack.c.h.b16 %v1191
    %v1243 = vunpack.c.l.b16 %v1192
    %v1244 = vunpack.c.h.b16 %v1192
    %v1245 = vunpack.c.l.b16 %v1193
    %v1246 = vunpack.c.h.b16 %v1193
    %v1247 = vunpack.c.l.b16 %v1194
    %v1248 = vunpack.c.h.b16 %v1194
    %v1249 = vunpack.c.l.b16 %v1195
    %v1250 = vunpack.c.h.b16 %v1195
    %v1251 = vunpack.c.l.b16 %v1196
    %v1252 = vunpack.c.h.b16 %v1196
    %v1253 = vunpack.c.l.b16 %v1197
    %v1254 = vunpack.c.h.b16 %v1197
    %v1255 = vunpack.c.l.b16 %v1198
    %v1256 = vunpack.c.h.b16 %v1198
    %v1257 = vunpack.c.l.b16 %v1199
    %v1258 = vunpack.c.h.b16 %v1199
    %v1259 = vunpack.c.l.b16 %v1200
    %v1260 = vunpack.c.h.b16 %v1200
    %v1261 = vunpack.c.l.b16 %v1201
    %v1262 = vunpack.c.h.b16 %v1201
    %v1263 = vunpack.c.l.b16 %v1202
    %v1264 = vunpack.c.h.b16 %v1202
    %v1265 = vunpack.c.l.b16 %v1203
    %v1266 = vunpack.c.h.b16 %v1203
    %v1267 = vunpack.c.l.b16 %v1204
    %v1268 = vunpack.c.h.b16 %v1204
    %v1269 = vunpack.c.l.b16 %v1205
    %v1270 = vunpack.c.h.b16 %v1205
    %v1271 = vunpack.c.l.b16 %v1206
    %v1272 = vunpack.c.h.b16 %v1206
    %v1273 = vunpack.c.l.b16 %v1207
    %v1274 = vunpack.c.h.b16 %v1207
    %v1275 = vunpack.c.l.b16 %v1208
    %v1276 = vunpack.c.h.b16 %v1208
    %v1277 = vunpack.c.l.b16 %v1209
    %v1278 = vunpack.c.h.b16 %v1209
    %v1279 = vpack.c.b16 %v1243, %v1241
    %v1280 = vpack.c.b16 %v1244, %v1242
    %v1281 = vpack.c.b16 %v1247, %v1245
    %v1282 = vpack.c.b16 %v1248, %v1246
    %v1283 = vpack.c.b16 %v1251, %v1249
    %v1284 = vpack.c.b16 %v1252, %v1250
    %v1285 = vpack.c.b16 %v1255, %v1253
    %v1286 = vpack.c.b16 %v1256, %v1254
    %v1287 = vpack.c.b16 %v1259, %v1257
    %v1288 = vpack.c.b16 %v1260, %v1258
    %v1289 = vpack.c.b16 %v1263, %v1261
    %v1290 = vpack.c.b16 %v1264, %v1262
    %v1291 = vpack.c.b16 %v1267, %v1265
    %v1292 = vpack.c.b16 %v1268, %v1266
    %v1293 = vpack.c.b16 %v1271, %v1269
    %v1294 = vpack.c.b16 %v1272, %v1270
    %v1295 = vpack.c.b16 %v1275, %v1273
    %v1296 = vpack.c.b16 %v1276, %v1274
    %v1297 = vpack.c.b16 %v1277, %v1277
    %v1298 = vpack.c.b16 %v1278, %v1278
    %vm1317 = vcmask 179200
    %v1319 = vsel %vm1317, %v1172, 0
    %v1322 = vsel %vm1317, %v1174, 0
    %v1325 = vsel %vm1317, %v1176, 0
    %v1328 = vsel %vm1317, %v1178, 0
    %v1331 = vsel %vm1317, %v1180, 0
    %v1334 = vsel %vm1317, %v1182, 0
    %v1337 = vsel %vm1317, %v1184, 0
    %v1340 = vsel %vm1317, %v1186, 0
    %v1343 = vsel %vm1317, %v1188, 0
    %v1346 = vsel %vm1317, %v1190, 0
    %vm1348 = vcmask 1042432
    %v1350 = vsel %vm1348, %v1297, 0
    %v1353 = vsel %vm1348, %v1298, 0
    %1355 = vmatprep.subr.bf16.mxu0 %v1280
    %1356 = vmatpush1.bf16.msra.mxu0 %v1279
    %1357 = vmatprep.subr.bf16.mxu0 %v1282
    %1358 = vmatpush1.bf16.msra.mxu0 %v1281
    %1359 = vmatprep.subr.bf16.mxu0 %v1284
    %1360 = vmatpush1.bf16.msra.mxu0 %v1283
    %1361 = vmatprep.subr.bf16.mxu0 %v1286
    %1362 = vmatpush1.bf16.msra.mxu0 %v1285
    %1363 = vmatprep.subr.bf16.mxu0 %v1288
    %1364 = vmatpush1.bf16.msra.mxu0 %v1287
    %1365 = vmatprep.subr.bf16.mxu0 %v1290
    %1366 = vmatpush1.bf16.msra.mxu0 %v1289
    %1367 = vmatprep.subr.bf16.mxu0 %v1292
    %1368 = vmatpush1.bf16.msra.mxu0 %v1291
    %1369 = vmatprep.subr.bf16.mxu0 %v1294
    %1370 = vmatpush1.bf16.msra.mxu0 %v1293
    %1371 = vmatprep.subr.bf16.mxu0 %v1296
    %1372 = vmatpush1.bf16.msra.mxu0 %v1295
    %1373 = vmatprep.subr.bf16.mxu0 %v1353
    %1374 = vmatpush1.bf16.msra.mxu0 %v1350
    %1375 = vmatprep.subr.bf16.mxu0 0
    %1376 = vmatpush1.bf16.msra.mxu0 0
    %1377 = vmatprep.subr.bf16.mxu0 0
    %1378 = vmatpush1.bf16.msra.mxu0 0
    %1379 = vmatprep.subr.bf16.mxu0 0
    %1380 = vmatpush1.bf16.msra.mxu0 0
    %1381 = vmatprep.subr.bf16.mxu0 0
    %1382 = vmatpush1.bf16.msra.mxu0 0
    %1383 = vmatprep.subr.bf16.mxu0 0
    %1384 = vmatpush1.bf16.msra.mxu0 0
    %1385 = vmatprep.subr.bf16.mxu0 0
    %1386 = vmatpush1.bf16.msra.mxu0 0
    %1387 = vmatprep.mubr.bf16.mxu0 %v1319
    %1388 = vmatmul.mubr.bf16.gmra.mrb[0].mxu0 %v1171
    %v1389 = vpop.f32.mrb[0].mxu0
    %v1390 = vadd.f32 %v1215, %v1389
    %v1391 = vpop.f32.mrb[0].mxu0
    %v1392 = vadd.f32 %v1219, %v1391
    %v1393 = vpop.f32.mrb[0].mxu0
    %v1394 = vadd.f32 %v1215, %v1393
    %v1395 = vpop.f32.mrb[0].mxu0
    %v1396 = vadd.f32 %v1219, %v1395
    %1397 = vmatprep.mubr.bf16.mxu0 %v1322
    %1398 = vmatmul.mubr.bf16.gmra.mrb[0].mxu0 %v1173
    %v1399 = vpop.f32.mrb[0].mxu0
    %v1400 = vadd.f32 %v1215, %v1399
    %v1401 = vpop.f32.mrb[0].mxu0
    %v1402 = vadd.f32 %v1219, %v1401
    %v1403 = vpop.f32.mrb[0].mxu0
    %v1404 = vadd.f32 %v1215, %v1403
    %v1405 = vpop.f32.mrb[0].mxu0
    %v1406 = vadd.f32 %v1219, %v1405
    %1407 = vmatprep.mubr.bf16.mxu0 %v1325
    %1408 = vmatmul.mubr.bf16.gmra.mrb[0].mxu0 %v1175
    %v1409 = vpop.f32.mrb[0].mxu0
    %v1410 = vadd.f32 %v1215, %v1409
    %v1411 = vpop.f32.mrb[0].mxu0
    %v1412 = vadd.f32 %v1219, %v1411
    %v1413 = vpop.f32.mrb[0].mxu0
    %v1414 = vadd.f32 %v1215, %v1413
    %v1415 = vpop.f32.mrb[0].mxu0
    %v1416 = vadd.f32 %v1219, %v1415
    %1417 = vmatprep.mubr.bf16.mxu0 %v1328
    %1418 = vmatmul.mubr.bf16.gmra.mrb[0].mxu0 %v1177
    %v1419 = vpop.f32.mrb[0].mxu0
    %v1420 = vadd.f32 %v1215, %v1419
    %v1421 = vpop.f32.mrb[0].mxu0
    %v1422 = vadd.f32 %v1219, %v1421
    %v1423 = vpop.f32.mrb[0].mxu0
    %v1424 = vadd.f32 %v1215, %v1423
    %v1425 = vpop.f32.mrb[0].mxu0
    %v1426 = vadd.f32 %v1219, %v1425
    %1427 = vmatprep.mubr.bf16.mxu0 %v1331
    %1428 = vmatmul.mubr.bf16.gmra.mrb[0].mxu0 %v1179
    %v1429 = vpop.f32.mrb[0].mxu0
    %v1430 = vadd.f32 %v1215, %v1429
    %v1431 = vpop.f32.mrb[0].mxu0
    %v1432 = vadd.f32 %v1219, %v1431
    %v1433 = vpop.f32.mrb[0].mxu0
    %v1434 = vadd.f32 %v1215, %v1433
    %v1435 = vpop.f32.mrb[0].mxu0
    %v1436 = vadd.f32 %v1219, %v1435
    %1437 = vmatprep.mubr.bf16.mxu0 %v1334
    %1438 = vmatmul.mubr.bf16.gmra.mrb[0].mxu0 %v1181
    %v1439 = vpop.f32.mrb[0].mxu0
    %v1440 = vadd.f32 %v1215, %v1439
    %v1441 = vpop.f32.mrb[0].mxu0
    %v1442 = vadd.f32 %v1219, %v1441
    %v1443 = vpop.f32.mrb[0].mxu0
    %v1444 = vadd.f32 %v1215, %v1443
    %v1445 = vpop.f32.mrb[0].mxu0
    %v1446 = vadd.f32 %v1219, %v1445
    %1447 = vmatprep.mubr.bf16.mxu0 %v1337
    %1448 = vmatmul.mubr.bf16.gmra.mrb[0].mxu0 %v1183
    %v1449 = vpop.f32.mrb[0].mxu0
    %v1450 = vadd.f32 %v1215, %v1449
    %v1451 = vpop.f32.mrb[0].mxu0
    %v1452 = vadd.f32 %v1219, %v1451
    %v1453 = vpop.f32.mrb[0].mxu0
    %v1454 = vadd.f32 %v1215, %v1453
    %v1455 = vpop.f32.mrb[0].mxu0
    %v1456 = vadd.f32 %v1219, %v1455
    %1457 = vmatprep.mubr.bf16.mxu0 %v1340
    %1458 = vmatmul.mubr.bf16.gmra.mrb[0].mxu0 %v1185
    %v1459 = vpop.f32.mrb[0].mxu0
    %v1460 = vadd.f32 %v1215, %v1459
    %v1461 = vpop.f32.mrb[0].mxu0
    %v1462 = vadd.f32 %v1219, %v1461
    %v1463 = vpop.f32.mrb[0].mxu0
    %v1464 = vadd.f32 %v1215, %v1463
    %v1465 = vpop.f32.mrb[0].mxu0
    %v1466 = vadd.f32 %v1219, %v1465
    %1467 = vmatprep.mubr.bf16.mxu0 %v1343
    %1468 = vmatmul.mubr.bf16.gmra.mrb[0].mxu0 %v1187
    %v1469 = vpop.f32.mrb[0].mxu0
    %v1470 = vadd.f32 %v1215, %v1469
    %v1471 = vpop.f32.mrb[0].mxu0
    %v1472 = vadd.f32 %v1219, %v1471
    %v1473 = vpop.f32.mrb[0].mxu0
    %v1474 = vadd.f32 %v1215, %v1473
    %v1475 = vpop.f32.mrb[0].mxu0
    %v1476 = vadd.f32 %v1219, %v1475
    %1477 = vmatprep.mubr.bf16.mxu0 %v1346
    %1478 = vmatmul.mubr.bf16.gmra.mrb[0].mxu0 %v1189
    %v1479 = vpop.f32.mrb[0].mxu0
    %v1480 = vadd.f32 %v1215, %v1479
    %v1481 = vpop.f32.mrb[0].mxu0
    %v1482 = vadd.f32 %v1219, %v1481
    %v1483 = vpop.f32.mrb[0].mxu0
    %v1484 = vadd.f32 %v1215, %v1483
    %v1485 = vpop.f32.mrb[0].mxu0
    %v1486 = vadd.f32 %v1219, %v1485
    %1487 = vdwg.mxu0
    %1488 = vst [vmem:[#allocation6] sm:$0xff] %v1390
    %1489 = vst [vmem:[#allocation6 + $0x8] sm:$0xff] %v1392
    %1490 = vst [vmem:[#allocation6 + $0x10] sm:$0xff] %v1394
    %1491 = vst [vmem:[#allocation6 + $0x18] sm:$0xff] %v1396
    %1492 = vst [vmem:[#allocation6 + $0x20] sm:$0xff] %v1400
    %1493 = vst [vmem:[#allocation6 + $0x28] sm:$0xff] %v1402
    %1494 = vst [vmem:[#allocation6 + $0x30] sm:$0xff] %v1404
    %1495 = vst [vmem:[#allocation6 + $0x38] sm:$0xff] %v1406
    %1496 = vst [vmem:[#allocation6 + $0x40] sm:$0xff] %v1410
    %1497 = vst [vmem:[#allocation6 + $0x48] sm:$0xff] %v1412
    %1498 = vst [vmem:[#allocation6 + $0x50] sm:$0xff] %v1414
    %1499 = vst [vmem:[#allocation6 + $0x58] sm:$0xff] %v1416
    %1500 = vst [vmem:[#allocation6 + $0x60] sm:$0xff] %v1420
    %1501 = vst [vmem:[#allocation6 + $0x68] sm:$0xff] %v1422
    %1502 = vst [vmem:[#allocation6 + $0x70] sm:$0xff] %v1424
    %1503 = vst [vmem:[#allocation6 + $0x78] sm:$0xff] %v1426
    %1504 = vst [vmem:[#allocation6 + $0x80] sm:$0xff] %v1430
    %1505 = vst [vmem:[#allocation6 + $0x88] sm:$0xff] %v1432
    %1506 = vst [vmem:[#allocation6 + $0x90] sm:$0xff] %v1434
    %1507 = vst [vmem:[#allocation6 + $0x98] sm:$0xff] %v1436
    %1508 = vst [vmem:[#allocation6 + $0xa0] sm:$0xff] %v1440
    %1509 = vst [vmem:[#allocation6 + $0xa8] sm:$0xff] %v1442
    %1510 = vst [vmem:[#allocation6 + $0xb0] sm:$0xff] %v1444
    %1511 = vst [vmem:[#allocation6 + $0xb8] sm:$0xff] %v1446
    %1512 = vst [vmem:[#allocation6 + $0xc0] sm:$0xff] %v1450
    %1513 = vst [vmem:[#allocation6 + $0xc8] sm:$0xff] %v1452
    %1514 = vst [vmem:[#allocation6 + $0xd0] sm:$0xff] %v1454
    %1515 = vst [vmem:[#allocation6 + $0xd8] sm:$0xff] %v1456
    %1516 = vst [vmem:[#allocation6 + $0xe0] sm:$0xff] %v1460
    %1517 = vst [vmem:[#allocation6 + $0xe8] sm:$0xff] %v1462
    %1518 = vst [vmem:[#allocation6 + $0xf0] sm:$0xff] %v1464
    %1519 = vst [vmem:[#allocation6 + $0xf8] sm:$0xff] %v1466
    %1520 = vst [vmem:[#allocation6 + $0x100] sm:$0xff] %v1470
    %1521 = vst [vmem:[#allocation6 + $0x108] sm:$0xff] %v1472
    %1522 = vst [vmem:[#allocation6 + $0x110] sm:$0xff] %v1474
    %1523 = vst [vmem:[#allocation6 + $0x118] sm:$0xff] %v1476
    %1524 = vst [vmem:[#allocation6 + $0x120] sm:$0xff] %v1480
    %1525 = vst [vmem:[#allocation6 + $0x128] sm:$0xff] %v1482
    %1526 = vst [vmem:[#allocation6 + $0x130] sm:$0xff] %v1484
    %1527 = vst [vmem:[#allocation6 + $0x138] sm:$0xff] %v1486
    %v1528 = vld [vmem:[%s6] sm:$0xff]
    %v1529 = vld [vmem:[%s6 + $0x8] sm:$0xff]
    %v1530 = vld [vmem:[%s6 + $0x10] sm:$0xff]
    %v1531 = vld [vmem:[%s6 + $0x18] sm:$0xff]
    %v1532 = vld [vmem:[%s6 + $0x20] sm:$0xff]
    %v1533 = vld [vmem:[%s6 + $0x28] sm:$0xff]
    %v1534 = vld [vmem:[%s6 + $0x30] sm:$0xff]
    %v1535 = vld [vmem:[%s6 + $0x38] sm:$0xff]
    %v1536 = vld [vmem:[%s6 + $0x40] sm:$0xff]
    %v1537 = vld [vmem:[%s6 + $0x48] sm:$0xff]
    %v1538 = vld [vmem:[%s6 + $0x50] sm:$0xff]
    %v1539 = vld [vmem:[%s6 + $0x58] sm:$0xff]
    %v1540 = vld [vmem:[%s6 + $0x60] sm:$0xff]
    %v1541 = vld [vmem:[%s6 + $0x68] sm:$0xff]
    %v1542 = vld [vmem:[%s6 + $0x70] sm:$0xff]
    %v1543 = vld [vmem:[%s6 + $0x78] sm:$0xff]
    %v1544 = vld [vmem:[%s6 + $0x80] sm:$0xff]
    %v1545 = vld [vmem:[%s6 + $0x88] sm:$0xff]
    %v1546 = vld [vmem:[%s6 + $0x90] sm:$0xff]
    %v1547 = vld [vmem:[%s6 + $0x98] sm:$0xff]
    %v1548 = vld [vmem:[%s6 + $0xa0] sm:$0xff]
    %v1549 = vld [vmem:[%s6 + $0xa8] sm:$0xff]
    %v1550 = vld [vmem:[%s6 + $0xb0] sm:$0xff]
    %v1551 = vld [vmem:[%s6 + $0xb8] sm:$0xff]
    %v1552 = vld [vmem:[%s6 + $0xc0] sm:$0xff]
    %v1553 = vld [vmem:[%s6 + $0xc8] sm:$0xff]
    %v1554 = vld [vmem:[%s6 + $0xd0] sm:$0xff]
    %v1555 = vld [vmem:[%s6 + $0xd8] sm:$0xff]
    %v1556 = vld [vmem:[%s6 + $0xe0] sm:$0xff]
    %v1557 = vld [vmem:[%s6 + $0xe8] sm:$0xff]
    %v1558 = vld [vmem:[%s6 + $0xf0] sm:$0xff]
    %v1559 = vld [vmem:[%s6 + $0xf8] sm:$0xff]
    %v1592 = vunpack.c.l.b16 %v1528
    %v1593 = vunpack.c.h.b16 %v1528
    %v1594 = vunpack.c.l.b16 %v1529
    %v1595 = vunpack.c.h.b16 %v1529
    %v1596 = vunpack.c.l.b16 %v1530
    %v1597 = vunpack.c.h.b16 %v1530
    %v1598 = vunpack.c.l.b16 %v1531
    %v1599 = vunpack.c.h.b16 %v1531
    %v1600 = vunpack.c.l.b16 %v1532
    %v1601 = vunpack.c.h.b16 %v1532
    %v1602 = vunpack.c.l.b16 %v1533
    %v1603 = vunpack.c.h.b16 %v1533
    %v1604 = vunpack.c.l.b16 %v1534
    %v1605 = vunpack.c.h.b16 %v1534
    %v1606 = vunpack.c.l.b16 %v1535
    %v1607 = vunpack.c.h.b16 %v1535
    %v1608 = vunpack.c.l.b16 %v1536
    %v1609 = vunpack.c.h.b16 %v1536
    %v1610 = vunpack.c.l.b16 %v1537
    %v1611 = vunpack.c.h.b16 %v1537
    %v1612 = vunpack.c.l.b16 %v1538
    %v1613 = vunpack.c.h.b16 %v1538
    %v1614 = vunpack.c.l.b16 %v1539
    %v1615 = vunpack.c.h.b16 %v1539
    %v1616 = vunpack.c.l.b16 %v1540
    %v1617 = vunpack.c.h.b16 %v1540
    %v1618 = vunpack.c.l.b16 %v1541
    %v1619 = vunpack.c.h.b16 %v1541
    %v1620 = vunpack.c.l.b16 %v1542
    %v1621 = vunpack.c.h.b16 %v1542
    %v1622 = vunpack.c.l.b16 %v1543
    %v1623 = vunpack.c.h.b16 %v1543
    %v1624 = vunpack.c.l.b16 %v1544
    %v1625 = vunpack.c.h.b16 %v1544
    %v1626 = vunpack.c.l.b16 %v1545
    %v1627 = vunpack.c.h.b16 %v1545
    %v1628 = vunpack.c.l.b16 %v1546
    %v1629 = vunpack.c.h.b16 %v1546
    %v1630 = vunpack.c.l.b16 %v1547
    %v1631 = vunpack.c.h.b16 %v1547
    %v1632 = vunpack.c.l.b16 %v1548
    %v1633 = vunpack.c.h.b16 %v1548
    %v1634 = vunpack.c.l.b16 %v1549
    %v1635 = vunpack.c.h.b16 %v1549
    %v1636 = vunpack.c.l.b16 %v1550
    %v1637 = vunpack.c.h.b16 %v1550
    %v1638 = vunpack.c.l.b16 %v1551
    %v1639 = vunpack.c.h.b16 %v1551
    %v1640 = vunpack.c.l.b16 %v1552
    %v1641 = vunpack.c.h.b16 %v1552
    %v1642 = vunpack.c.l.b16 %v1553
    %v1643 = vunpack.c.h.b16 %v1553
    %v1644 = vunpack.c.l.b16 %v1554
    %v1645 = vunpack.c.h.b16 %v1554
    %v1646 = vunpack.c.l.b16 %v1555
    %v1647 = vunpack.c.h.b16 %v1555
    %v1648 = vunpack.c.l.b16 %v1556
    %v1649 = vunpack.c.h.b16 %v1556
    %v1650 = vunpack.c.l.b16 %v1557
    %v1651 = vunpack.c.h.b16 %v1557
    %v1652 = vunpack.c.l.b16 %v1558
    %v1653 = vunpack.c.h.b16 %v1558
    %v1654 = vunpack.c.l.b16 %v1559
    %v1655 = vunpack.c.h.b16 %v1559
    %v1656 = vpack.c.b16 %v1594, %v1592
    %v1657 = vpack.c.b16 %v1595, %v1593
    %v1658 = vpack.c.b16 %v1598, %v1596
    %v1659 = vpack.c.b16 %v1599, %v1597
    %v1660 = vpack.c.b16 %v1602, %v1600
    %v1661 = vpack.c.b16 %v1603, %v1601
    %v1662 = vpack.c.b16 %v1606, %v1604
    %v1663 = vpack.c.b16 %v1607, %v1605
    %v1664 = vpack.c.b16 %v1610, %v1608
    %v1665 = vpack.c.b16 %v1611, %v1609
    %v1666 = vpack.c.b16 %v1614, %v1612
    %v1667 = vpack.c.b16 %v1615, %v1613
    %v1668 = vpack.c.b16 %v1618, %v1616
    %v1669 = vpack.c.b16 %v1619, %v1617
    %v1670 = vpack.c.b16 %v1622, %v1620
    %v1671 = vpack.c.b16 %v1623, %v1621
    %v1672 = vpack.c.b16 %v1626, %v1624
    %v1673 = vpack.c.b16 %v1627, %v1625
    %v1674 = vpack.c.b16 %v1630, %v1628
    %v1675 = vpack.c.b16 %v1631, %v1629
    %v1676 = vpack.c.b16 %v1634, %v1632
    %v1677 = vpack.c.b16 %v1635, %v1633
    %v1678 = vpack.c.b16 %v1638, %v1636
    %v1679 = vpack.c.b16 %v1639, %v1637
    %v1680 = vpack.c.b16 %v1642, %v1640
    %v1681 = vpack.c.b16 %v1643, %v1641
    %v1682 = vpack.c.b16 %v1646, %v1644
    %v1683 = vpack.c.b16 %v1647, %v1645
    %v1684 = vpack.c.b16 %v1650, %v1648
    %v1685 = vpack.c.b16 %v1651, %v1649
    %v1686 = vpack.c.b16 %v1654, %v1652
    %v1687 = vpack.c.b16 %v1655, %v1653
    %1720 = vmatprep.subr.bf16.mxu0 %v1657
    %1721 = vmatpush1.bf16.msra.mxu0 %v1656
    %1722 = vmatprep.subr.bf16.mxu0 %v1659
    %1723 = vmatpush1.bf16.msra.mxu0 %v1658
    %1724 = vmatprep.subr.bf16.mxu0 %v1661
    %1725 = vmatpush1.bf16.msra.mxu0 %v1660
    %1726 = vmatprep.subr.bf16.mxu0 %v1663
    %1727 = vmatpush1.bf16.msra.mxu0 %v1662
    %1728 = vmatprep.subr.bf16.mxu0 %v1665
    %1729 = vmatpush1.bf16.msra.mxu0 %v1664
    %1730 = vmatprep.subr.bf16.mxu0 %v1667
    %1731 = vmatpush1.bf16.msra.mxu0 %v1666
    %1732 = vmatprep.subr.bf16.mxu0 %v1669
    %1733 = vmatpush1.bf16.msra.mxu0 %v1668
    %1734 = vmatprep.subr.bf16.mxu0 %v1671
    %1735 = vmatpush1.bf16.msra.mxu0 %v1670
    %1736 = vmatprep.subr.bf16.mxu0 %v1673
    %1737 = vmatpush1.bf16.msra.mxu0 %v1672
    %1738 = vmatprep.subr.bf16.mxu0 %v1675
    %1739 = vmatpush1.bf16.msra.mxu0 %v1674
    %1740 = vmatprep.subr.bf16.mxu0 %v1677
    %1741 = vmatpush1.bf16.msra.mxu0 %v1676
    %1742 = vmatprep.subr.bf16.mxu0 %v1679
    %1743 = vmatpush1.bf16.msra.mxu0 %v1678
    %1744 = vmatprep.subr.bf16.mxu0 %v1681
    %1745 = vmatpush1.bf16.msra.mxu0 %v1680
    %1746 = vmatprep.subr.bf16.mxu0 %v1683
    %1747 = vmatpush1.bf16.msra.mxu0 %v1682
    %1748 = vmatprep.subr.bf16.mxu0 %v1685
    %1749 = vmatpush1.bf16.msra.mxu0 %v1684
    %1750 = vmatprep.subr.bf16.mxu0 %v1687
    %1751 = vmatpush1.bf16.msra.mxu0 %v1686
    %1752 = vmatprep.mubr.bf16.mxu0 0
    %1753 = vmatmul.mubr.bf16.gmra.mrb[0].mxu0 0
    %v1754 = vpop.f32.mrb[0].mxu0
    %v1755 = vadd.f32 0.0, %v1754
    %v1756 = vpop.f32.mrb[0].mxu0
    %v1757 = vadd.f32 0.0, %v1756
    %v1758 = vpop.f32.mrb[0].mxu0
    %v1759 = vpop.f32.mrb[0].mxu0
    %1760 = vdwg.mxu0
    %v1761 = vld [vmem:[#allocation2] sm:$0xff]
    %v1762 = vadd.f32 %v1761, %v1755
    %v1763 = vtanh.pop %v1762
    %v1764 = vld [vmem:[#allocation2 + $0xb8] sm:$0xff]
    %v1765 = vadd.f32 %v1764, %v1757
    %v1766 = vtanh.pop %v1765
    %s1767 = sld [smem:[#allocation7]]
    %v1768 = vstv %s1767
    %v1769 = vmul.f32 %v1763, %v1768
    %1770 = vst [vmem:[#allocation3] sm:$0xff] %v1769
    %s1771 = sld [smem:[#allocation7 + $0xb]]
    %v1772 = vstv %s1771
    %v1773 = vmul.f32 %v1766, %v1772
    %1774 = vst [vmem:[#allocation3 + $0xb8] sm:$0xff] %v1773
    %v1775 = vpack.c.bf16 %v1763, %v1763
    %v1776 = vpack.c.bf16 %v1766, %v1766
    %v1777 = vld [vmem:[%s6] sm:$0xff]
    %v1778 = vld [vmem:[%s6 + $0x8] sm:$0xff]
    %v1779 = vld [vmem:[%s6 + $0x10] sm:$0xff]
    %v1780 = vld [vmem:[%s6 + $0x18] sm:$0xff]
    %v1781 = vld [vmem:[%s6 + $0x20] sm:$0xff]
    %v1782 = vld [vmem:[%s6 + $0x28] sm:$0xff]
    %v1783 = vld [vmem:[%s6 + $0x30] sm:$0xff]
    %v1784 = vld [vmem:[%s6 + $0x38] sm:$0xff]
    %v1785 = vld [vmem:[%s6 + $0x40] sm:$0xff]
    %v1786 = vld [vmem:[%s6 + $0x48] sm:$0xff]
    %v1787 = vld [vmem:[%s6 + $0x50] sm:$0xff]
    %v1788 = vld [vmem:[%s6 + $0x58] sm:$0xff]
    %v1789 = vld [vmem:[%s6 + $0x60] sm:$0xff]
    %v1790 = vld [vmem:[%s6 + $0x68] sm:$0xff]
    %v1791 = vld [vmem:[%s6 + $0x70] sm:$0xff]
    %v1792 = vld [vmem:[%s6 + $0x78] sm:$0xff]
    %v1793 = vld [vmem:[%s6 + $0x80] sm:$0xff]
    %v1794 = vld [vmem:[%s6 + $0x88] sm:$0xff]
    %v1795 = vld [vmem:[%s6 + $0x90] sm:$0xff]
    %v1796 = vld [vmem:[%s6 + $0x98] sm:$0xff]
    %v1797 = vld [vmem:[%s6 + $0xa0] sm:$0xff]
    %v1798 = vld [vmem:[%s6 + $0xa8] sm:$0xff]
    %v1799 = vld [vmem:[%s6 + $0xb0] sm:$0xff]
    %v1800 = vld [vmem:[%s6 + $0xb8] sm:$0xff]
    %v1801 = vld [vmem:[%s6 + $0xc0] sm:$0xff]
    %v1802 = vld [vmem:[%s6 + $0xc8] sm:$0xff]
    %v1803 = vld [vmem:[%s6 + $0xd0] sm:$0xff]
    %v1804 = vld [vmem:[%s6 + $0xd8] sm:$0xff]
    %v1805 = vld [vmem:[%s6 + $0xe0] sm:$0xff]
    %v1806 = vld [vmem:[%s6 + $0xe8] sm:$0xff]
    %v1807 = vld [vmem:[%s6 + $0xf0] sm:$0xff]
    %v1808 = vld [vmem:[%s6 + $0xf8] sm:$0xff]
    %v1841 = vunpack.c.l.b16 %v1777
    %v1842 = vunpack.c.h.b16 %v1777
    %v1843 = vunpack.c.l.b16 %v1778
    %v1844 = vunpack.c.h.b16 %v1778
    %v1845 = vunpack.c.l.b16 %v1779
    %v1846 = vunpack.c.h.b16 %v1779
    %v1847 = vunpack.c.l.b16 %v1780
    %v1848 = vunpack.c.h.b16 %v1780
    %v1849 = vunpack.c.l.b16 %v1781
    %v1850 = vunpack.c.h.b16 %v1781
    %v1851 = vunpack.c.l.b16 %v1782
    %v1852 = vunpack.c.h.b16 %v1782
    %v1853 = vunpack.c.l.b16 %v1783
    %v1854 = vunpack.c.h.b16 %v1783
    %v1855 = vunpack.c.l.b16 %v1784
    %v1856 = vunpack.c.h.b16 %v1784
    %v1857 = vunpack.c.l.b16 %v1785
    %v1858 = vunpack.c.h.b16 %v1785
    %v1859 = vunpack.c.l.b16 %v1786
    %v1860 = vunpack.c.h.b16 %v1786
    %v1861 = vunpack.c.l.b16 %v1787
    %v1862 = vunpack.c.h.b16 %v1787
    %v1863 = vunpack.c.l.b16 %v1788
    %v1864 = vunpack.c.h.b16 %v1788
    %v1865 = vunpack.c.l.b16 %v1789
    %v1866 = vunpack.c.h.b16 %v1789
    %v1867 = vunpack.c.l.b16 %v1790
    %v1868 = vunpack.c.h.b16 %v1790
    %v1869 = vunpack.c.l.b16 %v1791
    %v1870 = vunpack.c.h.b16 %v1791
    %v1871 = vunpack.c.l.b16 %v1792
    %v1872 = vunpack.c.h.b16 %v1792
    %v1873 = vunpack.c.l.b16 %v1793
    %v1874 = vunpack.c.h.b16 %v1793
    %v1875 = vunpack.c.l.b16 %v1794
    %v1876 = vunpack.c.h.b16 %v1794
    %v1877 = vunpack.c.l.b16 %v1795
    %v1878 = vunpack.c.h.b16 %v1795
    %v1879 = vunpack.c.l.b16 %v1796
    %v1880 = vunpack.c.h.b16 %v1796
    %v1881 = vunpack.c.l.b16 %v1797
    %v1882 = vunpack.c.h.b16 %v1797
    %v1883 = vunpack.c.l.b16 %v1798
    %v1884 = vunpack.c.h.b16 %v1798
    %v1885 = vunpack.c.l.b16 %v1799
    %v1886 = vunpack.c.h.b16 %v1799
    %v1887 = vunpack.c.l.b16 %v1800
    %v1888 = vunpack.c.h.b16 %v1800
    %v1889 = vunpack.c.l.b16 %v1801
    %v1890 = vunpack.c.h.b16 %v1801
    %v1891 = vunpack.c.l.b16 %v1802
    %v1892 = vunpack.c.h.b16 %v1802
    %v1893 = vunpack.c.l.b16 %v1803
    %v1894 = vunpack.c.h.b16 %v1803
    %v1895 = vunpack.c.l.b16 %v1804
    %v1896 = vunpack.c.h.b16 %v1804
    %v1897 = vunpack.c.l.b16 %v1805
    %v1898 = vunpack.c.h.b16 %v1805
    %v1899 = vunpack.c.l.b16 %v1806
    %v1900 = vunpack.c.h.b16 %v1806
    %v1901 = vunpack.c.l.b16 %v1807
    %v1902 = vunpack.c.h.b16 %v1807
    %v1903 = vunpack.c.l.b16 %v1808
    %v1904 = vunpack.c.h.b16 %v1808
    %v1905 = vpack.c.b16 %v1843, %v1841
    %v1906 = vpack.c.b16 %v1844, %v1842
    %v1907 = vpack.c.b16 %v1847, %v1845
    %v1908 = vpack.c.b16 %v1848, %v1846
    %v1909 = vpack.c.b16 %v1851, %v1849
    %v1910 = vpack.c.b16 %v1852, %v1850
    %v1911 = vpack.c.b16 %v1855, %v1853
    %v1912 = vpack.c.b16 %v1856, %v1854
    %v1913 = vpack.c.b16 %v1859, %v1857
    %v1914 = vpack.c.b16 %v1860, %v1858
    %v1915 = vpack.c.b16 %v1863, %v1861
    %v1916 = vpack.c.b16 %v1864, %v1862
    %v1917 = vpack.c.b16 %v1867, %v1865
    %v1918 = vpack.c.b16 %v1868, %v1866
    %v1919 = vpack.c.b16 %v1871, %v1869
    %v1920 = vpack.c.b16 %v1872, %v1870
    %v1921 = vpack.c.b16 %v1875, %v1873
    %v1922 = vpack.c.b16 %v1876, %v1874
    %v1923 = vpack.c.b16 %v1879, %v1877
    %v1924 = vpack.c.b16 %v1880, %v1878
    %v1925 = vpack.c.b16 %v1883, %v1881
    %v1926 = vpack.c.b16 %v1884, %v1882
    %v1927 = vpack.c.b16 %v1887, %v1885
    %v1928 = vpack.c.b16 %v1888, %v1886
    %v1929 = vpack.c.b16 %v1891, %v1889
    %v1930 = vpack.c.b16 %v1892, %v1890
    %v1931 = vpack.c.b16 %v1895, %v1893
    %v1932 = vpack.c.b16 %v1896, %v1894
    %v1933 = vpack.c.b16 %v1899, %v1897
    %v1934 = vpack.c.b16 %v1900, %v1898
    %v1935 = vpack.c.b16 %v1903, %v1901
    %v1936 = vpack.c.b16 %v1904, %v1902
    %1969 = vmatprep.subr.bf16.mxu0 %v1906
    %1970 = vmatpush1.bf16.msra.mxu0 %v1905
    %1971 = vmatprep.subr.bf16.mxu0 %v1908
    %1972 = vmatpush1.bf16.msra.mxu0 %v1907
    %1973 = vmatprep.subr.bf16.mxu0 %v1910
    %1974 = vmatpush1.bf16.msra.mxu0 %v1909
    %1975 = vmatprep.subr.bf16.mxu0 %v1912
    %1976 = vmatpush1.bf16.msra.mxu0 %v1911
    %1977 = vmatprep.subr.bf16.mxu0 %v1914
    %1978 = vmatpush1.bf16.msra.mxu0 %v1913
    %1979 = vmatprep.subr.bf16.mxu0 %v1916
    %1980 = vmatpush1.bf16.msra.mxu0 %v1915
    %1981 = vmatprep.subr.bf16.mxu0 %v1918
    %1982 = vmatpush1.bf16.msra.mxu0 %v1917
    %1983 = vmatprep.subr.bf16.mxu0 %v1920
    %1984 = vmatpush1.bf16.msra.mxu0 %v1919
    %1985 = vmatprep.subr.bf16.mxu0 %v1922
    %1986 = vmatpush1.bf16.msra.mxu0 %v1921
    %1987 = vmatprep.subr.bf16.mxu0 %v1924
    %1988 = vmatpush1.bf16.msra.mxu0 %v1923
    %1989 = vmatprep.subr.bf16.mxu0 %v1926
    %1990 = vmatpush1.bf16.msra.mxu0 %v1925
    %1991 = vmatprep.subr.bf16.mxu0 %v1928
    %1992 = vmatpush1.bf16.msra.mxu0 %v1927
    %1993 = vmatprep.subr.bf16.mxu0 %v1930
    %1994 = vmatpush1.bf16.msra.mxu0 %v1929
    %1995 = vmatprep.subr.bf16.mxu0 %v1932
    %1996 = vmatpush1.bf16.msra.mxu0 %v1931
    %1997 = vmatprep.subr.bf16.mxu0 %v1934
    %1998 = vmatpush1.bf16.msra.mxu0 %v1933
    %1999 = vmatprep.subr.bf16.mxu0 %v1936
    %2000 = vmatpush1.bf16.msra.mxu0 %v1935
    %2001 = vmatprep.mubr.bf16.mxu0 %v1776
    %2002 = vmatmul.mubr.bf16.gmra.mrb[0].mxu0 %v1775
    %v2003 = vpop.f32.mrb[0].mxu0
    %v2004 = vadd.f32 0.0, %v2003
    %v2005 = vpop.f32.mrb[0].mxu0
    %v2006 = vadd.f32 0.0, %v2005
    %v2007 = vpop.f32.mrb[0].mxu0
    %v2008 = vpop.f32.mrb[0].mxu0
    %2009 = vdwg.mxu0
    %v2010 = vld [vmem:[#allocation2 + $0x10] sm:$0xff]
    %v2011 = vadd.f32 %v2010, %v2004
    %v2012 = vtanh.pop %v2011
    %v2013 = vld [vmem:[#allocation2 + $0xa8] sm:$0xff]
    %v2014 = vadd.f32 %v2013, %v2006
    %v2015 = vtanh.pop %v2014
    %s2016 = sld [smem:[#allocation7 + $0x1]]
    %v2017 = vstv %s2016
    %v2018 = vmul.f32 %v2012, %v2017
    %2019 = vst [vmem:[#allocation3 + $0x10] sm:$0xff] %v2018
    %s2020 = sld [smem:[#allocation7 + $0xa]]
    %v2021 = vstv %s2020
    %v2022 = vmul.f32 %v2015, %v2021
    %2023 = vst [vmem:[#allocation3 + $0xa8] sm:$0xff] %v2022
    %v2024 = vpack.c.bf16 %v2012, %v2012
    %v2025 = vpack.c.bf16 %v2015, %v2015
    %v2026 = vld [vmem:[%s6] sm:$0xff]
    %v2027 = vld [vmem:[%s6 + $0x8] sm:$0xff]
    %v2028 = vld [vmem:[%s6 + $0x10] sm:$0xff]
    %v2029 = vld [vmem:[%s6 + $0x18] sm:$0xff]
    %v2030 = vld [vmem:[%s6 + $0x20] sm:$0xff]
    %v2031 = vld [vmem:[%s6 + $0x28] sm:$0xff]
    %v2032 = vld [vmem:[%s6 + $0x30] sm:$0xff]
    %v2033 = vld [vmem:[%s6 + $0x38] sm:$0xff]
    %v2034 = vld [vmem:[%s6 + $0x40] sm:$0xff]
    %v2035 = vld [vmem:[%s6 + $0x48] sm:$0xff]
    %v2036 = vld [vmem:[%s6 + $0x50] sm:$0xff]
    %v2037 = vld [vmem:[%s6 + $0x58] sm:$0xff]
    %v2038 = vld [vmem:[%s6 + $0x60] sm:$0xff]
    %v2039 = vld [vmem:[%s6 + $0x68] sm:$0xff]
    %v2040 = vld [vmem:[%s6 + $0x70] sm:$0xff]
    %v2041 = vld [vmem:[%s6 + $0x78] sm:$0xff]
    %v2042 = vld [vmem:[%s6 + $0x80] sm:$0xff]
    %v2043 = vld [vmem:[%s6 + $0x88] sm:$0xff]
    %v2044 = vld [vmem:[%s6 + $0x90] sm:$0xff]
    %v2045 = vld [vmem:[%s6 + $0x98] sm:$0xff]
    %v2046 = vld [vmem:[%s6 + $0xa0] sm:$0xff]
    %v2047 = vld [vmem:[%s6 + $0xa8] sm:$0xff]
    %v2048 = vld [vmem:[%s6 + $0xb0] sm:$0xff]
    %v2049 = vld [vmem:[%s6 + $0xb8] sm:$0xff]
    %v2050 = vld [vmem:[%s6 + $0xc0] sm:$0xff]
    %v2051 = vld [vmem:[%s6 + $0xc8] sm:$0xff]
    %v2052 = vld [vmem:[%s6 + $0xd0] sm:$0xff]
    %v2053 = vld [vmem:[%s6 + $0xd8] sm:$0xff]
    %v2054 = vld [vmem:[%s6 + $0xe0] sm:$0xff]
    %v2055 = vld [vmem:[%s6 + $0xe8] sm:$0xff]
    %v2056 = vld [vmem:[%s6 + $0xf0] sm:$0xff]
    %v2057 = vld [vmem:[%s6 + $0xf8] sm:$0xff]
    %v2090 = vunpack.c.l.b16 %v2026
    %v2091 = vunpack.c.h.b16 %v2026
    %v2092 = vunpack.c.l.b16 %v2027
    %v2093 = vunpack.c.h.b16 %v2027
    %v2094 = vunpack.c.l.b16 %v2028
    %v2095 = vunpack.c.h.b16 %v2028
    %v2096 = vunpack.c.l.b16 %v2029
    %v2097 = vunpack.c.h.b16 %v2029
    %v2098 = vunpack.c.l.b16 %v2030
    %v2099 = vunpack.c.h.b16 %v2030
    %v2100 = vunpack.c.l.b16 %v2031
    %v2101 = vunpack.c.h.b16 %v2031
    %v2102 = vunpack.c.l.b16 %v2032
    %v2103 = vunpack.c.h.b16 %v2032
    %v2104 = vunpack.c.l.b16 %v2033
    %v2105 = vunpack.c.h.b16 %v2033
    %v2106 = vunpack.c.l.b16 %v2034
    %v2107 = vunpack.c.h.b16 %v2034
    %v2108 = vunpack.c.l.b16 %v2035
    %v2109 = vunpack.c.h.b16 %v2035
    %v2110 = vunpack.c.l.b16 %v2036
    %v2111 = vunpack.c.h.b16 %v2036
    %v2112 = vunpack.c.l.b16 %v2037
    %v2113 = vunpack.c.h.b16 %v2037
    %v2114 = vunpack.c.l.b16 %v2038
    %v2115 = vunpack.c.h.b16 %v2038
    %v2116 = vunpack.c.l.b16 %v2039
    %v2117 = vunpack.c.h.b16 %v2039
    %v2118 = vunpack.c.l.b16 %v2040
    %v2119 = vunpack.c.h.b16 %v2040
    %v2120 = vunpack.c.l.b16 %v2041
    %v2121 = vunpack.c.h.b16 %v2041
    %v2122 = vunpack.c.l.b16 %v2042
    %v2123 = vunpack.c.h.b16 %v2042
    %v2124 = vunpack.c.l.b16 %v2043
    %v2125 = vunpack.c.h.b16 %v2043
    %v2126 = vunpack.c.l.b16 %v2044
    %v2127 = vunpack.c.h.b16 %v2044
    %v2128 = vunpack.c.l.b16 %v2045
    %v2129 = vunpack.c.h.b16 %v2045
    %v2130 = vunpack.c.l.b16 %v2046
    %v2131 = vunpack.c.h.b16 %v2046
    %v2132 = vunpack.c.l.b16 %v2047
    %v2133 = vunpack.c.h.b16 %v2047
    %v2134 = vunpack.c.l.b16 %v2048
    %v2135 = vunpack.c.h.b16 %v2048
    %v2136 = vunpack.c.l.b16 %v2049
    %v2137 = vunpack.c.h.b16 %v2049
    %v2138 = vunpack.c.l.b16 %v2050
    %v2139 = vunpack.c.h.b16 %v2050
    %v2140 = vunpack.c.l.b16 %v2051
    %v2141 = vunpack.c.h.b16 %v2051
    %v2142 = vunpack.c.l.b16 %v2052
    %v2143 = vunpack.c.h.b16 %v2052
    %v2144 = vunpack.c.l.b16 %v2053
    %v2145 = vunpack.c.h.b16 %v2053
    %v2146 = vunpack.c.l.b16 %v2054
    %v2147 = vunpack.c.h.b16 %v2054
    %v2148 = vunpack.c.l.b16 %v2055
    %v2149 = vunpack.c.h.b16 %v2055
    %v2150 = vunpack.c.l.b16 %v2056
    %v2151 = vunpack.c.h.b16 %v2056
    %v2152 = vunpack.c.l.b16 %v2057
    %v2153 = vunpack.c.h.b16 %v2057
    %v2154 = vpack.c.b16 %v2092, %v2090
    %v2155 = vpack.c.b16 %v2093, %v2091
    %v2156 = vpack.c.b16 %v2096, %v2094
    %v2157 = vpack.c.b16 %v2097, %v2095
    %v2158 = vpack.c.b16 %v2100, %v2098
    %v2159 = vpack.c.b16 %v2101, %v2099
    %v2160 = vpack.c.b16 %v2104, %v2102
    %v2161 = vpack.c.b16 %v2105, %v2103
    %v2162 = vpack.c.b16 %v2108, %v2106
    %v2163 = vpack.c.b16 %v2109, %v2107
    %v2164 = vpack.c.b16 %v2112, %v2110
    %v2165 = vpack.c.b16 %v2113, %v2111
    %v2166 = vpack.c.b16 %v2116, %v2114
    %v2167 = vpack.c.b16 %v2117, %v2115
    %v2168 = vpack.c.b16 %v2120, %v2118
    %v2169 = vpack.c.b16 %v2121, %v2119
    %v2170 = vpack.c.b16 %v2124, %v2122
    %v2171 = vpack.c.b16 %v2125, %v2123
    %v2172 = vpack.c.b16 %v2128, %v2126
    %v2173 = vpack.c.b16 %v2129, %v2127
    %v2174 = vpack.c.b16 %v2132, %v2130
    %v2175 = vpack.c.b16 %v2133, %v2131
    %v2176 = vpack.c.b16 %v2136, %v2134
    %v2177 = vpack.c.b16 %v2137, %v2135
    %v2178 = vpack.c.b16 %v2140, %v2138
    %v2179 = vpack.c.b16 %v2141, %v2139
    %v2180 = vpack.c.b16 %v2144, %v2142
    %v2181 = vpack.c.b16 %v2145, %v2143
    %v2182 = vpack.c.b16 %v2148, %v2146
    %v2183 = vpack.c.b16 %v2149, %v2147
    %v2184 = vpack.c.b16 %v2152, %v2150
    %v2185 = vpack.c.b16 %v2153, %v2151
    %2218 = vmatprep.subr.bf16.mxu0 %v2155
    %2219 = vmatpush1.bf16.msra.mxu0 %v2154
    %2220 = vmatprep.subr.bf16.mxu0 %v2157
    %2221 = vmatpush1.bf16.msra.mxu0 %v2156
    %2222 = vmatprep.subr.bf16.mxu0 %v2159
    %2223 = vmatpush1.bf16.msra.mxu0 %v2158
    %2224 = vmatprep.subr.bf16.mxu0 %v2161
    %2225 = vmatpush1.bf16.msra.mxu0 %v2160
    %2226 = vmatprep.subr.bf16.mxu0 %v2163
    %2227 = vmatpush1.bf16.msra.mxu0 %v2162
    %2228 = vmatprep.subr.bf16.mxu0 %v2165
    %2229 = vmatpush1.bf16.msra.mxu0 %v2164
    %2230 = vmatprep.subr.bf16.mxu0 %v2167
    %2231 = vmatpush1.bf16.msra.mxu0 %v2166
    %2232 = vmatprep.subr.bf16.mxu0 %v2169
    %2233 = vmatpush1.bf16.msra.mxu0 %v2168
    %2234 = vmatprep.subr.bf16.mxu0 %v2171
    %2235 = vmatpush1.bf16.msra.mxu0 %v2170
    %2236 = vmatprep.subr.bf16.mxu0 %v2173
    %2237 = vmatpush1.bf16.msra.mxu0 %v2172
    %2238 = vmatprep.subr.bf16.mxu0 %v2175
    %2239 = vmatpush1.bf16.msra.mxu0 %v2174
    %2240 = vmatprep.subr.bf16.mxu0 %v2177
    %2241 = vmatpush1.bf16.msra.mxu0 %v2176
    %2242 = vmatprep.subr.bf16.mxu0 %v2179
    %2243 = vmatpush1.bf16.msra.mxu0 %v2178
    %2244 = vmatprep.subr.bf16.mxu0 %v2181
    %2245 = vmatpush1.bf16.msra.mxu0 %v2180
    %2246 = vmatprep.subr.bf16.mxu0 %v2183
    %2247 = vmatpush1.bf16.msra.mxu0 %v2182
    %2248 = vmatprep.subr.bf16.mxu0 %v2185
    %2249 = vmatpush1.bf16.msra.mxu0 %v2184
    %2250 = vmatprep.mubr.bf16.mxu0 %v2025
    %2251 = vmatmul.mubr.bf16.gmra.mrb[0].mxu0 %v2024
    %v2252 = vpop.f32.mrb[0].mxu0
    %v2253 = vadd.f32 0.0, %v2252
    %v2254 = vpop.f32.mrb[0].mxu0
    %v2255 = vadd.f32 0.0, %v2254
    %v2256 = vpop.f32.mrb[0].mxu0
    %v2257 = vpop.f32.mrb[0].mxu0
    %2258 = vdwg.mxu0
    %v2259 = vld [vmem:[#allocation2 + $0x20] sm:$0xff]
    %v2260 = vadd.f32 %v2259, %v2253
    %v2261 = vtanh.pop %v2260
    %v2262 = vld [vmem:[#allocation2 + $0x98] sm:$0xff]
    %v2263 = vadd.f32 %v2262, %v2255
    %v2264 = vtanh.pop %v2263
    %s2265 = sld [smem:[#allocation7 + $0x2]]
    %v2266 = vstv %s2265
    %v2267 = vmul.f32 %v2261, %v2266
    %2268 = vst [vmem:[#allocation3 + $0x20] sm:$0xff] %v2267
    %s2269 = sld [smem:[#allocation7 + $0x9]]
    %v2270 = vstv %s2269
    %v2271 = vmul.f32 %v2264, %v2270
    %2272 = vst [vmem:[#allocation3 + $0x98] sm:$0xff] %v2271
    %v2273 = vpack.c.bf16 %v2261, %v2261
    %v2274 = vpack.c.bf16 %v2264, %v2264
    %v2275 = vld [vmem:[%s6] sm:$0xff]
    %v2276 = vld [vmem:[%s6 + $0x8] sm:$0xff]
    %v2277 = vld [vmem:[%s6 + $0x10] sm:$0xff]
    %v2278 = vld [vmem:[%s6 + $0x18] sm:$0xff]
    %v2279 = vld [vmem:[%s6 + $0x20] sm:$0xff]
    %v2280 = vld [vmem:[%s6 + $0x28] sm:$0xff]
    %v2281 = vld [vmem:[%s6 + $0x30] sm:$0xff]
    %v2282 = vld [vmem:[%s6 + $0x38] sm:$0xff]
    %v2283 = vld [vmem:[%s6 + $0x40] sm:$0xff]
    %v2284 = vld [vmem:[%s6 + $0x48] sm:$0xff]
    %v2285 = vld [vmem:[%s6 + $0x50] sm:$0xff]
    %v2286 = vld [vmem:[%s6 + $0x58] sm:$0xff]
    %v2287 = vld [vmem:[%s6 + $0x60] sm:$0xff]
    %v2288 = vld [vmem:[%s6 + $0x68] sm:$0xff]
    %v2289 = vld [vmem:[%s6 + $0x70] sm:$0xff]
    %v2290 = vld [vmem:[%s6 + $0x78] sm:$0xff]
    %v2291 = vld [vmem:[%s6 + $0x80] sm:$0xff]
    %v2292 = vld [vmem:[%s6 + $0x88] sm:$0xff]
    %v2293 = vld [vmem:[%s6 + $0x90] sm:$0xff]
    %v2294 = vld [vmem:[%s6 + $0x98] sm:$0xff]
    %v2295 = vld [vmem:[%s6 + $0xa0] sm:$0xff]
    %v2296 = vld [vmem:[%s6 + $0xa8] sm:$0xff]
    %v2297 = vld [vmem:[%s6 + $0xb0] sm:$0xff]
    %v2298 = vld [vmem:[%s6 + $0xb8] sm:$0xff]
    %v2299 = vld [vmem:[%s6 + $0xc0] sm:$0xff]
    %v2300 = vld [vmem:[%s6 + $0xc8] sm:$0xff]
    %v2301 = vld [vmem:[%s6 + $0xd0] sm:$0xff]
    %v2302 = vld [vmem:[%s6 + $0xd8] sm:$0xff]
    %v2303 = vld [vmem:[%s6 + $0xe0] sm:$0xff]
    %v2304 = vld [vmem:[%s6 + $0xe8] sm:$0xff]
    %v2305 = vld [vmem:[%s6 + $0xf0] sm:$0xff]
    %v2306 = vld [vmem:[%s6 + $0xf8] sm:$0xff]
    %v2339 = vunpack.c.l.b16 %v2275
    %v2340 = vunpack.c.h.b16 %v2275
    %v2341 = vunpack.c.l.b16 %v2276
    %v2342 = vunpack.c.h.b16 %v2276
    %v2343 = vunpack.c.l.b16 %v2277
    %v2344 = vunpack.c.h.b16 %v2277
    %v2345 = vunpack.c.l.b16 %v2278
    %v2346 = vunpack.c.h.b16 %v2278
    %v2347 = vunpack.c.l.b16 %v2279
    %v2348 = vunpack.c.h.b16 %v2279
    %v2349 = vunpack.c.l.b16 %v2280
    %v2350 = vunpack.c.h.b16 %v2280
    %v2351 = vunpack.c.l.b16 %v2281
    %v2352 = vunpack.c.h.b16 %v2281
    %v2353 = vunpack.c.l.b16 %v2282
    %v2354 = vunpack.c.h.b16 %v2282
    %v2355 = vunpack.c.l.b16 %v2283
    %v2356 = vunpack.c.h.b16 %v2283
    %v2357 = vunpack.c.l.b16 %v2284
    %v2358 = vunpack.c.h.b16 %v2284
    %v2359 = vunpack.c.l.b16 %v2285
    %v2360 = vunpack.c.h.b16 %v2285
    %v2361 = vunpack.c.l.b16 %v2286
    %v2362 = vunpack.c.h.b16 %v2286
    %v2363 = vunpack.c.l.b16 %v2287
    %v2364 = vunpack.c.h.b16 %v2287
    %v2365 = vunpack.c.l.b16 %v2288
    %v2366 = vunpack.c.h.b16 %v2288
    %v2367 = vunpack.c.l.b16 %v2289
    %v2368 = vunpack.c.h.b16 %v2289
    %v2369 = vunpack.c.l.b16 %v2290
    %v2370 = vunpack.c.h.b16 %v2290
    %v2371 = vunpack.c.l.b16 %v2291
    %v2372 = vunpack.c.h.b16 %v2291
    %v2373 = vunpack.c.l.b16 %v2292
    %v2374 = vunpack.c.h.b16 %v2292
    %v2375 = vunpack.c.l.b16 %v2293
    %v2376 = vunpack.c.h.b16 %v2293
    %v2377 = vunpack.c.l.b16 %v2294
    %v2378 = vunpack.c.h.b16 %v2294
    %v2379 = vunpack.c.l.b16 %v2295
    %v2380 = vunpack.c.h.b16 %v2295
    %v2381 = vunpack.c.l.b16 %v2296
    %v2382 = vunpack.c.h.b16 %v2296
    %v2383 = vunpack.c.l.b16 %v2297
    %v2384 = vunpack.c.h.b16 %v2297
    %v2385 = vunpack.c.l.b16 %v2298
    %v2386 = vunpack.c.h.b16 %v2298
    %v2387 = vunpack.c.l.b16 %v2299
    %v2388 = vunpack.c.h.b16 %v2299
    %v2389 = vunpack.c.l.b16 %v2300
    %v2390 = vunpack.c.h.b16 %v2300
    %v2391 = vunpack.c.l.b16 %v2301
    %v2392 = vunpack.c.h.b16 %v2301
    %v2393 = vunpack.c.l.b16 %v2302
    %v2394 = vunpack.c.h.b16 %v2302
    %v2395 = vunpack.c.l.b16 %v2303
    %v2396 = vunpack.c.h.b16 %v2303
    %v2397 = vunpack.c.l.b16 %v2304
    %v2398 = vunpack.c.h.b16 %v2304
    %v2399 = vunpack.c.l.b16 %v2305
    %v2400 = vunpack.c.h.b16 %v2305
    %v2401 = vunpack.c.l.b16 %v2306
    %v2402 = vunpack.c.h.b16 %v2306
    %v2403 = vpack.c.b16 %v2341, %v2339
    %v2404 = vpack.c.b16 %v2342, %v2340
    %v2405 = vpack.c.b16 %v2345, %v2343
    %v2406 = vpack.c.b16 %v2346, %v2344
    %v2407 = vpack.c.b16 %v2349, %v2347
    %v2408 = vpack.c.b16 %v2350, %v2348
    %v2409 = vpack.c.b16 %v2353, %v2351
    %v2410 = vpack.c.b16 %v2354, %v2352
    %v2411 = vpack.c.b16 %v2357, %v2355
    %v2412 = vpack.c.b16 %v2358, %v2356
    %v2413 = vpack.c.b16 %v2361, %v2359
    %v2414 = vpack.c.b16 %v2362, %v2360
    %v2415 = vpack.c.b16 %v2365, %v2363
    %v2416 = vpack.c.b16 %v2366, %v2364
    %v2417 = vpack.c.b16 %v2369, %v2367
    %v2418 = vpack.c.b16 %v2370, %v2368
    %v2419 = vpack.c.b16 %v2373, %v2371
    %v2420 = vpack.c.b16 %v2374, %v2372
    %v2421 = vpack.c.b16 %v2377, %v2375
    %v2422 = vpack.c.b16 %v2378, %v2376
    %v2423 = vpack.c.b16 %v2381, %v2379
    %v2424 = vpack.c.b16 %v2382, %v2380
    %v2425 = vpack.c.b16 %v2385, %v2383
    %v2426 = vpack.c.b16 %v2386, %v2384
    %v2427 = vpack.c.b16 %v2389, %v2387
    %v2428 = vpack.c.b16 %v2390, %v2388
    %v2429 = vpack.c.b16 %v2393, %v2391
    %v2430 = vpack.c.b16 %v2394, %v2392
    %v2431 = vpack.c.b16 %v2397, %v2395
    %v2432 = vpack.c.b16 %v2398, %v2396
    %v2433 = vpack.c.b16 %v2401, %v2399
    %v2434 = vpack.c.b16 %v2402, %v2400
    %2467 = vmatprep.subr.bf16.mxu0 %v2404
    %2468 = vmatpush1.bf16.msra.mxu0 %v2403
    %2469 = vmatprep.subr.bf16.mxu0 %v2406
    %2470 = vmatpush1.bf16.msra.mxu0 %v2405
    %2471 = vmatprep.subr.bf16.mxu0 %v2408
    %2472 = vmatpush1.bf16.msra.mxu0 %v2407
    %2473 = vmatprep.subr.bf16.mxu0 %v2410
    %2474 = vmatpush1.bf16.msra.mxu0 %v2409
    %2475 = vmatprep.subr.bf16.mxu0 %v2412
    %2476 = vmatpush1.bf16.msra.mxu0 %v2411
    %2477 = vmatprep.subr.bf16.mxu0 %v2414
    %2478 = vmatpush1.bf16.msra.mxu0 %v2413
    %2479 = vmatprep.subr.bf16.mxu0 %v2416
    %2480 = vmatpush1.bf16.msra.mxu0 %v2415
    %2481 = vmatprep.subr.bf16.mxu0 %v2418
    %2482 = vmatpush1.bf16.msra.mxu0 %v2417
    %2483 = vmatprep.subr.bf16.mxu0 %v2420
    %2484 = vmatpush1.bf16.msra.mxu0 %v2419
    %2485 = vmatprep.subr.bf16.mxu0 %v2422
    %2486 = vmatpush1.bf16.msra.mxu0 %v2421
    %2487 = vmatprep.subr.bf16.mxu0 %v2424
    %2488 = vmatpush1.bf16.msra.mxu0 %v2423
    %2489 = vmatprep.subr.bf16.mxu0 %v2426
    %2490 = vmatpush1.bf16.msra.mxu0 %v2425
    %2491 = vmatprep.subr.bf16.mxu0 %v2428
    %2492 = vmatpush1.bf16.msra.mxu0 %v2427
    %2493 = vmatprep.subr.bf16.mxu0 %v2430
    %2494 = vmatpush1.bf16.msra.mxu0 %v2429
    %2495 = vmatprep.subr.bf16.mxu0 %v2432
    %2496 = vmatpush1.bf16.msra.mxu0 %v2431
    %2497 = vmatprep.subr.bf16.mxu0 %v2434
    %2498 = vmatpush1.bf16.msra.mxu0 %v2433
    %2499 = vmatprep.mubr.bf16.mxu0 %v2274
    %2500 = vmatmul.mubr.bf16.gmra.mrb[0].mxu0 %v2273
    %v2501 = vpop.f32.mrb[0].mxu0
    %v2502 = vadd.f32 0.0, %v2501
    %v2503 = vpop.f32.mrb[0].mxu0
    %v2504 = vadd.f32 0.0, %v2503
    %v2505 = vpop.f32.mrb[0].mxu0
    %v2506 = vpop.f32.mrb[0].mxu0
    %2507 = vdwg.mxu0
    %v2508 = vld [vmem:[#allocation2 + $0x30] sm:$0xff]
    %v2509 = vadd.f32 %v2508, %v2502
    %v2510 = vtanh.pop %v2509
    %v2511 = vld [vmem:[#allocation2 + $0x88] sm:$0xff]
    %v2512 = vadd.f32 %v2511, %v2504
    %v2513 = vtanh.pop %v2512
    %s2514 = sld [smem:[#allocation7 + $0x3]]
    %v2515 = vstv %s2514
    %v2516 = vmul.f32 %v2510, %v2515
    %2517 = vst [vmem:[#allocation3 + $0x30] sm:$0xff] %v2516
    %s2518 = sld [smem:[#allocation7 + $0x8]]
    %v2519 = vstv %s2518
    %v2520 = vmul.f32 %v2513, %v2519
    %2521 = vst [vmem:[#allocation3 + $0x88] sm:$0xff] %v2520
    %v2522 = vpack.c.bf16 %v2510, %v2510
    %v2523 = vpack.c.bf16 %v2513, %v2513
    %v2524 = vld [vmem:[%s6] sm:$0xff]
    %v2525 = vld [vmem:[%s6 + $0x8] sm:$0xff]
    %v2526 = vld [vmem:[%s6 + $0x10] sm:$0xff]
    %v2527 = vld [vmem:[%s6 + $0x18] sm:$0xff]
    %v2528 = vld [vmem:[%s6 + $0x20] sm:$0xff]
    %v2529 = vld [vmem:[%s6 + $0x28] sm:$0xff]
    %v2530 = vld [vmem:[%s6 + $0x30] sm:$0xff]
    %v2531 = vld [vmem:[%s6 + $0x38] sm:$0xff]
    %v2532 = vld [vmem:[%s6 + $0x40] sm:$0xff]
    %v2533 = vld [vmem:[%s6 + $0x48] sm:$0xff]
    %v2534 = vld [vmem:[%s6 + $0x50] sm:$0xff]
    %v2535 = vld [vmem:[%s6 + $0x58] sm:$0xff]
    %v2536 = vld [vmem:[%s6 + $0x60] sm:$0xff]
    %v2537 = vld [vmem:[%s6 + $0x68] sm:$0xff]
    %v2538 = vld [vmem:[%s6 + $0x70] sm:$0xff]
    %v2539 = vld [vmem:[%s6 + $0x78] sm:$0xff]
    %v2540 = vld [vmem:[%s6 + $0x80] sm:$0xff]
    %v2541 = vld [vmem:[%s6 + $0x88] sm:$0xff]
    %v2542 = vld [vmem:[%s6 + $0x90] sm:$0xff]
    %v2543 = vld [vmem:[%s6 + $0x98] sm:$0xff]
    %v2544 = vld [vmem:[%s6 + $0xa0] sm:$0xff]
    %v2545 = vld [vmem:[%s6 + $0xa8] sm:$0xff]
    %v2546 = vld [vmem:[%s6 + $0xb0] sm:$0xff]
    %v2547 = vld [vmem:[%s6 + $0xb8] sm:$0xff]
    %v2548 = vld [vmem:[%s6 + $0xc0] sm:$0xff]
    %v2549 = vld [vmem:[%s6 + $0xc8] sm:$0xff]
    %v2550 = vld [vmem:[%s6 + $0xd0] sm:$0xff]
    %v2551 = vld [vmem:[%s6 + $0xd8] sm:$0xff]
    %v2552 = vld [vmem:[%s6 + $0xe0] sm:$0xff]
    %v2553 = vld [vmem:[%s6 + $0xe8] sm:$0xff]
    %v2554 = vld [vmem:[%s6 + $0xf0] sm:$0xff]
    %v2555 = vld [vmem:[%s6 + $0xf8] sm:$0xff]
    %v2588 = vunpack.c.l.b16 %v2524
    %v2589 = vunpack.c.h.b16 %v2524
    %v2590 = vunpack.c.l.b16 %v2525
    %v2591 = vunpack.c.h.b16 %v2525
    %v2592 = vunpack.c.l.b16 %v2526
    %v2593 = vunpack.c.h.b16 %v2526
    %v2594 = vunpack.c.l.b16 %v2527
    %v2595 = vunpack.c.h.b16 %v2527
    %v2596 = vunpack.c.l.b16 %v2528
    %v2597 = vunpack.c.h.b16 %v2528
    %v2598 = vunpack.c.l.b16 %v2529
    %v2599 = vunpack.c.h.b16 %v2529
    %v2600 = vunpack.c.l.b16 %v2530
    %v2601 = vunpack.c.h.b16 %v2530
    %v2602 = vunpack.c.l.b16 %v2531
    %v2603 = vunpack.c.h.b16 %v2531
    %v2604 = vunpack.c.l.b16 %v2532
    %v2605 = vunpack.c.h.b16 %v2532
    %v2606 = vunpack.c.l.b16 %v2533
    %v2607 = vunpack.c.h.b16 %v2533
    %v2608 = vunpack.c.l.b16 %v2534
    %v2609 = vunpack.c.h.b16 %v2534
    %v2610 = vunpack.c.l.b16 %v2535
    %v2611 = vunpack.c.h.b16 %v2535
    %v2612 = vunpack.c.l.b16 %v2536
    %v2613 = vunpack.c.h.b16 %v2536
    %v2614 = vunpack.c.l.b16 %v2537
    %v2615 = vunpack.c.h.b16 %v2537
    %v2616 = vunpack.c.l.b16 %v2538
    %v2617 = vunpack.c.h.b16 %v2538
    %v2618 = vunpack.c.l.b16 %v2539
    %v2619 = vunpack.c.h.b16 %v2539
    %v2620 = vunpack.c.l.b16 %v2540
    %v2621 = vunpack.c.h.b16 %v2540
    %v2622 = vunpack.c.l.b16 %v2541
    %v2623 = vunpack.c.h.b16 %v2541
    %v2624 = vunpack.c.l.b16 %v2542
    %v2625 = vunpack.c.h.b16 %v2542
    %v2626 = vunpack.c.l.b16 %v2543
    %v2627 = vunpack.c.h.b16 %v2543
    %v2628 = vunpack.c.l.b16 %v2544
    %v2629 = vunpack.c.h.b16 %v2544
    %v2630 = vunpack.c.l.b16 %v2545
    %v2631 = vunpack.c.h.b16 %v2545
    %v2632 = vunpack.c.l.b16 %v2546
    %v2633 = vunpack.c.h.b16 %v2546
    %v2634 = vunpack.c.l.b16 %v2547
    %v2635 = vunpack.c.h.b16 %v2547
    %v2636 = vunpack.c.l.b16 %v2548
    %v2637 = vunpack.c.h.b16 %v2548
    %v2638 = vunpack.c.l.b16 %v2549
    %v2639 = vunpack.c.h.b16 %v2549
    %v2640 = vunpack.c.l.b16 %v2550
    %v2641 = vunpack.c.h.b16 %v2550
    %v2642 = vunpack.c.l.b16 %v2551
    %v2643 = vunpack.c.h.b16 %v2551
    %v2644 = vunpack.c.l.b16 %v2552
    %v2645 = vunpack.c.h.b16 %v2552
    %v2646 = vunpack.c.l.b16 %v2553
    %v2647 = vunpack.c.h.b16 %v2553
    %v2648 = vunpack.c.l.b16 %v2554
    %v2649 = vunpack.c.h.b16 %v2554
    %v2650 = vunpack.c.l.b16 %v2555
    %v2651 = vunpack.c.h.b16 %v2555
    %v2652 = vpack.c.b16 %v2590, %v2588
    %v2653 = vpack.c.b16 %v2591, %v2589
    %v2654 = vpack.c.b16 %v2594, %v2592
    %v2655 = vpack.c.b16 %v2595, %v2593
    %v2656 = vpack.c.b16 %v2598, %v2596
    %v2657 = vpack.c.b16 %v2599, %v2597
    %v2658 = vpack.c.b16 %v2602, %v2600
    %v2659 = vpack.c.b16 %v2603, %v2601
    %v2660 = vpack.c.b16 %v2606, %v2604
    %v2661 = vpack.c.b16 %v2607, %v2605
    %v2662 = vpack.c.b16 %v2610, %v2608
    %v2663 = vpack.c.b16 %v2611, %v2609
    %v2664 = vpack.c.b16 %v2614, %v2612
    %v2665 = vpack.c.b16 %v2615, %v2613
    %v2666 = vpack.c.b16 %v2618, %v2616
    %v2667 = vpack.c.b16 %v2619, %v2617
    %v2668 = vpack.c.b16 %v2622, %v2620
    %v2669 = vpack.c.b16 %v2623, %v2621
    %v2670 = vpack.c.b16 %v2626, %v2624
    %v2671 = vpack.c.b16 %v2627, %v2625
    %v2672 = vpack.c.b16 %v2630, %v2628
    %v2673 = vpack.c.b16 %v2631, %v2629
    %v2674 = vpack.c.b16 %v2634, %v2632
    %v2675 = vpack.c.b16 %v2635, %v2633
    %v2676 = vpack.c.b16 %v2638, %v2636
    %v2677 = vpack.c.b16 %v2639, %v2637
    %v2678 = vpack.c.b16 %v2642, %v2640
    %v2679 = vpack.c.b16 %v2643, %v2641
    %v2680 = vpack.c.b16 %v2646, %v2644
    %v2681 = vpack.c.b16 %v2647, %v2645
    %v2682 = vpack.c.b16 %v2650, %v2648
    %v2683 = vpack.c.b16 %v2651, %v2649
    %2716 = vmatprep.subr.bf16.mxu0 %v2653
    %2717 = vmatpush1.bf16.msra.mxu0 %v2652
    %2718 = vmatprep.subr.bf16.mxu0 %v2655
    %2719 = vmatpush1.bf16.msra.mxu0 %v2654
    %2720 = vmatprep.subr.bf16.mxu0 %v2657
    %2721 = vmatpush1.bf16.msra.mxu0 %v2656
    %2722 = vmatprep.subr.bf16.mxu0 %v2659
    %2723 = vmatpush1.bf16.msra.mxu0 %v2658
    %2724 = vmatprep.subr.bf16.mxu0 %v2661
    %2725 = vmatpush1.bf16.msra.mxu0 %v2660
    %2726 = vmatprep.subr.bf16.mxu0 %v2663
    %2727 = vmatpush1.bf16.msra.mxu0 %v2662
    %2728 = vmatprep.subr.bf16.mxu0 %v2665
    %2729 = vmatpush1.bf16.msra.mxu0 %v2664
    %2730 = vmatprep.subr.bf16.mxu0 %v2667
    %2731 = vmatpush1.bf16.msra.mxu0 %v2666
    %2732 = vmatprep.subr.bf16.mxu0 %v2669
    %2733 = vmatpush1.bf16.msra.mxu0 %v2668
    %2734 = vmatprep.subr.bf16.mxu0 %v2671
    %2735 = vmatpush1.bf16.msra.mxu0 %v2670
    %2736 = vmatprep.subr.bf16.mxu0 %v2673
    %2737 = vmatpush1.bf16.msra.mxu0 %v2672
    %2738 = vmatprep.subr.bf16.mxu0 %v2675
    %2739 = vmatpush1.bf16.msra.mxu0 %v2674
    %2740 = vmatprep.subr.bf16.mxu0 %v2677
    %2741 = vmatpush1.bf16.msra.mxu0 %v2676
    %2742 = vmatprep.subr.bf16.mxu0 %v2679
    %2743 = vmatpush1.bf16.msra.mxu0 %v2678
    %2744 = vmatprep.subr.bf16.mxu0 %v2681
    %2745 = vmatpush1.bf16.msra.mxu0 %v2680
    %2746 = vmatprep.subr.bf16.mxu0 %v2683
    %2747 = vmatpush1.bf16.msra.mxu0 %v2682
    %2748 = vmatprep.mubr.bf16.mxu0 %v2523
    %2749 = vmatmul.mubr.bf16.gmra.mrb[0].mxu0 %v2522
    %v2750 = vpop.f32.mrb[0].mxu0
    %v2751 = vadd.f32 0.0, %v2750
    %v2752 = vpop.f32.mrb[0].mxu0
    %v2753 = vadd.f32 0.0, %v2752
    %v2754 = vpop.f32.mrb[0].mxu0
    %v2755 = vpop.f32.mrb[0].mxu0
    %2756 = vdwg.mxu0
    %v2757 = vld [vmem:[#allocation2 + $0x40] sm:$0xff]
    %v2758 = vadd.f32 %v2757, %v2751
    %v2759 = vtanh.pop %v2758
    %v2760 = vld [vmem:[#allocation2 + $0x78] sm:$0xff]
    %v2761 = vadd.f32 %v2760, %v2753
    %v2762 = vtanh.pop %v2761
    %s2763 = sld [smem:[#allocation7 + $0x4]]
    %v2764 = vstv %s2763
    %v2765 = vmul.f32 %v2759, %v2764
    %2766 = vst [vmem:[#allocation3 + $0x40] sm:$0xff] %v2765
    %s2767 = sld [smem:[#allocation7 + $0x7]]
    %v2768 = vstv %s2767
    %v2769 = vmul.f32 %v2762, %v2768
    %2770 = vst [vmem:[#allocation3 + $0x78] sm:$0xff] %v2769
    %v2771 = vpack.c.bf16 %v2759, %v2759
    %v2772 = vpack.c.bf16 %v2762, %v2762
    %v2773 = vld [vmem:[%s6] sm:$0xff]
    %v2774 = vld [vmem:[%s6 + $0x8] sm:$0xff]
    %v2775 = vld [vmem:[%s6 + $0x10] sm:$0xff]
    %v2776 = vld [vmem:[%s6 + $0x18] sm:$0xff]
    %v2777 = vld [vmem:[%s6 + $0x20] sm:$0xff]
    %v2778 = vld [vmem:[%s6 + $0x28] sm:$0xff]
    %v2779 = vld [vmem:[%s6 + $0x30] sm:$0xff]
    %v2780 = vld [vmem:[%s6 + $0x38] sm:$0xff]
    %v2781 = vld [vmem:[%s6 + $0x40] sm:$0xff]
    %v2782 = vld [vmem:[%s6 + $0x48] sm:$0xff]
    %v2783 = vld [vmem:[%s6 + $0x50] sm:$0xff]
    %v2784 = vld [vmem:[%s6 + $0x58] sm:$0xff]
    %v2785 = vld [vmem:[%s6 + $0x60] sm:$0xff]
    %v2786 = vld [vmem:[%s6 + $0x68] sm:$0xff]
    %v2787 = vld [vmem:[%s6 + $0x70] sm:$0xff]
    %v2788 = vld [vmem:[%s6 + $0x78] sm:$0xff]
    %v2789 = vld [vmem:[%s6 + $0x80] sm:$0xff]
    %v2790 = vld [vmem:[%s6 + $0x88] sm:$0xff]
    %v2791 = vld [vmem:[%s6 + $0x90] sm:$0xff]
    %v2792 = vld [vmem:[%s6 + $0x98] sm:$0xff]
    %v2793 = vld [vmem:[%s6 + $0xa0] sm:$0xff]
    %v2794 = vld [vmem:[%s6 + $0xa8] sm:$0xff]
    %v2795 = vld [vmem:[%s6 + $0xb0] sm:$0xff]
    %v2796 = vld [vmem:[%s6 + $0xb8] sm:$0xff]
    %v2797 = vld [vmem:[%s6 + $0xc0] sm:$0xff]
    %v2798 = vld [vmem:[%s6 + $0xc8] sm:$0xff]
    %v2799 = vld [vmem:[%s6 + $0xd0] sm:$0xff]
    %v2800 = vld [vmem:[%s6 + $0xd8] sm:$0xff]
    %v2801 = vld [vmem:[%s6 + $0xe0] sm:$0xff]
    %v2802 = vld [vmem:[%s6 + $0xe8] sm:$0xff]
    %v2803 = vld [vmem:[%s6 + $0xf0] sm:$0xff]
    %v2804 = vld [vmem:[%s6 + $0xf8] sm:$0xff]
    %v2837 = vunpack.c.l.b16 %v2773
    %v2838 = vunpack.c.h.b16 %v2773
    %v2839 = vunpack.c.l.b16 %v2774
    %v2840 = vunpack.c.h.b16 %v2774
    %v2841 = vunpack.c.l.b16 %v2775
    %v2842 = vunpack.c.h.b16 %v2775
    %v2843 = vunpack.c.l.b16 %v2776
    %v2844 = vunpack.c.h.b16 %v2776
    %v2845 = vunpack.c.l.b16 %v2777
    %v2846 = vunpack.c.h.b16 %v2777
    %v2847 = vunpack.c.l.b16 %v2778
    %v2848 = vunpack.c.h.b16 %v2778
    %v2849 = vunpack.c.l.b16 %v2779
    %v2850 = vunpack.c.h.b16 %v2779
    %v2851 = vunpack.c.l.b16 %v2780
    %v2852 = vunpack.c.h.b16 %v2780
    %v2853 = vunpack.c.l.b16 %v2781
    %v2854 = vunpack.c.h.b16 %v2781
    %v2855 = vunpack.c.l.b16 %v2782
    %v2856 = vunpack.c.h.b16 %v2782
    %v2857 = vunpack.c.l.b16 %v2783
    %v2858 = vunpack.c.h.b16 %v2783
    %v2859 = vunpack.c.l.b16 %v2784
    %v2860 = vunpack.c.h.b16 %v2784
    %v2861 = vunpack.c.l.b16 %v2785
    %v2862 = vunpack.c.h.b16 %v2785
    %v2863 = vunpack.c.l.b16 %v2786
    %v2864 = vunpack.c.h.b16 %v2786
    %v2865 = vunpack.c.l.b16 %v2787
    %v2866 = vunpack.c.h.b16 %v2787
    %v2867 = vunpack.c.l.b16 %v2788
    %v2868 = vunpack.c.h.b16 %v2788
    %v2869 = vunpack.c.l.b16 %v2789
    %v2870 = vunpack.c.h.b16 %v2789
    %v2871 = vunpack.c.l.b16 %v2790
    %v2872 = vunpack.c.h.b16 %v2790
    %v2873 = vunpack.c.l.b16 %v2791
    %v2874 = vunpack.c.h.b16 %v2791
    %v2875 = vunpack.c.l.b16 %v2792
    %v2876 = vunpack.c.h.b16 %v2792
    %v2877 = vunpack.c.l.b16 %v2793
    %v2878 = vunpack.c.h.b16 %v2793
    %v2879 = vunpack.c.l.b16 %v2794
    %v2880 = vunpack.c.h.b16 %v2794
    %v2881 = vunpack.c.l.b16 %v2795
    %v2882 = vunpack.c.h.b16 %v2795
    %v2883 = vunpack.c.l.b16 %v2796
    %v2884 = vunpack.c.h.b16 %v2796
    %v2885 = vunpack.c.l.b16 %v2797
    %v2886 = vunpack.c.h.b16 %v2797
    %v2887 = vunpack.c.l.b16 %v2798
    %v2888 = vunpack.c.h.b16 %v2798
    %v2889 = vunpack.c.l.b16 %v2799
    %v2890 = vunpack.c.h.b16 %v2799
    %v2891 = vunpack.c.l.b16 %v2800
    %v2892 = vunpack.c.h.b16 %v2800
    %v2893 = vunpack.c.l.b16 %v2801
    %v2894 = vunpack.c.h.b16 %v2801
    %v2895 = vunpack.c.l.b16 %v2802
    %v2896 = vunpack.c.h.b16 %v2802
    %v2897 = vunpack.c.l.b16 %v2803
    %v2898 = vunpack.c.h.b16 %v2803
    %v2899 = vunpack.c.l.b16 %v2804
    %v2900 = vunpack.c.h.b16 %v2804
    %v2901 = vpack.c.b16 %v2839, %v2837
    %v2902 = vpack.c.b16 %v2840, %v2838
    %v2903 = vpack.c.b16 %v2843, %v2841
    %v2904 = vpack.c.b16 %v2844, %v2842
    %v2905 = vpack.c.b16 %v2847, %v2845
    %v2906 = vpack.c.b16 %v2848, %v2846
    %v2907 = vpack.c.b16 %v2851, %v2849
    %v2908 = vpack.c.b16 %v2852, %v2850
    %v2909 = vpack.c.b16 %v2855, %v2853
    %v2910 = vpack.c.b16 %v2856, %v2854
    %v2911 = vpack.c.b16 %v2859, %v2857
    %v2912 = vpack.c.b16 %v2860, %v2858
    %v2913 = vpack.c.b16 %v2863, %v2861
    %v2914 = vpack.c.b16 %v2864, %v2862
    %v2915 = vpack.c.b16 %v2867, %v2865
    %v2916 = vpack.c.b16 %v2868, %v2866
    %v2917 = vpack.c.b16 %v2871, %v2869
    %v2918 = vpack.c.b16 %v2872, %v2870
    %v2919 = vpack.c.b16 %v2875, %v2873
    %v2920 = vpack.c.b16 %v2876, %v2874
    %v2921 = vpack.c.b16 %v2879, %v2877
    %v2922 = vpack.c.b16 %v2880, %v2878
    %v2923 = vpack.c.b16 %v2883, %v2881
    %v2924 = vpack.c.b16 %v2884, %v2882
    %v2925 = vpack.c.b16 %v2887, %v2885
    %v2926 = vpack.c.b16 %v2888, %v2886
    %v2927 = vpack.c.b16 %v2891, %v2889
    %v2928 = vpack.c.b16 %v2892, %v2890
    %v2929 = vpack.c.b16 %v2895, %v2893
    %v2930 = vpack.c.b16 %v2896, %v2894
    %v2931 = vpack.c.b16 %v2899, %v2897
    %v2932 = vpack.c.b16 %v2900, %v2898
    %2965 = vmatprep.subr.bf16.mxu0 %v2902
    %2966 = vmatpush1.bf16.msra.mxu0 %v2901
    %2967 = vmatprep.subr.bf16.mxu0 %v2904
    %2968 = vmatpush1.bf16.msra.mxu0 %v2903
    %2969 = vmatprep.subr.bf16.mxu0 %v2906
    %2970 = vmatpush1.bf16.msra.mxu0 %v2905
    %2971 = vmatprep.subr.bf16.mxu0 %v2908
    %2972 = vmatpush1.bf16.msra.mxu0 %v2907
    %2973 = vmatprep.subr.bf16.mxu0 %v2910
    %2974 = vmatpush1.bf16.msra.mxu0 %v2909
    %2975 = vmatprep.subr.bf16.mxu0 %v2912
    %2976 = vmatpush1.bf16.msra.mxu0 %v2911
    %2977 = vmatprep.subr.bf16.mxu0 %v2914
    %2978 = vmatpush1.bf16.msra.mxu0 %v2913
    %2979 = vmatprep.subr.bf16.mxu0 %v2916
    %2980 = vmatpush1.bf16.msra.mxu0 %v2915
    %2981 = vmatprep.subr.bf16.mxu0 %v2918
    %2982 = vmatpush1.bf16.msra.mxu0 %v2917
    %2983 = vmatprep.subr.bf16.mxu0 %v2920
    %2984 = vmatpush1.bf16.msra.mxu0 %v2919
    %2985 = vmatprep.subr.bf16.mxu0 %v2922
    %2986 = vmatpush1.bf16.msra.mxu0 %v2921
    %2987 = vmatprep.subr.bf16.mxu0 %v2924
    %2988 = vmatpush1.bf16.msra.mxu0 %v2923
    %2989 = vmatprep.subr.bf16.mxu0 %v2926
    %2990 = vmatpush1.bf16.msra.mxu0 %v2925
    %2991 = vmatprep.subr.bf16.mxu0 %v2928
    %2992 = vmatpush1.bf16.msra.mxu0 %v2927
    %2993 = vmatprep.subr.bf16.mxu0 %v2930
    %2994 = vmatpush1.bf16.msra.mxu0 %v2929
    %2995 = vmatprep.subr.bf16.mxu0 %v2932
    %2996 = vmatpush1.bf16.msra.mxu0 %v2931
    %2997 = vmatprep.mubr.bf16.mxu0 %v2772
    %2998 = vmatmul.mubr.bf16.gmra.mrb[0].mxu0 %v2771
    %v2999 = vpop.f32.mrb[0].mxu0
    %v3000 = vadd.f32 0.0, %v2999
    %v3001 = vpop.f32.mrb[0].mxu0
    %v3002 = vadd.f32 0.0, %v3001
    %v3003 = vpop.f32.mrb[0].mxu0
    %v3004 = vpop.f32.mrb[0].mxu0
    %3005 = vdwg.mxu0
    %v3006 = vld [vmem:[#allocation2 + $0x50] sm:$0xff]
    %v3007 = vadd.f32 %v3006, %v3000
    %v3008 = vtanh.pop %v3007
    %v3009 = vld [vmem:[#allocation2 + $0x68] sm:$0xff]
    %v3010 = vadd.f32 %v3009, %v3002
    %v3011 = vtanh.pop %v3010
    %s3012 = sld [smem:[#allocation7 + $0x5]]
    %v3013 = vstv %s3012
    %v3014 = vmul.f32 %v3008, %v3013
    %3015 = vst [vmem:[#allocation3 + $0x50] sm:$0xff] %v3014
    %s3016 = sld [smem:[#allocation7 + $0x6]]
    %v3017 = vstv %s3016
    %v3018 = vmul.f32 %v3011, %v3017
    %3019 = vst [vmem:[#allocation3 + $0x68] sm:$0xff] %v3018
    %v3020 = vpack.c.bf16 %v3008, %v3008
    %v3021 = vpack.c.bf16 %v3011, %v3011
    %v3022 = vld [vmem:[%s6] sm:$0xff]
    %v3023 = vld [vmem:[%s6 + $0x8] sm:$0xff]
    %v3024 = vld [vmem:[%s6 + $0x10] sm:$0xff]
    %v3025 = vld [vmem:[%s6 + $0x18] sm:$0xff]
    %v3026 = vld [vmem:[%s6 + $0x20] sm:$0xff]
    %v3027 = vld [vmem:[%s6 + $0x28] sm:$0xff]
    %v3028 = vld [vmem:[%s6 + $0x30] sm:$0xff]
    %v3029 = vld [vmem:[%s6 + $0x38] sm:$0xff]
    %v3030 = vld [vmem:[%s6 + $0x40] sm:$0xff]
    %v3031 = vld [vmem:[%s6 + $0x48] sm:$0xff]
    %v3032 = vld [vmem:[%s6 + $0x50] sm:$0xff]
    %v3033 = vld [vmem:[%s6 + $0x58] sm:$0xff]
    %v3034 = vld [vmem:[%s6 + $0x60] sm:$0xff]
    %v3035 = vld [vmem:[%s6 + $0x68] sm:$0xff]
    %v3036 = vld [vmem:[%s6 + $0x70] sm:$0xff]
    %v3037 = vld [vmem:[%s6 + $0x78] sm:$0xff]
    %v3038 = vld [vmem:[%s6 + $0x80] sm:$0xff]
    %v3039 = vld [vmem:[%s6 + $0x88] sm:$0xff]
    %v3040 = vld [vmem:[%s6 + $0x90] sm:$0xff]
    %v3041 = vld [vmem:[%s6 + $0x98] sm:$0xff]
    %v3042 = vld [vmem:[%s6 + $0xa0] sm:$0xff]
    %v3043 = vld [vmem:[%s6 + $0xa8] sm:$0xff]
    %v3044 = vld [vmem:[%s6 + $0xb0] sm:$0xff]
    %v3045 = vld [vmem:[%s6 + $0xb8] sm:$0xff]
    %v3046 = vld [vmem:[%s6 + $0xc0] sm:$0xff]
    %v3047 = vld [vmem:[%s6 + $0xc8] sm:$0xff]
    %v3048 = vld [vmem:[%s6 + $0xd0] sm:$0xff]
    %v3049 = vld [vmem:[%s6 + $0xd8] sm:$0xff]
    %v3050 = vld [vmem:[%s6 + $0xe0] sm:$0xff]
    %v3051 = vld [vmem:[%s6 + $0xe8] sm:$0xff]
    %v3052 = vld [vmem:[%s6 + $0xf0] sm:$0xff]
    %v3053 = vld [vmem:[%s6 + $0xf8] sm:$0xff]
    %v3086 = vunpack.c.l.b16 %v3022
    %v3087 = vunpack.c.h.b16 %v3022
    %v3088 = vunpack.c.l.b16 %v3023
    %v3089 = vunpack.c.h.b16 %v3023
    %v3090 = vunpack.c.l.b16 %v3024
    %v3091 = vunpack.c.h.b16 %v3024
    %v3092 = vunpack.c.l.b16 %v3025
    %v3093 = vunpack.c.h.b16 %v3025
    %v3094 = vunpack.c.l.b16 %v3026
    %v3095 = vunpack.c.h.b16 %v3026
    %v3096 = vunpack.c.l.b16 %v3027
    %v3097 = vunpack.c.h.b16 %v3027
    %v3098 = vunpack.c.l.b16 %v3028
    %v3099 = vunpack.c.h.b16 %v3028
    %v3100 = vunpack.c.l.b16 %v3029
    %v3101 = vunpack.c.h.b16 %v3029
    %v3102 = vunpack.c.l.b16 %v3030
    %v3103 = vunpack.c.h.b16 %v3030
    %v3104 = vunpack.c.l.b16 %v3031
    %v3105 = vunpack.c.h.b16 %v3031
    %v3106 = vunpack.c.l.b16 %v3032
    %v3107 = vunpack.c.h.b16 %v3032
    %v3108 = vunpack.c.l.b16 %v3033
    %v3109 = vunpack.c.h.b16 %v3033
    %v3110 = vunpack.c.l.b16 %v3034
    %v3111 = vunpack.c.h.b16 %v3034
    %v3112 = vunpack.c.l.b16 %v3035
    %v3113 = vunpack.c.h.b16 %v3035
    %v3114 = vunpack.c.l.b16 %v3036
    %v3115 = vunpack.c.h.b16 %v3036
    %v3116 = vunpack.c.l.b16 %v3037
    %v3117 = vunpack.c.h.b16 %v3037
    %v3118 = vunpack.c.l.b16 %v3038
    %v3119 = vunpack.c.h.b16 %v3038
    %v3120 = vunpack.c.l.b16 %v3039
    %v3121 = vunpack.c.h.b16 %v3039
    %v3122 = vunpack.c.l.b16 %v3040
    %v3123 = vunpack.c.h.b16 %v3040
    %v3124 = vunpack.c.l.b16 %v3041
    %v3125 = vunpack.c.h.b16 %v3041
    %v3126 = vunpack.c.l.b16 %v3042
    %v3127 = vunpack.c.h.b16 %v3042
    %v3128 = vunpack.c.l.b16 %v3043
    %v3129 = vunpack.c.h.b16 %v3043
    %v3130 = vunpack.c.l.b16 %v3044
    %v3131 = vunpack.c.h.b16 %v3044
    %v3132 = vunpack.c.l.b16 %v3045
    %v3133 = vunpack.c.h.b16 %v3045
    %v3134 = vunpack.c.l.b16 %v3046
    %v3135 = vunpack.c.h.b16 %v3046
    %v3136 = vunpack.c.l.b16 %v3047
    %v3137 = vunpack.c.h.b16 %v3047
    %v3138 = vunpack.c.l.b16 %v3048
    %v3139 = vunpack.c.h.b16 %v3048
    %v3140 = vunpack.c.l.b16 %v3049
    %v3141 = vunpack.c.h.b16 %v3049
    %v3142 = vunpack.c.l.b16 %v3050
    %v3143 = vunpack.c.h.b16 %v3050
    %v3144 = vunpack.c.l.b16 %v3051
    %v3145 = vunpack.c.h.b16 %v3051
    %v3146 = vunpack.c.l.b16 %v3052
    %v3147 = vunpack.c.h.b16 %v3052
    %v3148 = vunpack.c.l.b16 %v3053
    %v3149 = vunpack.c.h.b16 %v3053
    %v3150 = vpack.c.b16 %v3088, %v3086
    %v3151 = vpack.c.b16 %v3089, %v3087
    %v3152 = vpack.c.b16 %v3092, %v3090
    %v3153 = vpack.c.b16 %v3093, %v3091
    %v3154 = vpack.c.b16 %v3096, %v3094
    %v3155 = vpack.c.b16 %v3097, %v3095
    %v3156 = vpack.c.b16 %v3100, %v3098
    %v3157 = vpack.c.b16 %v3101, %v3099
    %v3158 = vpack.c.b16 %v3104, %v3102
    %v3159 = vpack.c.b16 %v3105, %v3103
    %v3160 = vpack.c.b16 %v3108, %v3106
    %v3161 = vpack.c.b16 %v3109, %v3107
    %v3162 = vpack.c.b16 %v3112, %v3110
    %v3163 = vpack.c.b16 %v3113, %v3111
    %v3164 = vpack.c.b16 %v3116, %v3114
    %v3165 = vpack.c.b16 %v3117, %v3115
    %v3166 = vpack.c.b16 %v3120, %v3118
    %v3167 = vpack.c.b16 %v3121, %v3119
    %v3168 = vpack.c.b16 %v3124, %v3122
    %v3169 = vpack.c.b16 %v3125, %v3123
    %v3170 = vpack.c.b16 %v3128, %v3126
    %v3171 = vpack.c.b16 %v3129, %v3127
    %v3172 = vpack.c.b16 %v3132, %v3130
    %v3173 = vpack.c.b16 %v3133, %v3131
    %v3174 = vpack.c.b16 %v3136, %v3134
    %v3175 = vpack.c.b16 %v3137, %v3135
    %v3176 = vpack.c.b16 %v3140, %v3138
    %v3177 = vpack.c.b16 %v3141, %v3139
    %v3178 = vpack.c.b16 %v3144, %v3142
    %v3179 = vpack.c.b16 %v3145, %v3143
    %v3180 = vpack.c.b16 %v3148, %v3146
    %v3181 = vpack.c.b16 %v3149, %v3147
    %3214 = vmatprep.subr.bf16.mxu0 %v3151
    %3215 = vmatpush1.bf16.msra.mxu0 %v3150
    %3216 = vmatprep.subr.bf16.mxu0 %v3153
    %3217 = vmatpush1.bf16.msra.mxu0 %v3152
    %3218 = vmatprep.subr.bf16.mxu0 %v3155
    %3219 = vmatpush1.bf16.msra.mxu0 %v3154
    %3220 = vmatprep.subr.bf16.mxu0 %v3157
    %3221 = vmatpush1.bf16.msra.mxu0 %v3156
    %3222 = vmatprep.subr.bf16.mxu0 %v3159
    %3223 = vmatpush1.bf16.msra.mxu0 %v3158
    %3224 = vmatprep.subr.bf16.mxu0 %v3161
    %3225 = vmatpush1.bf16.msra.mxu0 %v3160
    %3226 = vmatprep.subr.bf16.mxu0 %v3163
    %3227 = vmatpush1.bf16.msra.mxu0 %v3162
    %3228 = vmatprep.subr.bf16.mxu0 %v3165
    %3229 = vmatpush1.bf16.msra.mxu0 %v3164
    %3230 = vmatprep.subr.bf16.mxu0 %v3167
    %3231 = vmatpush1.bf16.msra.mxu0 %v3166
    %3232 = vmatprep.subr.bf16.mxu0 %v3169
    %3233 = vmatpush1.bf16.msra.mxu0 %v3168
    %3234 = vmatprep.subr.bf16.mxu0 %v3171
    %3235 = vmatpush1.bf16.msra.mxu0 %v3170
    %3236 = vmatprep.subr.bf16.mxu0 %v3173
    %3237 = vmatpush1.bf16.msra.mxu0 %v3172
    %3238 = vmatprep.subr.bf16.mxu0 %v3175
    %3239 = vmatpush1.bf16.msra.mxu0 %v3174
    %3240 = vmatprep.subr.bf16.mxu0 %v3177
    %3241 = vmatpush1.bf16.msra.mxu0 %v3176
    %3242 = vmatprep.subr.bf16.mxu0 %v3179
    %3243 = vmatpush1.bf16.msra.mxu0 %v3178
    %3244 = vmatprep.subr.bf16.mxu0 %v3181
    %3245 = vmatpush1.bf16.msra.mxu0 %v3180
    %3246 = vmatprep.mubr.bf16.mxu0 %v3021
    %3247 = vmatmul.mubr.bf16.gmra.mrb[0].mxu0 %v3020
    %v3248 = vpop.f32.mrb[0].mxu0
    %v3249 = vadd.f32 0.0, %v3248
    %v3250 = vpop.f32.mrb[0].mxu0
    %v3251 = vadd.f32 0.0, %v3250
    %v3252 = vpop.f32.mrb[0].mxu0
    %v3253 = vpop.f32.mrb[0].mxu0
    %3254 = vdwg.mxu0
    %v3255 = vld [vmem:[#allocation2 + $0x60] sm:$0xff]
    %v3256 = vadd.f32 %v3255, %v3249
    %v3257 = vtanh.pop %v3256
    %v3258 = vld [vmem:[#allocation2 + $0x58] sm:$0xff]
    %v3259 = vadd.f32 %v3258, %v3251
    %v3260 = vtanh.pop %v3259
    %s3261 = sld [smem:[#allocation7 + $0x6]]
    %v3262 = vstv %s3261
    %v3263 = vmul.f32 %v3257, %v3262
    %3264 = vst [vmem:[#allocation3 + $0x60] sm:$0xff] %v3263
    %s3265 = sld [smem:[#allocation7 + $0x5]]
    %v3266 = vstv %s3265
    %v3267 = vmul.f32 %v3260, %v3266
    %3268 = vst [vmem:[#allocation3 + $0x58] sm:$0xff] %v3267
    %v3269 = vpack.c.bf16 %v3257, %v3257
    %v3270 = vpack.c.bf16 %v3260, %v3260
    %v3271 = vld [vmem:[%s6] sm:$0xff]
    %v3272 = vld [vmem:[%s6 + $0x8] sm:$0xff]
    %v3273 = vld [vmem:[%s6 + $0x10] sm:$0xff]
    %v3274 = vld [vmem:[%s6 + $0x18] sm:$0xff]
    %v3275 = vld [vmem:[%s6 + $0x20] sm:$0xff]
    %v3276 = vld [vmem:[%s6 + $0x28] sm:$0xff]
    %v3277 = vld [vmem:[%s6 + $0x30] sm:$0xff]
    %v3278 = vld [vmem:[%s6 + $0x38] sm:$0xff]
    %v3279 = vld [vmem:[%s6 + $0x40] sm:$0xff]
    %v3280 = vld [vmem:[%s6 + $0x48] sm:$0xff]
    %v3281 = vld [vmem:[%s6 + $0x50] sm:$0xff]
    %v3282 = vld [vmem:[%s6 + $0x58] sm:$0xff]
    %v3283 = vld [vmem:[%s6 + $0x60] sm:$0xff]
    %v3284 = vld [vmem:[%s6 + $0x68] sm:$0xff]
    %v3285 = vld [vmem:[%s6 + $0x70] sm:$0xff]
    %v3286 = vld [vmem:[%s6 + $0x78] sm:$0xff]
    %v3287 = vld [vmem:[%s6 + $0x80] sm:$0xff]
    %v3288 = vld [vmem:[%s6 + $0x88] sm:$0xff]
    %v3289 = vld [vmem:[%s6 + $0x90] sm:$0xff]
    %v3290 = vld [vmem:[%s6 + $0x98] sm:$0xff]
    %v3291 = vld [vmem:[%s6 + $0xa0] sm:$0xff]
    %v3292 = vld [vmem:[%s6 + $0xa8] sm:$0xff]
    %v3293 = vld [vmem:[%s6 + $0xb0] sm:$0xff]
    %v3294 = vld [vmem:[%s6 + $0xb8] sm:$0xff]
    %v3295 = vld [vmem:[%s6 + $0xc0] sm:$0xff]
    %v3296 = vld [vmem:[%s6 + $0xc8] sm:$0xff]
    %v3297 = vld [vmem:[%s6 + $0xd0] sm:$0xff]
    %v3298 = vld [vmem:[%s6 + $0xd8] sm:$0xff]
    %v3299 = vld [vmem:[%s6 + $0xe0] sm:$0xff]
    %v3300 = vld [vmem:[%s6 + $0xe8] sm:$0xff]
    %v3301 = vld [vmem:[%s6 + $0xf0] sm:$0xff]
    %v3302 = vld [vmem:[%s6 + $0xf8] sm:$0xff]
    %v3335 = vunpack.c.l.b16 %v3271
    %v3336 = vunpack.c.h.b16 %v3271
    %v3337 = vunpack.c.l.b16 %v3272
    %v3338 = vunpack.c.h.b16 %v3272
    %v3339 = vunpack.c.l.b16 %v3273
    %v3340 = vunpack.c.h.b16 %v3273
    %v3341 = vunpack.c.l.b16 %v3274
    %v3342 = vunpack.c.h.b16 %v3274
    %v3343 = vunpack.c.l.b16 %v3275
    %v3344 = vunpack.c.h.b16 %v3275
    %v3345 = vunpack.c.l.b16 %v3276
    %v3346 = vunpack.c.h.b16 %v3276
    %v3347 = vunpack.c.l.b16 %v3277
    %v3348 = vunpack.c.h.b16 %v3277
    %v3349 = vunpack.c.l.b16 %v3278
    %v3350 = vunpack.c.h.b16 %v3278
    %v3351 = vunpack.c.l.b16 %v3279
    %v3352 = vunpack.c.h.b16 %v3279
    %v3353 = vunpack.c.l.b16 %v3280
    %v3354 = vunpack.c.h.b16 %v3280
    %v3355 = vunpack.c.l.b16 %v3281
    %v3356 = vunpack.c.h.b16 %v3281
    %v3357 = vunpack.c.l.b16 %v3282
    %v3358 = vunpack.c.h.b16 %v3282
    %v3359 = vunpack.c.l.b16 %v3283
    %v3360 = vunpack.c.h.b16 %v3283
    %v3361 = vunpack.c.l.b16 %v3284
    %v3362 = vunpack.c.h.b16 %v3284
    %v3363 = vunpack.c.l.b16 %v3285
    %v3364 = vunpack.c.h.b16 %v3285
    %v3365 = vunpack.c.l.b16 %v3286
    %v3366 = vunpack.c.h.b16 %v3286
    %v3367 = vunpack.c.l.b16 %v3287
    %v3368 = vunpack.c.h.b16 %v3287
    %v3369 = vunpack.c.l.b16 %v3288
    %v3370 = vunpack.c.h.b16 %v3288
    %v3371 = vunpack.c.l.b16 %v3289
    %v3372 = vunpack.c.h.b16 %v3289
    %v3373 = vunpack.c.l.b16 %v3290
    %v3374 = vunpack.c.h.b16 %v3290
    %v3375 = vunpack.c.l.b16 %v3291
    %v3376 = vunpack.c.h.b16 %v3291
    %v3377 = vunpack.c.l.b16 %v3292
    %v3378 = vunpack.c.h.b16 %v3292
    %v3379 = vunpack.c.l.b16 %v3293
    %v3380 = vunpack.c.h.b16 %v3293
    %v3381 = vunpack.c.l.b16 %v3294
    %v3382 = vunpack.c.h.b16 %v3294
    %v3383 = vunpack.c.l.b16 %v3295
    %v3384 = vunpack.c.h.b16 %v3295
    %v3385 = vunpack.c.l.b16 %v3296
    %v3386 = vunpack.c.h.b16 %v3296
    %v3387 = vunpack.c.l.b16 %v3297
    %v3388 = vunpack.c.h.b16 %v3297
    %v3389 = vunpack.c.l.b16 %v3298
    %v3390 = vunpack.c.h.b16 %v3298
    %v3391 = vunpack.c.l.b16 %v3299
    %v3392 = vunpack.c.h.b16 %v3299
    %v3393 = vunpack.c.l.b16 %v3300
    %v3394 = vunpack.c.h.b16 %v3300
    %v3395 = vunpack.c.l.b16 %v3301
    %v3396 = vunpack.c.h.b16 %v3301
    %v3397 = vunpack.c.l.b16 %v3302
    %v3398 = vunpack.c.h.b16 %v3302
    %v3399 = vpack.c.b16 %v3337, %v3335
    %v3400 = vpack.c.b16 %v3338, %v3336
    %v3401 = vpack.c.b16 %v3341, %v3339
    %v3402 = vpack.c.b16 %v3342, %v3340
    %v3403 = vpack.c.b16 %v3345, %v3343
    %v3404 = vpack.c.b16 %v3346, %v3344
    %v3405 = vpack.c.b16 %v3349, %v3347
    %v3406 = vpack.c.b16 %v3350, %v3348
    %v3407 = vpack.c.b16 %v3353, %v3351
    %v3408 = vpack.c.b16 %v3354, %v3352
    %v3409 = vpack.c.b16 %v3357, %v3355
    %v3410 = vpack.c.b16 %v3358, %v3356
    %v3411 = vpack.c.b16 %v3361, %v3359
    %v3412 = vpack.c.b16 %v3362, %v3360
    %v3413 = vpack.c.b16 %v3365, %v3363
    %v3414 = vpack.c.b16 %v3366, %v3364
    %v3415 = vpack.c.b16 %v3369, %v3367
    %v3416 = vpack.c.b16 %v3370, %v3368
    %v3417 = vpack.c.b16 %v3373, %v3371
    %v3418 = vpack.c.b16 %v3374, %v3372
    %v3419 = vpack.c.b16 %v3377, %v3375
    %v3420 = vpack.c.b16 %v3378, %v3376
    %v3421 = vpack.c.b16 %v3381, %v3379
    %v3422 = vpack.c.b16 %v3382, %v3380
    %v3423 = vpack.c.b16 %v3385, %v3383
    %v3424 = vpack.c.b16 %v3386, %v3384
    %v3425 = vpack.c.b16 %v3389, %v3387
    %v3426 = vpack.c.b16 %v3390, %v3388
    %v3427 = vpack.c.b16 %v3393, %v3391
    %v3428 = vpack.c.b16 %v3394, %v3392
    %v3429 = vpack.c.b16 %v3397, %v3395
    %v3430 = vpack.c.b16 %v3398, %v3396
    %3463 = vmatprep.subr.bf16.mxu0 %v3400
    %3464 = vmatpush1.bf16.msra.mxu0 %v3399
    %3465 = vmatprep.subr.bf16.mxu0 %v3402
    %3466 = vmatpush1.bf16.msra.mxu0 %v3401
    %3467 = vmatprep.subr.bf16.mxu0 %v3404
    %3468 = vmatpush1.bf16.msra.mxu0 %v3403
    %3469 = vmatprep.subr.bf16.mxu0 %v3406
    %3470 = vmatpush1.bf16.msra.mxu0 %v3405
    %3471 = vmatprep.subr.bf16.mxu0 %v3408
    %3472 = vmatpush1.bf16.msra.mxu0 %v3407
    %3473 = vmatprep.subr.bf16.mxu0 %v3410
    %3474 = vmatpush1.bf16.msra.mxu0 %v3409
    %3475 = vmatprep.subr.bf16.mxu0 %v3412
    %3476 = vmatpush1.bf16.msra.mxu0 %v3411
    %3477 = vmatprep.subr.bf16.mxu0 %v3414
    %3478 = vmatpush1.bf16.msra.mxu0 %v3413
    %3479 = vmatprep.subr.bf16.mxu0 %v3416
    %3480 = vmatpush1.bf16.msra.mxu0 %v3415
    %3481 = vmatprep.subr.bf16.mxu0 %v3418
    %3482 = vmatpush1.bf16.msra.mxu0 %v3417
    %3483 = vmatprep.subr.bf16.mxu0 %v3420
    %3484 = vmatpush1.bf16.msra.mxu0 %v3419
    %3485 = vmatprep.subr.bf16.mxu0 %v3422
    %3486 = vmatpush1.bf16.msra.mxu0 %v3421
    %3487 = vmatprep.subr.bf16.mxu0 %v3424
    %3488 = vmatpush1.bf16.msra.mxu0 %v3423
    %3489 = vmatprep.subr.bf16.mxu0 %v3426
    %3490 = vmatpush1.bf16.msra.mxu0 %v3425
    %3491 = vmatprep.subr.bf16.mxu0 %v3428
    %3492 = vmatpush1.bf16.msra.mxu0 %v3427
    %3493 = vmatprep.subr.bf16.mxu0 %v3430
    %3494 = vmatpush1.bf16.msra.mxu0 %v3429
    %3495 = vmatprep.mubr.bf16.mxu0 %v3270
    %3496 = vmatmul.mubr.bf16.gmra.mrb[0].mxu0 %v3269
    %v3497 = vpop.f32.mrb[0].mxu0
    %v3498 = vadd.f32 0.0, %v3497
    %v3499 = vpop.f32.mrb[0].mxu0
    %v3500 = vadd.f32 0.0, %v3499
    %v3501 = vpop.f32.mrb[0].mxu0
    %v3502 = vpop.f32.mrb[0].mxu0
    %3503 = vdwg.mxu0
    %v3504 = vld [vmem:[#allocation2 + $0x70] sm:$0xff]
    %v3505 = vadd.f32 %v3504, %v3498
    %v3506 = vtanh.pop %v3505
    %v3507 = vld [vmem:[#allocation2 + $0x48] sm:$0xff]
    %v3508 = vadd.f32 %v3507, %v3500
    %v3509 = vtanh.pop %v3508
    %s3510 = sld [smem:[#allocation7 + $0x7]]
    %v3511 = vstv %s3510
    %v3512 = vmul.f32 %v3506, %v3511
    %3513 = vst [vmem:[#allocation3 + $0x70] sm:$0xff] %v3512
    %s3514 = sld [smem:[#allocation7 + $0x4]]
    %v3515 = vstv %s3514
    %v3516 = vmul.f32 %v3509, %v3515
    %3517 = vst [vmem:[#allocation3 + $0x48] sm:$0xff] %v3516
    %v3518 = vpack.c.bf16 %v3506, %v3506
    %v3519 = vpack.c.bf16 %v3509, %v3509
    %v3520 = vld [vmem:[%s6] sm:$0xff]
    %v3521 = vld [vmem:[%s6 + $0x8] sm:$0xff]
    %v3522 = vld [vmem:[%s6 + $0x10] sm:$0xff]
    %v3523 = vld [vmem:[%s6 + $0x18] sm:$0xff]
    %v3524 = vld [vmem:[%s6 + $0x20] sm:$0xff]
    %v3525 = vld [vmem:[%s6 + $0x28] sm:$0xff]
    %v3526 = vld [vmem:[%s6 + $0x30] sm:$0xff]
    %v3527 = vld [vmem:[%s6 + $0x38] sm:$0xff]
    %v3528 = vld [vmem:[%s6 + $0x40] sm:$0xff]
    %v3529 = vld [vmem:[%s6 + $0x48] sm:$0xff]
    %v3530 = vld [vmem:[%s6 + $0x50] sm:$0xff]
    %v3531 = vld [vmem:[%s6 + $0x58] sm:$0xff]
    %v3532 = vld [vmem:[%s6 + $0x60] sm:$0xff]
    %v3533 = vld [vmem:[%s6 + $0x68] sm:$0xff]
    %v3534 = vld [vmem:[%s6 + $0x70] sm:$0xff]
    %v3535 = vld [vmem:[%s6 + $0x78] sm:$0xff]
    %v3536 = vld [vmem:[%s6 + $0x80] sm:$0xff]
    %v3537 = vld [vmem:[%s6 + $0x88] sm:$0xff]
    %v3538 = vld [vmem:[%s6 + $0x90] sm:$0xff]
    %v3539 = vld [vmem:[%s6 + $0x98] sm:$0xff]
    %v3540 = vld [vmem:[%s6 + $0xa0] sm:$0xff]
    %v3541 = vld [vmem:[%s6 + $0xa8] sm:$0xff]
    %v3542 = vld [vmem:[%s6 + $0xb0] sm:$0xff]
    %v3543 = vld [vmem:[%s6 + $0xb8] sm:$0xff]
    %v3544 = vld [vmem:[%s6 + $0xc0] sm:$0xff]
    %v3545 = vld [vmem:[%s6 + $0xc8] sm:$0xff]
    %v3546 = vld [vmem:[%s6 + $0xd0] sm:$0xff]
    %v3547 = vld [vmem:[%s6 + $0xd8] sm:$0xff]
    %v3548 = vld [vmem:[%s6 + $0xe0] sm:$0xff]
    %v3549 = vld [vmem:[%s6 + $0xe8] sm:$0xff]
    %v3550 = vld [vmem:[%s6 + $0xf0] sm:$0xff]
    %v3551 = vld [vmem:[%s6 + $0xf8] sm:$0xff]
    %v3584 = vunpack.c.l.b16 %v3520
    %v3585 = vunpack.c.h.b16 %v3520
    %v3586 = vunpack.c.l.b16 %v3521
    %v3587 = vunpack.c.h.b16 %v3521
    %v3588 = vunpack.c.l.b16 %v3522
    %v3589 = vunpack.c.h.b16 %v3522
    %v3590 = vunpack.c.l.b16 %v3523
    %v3591 = vunpack.c.h.b16 %v3523
    %v3592 = vunpack.c.l.b16 %v3524
    %v3593 = vunpack.c.h.b16 %v3524
    %v3594 = vunpack.c.l.b16 %v3525
    %v3595 = vunpack.c.h.b16 %v3525
    %v3596 = vunpack.c.l.b16 %v3526
    %v3597 = vunpack.c.h.b16 %v3526
    %v3598 = vunpack.c.l.b16 %v3527
    %v3599 = vunpack.c.h.b16 %v3527
    %v3600 = vunpack.c.l.b16 %v3528
    %v3601 = vunpack.c.h.b16 %v3528
    %v3602 = vunpack.c.l.b16 %v3529
    %v3603 = vunpack.c.h.b16 %v3529
    %v3604 = vunpack.c.l.b16 %v3530
    %v3605 = vunpack.c.h.b16 %v3530
    %v3606 = vunpack.c.l.b16 %v3531
    %v3607 = vunpack.c.h.b16 %v3531
    %v3608 = vunpack.c.l.b16 %v3532
    %v3609 = vunpack.c.h.b16 %v3532
    %v3610 = vunpack.c.l.b16 %v3533
    %v3611 = vunpack.c.h.b16 %v3533
    %v3612 = vunpack.c.l.b16 %v3534
    %v3613 = vunpack.c.h.b16 %v3534
    %v3614 = vunpack.c.l.b16 %v3535
    %v3615 = vunpack.c.h.b16 %v3535
    %v3616 = vunpack.c.l.b16 %v3536
    %v3617 = vunpack.c.h.b16 %v3536
    %v3618 = vunpack.c.l.b16 %v3537
    %v3619 = vunpack.c.h.b16 %v3537
    %v3620 = vunpack.c.l.b16 %v3538
    %v3621 = vunpack.c.h.b16 %v3538
    %v3622 = vunpack.c.l.b16 %v3539
    %v3623 = vunpack.c.h.b16 %v3539
    %v3624 = vunpack.c.l.b16 %v3540
    %v3625 = vunpack.c.h.b16 %v3540
    %v3626 = vunpack.c.l.b16 %v3541
    %v3627 = vunpack.c.h.b16 %v3541
    %v3628 = vunpack.c.l.b16 %v3542
    %v3629 = vunpack.c.h.b16 %v3542
    %v3630 = vunpack.c.l.b16 %v3543
    %v3631 = vunpack.c.h.b16 %v3543
    %v3632 = vunpack.c.l.b16 %v3544
    %v3633 = vunpack.c.h.b16 %v3544
    %v3634 = vunpack.c.l.b16 %v3545
    %v3635 = vunpack.c.h.b16 %v3545
    %v3636 = vunpack.c.l.b16 %v3546
    %v3637 = vunpack.c.h.b16 %v3546
    %v3638 = vunpack.c.l.b16 %v3547
    %v3639 = vunpack.c.h.b16 %v3547
    %v3640 = vunpack.c.l.b16 %v3548
    %v3641 = vunpack.c.h.b16 %v3548
    %v3642 = vunpack.c.l.b16 %v3549
    %v3643 = vunpack.c.h.b16 %v3549
    %v3644 = vunpack.c.l.b16 %v3550
    %v3645 = vunpack.c.h.b16 %v3550
    %v3646 = vunpack.c.l.b16 %v3551
    %v3647 = vunpack.c.h.b16 %v3551
    %v3648 = vpack.c.b16 %v3586, %v3584
    %v3649 = vpack.c.b16 %v3587, %v3585
    %v3650 = vpack.c.b16 %v3590, %v3588
    %v3651 = vpack.c.b16 %v3591, %v3589
    %v3652 = vpack.c.b16 %v3594, %v3592
    %v3653 = vpack.c.b16 %v3595, %v3593
    %v3654 = vpack.c.b16 %v3598, %v3596
    %v3655 = vpack.c.b16 %v3599, %v3597
    %v3656 = vpack.c.b16 %v3602, %v3600
    %v3657 = vpack.c.b16 %v3603, %v3601
    %v3658 = vpack.c.b16 %v3606, %v3604
    %v3659 = vpack.c.b16 %v3607, %v3605
    %v3660 = vpack.c.b16 %v3610, %v3608
    %v3661 = vpack.c.b16 %v3611, %v3609
    %v3662 = vpack.c.b16 %v3614, %v3612
    %v3663 = vpack.c.b16 %v3615, %v3613
    %v3664 = vpack.c.b16 %v3618, %v3616
    %v3665 = vpack.c.b16 %v3619, %v3617
    %v3666 = vpack.c.b16 %v3622, %v3620
    %v3667 = vpack.c.b16 %v3623, %v3621
    %v3668 = vpack.c.b16 %v3626, %v3624
    %v3669 = vpack.c.b16 %v3627, %v3625
    %v3670 = vpack.c.b16 %v3630, %v3628
    %v3671 = vpack.c.b16 %v3631, %v3629
    %v3672 = vpack.c.b16 %v3634, %v3632
    %v3673 = vpack.c.b16 %v3635, %v3633
    %v3674 = vpack.c.b16 %v3638, %v3636
    %v3675 = vpack.c.b16 %v3639, %v3637
    %v3676 = vpack.c.b16 %v3642, %v3640
    %v3677 = vpack.c.b16 %v3643, %v3641
    %v3678 = vpack.c.b16 %v3646, %v3644
    %v3679 = vpack.c.b16 %v3647, %v3645
    %3712 = vmatprep.subr.bf16.mxu0 %v3649
    %3713 = vmatpush1.bf16.msra.mxu0 %v3648
    %3714 = vmatprep.subr.bf16.mxu0 %v3651
    %3715 = vmatpush1.bf16.msra.mxu0 %v3650
    %3716 = vmatprep.subr.bf16.mxu0 %v3653
    %3717 = vmatpush1.bf16.msra.mxu0 %v3652
    %3718 = vmatprep.subr.bf16.mxu0 %v3655
    %3719 = vmatpush1.bf16.msra.mxu0 %v3654
    %3720 = vmatprep.subr.bf16.mxu0 %v3657
    %3721 = vmatpush1.bf16.msra.mxu0 %v3656
    %3722 = vmatprep.subr.bf16.mxu0 %v3659
    %3723 = vmatpush1.bf16.msra.mxu0 %v3658
    %3724 = vmatprep.subr.bf16.mxu0 %v3661
    %3725 = vmatpush1.bf16.msra.mxu0 %v3660
    %3726 = vmatprep.subr.bf16.mxu0 %v3663
    %3727 = vmatpush1.bf16.msra.mxu0 %v3662
    %3728 = vmatprep.subr.bf16.mxu0 %v3665
    %3729 = vmatpush1.bf16.msra.mxu0 %v3664
    %3730 = vmatprep.subr.bf16.mxu0 %v3667
    %3731 = vmatpush1.bf16.msra.mxu0 %v3666
    %3732 = vmatprep.subr.bf16.mxu0 %v3669
    %3733 = vmatpush1.bf16.msra.mxu0 %v3668
    %3734 = vmatprep.subr.bf16.mxu0 %v3671
    %3735 = vmatpush1.bf16.msra.mxu0 %v3670
    %3736 = vmatprep.subr.bf16.mxu0 %v3673
    %3737 = vmatpush1.bf16.msra.mxu0 %v3672
    %3738 = vmatprep.subr.bf16.mxu0 %v3675
    %3739 = vmatpush1.bf16.msra.mxu0 %v3674
    %3740 = vmatprep.subr.bf16.mxu0 %v3677
    %3741 = vmatpush1.bf16.msra.mxu0 %v3676
    %3742 = vmatprep.subr.bf16.mxu0 %v3679
    %3743 = vmatpush1.bf16.msra.mxu0 %v3678
    %3744 = vmatprep.mubr.bf16.mxu0 %v3519
    %3745 = vmatmul.mubr.bf16.gmra.mrb[0].mxu0 %v3518
    %v3746 = vpop.f32.mrb[0].mxu0
    %v3747 = vadd.f32 0.0, %v3746
    %v3748 = vpop.f32.mrb[0].mxu0
    %v3749 = vadd.f32 0.0, %v3748
    %v3750 = vpop.f32.mrb[0].mxu0
    %v3751 = vpop.f32.mrb[0].mxu0
    %3752 = vdwg.mxu0
    %v3753 = vld [vmem:[#allocation2 + $0x80] sm:$0xff]
    %v3754 = vadd.f32 %v3753, %v3747
    %v3755 = vtanh.pop %v3754
    %v3756 = vld [vmem:[#allocation2 + $0x38] sm:$0xff]
    %v3757 = vadd.f32 %v3756, %v3749
    %v3758 = vtanh.pop %v3757
    %s3759 = sld [smem:[#allocation7 + $0x8]]
    %v3760 = vstv %s3759
    %v3761 = vmul.f32 %v3755, %v3760
    %3762 = vst [vmem:[#allocation3 + $0x80] sm:$0xff] %v3761
    %s3763 = sld [smem:[#allocation7 + $0x3]]
    %v3764 = vstv %s3763
    %v3765 = vmul.f32 %v3758, %v3764
    %3766 = vst [vmem:[#allocation3 + $0x38] sm:$0xff] %v3765
    %v3767 = vpack.c.bf16 %v3755, %v3755
    %v3768 = vpack.c.bf16 %v3758, %v3758
    %v3769 = vld [vmem:[%s6] sm:$0xff]
    %v3770 = vld [vmem:[%s6 + $0x8] sm:$0xff]
    %v3771 = vld [vmem:[%s6 + $0x10] sm:$0xff]
    %v3772 = vld [vmem:[%s6 + $0x18] sm:$0xff]
    %v3773 = vld [vmem:[%s6 + $0x20] sm:$0xff]
    %v3774 = vld [vmem:[%s6 + $0x28] sm:$0xff]
    %v3775 = vld [vmem:[%s6 + $0x30] sm:$0xff]
    %v3776 = vld [vmem:[%s6 + $0x38] sm:$0xff]
    %v3777 = vld [vmem:[%s6 + $0x40] sm:$0xff]
    %v3778 = vld [vmem:[%s6 + $0x48] sm:$0xff]
    %v3779 = vld [vmem:[%s6 + $0x50] sm:$0xff]
    %v3780 = vld [vmem:[%s6 + $0x58] sm:$0xff]
    %v3781 = vld [vmem:[%s6 + $0x60] sm:$0xff]
    %v3782 = vld [vmem:[%s6 + $0x68] sm:$0xff]
    %v3783 = vld [vmem:[%s6 + $0x70] sm:$0xff]
    %v3784 = vld [vmem:[%s6 + $0x78] sm:$0xff]
    %v3785 = vld [vmem:[%s6 + $0x80] sm:$0xff]
    %v3786 = vld [vmem:[%s6 + $0x88] sm:$0xff]
    %v3787 = vld [vmem:[%s6 + $0x90] sm:$0xff]
    %v3788 = vld [vmem:[%s6 + $0x98] sm:$0xff]
    %v3789 = vld [vmem:[%s6 + $0xa0] sm:$0xff]
    %v3790 = vld [vmem:[%s6 + $0xa8] sm:$0xff]
    %v3791 = vld [vmem:[%s6 + $0xb0] sm:$0xff]
    %v3792 = vld [vmem:[%s6 + $0xb8] sm:$0xff]
    %v3793 = vld [vmem:[%s6 + $0xc0] sm:$0xff]
    %v3794 = vld [vmem:[%s6 + $0xc8] sm:$0xff]
    %v3795 = vld [vmem:[%s6 + $0xd0] sm:$0xff]
    %v3796 = vld [vmem:[%s6 + $0xd8] sm:$0xff]
    %v3797 = vld [vmem:[%s6 + $0xe0] sm:$0xff]
    %v3798 = vld [vmem:[%s6 + $0xe8] sm:$0xff]
    %v3799 = vld [vmem:[%s6 + $0xf0] sm:$0xff]
    %v3800 = vld [vmem:[%s6 + $0xf8] sm:$0xff]
    %v3833 = vunpack.c.l.b16 %v3769
    %v3834 = vunpack.c.h.b16 %v3769
    %v3835 = vunpack.c.l.b16 %v3770
    %v3836 = vunpack.c.h.b16 %v3770
    %v3837 = vunpack.c.l.b16 %v3771
    %v3838 = vunpack.c.h.b16 %v3771
    %v3839 = vunpack.c.l.b16 %v3772
    %v3840 = vunpack.c.h.b16 %v3772
    %v3841 = vunpack.c.l.b16 %v3773
    %v3842 = vunpack.c.h.b16 %v3773
    %v3843 = vunpack.c.l.b16 %v3774
    %v3844 = vunpack.c.h.b16 %v3774
    %v3845 = vunpack.c.l.b16 %v3775
    %v3846 = vunpack.c.h.b16 %v3775
    %v3847 = vunpack.c.l.b16 %v3776
    %v3848 = vunpack.c.h.b16 %v3776
    %v3849 = vunpack.c.l.b16 %v3777
    %v3850 = vunpack.c.h.b16 %v3777
    %v3851 = vunpack.c.l.b16 %v3778
    %v3852 = vunpack.c.h.b16 %v3778
    %v3853 = vunpack.c.l.b16 %v3779
    %v3854 = vunpack.c.h.b16 %v3779
    %v3855 = vunpack.c.l.b16 %v3780
    %v3856 = vunpack.c.h.b16 %v3780
    %v3857 = vunpack.c.l.b16 %v3781
    %v3858 = vunpack.c.h.b16 %v3781
    %v3859 = vunpack.c.l.b16 %v3782
    %v3860 = vunpack.c.h.b16 %v3782
    %v3861 = vunpack.c.l.b16 %v3783
    %v3862 = vunpack.c.h.b16 %v3783
    %v3863 = vunpack.c.l.b16 %v3784
    %v3864 = vunpack.c.h.b16 %v3784
    %v3865 = vunpack.c.l.b16 %v3785
    %v3866 = vunpack.c.h.b16 %v3785
    %v3867 = vunpack.c.l.b16 %v3786
    %v3868 = vunpack.c.h.b16 %v3786
    %v3869 = vunpack.c.l.b16 %v3787
    %v3870 = vunpack.c.h.b16 %v3787
    %v3871 = vunpack.c.l.b16 %v3788
    %v3872 = vunpack.c.h.b16 %v3788
    %v3873 = vunpack.c.l.b16 %v3789
    %v3874 = vunpack.c.h.b16 %v3789
    %v3875 = vunpack.c.l.b16 %v3790
    %v3876 = vunpack.c.h.b16 %v3790
    %v3877 = vunpack.c.l.b16 %v3791
    %v3878 = vunpack.c.h.b16 %v3791
    %v3879 = vunpack.c.l.b16 %v3792
    %v3880 = vunpack.c.h.b16 %v3792
    %v3881 = vunpack.c.l.b16 %v3793
    %v3882 = vunpack.c.h.b16 %v3793
    %v3883 = vunpack.c.l.b16 %v3794
    %v3884 = vunpack.c.h.b16 %v3794
    %v3885 = vunpack.c.l.b16 %v3795
    %v3886 = vunpack.c.h.b16 %v3795
    %v3887 = vunpack.c.l.b16 %v3796
    %v3888 = vunpack.c.h.b16 %v3796
    %v3889 = vunpack.c.l.b16 %v3797
    %v3890 = vunpack.c.h.b16 %v3797
    %v3891 = vunpack.c.l.b16 %v3798
    %v3892 = vunpack.c.h.b16 %v3798
    %v3893 = vunpack.c.l.b16 %v3799
    %v3894 = vunpack.c.h.b16 %v3799
    %v3895 = vunpack.c.l.b16 %v3800
    %v3896 = vunpack.c.h.b16 %v3800
    %v3897 = vpack.c.b16 %v3835, %v3833
    %v3898 = vpack.c.b16 %v3836, %v3834
    %v3899 = vpack.c.b16 %v3839, %v3837
    %v3900 = vpack.c.b16 %v3840, %v3838
    %v3901 = vpack.c.b16 %v3843, %v3841
    %v3902 = vpack.c.b16 %v3844, %v3842
    %v3903 = vpack.c.b16 %v3847, %v3845
    %v3904 = vpack.c.b16 %v3848, %v3846
    %v3905 = vpack.c.b16 %v3851, %v3849
    %v3906 = vpack.c.b16 %v3852, %v3850
    %v3907 = vpack.c.b16 %v3855, %v3853
    %v3908 = vpack.c.b16 %v3856, %v3854
    %v3909 = vpack.c.b16 %v3859, %v3857
    %v3910 = vpack.c.b16 %v3860, %v3858
    %v3911 = vpack.c.b16 %v3863, %v3861
    %v3912 = vpack.c.b16 %v3864, %v3862
    %v3913 = vpack.c.b16 %v3867, %v3865
    %v3914 = vpack.c.b16 %v3868, %v3866
    %v3915 = vpack.c.b16 %v3871, %v3869
    %v3916 = vpack.c.b16 %v3872, %v3870
    %v3917 = vpack.c.b16 %v3875, %v3873
    %v3918 = vpack.c.b16 %v3876, %v3874
    %v3919 = vpack.c.b16 %v3879, %v3877
    %v3920 = vpack.c.b16 %v3880, %v3878
    %v3921 = vpack.c.b16 %v3883, %v3881
    %v3922 = vpack.c.b16 %v3884, %v3882
    %v3923 = vpack.c.b16 %v3887, %v3885
    %v3924 = vpack.c.b16 %v3888, %v3886
    %v3925 = vpack.c.b16 %v3891, %v3889
    %v3926 = vpack.c.b16 %v3892, %v3890
    %v3927 = vpack.c.b16 %v3895, %v3893
    %v3928 = vpack.c.b16 %v3896, %v3894
    %3961 = vmatprep.subr.bf16.mxu0 %v3898
    %3962 = vmatpush1.bf16.msra.mxu0 %v3897
    %3963 = vmatprep.subr.bf16.mxu0 %v3900
    %3964 = vmatpush1.bf16.msra.mxu0 %v3899
    %3965 = vmatprep.subr.bf16.mxu0 %v3902
    %3966 = vmatpush1.bf16.msra.mxu0 %v3901
    %3967 = vmatprep.subr.bf16.mxu0 %v3904
    %3968 = vmatpush1.bf16.msra.mxu0 %v3903
    %3969 = vmatprep.subr.bf16.mxu0 %v3906
    %3970 = vmatpush1.bf16.msra.mxu0 %v3905
    %3971 = vmatprep.subr.bf16.mxu0 %v3908
    %3972 = vmatpush1.bf16.msra.mxu0 %v3907
    %3973 = vmatprep.subr.bf16.mxu0 %v3910
    %3974 = vmatpush1.bf16.msra.mxu0 %v3909
    %3975 = vmatprep.subr.bf16.mxu0 %v3912
    %3976 = vmatpush1.bf16.msra.mxu0 %v3911
    %3977 = vmatprep.subr.bf16.mxu0 %v3914
    %3978 = vmatpush1.bf16.msra.mxu0 %v3913
    %3979 = vmatprep.subr.bf16.mxu0 %v3916
    %3980 = vmatpush1.bf16.msra.mxu0 %v3915
    %3981 = vmatprep.subr.bf16.mxu0 %v3918
    %3982 = vmatpush1.bf16.msra.mxu0 %v3917
    %3983 = vmatprep.subr.bf16.mxu0 %v3920
    %3984 = vmatpush1.bf16.msra.mxu0 %v3919
    %3985 = vmatprep.subr.bf16.mxu0 %v3922
    %3986 = vmatpush1.bf16.msra.mxu0 %v3921
    %3987 = vmatprep.subr.bf16.mxu0 %v3924
    %3988 = vmatpush1.bf16.msra.mxu0 %v3923
    %3989 = vmatprep.subr.bf16.mxu0 %v3926
    %3990 = vmatpush1.bf16.msra.mxu0 %v3925
    %3991 = vmatprep.subr.bf16.mxu0 %v3928
    %3992 = vmatpush1.bf16.msra.mxu0 %v3927
    %3993 = vmatprep.mubr.bf16.mxu0 %v3768
    %3994 = vmatmul.mubr.bf16.gmra.mrb[0].mxu0 %v3767
    %v3995 = vpop.f32.mrb[0].mxu0
    %v3996 = vadd.f32 0.0, %v3995
    %v3997 = vpop.f32.mrb[0].mxu0
    %v3998 = vadd.f32 0.0, %v3997
    %v3999 = vpop.f32.mrb[0].mxu0
    %v4000 = vpop.f32.mrb[0].mxu0
    %4001 = vdwg.mxu0
    %v4002 = vld [vmem:[#allocation2 + $0x90] sm:$0xff]
    %v4003 = vadd.f32 %v4002, %v3996
    %v4004 = vtanh.pop %v4003
    %v4005 = vld [vmem:[#allocation2 + $0x28] sm:$0xff]
    %v4006 = vadd.f32 %v4005, %v3998
    %v4007 = vtanh.pop %v4006
    %s4008 = sld [smem:[#allocation7 + $0x9]]
    %v4009 = vstv %s4008
    %v4010 = vmul.f32 %v4004, %v4009
    %4011 = vst [vmem:[#allocation3 + $0x90] sm:$0xff] %v4010
    %s4012 = sld [smem:[#allocation7 + $0x2]]
    %v4013 = vstv %s4012
    %v4014 = vmul.f32 %v4007, %v4013
    %4015 = vst [vmem:[#allocation3 + $0x28] sm:$0xff] %v4014
    %v4016 = vpack.c.bf16 %v4004, %v4004
    %v4017 = vpack.c.bf16 %v4007, %v4007
    %v4018 = vld [vmem:[%s6] sm:$0xff]
    %v4019 = vld [vmem:[%s6 + $0x8] sm:$0xff]
    %v4020 = vld [vmem:[%s6 + $0x10] sm:$0xff]
    %v4021 = vld [vmem:[%s6 + $0x18] sm:$0xff]
    %v4022 = vld [vmem:[%s6 + $0x20] sm:$0xff]
    %v4023 = vld [vmem:[%s6 + $0x28] sm:$0xff]
    %v4024 = vld [vmem:[%s6 + $0x30] sm:$0xff]
    %v4025 = vld [vmem:[%s6 + $0x38] sm:$0xff]
    %v4026 = vld [vmem:[%s6 + $0x40] sm:$0xff]
    %v4027 = vld [vmem:[%s6 + $0x48] sm:$0xff]
    %v4028 = vld [vmem:[%s6 + $0x50] sm:$0xff]
    %v4029 = vld [vmem:[%s6 + $0x58] sm:$0xff]
    %v4030 = vld [vmem:[%s6 + $0x60] sm:$0xff]
    %v4031 = vld [vmem:[%s6 + $0x68] sm:$0xff]
    %v4032 = vld [vmem:[%s6 + $0x70] sm:$0xff]
    %v4033 = vld [vmem:[%s6 + $0x78] sm:$0xff]
    %v4034 = vld [vmem:[%s6 + $0x80] sm:$0xff]
    %v4035 = vld [vmem:[%s6 + $0x88] sm:$0xff]
    %v4036 = vld [vmem:[%s6 + $0x90] sm:$0xff]
    %v4037 = vld [vmem:[%s6 + $0x98] sm:$0xff]
    %v4038 = vld [vmem:[%s6 + $0xa0] sm:$0xff]
    %v4039 = vld [vmem:[%s6 + $0xa8] sm:$0xff]
    %v4040 = vld [vmem:[%s6 + $0xb0] sm:$0xff]
    %v4041 = vld [vmem:[%s6 + $0xb8] sm:$0xff]
    %v4042 = vld [vmem:[%s6 + $0xc0] sm:$0xff]
    %v4043 = vld [vmem:[%s6 + $0xc8] sm:$0xff]
    %v4044 = vld [vmem:[%s6 + $0xd0] sm:$0xff]
    %v4045 = vld [vmem:[%s6 + $0xd8] sm:$0xff]
    %v4046 = vld [vmem:[%s6 + $0xe0] sm:$0xff]
    %v4047 = vld [vmem:[%s6 + $0xe8] sm:$0xff]
    %v4048 = vld [vmem:[%s6 + $0xf0] sm:$0xff]
    %v4049 = vld [vmem:[%s6 + $0xf8] sm:$0xff]
    %v4082 = vunpack.c.l.b16 %v4018
    %v4083 = vunpack.c.h.b16 %v4018
    %v4084 = vunpack.c.l.b16 %v4019
    %v4085 = vunpack.c.h.b16 %v4019
    %v4086 = vunpack.c.l.b16 %v4020
    %v4087 = vunpack.c.h.b16 %v4020
    %v4088 = vunpack.c.l.b16 %v4021
    %v4089 = vunpack.c.h.b16 %v4021
    %v4090 = vunpack.c.l.b16 %v4022
    %v4091 = vunpack.c.h.b16 %v4022
    %v4092 = vunpack.c.l.b16 %v4023
    %v4093 = vunpack.c.h.b16 %v4023
    %v4094 = vunpack.c.l.b16 %v4024
    %v4095 = vunpack.c.h.b16 %v4024
    %v4096 = vunpack.c.l.b16 %v4025
    %v4097 = vunpack.c.h.b16 %v4025
    %v4098 = vunpack.c.l.b16 %v4026
    %v4099 = vunpack.c.h.b16 %v4026
    %v4100 = vunpack.c.l.b16 %v4027
    %v4101 = vunpack.c.h.b16 %v4027
    %v4102 = vunpack.c.l.b16 %v4028
    %v4103 = vunpack.c.h.b16 %v4028
    %v4104 = vunpack.c.l.b16 %v4029
    %v4105 = vunpack.c.h.b16 %v4029
    %v4106 = vunpack.c.l.b16 %v4030
    %v4107 = vunpack.c.h.b16 %v4030
    %v4108 = vunpack.c.l.b16 %v4031
    %v4109 = vunpack.c.h.b16 %v4031
    %v4110 = vunpack.c.l.b16 %v4032
    %v4111 = vunpack.c.h.b16 %v4032
    %v4112 = vunpack.c.l.b16 %v4033
    %v4113 = vunpack.c.h.b16 %v4033
    %v4114 = vunpack.c.l.b16 %v4034
    %v4115 = vunpack.c.h.b16 %v4034
    %v4116 = vunpack.c.l.b16 %v4035
    %v4117 = vunpack.c.h.b16 %v4035
    %v4118 = vunpack.c.l.b16 %v4036
    %v4119 = vunpack.c.h.b16 %v4036
    %v4120 = vunpack.c.l.b16 %v4037
    %v4121 = vunpack.c.h.b16 %v4037
    %v4122 = vunpack.c.l.b16 %v4038
    %v4123 = vunpack.c.h.b16 %v4038
    %v4124 = vunpack.c.l.b16 %v4039
    %v4125 = vunpack.c.h.b16 %v4039
    %v4126 = vunpack.c.l.b16 %v4040
    %v4127 = vunpack.c.h.b16 %v4040
    %v4128 = vunpack.c.l.b16 %v4041
    %v4129 = vunpack.c.h.b16 %v4041
    %v4130 = vunpack.c.l.b16 %v4042
    %v4131 = vunpack.c.h.b16 %v4042
    %v4132 = vunpack.c.l.b16 %v4043
    %v4133 = vunpack.c.h.b16 %v4043
    %v4134 = vunpack.c.l.b16 %v4044
    %v4135 = vunpack.c.h.b16 %v4044
    %v4136 = vunpack.c.l.b16 %v4045
    %v4137 = vunpack.c.h.b16 %v4045
    %v4138 = vunpack.c.l.b16 %v4046
    %v4139 = vunpack.c.h.b16 %v4046
    %v4140 = vunpack.c.l.b16 %v4047
    %v4141 = vunpack.c.h.b16 %v4047
    %v4142 = vunpack.c.l.b16 %v4048
    %v4143 = vunpack.c.h.b16 %v4048
    %v4144 = vunpack.c.l.b16 %v4049
    %v4145 = vunpack.c.h.b16 %v4049
    %v4146 = vpack.c.b16 %v4084, %v4082
    %v4147 = vpack.c.b16 %v4085, %v4083
    %v4148 = vpack.c.b16 %v4088, %v4086
    %v4149 = vpack.c.b16 %v4089, %v4087
    %v4150 = vpack.c.b16 %v4092, %v4090
    %v4151 = vpack.c.b16 %v4093, %v4091
    %v4152 = vpack.c.b16 %v4096, %v4094
    %v4153 = vpack.c.b16 %v4097, %v4095
    %v4154 = vpack.c.b16 %v4100, %v4098
    %v4155 = vpack.c.b16 %v4101, %v4099
    %v4156 = vpack.c.b16 %v4104, %v4102
    %v4157 = vpack.c.b16 %v4105, %v4103
    %v4158 = vpack.c.b16 %v4108, %v4106
    %v4159 = vpack.c.b16 %v4109, %v4107
    %v4160 = vpack.c.b16 %v4112, %v4110
    %v4161 = vpack.c.b16 %v4113, %v4111
    %v4162 = vpack.c.b16 %v4116, %v4114
    %v4163 = vpack.c.b16 %v4117, %v4115
    %v4164 = vpack.c.b16 %v4120, %v4118
    %v4165 = vpack.c.b16 %v4121, %v4119
    %v4166 = vpack.c.b16 %v4124, %v4122
    %v4167 = vpack.c.b16 %v4125, %v4123
    %v4168 = vpack.c.b16 %v4128, %v4126
    %v4169 = vpack.c.b16 %v4129, %v4127
    %v4170 = vpack.c.b16 %v4132, %v4130
    %v4171 = vpack.c.b16 %v4133, %v4131
    %v4172 = vpack.c.b16 %v4136, %v4134
    %v4173 = vpack.c.b16 %v4137, %v4135
    %v4174 = vpack.c.b16 %v4140, %v4138
    %v4175 = vpack.c.b16 %v4141, %v4139
    %v4176 = vpack.c.b16 %v4144, %v4142
    %v4177 = vpack.c.b16 %v4145, %v4143
    %4210 = vmatprep.subr.bf16.mxu0 %v4147
    %4211 = vmatpush1.bf16.msra.mxu0 %v4146
    %4212 = vmatprep.subr.bf16.mxu0 %v4149
    %4213 = vmatpush1.bf16.msra.mxu0 %v4148
    %4214 = vmatprep.subr.bf16.mxu0 %v4151
    %4215 = vmatpush1.bf16.msra.mxu0 %v4150
    %4216 = vmatprep.subr.bf16.mxu0 %v4153
    %4217 = vmatpush1.bf16.msra.mxu0 %v4152
    %4218 = vmatprep.subr.bf16.mxu0 %v4155
    %4219 = vmatpush1.bf16.msra.mxu0 %v4154
    %4220 = vmatprep.subr.bf16.mxu0 %v4157
    %4221 = vmatpush1.bf16.msra.mxu0 %v4156
    %4222 = vmatprep.subr.bf16.mxu0 %v4159
    %4223 = vmatpush1.bf16.msra.mxu0 %v4158
    %4224 = vmatprep.subr.bf16.mxu0 %v4161
    %4225 = vmatpush1.bf16.msra.mxu0 %v4160
    %4226 = vmatprep.subr.bf16.mxu0 %v4163
    %4227 = vmatpush1.bf16.msra.mxu0 %v4162
    %4228 = vmatprep.subr.bf16.mxu0 %v4165
    %4229 = vmatpush1.bf16.msra.mxu0 %v4164
    %4230 = vmatprep.subr.bf16.mxu0 %v4167
    %4231 = vmatpush1.bf16.msra.mxu0 %v4166
    %4232 = vmatprep.subr.bf16.mxu0 %v4169
    %4233 = vmatpush1.bf16.msra.mxu0 %v4168
    %4234 = vmatprep.subr.bf16.mxu0 %v4171
    %4235 = vmatpush1.bf16.msra.mxu0 %v4170
    %4236 = vmatprep.subr.bf16.mxu0 %v4173
    %4237 = vmatpush1.bf16.msra.mxu0 %v4172
    %4238 = vmatprep.subr.bf16.mxu0 %v4175
    %4239 = vmatpush1.bf16.msra.mxu0 %v4174
    %4240 = vmatprep.subr.bf16.mxu0 %v4177
    %4241 = vmatpush1.bf16.msra.mxu0 %v4176
    %4242 = vmatprep.mubr.bf16.mxu0 %v4017
    %4243 = vmatmul.mubr.bf16.gmra.mrb[0].mxu0 %v4016
    %v4244 = vpop.f32.mrb[0].mxu0
    %v4245 = vadd.f32 0.0, %v4244
    %v4246 = vpop.f32.mrb[0].mxu0
    %v4247 = vadd.f32 0.0, %v4246
    %v4248 = vpop.f32.mrb[0].mxu0
    %v4249 = vpop.f32.mrb[0].mxu0
    %4250 = vdwg.mxu0
    %v4251 = vld [vmem:[#allocation2 + $0xa0] sm:$0xff]
    %v4252 = vadd.f32 %v4251, %v4245
    %v4253 = vtanh.pop %v4252
    %v4254 = vld [vmem:[#allocation2 + $0x18] sm:$0xff]
    %v4255 = vadd.f32 %v4254, %v4247
    %v4256 = vtanh.pop %v4255
    %s4257 = sld [smem:[#allocation7 + $0xa]]
    %v4258 = vstv %s4257
    %v4259 = vmul.f32 %v4253, %v4258
    %4260 = vst [vmem:[#allocation3 + $0xa0] sm:$0xff] %v4259
    %s4261 = sld [smem:[#allocation7 + $0x1]]
    %v4262 = vstv %s4261
    %v4263 = vmul.f32 %v4256, %v4262
    %4264 = vst [vmem:[#allocation3 + $0x18] sm:$0xff] %v4263
    %v4265 = vpack.c.bf16 %v4253, %v4253
    %v4266 = vpack.c.bf16 %v4256, %v4256
    %v4267 = vld [vmem:[%s6] sm:$0xff]
    %v4268 = vld [vmem:[%s6 + $0x8] sm:$0xff]
    %v4269 = vld [vmem:[%s6 + $0x10] sm:$0xff]
    %v4270 = vld [vmem:[%s6 + $0x18] sm:$0xff]
    %v4271 = vld [vmem:[%s6 + $0x20] sm:$0xff]
    %v4272 = vld [vmem:[%s6 + $0x28] sm:$0xff]
    %v4273 = vld [vmem:[%s6 + $0x30] sm:$0xff]
    %v4274 = vld [vmem:[%s6 + $0x38] sm:$0xff]
    %v4275 = vld [vmem:[%s6 + $0x40] sm:$0xff]
    %v4276 = vld [vmem:[%s6 + $0x48] sm:$0xff]
    %v4277 = vld [vmem:[%s6 + $0x50] sm:$0xff]
    %v4278 = vld [vmem:[%s6 + $0x58] sm:$0xff]
    %v4279 = vld [vmem:[%s6 + $0x60] sm:$0xff]
    %v4280 = vld [vmem:[%s6 + $0x68] sm:$0xff]
    %v4281 = vld [vmem:[%s6 + $0x70] sm:$0xff]
    %v4282 = vld [vmem:[%s6 + $0x78] sm:$0xff]
    %v4283 = vld [vmem:[%s6 + $0x80] sm:$0xff]
    %v4284 = vld [vmem:[%s6 + $0x88] sm:$0xff]
    %v4285 = vld [vmem:[%s6 + $0x90] sm:$0xff]
    %v4286 = vld [vmem:[%s6 + $0x98] sm:$0xff]
    %v4287 = vld [vmem:[%s6 + $0xa0] sm:$0xff]
    %v4288 = vld [vmem:[%s6 + $0xa8] sm:$0xff]
    %v4289 = vld [vmem:[%s6 + $0xb0] sm:$0xff]
    %v4290 = vld [vmem:[%s6 + $0xb8] sm:$0xff]
    %v4291 = vld [vmem:[%s6 + $0xc0] sm:$0xff]
    %v4292 = vld [vmem:[%s6 + $0xc8] sm:$0xff]
    %v4293 = vld [vmem:[%s6 + $0xd0] sm:$0xff]
    %v4294 = vld [vmem:[%s6 + $0xd8] sm:$0xff]
    %v4295 = vld [vmem:[%s6 + $0xe0] sm:$0xff]
    %v4296 = vld [vmem:[%s6 + $0xe8] sm:$0xff]
    %v4297 = vld [vmem:[%s6 + $0xf0] sm:$0xff]
    %v4298 = vld [vmem:[%s6 + $0xf8] sm:$0xff]
    %v4331 = vunpack.c.l.b16 %v4267
    %v4332 = vunpack.c.h.b16 %v4267
    %v4333 = vunpack.c.l.b16 %v4268
    %v4334 = vunpack.c.h.b16 %v4268
    %v4335 = vunpack.c.l.b16 %v4269
    %v4336 = vunpack.c.h.b16 %v4269
    %v4337 = vunpack.c.l.b16 %v4270
    %v4338 = vunpack.c.h.b16 %v4270
    %v4339 = vunpack.c.l.b16 %v4271
    %v4340 = vunpack.c.h.b16 %v4271
    %v4341 = vunpack.c.l.b16 %v4272
    %v4342 = vunpack.c.h.b16 %v4272
    %v4343 = vunpack.c.l.b16 %v4273
    %v4344 = vunpack.c.h.b16 %v4273
    %v4345 = vunpack.c.l.b16 %v4274
    %v4346 = vunpack.c.h.b16 %v4274
    %v4347 = vunpack.c.l.b16 %v4275
    %v4348 = vunpack.c.h.b16 %v4275
    %v4349 = vunpack.c.l.b16 %v4276
    %v4350 = vunpack.c.h.b16 %v4276
    %v4351 = vunpack.c.l.b16 %v4277
    %v4352 = vunpack.c.h.b16 %v4277
    %v4353 = vunpack.c.l.b16 %v4278
    %v4354 = vunpack.c.h.b16 %v4278
    %v4355 = vunpack.c.l.b16 %v4279
    %v4356 = vunpack.c.h.b16 %v4279
    %v4357 = vunpack.c.l.b16 %v4280
    %v4358 = vunpack.c.h.b16 %v4280
    %v4359 = vunpack.c.l.b16 %v4281
    %v4360 = vunpack.c.h.b16 %v4281
    %v4361 = vunpack.c.l.b16 %v4282
    %v4362 = vunpack.c.h.b16 %v4282
    %v4363 = vunpack.c.l.b16 %v4283
    %v4364 = vunpack.c.h.b16 %v4283
    %v4365 = vunpack.c.l.b16 %v4284
    %v4366 = vunpack.c.h.b16 %v4284
    %v4367 = vunpack.c.l.b16 %v4285
    %v4368 = vunpack.c.h.b16 %v4285
    %v4369 = vunpack.c.l.b16 %v4286
    %v4370 = vunpack.c.h.b16 %v4286
    %v4371 = vunpack.c.l.b16 %v4287
    %v4372 = vunpack.c.h.b16 %v4287
    %v4373 = vunpack.c.l.b16 %v4288
    %v4374 = vunpack.c.h.b16 %v4288
    %v4375 = vunpack.c.l.b16 %v4289
    %v4376 = vunpack.c.h.b16 %v4289
    %v4377 = vunpack.c.l.b16 %v4290
    %v4378 = vunpack.c.h.b16 %v4290
    %v4379 = vunpack.c.l.b16 %v4291
    %v4380 = vunpack.c.h.b16 %v4291
    %v4381 = vunpack.c.l.b16 %v4292
    %v4382 = vunpack.c.h.b16 %v4292
    %v4383 = vunpack.c.l.b16 %v4293
    %v4384 = vunpack.c.h.b16 %v4293
    %v4385 = vunpack.c.l.b16 %v4294
    %v4386 = vunpack.c.h.b16 %v4294
    %v4387 = vunpack.c.l.b16 %v4295
    %v4388 = vunpack.c.h.b16 %v4295
    %v4389 = vunpack.c.l.b16 %v4296
    %v4390 = vunpack.c.h.b16 %v4296
    %v4391 = vunpack.c.l.b16 %v4297
    %v4392 = vunpack.c.h.b16 %v4297
    %v4393 = vunpack.c.l.b16 %v4298
    %v4394 = vunpack.c.h.b16 %v4298
    %v4395 = vpack.c.b16 %v4333, %v4331
    %v4396 = vpack.c.b16 %v4334, %v4332
    %v4397 = vpack.c.b16 %v4337, %v4335
    %v4398 = vpack.c.b16 %v4338, %v4336
    %v4399 = vpack.c.b16 %v4341, %v4339
    %v4400 = vpack.c.b16 %v4342, %v4340
    %v4401 = vpack.c.b16 %v4345, %v4343
    %v4402 = vpack.c.b16 %v4346, %v4344
    %v4403 = vpack.c.b16 %v4349, %v4347
    %v4404 = vpack.c.b16 %v4350, %v4348
    %v4405 = vpack.c.b16 %v4353, %v4351
    %v4406 = vpack.c.b16 %v4354, %v4352
    %v4407 = vpack.c.b16 %v4357, %v4355
    %v4408 = vpack.c.b16 %v4358, %v4356
    %v4409 = vpack.c.b16 %v4361, %v4359
    %v4410 = vpack.c.b16 %v4362, %v4360
    %v4411 = vpack.c.b16 %v4365, %v4363
    %v4412 = vpack.c.b16 %v4366, %v4364
    %v4413 = vpack.c.b16 %v4369, %v4367
    %v4414 = vpack.c.b16 %v4370, %v4368
    %v4415 = vpack.c.b16 %v4373, %v4371
    %v4416 = vpack.c.b16 %v4374, %v4372
    %v4417 = vpack.c.b16 %v4377, %v4375
    %v4418 = vpack.c.b16 %v4378, %v4376
    %v4419 = vpack.c.b16 %v4381, %v4379
    %v4420 = vpack.c.b16 %v4382, %v4380
    %v4421 = vpack.c.b16 %v4385, %v4383
    %v4422 = vpack.c.b16 %v4386, %v4384
    %v4423 = vpack.c.b16 %v4389, %v4387
    %v4424 = vpack.c.b16 %v4390, %v4388
    %v4425 = vpack.c.b16 %v4393, %v4391
    %v4426 = vpack.c.b16 %v4394, %v4392
    %4459 = vmatprep.subr.bf16.mxu0 %v4396
    %4460 = vmatpush1.bf16.msra.mxu0 %v4395
    %4461 = vmatprep.subr.bf16.mxu0 %v4398
    %4462 = vmatpush1.bf16.msra.mxu0 %v4397
    %4463 = vmatprep.subr.bf16.mxu0 %v4400
    %4464 = vmatpush1.bf16.msra.mxu0 %v4399
    %4465 = vmatprep.subr.bf16.mxu0 %v4402
    %4466 = vmatpush1.bf16.msra.mxu0 %v4401
    %4467 = vmatprep.subr.bf16.mxu0 %v4404
    %4468 = vmatpush1.bf16.msra.mxu0 %v4403
    %4469 = vmatprep.subr.bf16.mxu0 %v4406
    %4470 = vmatpush1.bf16.msra.mxu0 %v4405
    %4471 = vmatprep.subr.bf16.mxu0 %v4408
    %4472 = vmatpush1.bf16.msra.mxu0 %v4407
    %4473 = vmatprep.subr.bf16.mxu0 %v4410
    %4474 = vmatpush1.bf16.msra.mxu0 %v4409
    %4475 = vmatprep.subr.bf16.mxu0 %v4412
    %4476 = vmatpush1.bf16.msra.mxu0 %v4411
    %4477 = vmatprep.subr.bf16.mxu0 %v4414
    %4478 = vmatpush1.bf16.msra.mxu0 %v4413
    %4479 = vmatprep.subr.bf16.mxu0 %v4416
    %4480 = vmatpush1.bf16.msra.mxu0 %v4415
    %4481 = vmatprep.subr.bf16.mxu0 %v4418
    %4482 = vmatpush1.bf16.msra.mxu0 %v4417
    %4483 = vmatprep.subr.bf16.mxu0 %v4420
    %4484 = vmatpush1.bf16.msra.mxu0 %v4419
    %4485 = vmatprep.subr.bf16.mxu0 %v4422
    %4486 = vmatpush1.bf16.msra.mxu0 %v4421
    %4487 = vmatprep.subr.bf16.mxu0 %v4424
    %4488 = vmatpush1.bf16.msra.mxu0 %v4423
    %4489 = vmatprep.subr.bf16.mxu0 %v4426
    %4490 = vmatpush1.bf16.msra.mxu0 %v4425
    %4491 = vmatprep.mubr.bf16.mxu0 %v4266
    %4492 = vmatmul.mubr.bf16.gmra.mrb[0].mxu0 %v4265
    %v4493 = vpop.f32.mrb[0].mxu0
    %v4494 = vadd.f32 0.0, %v4493
    %v4495 = vpop.f32.mrb[0].mxu0
    %v4496 = vadd.f32 0.0, %v4495
    %v4497 = vpop.f32.mrb[0].mxu0
    %v4498 = vpop.f32.mrb[0].mxu0
    %4499 = vdwg.mxu0
    %v4500 = vld [vmem:[#allocation2 + $0xb0] sm:$0xff]
    %v4501 = vadd.f32 %v4500, %v4494
    %v4502 = vtanh.pop %v4501
    %v4503 = vld [vmem:[#allocation2 + $0x8] sm:$0xff]
    %v4504 = vadd.f32 %v4503, %v4496
    %v4505 = vtanh.pop %v4504
    %s4506 = sld [smem:[#allocation7 + $0xb]]
    %v4507 = vstv %s4506
    %v4508 = vmul.f32 %v4502, %v4507
    %4509 = vst [vmem:[#allocation3 + $0xb0] sm:$0xff] %v4508
    %s4510 = sld [smem:[#allocation7]]
    %v4511 = vstv %s4510
    %v4512 = vmul.f32 %v4505, %v4511
    %4513 = vst [vmem:[#allocation3 + $0x8] sm:$0xff] %v4512
    %v4514 = vld [vmem:[#allocation3] sm:$0xff]
    %v4515 = vld [vmem:[#allocation3 + $0x8] sm:$0xff]
    %v4516 = vld [vmem:[#allocation3 + $0x10] sm:$0xff]
    %v4517 = vld [vmem:[#allocation3 + $0x18] sm:$0xff]
    %v4518 = vld [vmem:[#allocation3 + $0x20] sm:$0xff]
    %v4519 = vld [vmem:[#allocation3 + $0x28] sm:$0xff]
    %v4520 = vld [vmem:[#allocation3 + $0x30] sm:$0xff]
    %v4521 = vld [vmem:[#allocation3 + $0x38] sm:$0xff]
    %v4522 = vld [vmem:[#allocation3 + $0x40] sm:$0xff]
    %v4523 = vld [vmem:[#allocation3 + $0x48] sm:$0xff]
    %v4524 = vld [vmem:[#allocation3 + $0x50] sm:$0xff]
    %v4525 = vld [vmem:[#allocation3 + $0x58] sm:$0xff]
    %v4526 = vld [vmem:[#allocation3 + $0x60] sm:$0xff]
    %v4527 = vld [vmem:[#allocation3 + $0x68] sm:$0xff]
    %v4528 = vld [vmem:[#allocation3 + $0x70] sm:$0xff]
    %v4529 = vld [vmem:[#allocation3 + $0x78] sm:$0xff]
    %v4530 = vld [vmem:[#allocation3 + $0x80] sm:$0xff]
    %v4531 = vld [vmem:[#allocation3 + $0x88] sm:$0xff]
    %v4532 = vld [vmem:[#allocation3 + $0x90] sm:$0xff]
    %v4533 = vld [vmem:[#allocation3 + $0x98] sm:$0xff]
    %v4534 = vld [vmem:[#allocation3 + $0xa0] sm:$0xff]
    %v4535 = vld [vmem:[#allocation3 + $0xa8] sm:$0xff]
    %v4536 = vld [vmem:[#allocation3 + $0xb0] sm:$0xff]
    %v4537 = vld [vmem:[#allocation3 + $0xb8] sm:$0xff]
    %v4538 = vpack.c.bf16 %v4516, %v4514
    %v4539 = vpack.c.bf16 %v4517, %v4515
    %v4540 = vpack.c.bf16 %v4520, %v4518
    %v4541 = vpack.c.bf16 %v4521, %v4519
    %v4542 = vpack.c.bf16 %v4524, %v4522
    %v4543 = vpack.c.bf16 %v4525, %v4523
    %v4544 = vpack.c.bf16 %v4528, %v4526
    %v4545 = vpack.c.bf16 %v4529, %v4527
    %v4546 = vpack.c.bf16 %v4532, %v4530
    %v4547 = vpack.c.bf16 %v4533, %v4531
    %v4548 = vpack.c.bf16 %v4536, %v4534
    %v4549 = vpack.c.bf16 %v4537, %v4535
    %v4550 = vld [vmem:[%s7] sm:$0xff]
    %v4551 = vld [vmem:[%s7 + $0x8] sm:$0xff]
    %v4552 = vld [vmem:[%s7 + $0x10] sm:$0xff]
    %v4553 = vld [vmem:[%s7 + $0x18] sm:$0xff]
    %v4554 = vld [vmem:[%s7 + $0x20] sm:$0xff]
    %v4555 = vld [vmem:[%s7 + $0x28] sm:$0xff]
    %v4556 = vld [vmem:[%s7 + $0x30] sm:$0xff]
    %v4557 = vld [vmem:[%s7 + $0x38] sm:$0xff]
    %v4558 = vld [vmem:[%s7 + $0x40] sm:$0xff]
    %v4559 = vld [vmem:[%s7 + $0x48] sm:$0xff]
    %v4560 = vld [vmem:[%s7 + $0x50] sm:$0xff]
    %v4561 = vld [vmem:[%s7 + $0x58] sm:$0xff]
    %v4562 = vld [vmem:[%s7 + $0x60] sm:$0xff]
    %v4563 = vld [vmem:[%s7 + $0x68] sm:$0xff]
    %v4564 = vld [vmem:[%s7 + $0x70] sm:$0xff]
    %v4565 = vld [vmem:[%s7 + $0x78] sm:$0xff]
    %v4566 = vld [vmem:[%s7 + $0x80] sm:$0xff]
    %v4567 = vld [vmem:[%s7 + $0x88] sm:$0xff]
    %v4568 = vld [vmem:[%s7 + $0x90] sm:$0xff]
    %v4569 = vld [vmem:[%s7 + $0x98] sm:$0xff]
    %v4570 = vld [vmem:[%s7 + $0xa0] sm:$0xff]
    %v4571 = vld [vmem:[%s7 + $0xa8] sm:$0xff]
    %v4572 = vld [vmem:[%s7 + $0xb0] sm:$0xff]
    %v4573 = vld [vmem:[%s7 + $0xb8] sm:$0xff]
    %v4574 = vld [vmem:[%s7 + $0xc0] sm:$0xff]
    %v4575 = vld [vmem:[%s7 + $0xc8] sm:$0xff]
    %v4576 = vld [vmem:[%s7 + $0xd0] sm:$0xff]
    %v4577 = vld [vmem:[%s7 + $0xd8] sm:$0xff]
    %v4578 = vld [vmem:[%s7 + $0xe0] sm:$0xff]
    %v4579 = vld [vmem:[%s7 + $0xe8] sm:$0xff]
    %v4580 = vld [vmem:[%s7 + $0xf0] sm:$0xff]
    %v4581 = vld [vmem:[%s7 + $0xf8] sm:$0xff]
    %v4582 = vld [vmem:[%s7 + $0x100] sm:$0xff]
    %v4583 = vld [vmem:[%s7 + $0x108] sm:$0xff]
    %v4584 = vld [vmem:[%s7 + $0x110] sm:$0xff]
    %v4585 = vld [vmem:[%s7 + $0x118] sm:$0xff]
    %v4586 = vld [vmem:[%s7 + $0x120] sm:$0xff]
    %v4587 = vld [vmem:[%s7 + $0x128] sm:$0xff]
    %v4588 = vld [vmem:[%s7 + $0x130] sm:$0xff]
    %v4589 = vld [vmem:[%s7 + $0x138] sm:$0xff]
    %v4590 = vld [vmem:[%s7 + $0x140] sm:$0xff]
    %v4591 = vld [vmem:[%s7 + $0x148] sm:$0xff]
    %v4592 = vld [vmem:[%s7 + $0x150] sm:$0xff]
    %v4593 = vld [vmem:[%s7 + $0x158] sm:$0xff]
    %v4594 = vld [vmem:[%s7 + $0x160] sm:$0xff]
    %v4595 = vld [vmem:[%s7 + $0x168] sm:$0xff]
    %v4596 = vld [vmem:[%s7 + $0x170] sm:$0xff]
    %v4597 = vld [vmem:[%s7 + $0x178] sm:$0xff]
    %v4598 = vld [vmem:[%s7 + $0x180] sm:$0xff]
    %v4599 = vld [vmem:[%s7 + $0x188] sm:$0xff]
    %v4600 = vld [vmem:[%s7 + $0x190] sm:$0xff]
    %v4601 = vld [vmem:[%s7 + $0x198] sm:$0xff]
    %v4602 = vld [vmem:[%s7 + $0x1a0] sm:$0xff]
    %v4603 = vld [vmem:[%s7 + $0x1a8] sm:$0xff]
    %v4604 = vld [vmem:[%s7 + $0x1b0] sm:$0xff]
    %v4605 = vld [vmem:[%s7 + $0x1b8] sm:$0xff]
    %v4606 = vld [vmem:[%s7 + $0x1c0] sm:$0xff]
    %v4607 = vld [vmem:[%s7 + $0x1c8] sm:$0xff]
    %v4608 = vld [vmem:[%s7 + $0x1d0] sm:$0xff]
    %v4609 = vld [vmem:[%s7 + $0x1d8] sm:$0xff]
    %v4610 = vld [vmem:[%s7 + $0x1e0] sm:$0xff]
    %v4611 = vld [vmem:[%s7 + $0x1e8] sm:$0xff]
    %v4612 = vld [vmem:[%s7 + $0x1f0] sm:$0xff]
    %v4613 = vld [vmem:[%s7 + $0x1f8] sm:$0xff]
    %v4678 = vunpack.c.l.b16 %v4550
    %v4679 = vunpack.c.h.b16 %v4550
    %v4680 = vunpack.c.l.b16 %v4551
    %v4681 = vunpack.c.h.b16 %v4551
    %v4682 = vunpack.c.l.b16 %v4552
    %v4683 = vunpack.c.h.b16 %v4552
    %v4684 = vunpack.c.l.b16 %v4553
    %v4685 = vunpack.c.h.b16 %v4553
    %v4686 = vunpack.c.l.b16 %v4554
    %v4687 = vunpack.c.h.b16 %v4554
    %v4688 = vunpack.c.l.b16 %v4555
    %v4689 = vunpack.c.h.b16 %v4555
    %v4690 = vunpack.c.l.b16 %v4556
    %v4691 = vunpack.c.h.b16 %v4556
    %v4692 = vunpack.c.l.b16 %v4557
    %v4693 = vunpack.c.h.b16 %v4557
    %v4694 = vunpack.c.l.b16 %v4558
    %v4695 = vunpack.c.h.b16 %v4558
    %v4696 = vunpack.c.l.b16 %v4559
    %v4697 = vunpack.c.h.b16 %v4559
    %v4698 = vunpack.c.l.b16 %v4560
    %v4699 = vunpack.c.h.b16 %v4560
    %v4700 = vunpack.c.l.b16 %v4561
    %v4701 = vunpack.c.h.b16 %v4561
    %v4702 = vunpack.c.l.b16 %v4562
    %v4703 = vunpack.c.h.b16 %v4562
    %v4704 = vunpack.c.l.b16 %v4563
    %v4705 = vunpack.c.h.b16 %v4563
    %v4706 = vunpack.c.l.b16 %v4564
    %v4707 = vunpack.c.h.b16 %v4564
    %v4708 = vunpack.c.l.b16 %v4565
    %v4709 = vunpack.c.h.b16 %v4565
    %v4710 = vunpack.c.l.b16 %v4566
    %v4711 = vunpack.c.h.b16 %v4566
    %v4712 = vunpack.c.l.b16 %v4567
    %v4713 = vunpack.c.h.b16 %v4567
    %v4714 = vunpack.c.l.b16 %v4568
    %v4715 = vunpack.c.h.b16 %v4568
    %v4716 = vunpack.c.l.b16 %v4569
    %v4717 = vunpack.c.h.b16 %v4569
    %v4718 = vunpack.c.l.b16 %v4570
    %v4719 = vunpack.c.h.b16 %v4570
    %v4720 = vunpack.c.l.b16 %v4571
    %v4721 = vunpack.c.h.b16 %v4571
    %v4722 = vunpack.c.l.b16 %v4572
    %v4723 = vunpack.c.h.b16 %v4572
    %v4724 = vunpack.c.l.b16 %v4573
    %v4725 = vunpack.c.h.b16 %v4573
    %v4726 = vunpack.c.l.b16 %v4574
    %v4727 = vunpack.c.h.b16 %v4574
    %v4728 = vunpack.c.l.b16 %v4575
    %v4729 = vunpack.c.h.b16 %v4575
    %v4730 = vunpack.c.l.b16 %v4576
    %v4731 = vunpack.c.h.b16 %v4576
    %v4732 = vunpack.c.l.b16 %v4577
    %v4733 = vunpack.c.h.b16 %v4577
    %v4734 = vunpack.c.l.b16 %v4578
    %v4735 = vunpack.c.h.b16 %v4578
    %v4736 = vunpack.c.l.b16 %v4579
    %v4737 = vunpack.c.h.b16 %v4579
    %v4738 = vunpack.c.l.b16 %v4580
    %v4739 = vunpack.c.h.b16 %v4580
    %v4740 = vunpack.c.l.b16 %v4581
    %v4741 = vunpack.c.h.b16 %v4581
    %v4742 = vunpack.c.l.b16 %v4582
    %v4743 = vunpack.c.h.b16 %v4582
    %v4744 = vunpack.c.l.b16 %v4583
    %v4745 = vunpack.c.h.b16 %v4583
    %v4746 = vunpack.c.l.b16 %v4584
    %v4747 = vunpack.c.h.b16 %v4584
    %v4748 = vunpack.c.l.b16 %v4585
    %v4749 = vunpack.c.h.b16 %v4585
    %v4750 = vunpack.c.l.b16 %v4586
    %v4751 = vunpack.c.h.b16 %v4586
    %v4752 = vunpack.c.l.b16 %v4587
    %v4753 = vunpack.c.h.b16 %v4587
    %v4754 = vunpack.c.l.b16 %v4588
    %v4755 = vunpack.c.h.b16 %v4588
    %v4756 = vunpack.c.l.b16 %v4589
    %v4757 = vunpack.c.h.b16 %v4589
    %v4758 = vunpack.c.l.b16 %v4590
    %v4759 = vunpack.c.h.b16 %v4590
    %v4760 = vunpack.c.l.b16 %v4591
    %v4761 = vunpack.c.h.b16 %v4591
    %v4762 = vunpack.c.l.b16 %v4592
    %v4763 = vunpack.c.h.b16 %v4592
    %v4764 = vunpack.c.l.b16 %v4593
    %v4765 = vunpack.c.h.b16 %v4593
    %v4766 = vunpack.c.l.b16 %v4594
    %v4767 = vunpack.c.h.b16 %v4594
    %v4768 = vunpack.c.l.b16 %v4595
    %v4769 = vunpack.c.h.b16 %v4595
    %v4770 = vunpack.c.l.b16 %v4596
    %v4771 = vunpack.c.h.b16 %v4596
    %v4772 = vunpack.c.l.b16 %v4597
    %v4773 = vunpack.c.h.b16 %v4597
    %v4774 = vunpack.c.l.b16 %v4598
    %v4775 = vunpack.c.h.b16 %v4598
    %v4776 = vunpack.c.l.b16 %v4599
    %v4777 = vunpack.c.h.b16 %v4599
    %v4778 = vunpack.c.l.b16 %v4600
    %v4779 = vunpack.c.h.b16 %v4600
    %v4780 = vunpack.c.l.b16 %v4601
    %v4781 = vunpack.c.h.b16 %v4601
    %v4782 = vunpack.c.l.b16 %v4602
    %v4783 = vunpack.c.h.b16 %v4602
    %v4784 = vunpack.c.l.b16 %v4603
    %v4785 = vunpack.c.h.b16 %v4603
    %v4786 = vunpack.c.l.b16 %v4604
    %v4787 = vunpack.c.h.b16 %v4604
    %v4788 = vunpack.c.l.b16 %v4605
    %v4789 = vunpack.c.h.b16 %v4605
    %v4790 = vunpack.c.l.b16 %v4606
    %v4791 = vunpack.c.h.b16 %v4606
    %v4792 = vunpack.c.l.b16 %v4607
    %v4793 = vunpack.c.h.b16 %v4607
    %v4794 = vunpack.c.l.b16 %v4608
    %v4795 = vunpack.c.h.b16 %v4608
    %v4796 = vunpack.c.l.b16 %v4609
    %v4797 = vunpack.c.h.b16 %v4609
    %v4798 = vunpack.c.l.b16 %v4610
    %v4799 = vunpack.c.h.b16 %v4610
    %v4800 = vunpack.c.l.b16 %v4611
    %v4801 = vunpack.c.h.b16 %v4611
    %v4802 = vunpack.c.l.b16 %v4612
    %v4803 = vunpack.c.h.b16 %v4612
    %v4804 = vunpack.c.l.b16 %v4613
    %v4805 = vunpack.c.h.b16 %v4613
    %v4806 = vpack.c.b16 %v4682, %v4678
    %v4807 = vpack.c.b16 %v4683, %v4679
    %v4808 = vpack.c.b16 %v4684, %v4680
    %v4809 = vpack.c.b16 %v4685, %v4681
    %v4810 = vpack.c.b16 %v4690, %v4686
    %v4811 = vpack.c.b16 %v4691, %v4687
    %v4812 = vpack.c.b16 %v4692, %v4688
    %v4813 = vpack.c.b16 %v4693, %v4689
    %v4814 = vpack.c.b16 %v4698, %v4694
    %v4815 = vpack.c.b16 %v4699, %v4695
    %v4816 = vpack.c.b16 %v4700, %v4696
    %v4817 = vpack.c.b16 %v4701, %v4697
    %v4818 = vpack.c.b16 %v4706, %v4702
    %v4819 = vpack.c.b16 %v4707, %v4703
    %v4820 = vpack.c.b16 %v4708, %v4704
    %v4821 = vpack.c.b16 %v4709, %v4705
    %v4822 = vpack.c.b16 %v4714, %v4710
    %v4823 = vpack.c.b16 %v4715, %v4711
    %v4824 = vpack.c.b16 %v4716, %v4712
    %v4825 = vpack.c.b16 %v4717, %v4713
    %v4826 = vpack.c.b16 %v4722, %v4718
    %v4827 = vpack.c.b16 %v4723, %v4719
    %v4828 = vpack.c.b16 %v4724, %v4720
    %v4829 = vpack.c.b16 %v4725, %v4721
    %v4830 = vpack.c.b16 %v4730, %v4726
    %v4831 = vpack.c.b16 %v4731, %v4727
    %v4832 = vpack.c.b16 %v4732, %v4728
    %v4833 = vpack.c.b16 %v4733, %v4729
    %v4834 = vpack.c.b16 %v4738, %v4734
    %v4835 = vpack.c.b16 %v4739, %v4735
    %v4836 = vpack.c.b16 %v4740, %v4736
    %v4837 = vpack.c.b16 %v4741, %v4737
    %v4838 = vpack.c.b16 %v4746, %v4742
    %v4839 = vpack.c.b16 %v4747, %v4743
    %v4840 = vpack.c.b16 %v4748, %v4744
    %v4841 = vpack.c.b16 %v4749, %v4745
    %v4842 = vpack.c.b16 %v4754, %v4750
    %v4843 = vpack.c.b16 %v4755, %v4751
    %v4844 = vpack.c.b16 %v4756, %v4752
    %v4845 = vpack.c.b16 %v4757, %v4753
    %v4846 = vpack.c.b16 %v4762, %v4758
    %v4847 = vpack.c.b16 %v4763, %v4759
    %v4848 = vpack.c.b16 %v4764, %v4760
    %v4849 = vpack.c.b16 %v4765, %v4761
    %v4850 = vpack.c.b16 %v4770, %v4766
    %v4851 = vpack.c.b16 %v4771, %v4767
    %v4852 = vpack.c.b16 %v4772, %v4768
    %v4853 = vpack.c.b16 %v4773, %v4769
    %v4854 = vpack.c.b16 %v4778, %v4774
    %v4855 = vpack.c.b16 %v4779, %v4775
    %v4856 = vpack.c.b16 %v4780, %v4776
    %v4857 = vpack.c.b16 %v4781, %v4777
    %v4858 = vpack.c.b16 %v4786, %v4782
    %v4859 = vpack.c.b16 %v4787, %v4783
    %v4860 = vpack.c.b16 %v4788, %v4784
    %v4861 = vpack.c.b16 %v4789, %v4785
    %v4862 = vpack.c.b16 %v4794, %v4790
    %v4863 = vpack.c.b16 %v4795, %v4791
    %v4864 = vpack.c.b16 %v4796, %v4792
    %v4865 = vpack.c.b16 %v4797, %v4793
    %v4866 = vpack.c.b16 %v4802, %v4798
    %v4867 = vpack.c.b16 %v4803, %v4799
    %v4868 = vpack.c.b16 %v4804, %v4800
    %v4869 = vpack.c.b16 %v4805, %v4801
    %4934 = vmatprep.subr.bf16.mxu0 %v4807
    %4935 = vmatpush1.bf16.msra.mxu0 %v4806
    %4936 = vmatprep.subr.bf16.mxu0 %v4811
    %4937 = vmatpush1.bf16.msra.mxu0 %v4810
    %4938 = vmatprep.subr.bf16.mxu0 %v4815
    %4939 = vmatpush1.bf16.msra.mxu0 %v4814
    %4940 = vmatprep.subr.bf16.mxu0 %v4819
    %4941 = vmatpush1.bf16.msra.mxu0 %v4818
    %4942 = vmatprep.subr.bf16.mxu0 %v4823
    %4943 = vmatpush1.bf16.msra.mxu0 %v4822
    %4944 = vmatprep.subr.bf16.mxu0 %v4827
    %4945 = vmatpush1.bf16.msra.mxu0 %v4826
    %4946 = vmatprep.subr.bf16.mxu0 %v4831
    %4947 = vmatpush1.bf16.msra.mxu0 %v4830
    %4948 = vmatprep.subr.bf16.mxu0 %v4835
    %4949 = vmatpush1.bf16.msra.mxu0 %v4834
    %4950 = vmatprep.subr.bf16.mxu0 %v4839
    %4951 = vmatpush1.bf16.msra.mxu0 %v4838
    %4952 = vmatprep.subr.bf16.mxu0 %v4843
    %4953 = vmatpush1.bf16.msra.mxu0 %v4842
    %4954 = vmatprep.subr.bf16.mxu0 %v4847
    %4955 = vmatpush1.bf16.msra.mxu0 %v4846
    %4956 = vmatprep.subr.bf16.mxu0 %v4851
    %4957 = vmatpush1.bf16.msra.mxu0 %v4850
    %4958 = vmatprep.subr.bf16.mxu0 %v4855
    %4959 = vmatpush1.bf16.msra.mxu0 %v4854
    %4960 = vmatprep.subr.bf16.mxu0 %v4859
    %4961 = vmatpush1.bf16.msra.mxu0 %v4858
    %4962 = vmatprep.subr.bf16.mxu0 %v4863
    %4963 = vmatpush1.bf16.msra.mxu0 %v4862
    %4964 = vmatprep.subr.bf16.mxu0 %v4867
    %4965 = vmatpush1.bf16.msra.mxu0 %v4866
    %4966 = vmatprep.mubr.bf16.mxu0 %v4539
    %4967 = vmatmul.mubr.bf16.gmra.mrb[0].mxu0 %v4538
    %v4968 = vpop.f32.mrb[0].mxu0
    %v4969 = vadd.f32 0.0, %v4968
    %v4970 = vpop.f32.mrb[0].mxu0
    %v4971 = vadd.f32 0.0, %v4970
    %v4972 = vpop.f32.mrb[0].mxu0
    %v4973 = vadd.f32 0.0, %v4972
    %v4974 = vpop.f32.mrb[0].mxu0
    %v4975 = vadd.f32 0.0, %v4974
    %4976 = vmatprep.mubr.bf16.mxu0 %v4541
    %4977 = vmatmul.mubr.bf16.gmra.mrb[0].mxu0 %v4540
    %v4978 = vpop.f32.mrb[0].mxu0
    %v4979 = vadd.f32 0.0, %v4978
    %v4980 = vpop.f32.mrb[0].mxu0
    %v4981 = vadd.f32 0.0, %v4980
    %v4982 = vpop.f32.mrb[0].mxu0
    %v4983 = vadd.f32 0.0, %v4982
    %v4984 = vpop.f32.mrb[0].mxu0
    %v4985 = vadd.f32 0.0, %v4984
    %4986 = vmatprep.mubr.bf16.mxu0 %v4543
    %4987 = vmatmul.mubr.bf16.gmra.mrb[0].mxu0 %v4542
    %v4988 = vpop.f32.mrb[0].mxu0
    %v4989 = vadd.f32 0.0, %v4988
    %v4990 = vpop.f32.mrb[0].mxu0
    %v4991 = vadd.f32 0.0, %v4990
    %v4992 = vpop.f32.mrb[0].mxu0
    %v4993 = vadd.f32 0.0, %v4992
    %v4994 = vpop.f32.mrb[0].mxu0
    %v4995 = vadd.f32 0.0, %v4994
    %4996 = vmatprep.mubr.bf16.mxu0 %v4545
    %4997 = vmatmul.mubr.bf16.gmra.mrb[0].mxu0 %v4544
    %v4998 = vpop.f32.mrb[0].mxu0
    %v4999 = vadd.f32 0.0, %v4998
    %v5000 = vpop.f32.mrb[0].mxu0
    %v5001 = vadd.f32 0.0, %v5000
    %v5002 = vpop.f32.mrb[0].mxu0
    %v5003 = vadd.f32 0.0, %v5002
    %v5004 = vpop.f32.mrb[0].mxu0
    %v5005 = vadd.f32 0.0, %v5004
    %5006 = vmatprep.mubr.bf16.mxu0 %v4547
    %5007 = vmatmul.mubr.bf16.gmra.mrb[0].mxu0 %v4546
    %v5008 = vpop.f32.mrb[0].mxu0
    %v5009 = vadd.f32 0.0, %v5008
    %v5010 = vpop.f32.mrb[0].mxu0
    %v5011 = vadd.f32 0.0, %v5010
    %v5012 = vpop.f32.mrb[0].mxu0
    %v5013 = vadd.f32 0.0, %v5012
    %v5014 = vpop.f32.mrb[0].mxu0
    %v5015 = vadd.f32 0.0, %v5014
    %5016 = vmatprep.mubr.bf16.mxu0 %v4549
    %5017 = vmatmul.mubr.bf16.gmra.mrb[0].mxu0 %v4548
    %v5018 = vpop.f32.mrb[0].mxu0
    %v5019 = vadd.f32 0.0, %v5018
    %v5020 = vpop.f32.mrb[0].mxu0
    %v5021 = vadd.f32 0.0, %v5020
    %v5022 = vpop.f32.mrb[0].mxu0
    %v5023 = vadd.f32 0.0, %v5022
    %v5024 = vpop.f32.mrb[0].mxu0
    %v5025 = vadd.f32 0.0, %v5024
    %5026 = vdwg.mxu0
    %5027 = vmatprep.subr.bf16.mxu0 %v4809
    %5028 = vmatpush1.bf16.msra.mxu0 %v4808
    %5029 = vmatprep.subr.bf16.mxu0 %v4813
    %5030 = vmatpush1.bf16.msra.mxu0 %v4812
    %5031 = vmatprep.subr.bf16.mxu0 %v4817
    %5032 = vmatpush1.bf16.msra.mxu0 %v4816
    %5033 = vmatprep.subr.bf16.mxu0 %v4821
    %5034 = vmatpush1.bf16.msra.mxu0 %v4820
    %5035 = vmatprep.subr.bf16.mxu0 %v4825
    %5036 = vmatpush1.bf16.msra.mxu0 %v4824
    %5037 = vmatprep.subr.bf16.mxu0 %v4829
    %5038 = vmatpush1.bf16.msra.mxu0 %v4828
    %5039 = vmatprep.subr.bf16.mxu0 %v4833
    %5040 = vmatpush1.bf16.msra.mxu0 %v4832
    %5041 = vmatprep.subr.bf16.mxu0 %v4837
    %5042 = vmatpush1.bf16.msra.mxu0 %v4836
    %5043 = vmatprep.subr.bf16.mxu0 %v4841
    %5044 = vmatpush1.bf16.msra.mxu0 %v4840
    %5045 = vmatprep.subr.bf16.mxu0 %v4845
    %5046 = vmatpush1.bf16.msra.mxu0 %v4844
    %5047 = vmatprep.subr.bf16.mxu0 %v4849
    %5048 = vmatpush1.bf16.msra.mxu0 %v4848
    %5049 = vmatprep.subr.bf16.mxu0 %v4853
    %5050 = vmatpush1.bf16.msra.mxu0 %v4852
    %5051 = vmatprep.subr.bf16.mxu0 %v4857
    %5052 = vmatpush1.bf16.msra.mxu0 %v4856
    %5053 = vmatprep.subr.bf16.mxu0 %v4861
    %5054 = vmatpush1.bf16.msra.mxu0 %v4860
    %5055 = vmatprep.subr.bf16.mxu0 %v4865
    %5056 = vmatpush1.bf16.msra.mxu0 %v4864
    %5057 = vmatprep.subr.bf16.mxu0 %v4869
    %5058 = vmatpush1.bf16.msra.mxu0 %v4868
    %5059 = vmatprep.mubr.bf16.mxu0 %v4539
    %5060 = vmatmul.mubr.bf16.gmra.mrb[0].mxu0 %v4538
    %v5061 = vpop.f32.mrb[0].mxu0
    %v5062 = vadd.f32 0.0, %v5061
    %v5063 = vpop.f32.mrb[0].mxu0
    %v5064 = vadd.f32 0.0, %v5063
    %v5065 = vpop.f32.mrb[0].mxu0
    %v5066 = vadd.f32 0.0, %v5065
    %v5067 = vpop.f32.mrb[0].mxu0
    %v5068 = vadd.f32 0.0, %v5067
    %5069 = vmatprep.mubr.bf16.mxu0 %v4541
    %5070 = vmatmul.mubr.bf16.gmra.mrb[0].mxu0 %v4540
    %v5071 = vpop.f32.mrb[0].mxu0
    %v5072 = vadd.f32 0.0, %v5071
    %v5073 = vpop.f32.mrb[0].mxu0
    %v5074 = vadd.f32 0.0, %v5073
    %v5075 = vpop.f32.mrb[0].mxu0
    %v5076 = vadd.f32 0.0, %v5075
    %v5077 = vpop.f32.mrb[0].mxu0
    %v5078 = vadd.f32 0.0, %v5077
    %5079 = vmatprep.mubr.bf16.mxu0 %v4543
    %5080 = vmatmul.mubr.bf16.gmra.mrb[0].mxu0 %v4542
    %v5081 = vpop.f32.mrb[0].mxu0
    %v5082 = vadd.f32 0.0, %v5081
    %v5083 = vpop.f32.mrb[0].mxu0
    %v5084 = vadd.f32 0.0, %v5083
    %v5085 = vpop.f32.mrb[0].mxu0
    %v5086 = vadd.f32 0.0, %v5085
    %v5087 = vpop.f32.mrb[0].mxu0
    %v5088 = vadd.f32 0.0, %v5087
    %5089 = vmatprep.mubr.bf16.mxu0 %v4545
    %5090 = vmatmul.mubr.bf16.gmra.mrb[0].mxu0 %v4544
    %v5091 = vpop.f32.mrb[0].mxu0
    %v5092 = vadd.f32 0.0, %v5091
    %v5093 = vpop.f32.mrb[0].mxu0
    %v5094 = vadd.f32 0.0, %v5093
    %v5095 = vpop.f32.mrb[0].mxu0
    %v5096 = vadd.f32 0.0, %v5095
    %v5097 = vpop.f32.mrb[0].mxu0
    %v5098 = vadd.f32 0.0, %v5097
    %5099 = vmatprep.mubr.bf16.mxu0 %v4547
    %5100 = vmatmul.mubr.bf16.gmra.mrb[0].mxu0 %v4546
    %v5101 = vpop.f32.mrb[0].mxu0
    %v5102 = vadd.f32 0.0, %v5101
    %v5103 = vpop.f32.mrb[0].mxu0
    %v5104 = vadd.f32 0.0, %v5103
    %v5105 = vpop.f32.mrb[0].mxu0
    %v5106 = vadd.f32 0.0, %v5105
    %v5107 = vpop.f32.mrb[0].mxu0
    %v5108 = vadd.f32 0.0, %v5107
    %5109 = vmatprep.mubr.bf16.mxu0 %v4549
    %5110 = vmatmul.mubr.bf16.gmra.mrb[0].mxu0 %v4548
    %v5111 = vpop.f32.mrb[0].mxu0
    %v5112 = vadd.f32 0.0, %v5111
    %v5113 = vpop.f32.mrb[0].mxu0
    %v5114 = vadd.f32 0.0, %v5113
    %v5115 = vpop.f32.mrb[0].mxu0
    %v5116 = vadd.f32 0.0, %v5115
    %v5117 = vpop.f32.mrb[0].mxu0
    %v5118 = vadd.f32 0.0, %v5117
    %5119 = vdwg.mxu0
    %5120 = vst [vmem:[#allocation4] sm:$0xff] %v4969
    %5121 = vst [vmem:[#allocation4 + $0x8] sm:$0xff] %v4971
    %5122 = vst [vmem:[#allocation4 + $0x10] sm:$0xff] %v5062
    %5123 = vst [vmem:[#allocation4 + $0x18] sm:$0xff] %v5064
    %5124 = vst [vmem:[#allocation4 + $0x20] sm:$0xff] %v4973
    %5125 = vst [vmem:[#allocation4 + $0x28] sm:$0xff] %v4975
    %5126 = vst [vmem:[#allocation4 + $0x30] sm:$0xff] %v5066
    %5127 = vst [vmem:[#allocation4 + $0x38] sm:$0xff] %v5068
    %5128 = vst [vmem:[#allocation4 + $0x40] sm:$0xff] %v4979
    %5129 = vst [vmem:[#allocation4 + $0x48] sm:$0xff] %v4981
    %5130 = vst [vmem:[#allocation4 + $0x50] sm:$0xff] %v5072
    %5131 = vst [vmem:[#allocation4 + $0x58] sm:$0xff] %v5074
    %5132 = vst [vmem:[#allocation4 + $0x60] sm:$0xff] %v4983
    %5133 = vst [vmem:[#allocation4 + $0x68] sm:$0xff] %v4985
    %5134 = vst [vmem:[#allocation4 + $0x70] sm:$0xff] %v5076
    %5135 = vst [vmem:[#allocation4 + $0x78] sm:$0xff] %v5078
    %5136 = vst [vmem:[#allocation4 + $0x80] sm:$0xff] %v4989
    %5137 = vst [vmem:[#allocation4 + $0x88] sm:$0xff] %v4991
    %5138 = vst [vmem:[#allocation4 + $0x90] sm:$0xff] %v5082
    %5139 = vst [vmem:[#allocation4 + $0x98] sm:$0xff] %v5084
    %5140 = vst [vmem:[#allocation4 + $0xa0] sm:$0xff] %v4993
    %5141 = vst [vmem:[#allocation4 + $0xa8] sm:$0xff] %v4995
    %5142 = vst [vmem:[#allocation4 + $0xb0] sm:$0xff] %v5086
    %5143 = vst [vmem:[#allocation4 + $0xb8] sm:$0xff] %v5088
    %5144 = vst [vmem:[#allocation4 + $0xc0] sm:$0xff] %v4999
    %5145 = vst [vmem:[#allocation4 + $0xc8] sm:$0xff] %v5001
    %5146 = vst [vmem:[#allocation4 + $0xd0] sm:$0xff] %v5092
    %5147 = vst [vmem:[#allocation4 + $0xd8] sm:$0xff] %v5094
    %5148 = vst [vmem:[#allocation4 + $0xe0] sm:$0xff] %v5003
    %5149 = vst [vmem:[#allocation4 + $0xe8] sm:$0xff] %v5005
    %5150 = vst [vmem:[#allocation4 + $0xf0] sm:$0xff] %v5096
    %5151 = vst [vmem:[#allocation4 + $0xf8] sm:$0xff] %v5098
    %5152 = vst [vmem:[#allocation4 + $0x100] sm:$0xff] %v5009
    %5153 = vst [vmem:[#allocation4 + $0x108] sm:$0xff] %v5011
    %5154 = vst [vmem:[#allocation4 + $0x110] sm:$0xff] %v5102
    %5155 = vst [vmem:[#allocation4 + $0x118] sm:$0xff] %v5104
    %5156 = vst [vmem:[#allocation4 + $0x120] sm:$0xff] %v5013
    %5157 = vst [vmem:[#allocation4 + $0x128] sm:$0xff] %v5015
    %5158 = vst [vmem:[#allocation4 + $0x130] sm:$0xff] %v5106
    %5159 = vst [vmem:[#allocation4 + $0x138] sm:$0xff] %v5108
    %5160 = vst [vmem:[#allocation4 + $0x140] sm:$0xff] %v5019
    %5161 = vst [vmem:[#allocation4 + $0x148] sm:$0xff] %v5021
    %5162 = vst [vmem:[#allocation4 + $0x150] sm:$0xff] %v5112
    %5163 = vst [vmem:[#allocation4 + $0x158] sm:$0xff] %v5114
    %5164 = vst [vmem:[#allocation4 + $0x160] sm:$0xff] %v5023
    %5165 = vst [vmem:[#allocation4 + $0x168] sm:$0xff] %v5025
    %5166 = vst [vmem:[#allocation4 + $0x170] sm:$0xff] %v5116
    %5167 = vst [vmem:[#allocation4 + $0x178] sm:$0xff] %v5118
    %v5168 = vld [vmem:[#allocation4] sm:$0xff]
    %v5169 = vld [vmem:[#allocation4 + $0x8] sm:$0xff]
    %v5170 = vld [vmem:[%s8] ss:$8 sm:$0x3]
    %v5172 = vlaneseq
    %v5173 = vshrl.u32 %v5172, 7
    %v5174 = vsub.s32 0, %v5173
    %v5175 = vrot.slane %v5170, %v5174
    %v5176 = vlaneseq
    %v5177 = vshrl.u32 %v5176, 7
    %v5178 = vsub.s32 1, %v5177
    %v5179 = vrot.slane %v5170, %v5178
    %v5182 = vadd.f32 %v5168, %v5175
    %v5183 = vadd.f32 %v5169, %v5179
    %v5184 = vld [vmem:[%s9] sm:$0xff]
    %v5185 = vld [vmem:[%s9 + $0x8] sm:$0xff]
    %v5186 = vld [vmem:[%s9 + $0x10] sm:$0xff]
    %v5187 = vld [vmem:[%s9 + $0x18] sm:$0xff]
    %v5188 = vld [vmem:[%s9 + $0x20] sm:$0xff]
    %v5189 = vld [vmem:[%s9 + $0x28] sm:$0xff]
    %v5190 = vld [vmem:[%s9 + $0x30] sm:$0xff]
    %v5191 = vld [vmem:[%s9 + $0x38] sm:$0xff]
    %v5192 = vld [vmem:[%s9 + $0x40] sm:$0xff]
    %v5193 = vld [vmem:[%s9 + $0x48] sm:$0xff]
    %v5194 = vld [vmem:[%s9 + $0x50] sm:$0xff]
    %v5195 = vld [vmem:[%s9 + $0x58] sm:$0xff]
    %v5196 = vld [vmem:[%s9 + $0x60] sm:$0xff]
    %v5197 = vld [vmem:[%s9 + $0x68] sm:$0xff]
    %v5198 = vld [vmem:[%s9 + $0x70] sm:$0xff]
    %v5199 = vld [vmem:[%s9 + $0x78] sm:$0xff]
    %v5200 = vld [vmem:[%s9 + $0x80] sm:$0xff]
    %v5201 = vld [vmem:[%s9 + $0x88] sm:$0xff]
    %v5202 = vld [vmem:[%s9 + $0x90] sm:$0xff]
    %v5203 = vld [vmem:[%s9 + $0x98] sm:$0xff]
    %v5204 = vld [vmem:[%s9 + $0xa0] sm:$0xff]
    %v5205 = vld [vmem:[%s9 + $0xa8] sm:$0xff]
    %v5206 = vld [vmem:[%s9 + $0xb0] sm:$0xff]
    %v5207 = vld [vmem:[%s9 + $0xb8] sm:$0xff]
    %v5208 = vld [vmem:[%s9 + $0xc0] sm:$0xff]
    %v5209 = vld [vmem:[%s9 + $0xc8] sm:$0xff]
    %v5210 = vld [vmem:[%s9 + $0xd0] sm:$0xff]
    %v5211 = vld [vmem:[%s9 + $0xd8] sm:$0xff]
    %v5212 = vld [vmem:[%s9 + $0xe0] sm:$0xff]
    %v5213 = vld [vmem:[%s9 + $0xe8] sm:$0xff]
    %v5214 = vld [vmem:[%s9 + $0xf0] sm:$0xff]
    %v5215 = vld [vmem:[%s9 + $0xf8] sm:$0xff]
    %v5248 = vunpack.c.l.b16 %v5184
    %v5249 = vunpack.c.h.b16 %v5184
    %v5250 = vunpack.c.l.b16 %v5185
    %v5251 = vunpack.c.h.b16 %v5185
    %v5252 = vunpack.c.l.b16 %v5186
    %v5253 = vunpack.c.h.b16 %v5186
    %v5254 = vunpack.c.l.b16 %v5187
    %v5255 = vunpack.c.h.b16 %v5187
    %v5256 = vunpack.c.l.b16 %v5188
    %v5257 = vunpack.c.h.b16 %v5188
    %v5258 = vunpack.c.l.b16 %v5189
    %v5259 = vunpack.c.h.b16 %v5189
    %v5260 = vunpack.c.l.b16 %v5190
    %v5261 = vunpack.c.h.b16 %v5190
    %v5262 = vunpack.c.l.b16 %v5191
    %v5263 = vunpack.c.h.b16 %v5191
    %v5264 = vunpack.c.l.b16 %v5192
    %v5265 = vunpack.c.h.b16 %v5192
    %v5266 = vunpack.c.l.b16 %v5193
    %v5267 = vunpack.c.h.b16 %v5193
    %v5268 = vunpack.c.l.b16 %v5194
    %v5269 = vunpack.c.h.b16 %v5194
    %v5270 = vunpack.c.l.b16 %v5195
    %v5271 = vunpack.c.h.b16 %v5195
    %v5272 = vunpack.c.l.b16 %v5196
    %v5273 = vunpack.c.h.b16 %v5196
    %v5274 = vunpack.c.l.b16 %v5197
    %v5275 = vunpack.c.h.b16 %v5197
    %v5276 = vunpack.c.l.b16 %v5198
    %v5277 = vunpack.c.h.b16 %v5198
    %v5278 = vunpack.c.l.b16 %v5199
    %v5279 = vunpack.c.h.b16 %v5199
    %v5280 = vunpack.c.l.b16 %v5200
    %v5281 = vunpack.c.h.b16 %v5200
    %v5282 = vunpack.c.l.b16 %v5201
    %v5283 = vunpack.c.h.b16 %v5201
    %v5284 = vunpack.c.l.b16 %v5202
    %v5285 = vunpack.c.h.b16 %v5202
    %v5286 = vunpack.c.l.b16 %v5203
    %v5287 = vunpack.c.h.b16 %v5203
    %v5288 = vunpack.c.l.b16 %v5204
    %v5289 = vunpack.c.h.b16 %v5204
    %v5290 = vunpack.c.l.b16 %v5205
    %v5291 = vunpack.c.h.b16 %v5205
    %v5292 = vunpack.c.l.b16 %v5206
    %v5293 = vunpack.c.h.b16 %v5206
    %v5294 = vunpack.c.l.b16 %v5207
    %v5295 = vunpack.c.h.b16 %v5207
    %v5296 = vunpack.c.l.b16 %v5208
    %v5297 = vunpack.c.h.b16 %v5208
    %v5298 = vunpack.c.l.b16 %v5209
    %v5299 = vunpack.c.h.b16 %v5209
    %v5300 = vunpack.c.l.b16 %v5210
    %v5301 = vunpack.c.h.b16 %v5210
    %v5302 = vunpack.c.l.b16 %v5211
    %v5303 = vunpack.c.h.b16 %v5211
    %v5304 = vunpack.c.l.b16 %v5212
    %v5305 = vunpack.c.h.b16 %v5212
    %v5306 = vunpack.c.l.b16 %v5213
    %v5307 = vunpack.c.h.b16 %v5213
    %v5308 = vunpack.c.l.b16 %v5214
    %v5309 = vunpack.c.h.b16 %v5214
    %v5310 = vunpack.c.l.b16 %v5215
    %v5311 = vunpack.c.h.b16 %v5215
    %v5312 = vpack.c.b16 %v5250, %v5248
    %v5313 = vpack.c.b16 %v5251, %v5249
    %v5314 = vpack.c.b16 %v5254, %v5252
    %v5315 = vpack.c.b16 %v5255, %v5253
    %v5316 = vpack.c.b16 %v5258, %v5256
    %v5317 = vpack.c.b16 %v5259, %v5257
    %v5318 = vpack.c.b16 %v5262, %v5260
    %v5319 = vpack.c.b16 %v5263, %v5261
    %v5320 = vpack.c.b16 %v5266, %v5264
    %v5321 = vpack.c.b16 %v5267, %v5265
    %v5322 = vpack.c.b16 %v5270, %v5268
    %v5323 = vpack.c.b16 %v5271, %v5269
    %v5324 = vpack.c.b16 %v5274, %v5272
    %v5325 = vpack.c.b16 %v5275, %v5273
    %v5326 = vpack.c.b16 %v5278, %v5276
    %v5327 = vpack.c.b16 %v5279, %v5277
    %v5328 = vpack.c.b16 %v5282, %v5280
    %v5329 = vpack.c.b16 %v5283, %v5281
    %v5330 = vpack.c.b16 %v5286, %v5284
    %v5331 = vpack.c.b16 %v5287, %v5285
    %v5332 = vpack.c.b16 %v5290, %v5288
    %v5333 = vpack.c.b16 %v5291, %v5289
    %v5334 = vpack.c.b16 %v5294, %v5292
    %v5335 = vpack.c.b16 %v5295, %v5293
    %v5336 = vpack.c.b16 %v5298, %v5296
    %v5337 = vpack.c.b16 %v5299, %v5297
    %v5338 = vpack.c.b16 %v5302, %v5300
    %v5339 = vpack.c.b16 %v5303, %v5301
    %v5340 = vpack.c.b16 %v5306, %v5304
    %v5341 = vpack.c.b16 %v5307, %v5305
    %v5342 = vpack.c.b16 %v5310, %v5308
    %v5343 = vpack.c.b16 %v5311, %v5309
    %5376 = vmatprep.subr.bf16.mxu0 %v5313
    %5377 = vmatpush1.bf16.msra.mxu0 %v5312
    %5378 = vmatprep.subr.bf16.mxu0 %v5315
    %5379 = vmatpush1.bf16.msra.mxu0 %v5314
    %5380 = vmatprep.subr.bf16.mxu0 %v5317
    %5381 = vmatpush1.bf16.msra.mxu0 %v5316
    %5382 = vmatprep.subr.bf16.mxu0 %v5319
    %5383 = vmatpush1.bf16.msra.mxu0 %v5318
    %5384 = vmatprep.subr.bf16.mxu0 %v5321
    %5385 = vmatpush1.bf16.msra.mxu0 %v5320
    %5386 = vmatprep.subr.bf16.mxu0 %v5323
    %5387 = vmatpush1.bf16.msra.mxu0 %v5322
    %5388 = vmatprep.subr.bf16.mxu0 %v5325
    %5389 = vmatpush1.bf16.msra.mxu0 %v5324
    %5390 = vmatprep.subr.bf16.mxu0 %v5327
    %5391 = vmatpush1.bf16.msra.mxu0 %v5326
    %5392 = vmatprep.subr.bf16.mxu0 %v5329
    %5393 = vmatpush1.bf16.msra.mxu0 %v5328
    %5394 = vmatprep.subr.bf16.mxu0 %v5331
    %5395 = vmatpush1.bf16.msra.mxu0 %v5330
    %5396 = vmatprep.subr.bf16.mxu0 %v5333
    %5397 = vmatpush1.bf16.msra.mxu0 %v5332
    %5398 = vmatprep.subr.bf16.mxu0 %v5335
    %5399 = vmatpush1.bf16.msra.mxu0 %v5334
    %5400 = vmatprep.subr.bf16.mxu0 %v5337
    %5401 = vmatpush1.bf16.msra.mxu0 %v5336
    %5402 = vmatprep.subr.bf16.mxu0 %v5339
    %5403 = vmatpush1.bf16.msra.mxu0 %v5338
    %5404 = vmatprep.subr.bf16.mxu0 %v5341
    %5405 = vmatpush1.bf16.msra.mxu0 %v5340
    %5406 = vmatprep.subr.bf16.mxu0 %v5343
    %5407 = vmatpush1.bf16.msra.mxu0 %v5342
    %5408 = vmatprep.mubr.bf16.mxu0 0
    %5409 = vmatmul.mubr.bf16.gmra.mrb[0].mxu0 0
    %v5410 = vpop.f32.mrb[0].mxu0
    %v5411 = vadd.f32 0.0, %v5410
    %v5412 = vpop.f32.mrb[0].mxu0
    %v5413 = vadd.f32 0.0, %v5412
    %v5414 = vpop.f32.mrb[0].mxu0
    %v5415 = vpop.f32.mrb[0].mxu0
    %5416 = vdwg.mxu0
    %v5417 = vadd.f32 %v5182, %v5411
    %v5418 = vadd.f32 %v5183, %v5413
    %v5419 = vtanh.pop %v5417
    %v5420 = vtanh.pop %v5418
    %v5421 = vld [vmem:[#allocation4 + $0x20] sm:$0xff]
    %v5422 = vld [vmem:[#allocation4 + $0x28] sm:$0xff]
    %s5423 = scalar_lea.vmem %s8, 1
    %v5424 = vld [vmem:[%s5423] ss:$8 sm:$0x3]
    %v5426 = vlaneseq
    %v5427 = vshrl.u32 %v5426, 7
    %v5428 = vsub.s32 0, %v5427
    %v5429 = vrot.slane %v5424, %v5428
    %v5430 = vlaneseq
    %v5431 = vshrl.u32 %v5430, 7
    %v5432 = vsub.s32 1, %v5431
    %v5433 = vrot.slane %v5424, %v5432
    %v5436 = vadd.f32 %v5421, %v5429
    %v5437 = vadd.f32 %v5422, %v5433
    %v5438 = vpack.c.bf16 %v5419, %v5419
    %v5439 = vpack.c.bf16 %v5420, %v5420
    %5440 = vmatprep.subr.bf16.mxu0 %v5313
    %5441 = vmatpush1.bf16.msra.mxu0 %v5312
    %5442 = vmatprep.subr.bf16.mxu0 %v5315
    %5443 = vmatpush1.bf16.msra.mxu0 %v5314
    %5444 = vmatprep.subr.bf16.mxu0 %v5317
    %5445 = vmatpush1.bf16.msra.mxu0 %v5316
    %5446 = vmatprep.subr.bf16.mxu0 %v5319
    %5447 = vmatpush1.bf16.msra.mxu0 %v5318
    %5448 = vmatprep.subr.bf16.mxu0 %v5321
    %5449 = vmatpush1.bf16.msra.mxu0 %v5320
    %5450 = vmatprep.subr.bf16.mxu0 %v5323
    %5451 = vmatpush1.bf16.msra.mxu0 %v5322
    %5452 = vmatprep.subr.bf16.mxu0 %v5325
    %5453 = vmatpush1.bf16.msra.mxu0 %v5324
    %5454 = vmatprep.subr.bf16.mxu0 %v5327
    %5455 = vmatpush1.bf16.msra.mxu0 %v5326
    %5456 = vmatprep.subr.bf16.mxu0 %v5329
    %5457 = vmatpush1.bf16.msra.mxu0 %v5328
    %5458 = vmatprep.subr.bf16.mxu0 %v5331
    %5459 = vmatpush1.bf16.msra.mxu0 %v5330
    %5460 = vmatprep.subr.bf16.mxu0 %v5333
    %5461 = vmatpush1.bf16.msra.mxu0 %v5332
    %5462 = vmatprep.subr.bf16.mxu0 %v5335
    %5463 = vmatpush1.bf16.msra.mxu0 %v5334
    %5464 = vmatprep.subr.bf16.mxu0 %v5337
    %5465 = vmatpush1.bf16.msra.mxu0 %v5336
    %5466 = vmatprep.subr.bf16.mxu0 %v5339
    %5467 = vmatpush1.bf16.msra.mxu0 %v5338
    %5468 = vmatprep.subr.bf16.mxu0 %v5341
    %5469 = vmatpush1.bf16.msra.mxu0 %v5340
    %5470 = vmatprep.subr.bf16.mxu0 %v5343
    %5471 = vmatpush1.bf16.msra.mxu0 %v5342
    %5472 = vmatprep.mubr.bf16.mxu0 %v5439
    %5473 = vmatmul.mubr.bf16.gmra.mrb[0].mxu0 %v5438
    %v5474 = vpop.f32.mrb[0].mxu0
    %v5475 = vadd.f32 0.0, %v5474
    %v5476 = vpop.f32.mrb[0].mxu0
    %v5477 = vadd.f32 0.0, %v5476
    %v5478 = vpop.f32.mrb[0].mxu0
    %v5479 = vpop.f32.mrb[0].mxu0
    %5480 = vdwg.mxu0
    %v5481 = vadd.f32 %v5436, %v5475
    %v5482 = vadd.f32 %v5437, %v5477
    %v5483 = vtanh.pop %v5481
    %v5484 = vtanh.pop %v5482
    %v5485 = vld [vmem:[#allocation4 + $0x40] sm:$0xff]
    %v5486 = vld [vmem:[#allocation4 + $0x48] sm:$0xff]
    %s5487 = scalar_lea.vmem %s8, 2
    %v5488 = vld [vmem:[%s5487] ss:$8 sm:$0x3]
    %v5490 = vlaneseq
    %v5491 = vshrl.u32 %v5490, 7
    %v5492 = vsub.s32 0, %v5491
    %v5493 = vrot.slane %v5488, %v5492
    %v5494 = vlaneseq
    %v5495 = vshrl.u32 %v5494, 7
    %v5496 = vsub.s32 1, %v5495
    %v5497 = vrot.slane %v5488, %v5496
    %v5500 = vadd.f32 %v5485, %v5493
    %v5501 = vadd.f32 %v5486, %v5497
    %v5502 = vpack.c.bf16 %v5483, %v5483
    %v5503 = vpack.c.bf16 %v5484, %v5484
    %5504 = vmatprep.subr.bf16.mxu0 %v5313
    %5505 = vmatpush1.bf16.msra.mxu0 %v5312
    %5506 = vmatprep.subr.bf16.mxu0 %v5315
    %5507 = vmatpush1.bf16.msra.mxu0 %v5314
    %5508 = vmatprep.subr.bf16.mxu0 %v5317
    %5509 = vmatpush1.bf16.msra.mxu0 %v5316
    %5510 = vmatprep.subr.bf16.mxu0 %v5319
    %5511 = vmatpush1.bf16.msra.mxu0 %v5318
    %5512 = vmatprep.subr.bf16.mxu0 %v5321
    %5513 = vmatpush1.bf16.msra.mxu0 %v5320
    %5514 = vmatprep.subr.bf16.mxu0 %v5323
    %5515 = vmatpush1.bf16.msra.mxu0 %v5322
    %5516 = vmatprep.subr.bf16.mxu0 %v5325
    %5517 = vmatpush1.bf16.msra.mxu0 %v5324
    %5518 = vmatprep.subr.bf16.mxu0 %v5327
    %5519 = vmatpush1.bf16.msra.mxu0 %v5326
    %5520 = vmatprep.subr.bf16.mxu0 %v5329
    %5521 = vmatpush1.bf16.msra.mxu0 %v5328
    %5522 = vmatprep.subr.bf16.mxu0 %v5331
    %5523 = vmatpush1.bf16.msra.mxu0 %v5330
    %5524 = vmatprep.subr.bf16.mxu0 %v5333
    %5525 = vmatpush1.bf16.msra.mxu0 %v5332
    %5526 = vmatprep.subr.bf16.mxu0 %v5335
    %5527 = vmatpush1.bf16.msra.mxu0 %v5334
    %5528 = vmatprep.subr.bf16.mxu0 %v5337
    %5529 = vmatpush1.bf16.msra.mxu0 %v5336
    %5530 = vmatprep.subr.bf16.mxu0 %v5339
    %5531 = vmatpush1.bf16.msra.mxu0 %v5338
    %5532 = vmatprep.subr.bf16.mxu0 %v5341
    %5533 = vmatpush1.bf16.msra.mxu0 %v5340
    %5534 = vmatprep.subr.bf16.mxu0 %v5343
    %5535 = vmatpush1.bf16.msra.mxu0 %v5342
    %5536 = vmatprep.mubr.bf16.mxu0 %v5503
    %5537 = vmatmul.mubr.bf16.gmra.mrb[0].mxu0 %v5502
    %v5538 = vpop.f32.mrb[0].mxu0
    %v5539 = vadd.f32 0.0, %v5538
    %v5540 = vpop.f32.mrb[0].mxu0
    %v5541 = vadd.f32 0.0, %v5540
    %v5542 = vpop.f32.mrb[0].mxu0
    %v5543 = vpop.f32.mrb[0].mxu0
    %5544 = vdwg.mxu0
    %v5545 = vadd.f32 %v5500, %v5539
    %v5546 = vadd.f32 %v5501, %v5541
    %v5547 = vtanh.pop %v5545
    %v5548 = vtanh.pop %v5546
    %v5549 = vld [vmem:[#allocation4 + $0x60] sm:$0xff]
    %v5550 = vld [vmem:[#allocation4 + $0x68] sm:$0xff]
    %s5551 = scalar_lea.vmem %s8, 3
    %v5552 = vld [vmem:[%s5551] ss:$8 sm:$0x3]
    %v5554 = vlaneseq
    %v5555 = vshrl.u32 %v5554, 7
    %v5556 = vsub.s32 0, %v5555
    %v5557 = vrot.slane %v5552, %v5556
    %v5558 = vlaneseq
    %v5559 = vshrl.u32 %v5558, 7
    %v5560 = vsub.s32 1, %v5559
    %v5561 = vrot.slane %v5552, %v5560
    %v5564 = vadd.f32 %v5549, %v5557
    %v5565 = vadd.f32 %v5550, %v5561
    %v5566 = vpack.c.bf16 %v5547, %v5547
    %v5567 = vpack.c.bf16 %v5548, %v5548
    %5568 = vmatprep.subr.bf16.mxu0 %v5313
    %5569 = vmatpush1.bf16.msra.mxu0 %v5312
    %5570 = vmatprep.subr.bf16.mxu0 %v5315
    %5571 = vmatpush1.bf16.msra.mxu0 %v5314
    %5572 = vmatprep.subr.bf16.mxu0 %v5317
    %5573 = vmatpush1.bf16.msra.mxu0 %v5316
    %5574 = vmatprep.subr.bf16.mxu0 %v5319
    %5575 = vmatpush1.bf16.msra.mxu0 %v5318
    %5576 = vmatprep.subr.bf16.mxu0 %v5321
    %5577 = vmatpush1.bf16.msra.mxu0 %v5320
    %5578 = vmatprep.subr.bf16.mxu0 %v5323
    %5579 = vmatpush1.bf16.msra.mxu0 %v5322
    %5580 = vmatprep.subr.bf16.mxu0 %v5325
    %5581 = vmatpush1.bf16.msra.mxu0 %v5324
    %5582 = vmatprep.subr.bf16.mxu0 %v5327
    %5583 = vmatpush1.bf16.msra.mxu0 %v5326
    %5584 = vmatprep.subr.bf16.mxu0 %v5329
    %5585 = vmatpush1.bf16.msra.mxu0 %v5328
    %5586 = vmatprep.subr.bf16.mxu0 %v5331
    %5587 = vmatpush1.bf16.msra.mxu0 %v5330
    %5588 = vmatprep.subr.bf16.mxu0 %v5333
    %5589 = vmatpush1.bf16.msra.mxu0 %v5332
    %5590 = vmatprep.subr.bf16.mxu0 %v5335
    %5591 = vmatpush1.bf16.msra.mxu0 %v5334
    %5592 = vmatprep.subr.bf16.mxu0 %v5337
    %5593 = vmatpush1.bf16.msra.mxu0 %v5336
    %5594 = vmatprep.subr.bf16.mxu0 %v5339
    %5595 = vmatpush1.bf16.msra.mxu0 %v5338
    %5596 = vmatprep.subr.bf16.mxu0 %v5341
    %5597 = vmatpush1.bf16.msra.mxu0 %v5340
    %5598 = vmatprep.subr.bf16.mxu0 %v5343
    %5599 = vmatpush1.bf16.msra.mxu0 %v5342
    %5600 = vmatprep.mubr.bf16.mxu0 %v5567
    %5601 = vmatmul.mubr.bf16.gmra.mrb[0].mxu0 %v5566
    %v5602 = vpop.f32.mrb[0].mxu0
    %v5603 = vadd.f32 0.0, %v5602
    %v5604 = vpop.f32.mrb[0].mxu0
    %v5605 = vadd.f32 0.0, %v5604
    %v5606 = vpop.f32.mrb[0].mxu0
    %v5607 = vpop.f32.mrb[0].mxu0
    %5608 = vdwg.mxu0
    %v5609 = vadd.f32 %v5564, %v5603
    %v5610 = vadd.f32 %v5565, %v5605
    %v5611 = vtanh.pop %v5609
    %v5612 = vtanh.pop %v5610
    %v5613 = vld [vmem:[#allocation4 + $0x80] sm:$0xff]
    %v5614 = vld [vmem:[#allocation4 + $0x88] sm:$0xff]
    %s5615 = scalar_lea.vmem %s8, 4
    %v5616 = vld [vmem:[%s5615] ss:$8 sm:$0x3]
    %v5618 = vlaneseq
    %v5619 = vshrl.u32 %v5618, 7
    %v5620 = vsub.s32 0, %v5619
    %v5621 = vrot.slane %v5616, %v5620
    %v5622 = vlaneseq
    %v5623 = vshrl.u32 %v5622, 7
    %v5624 = vsub.s32 1, %v5623
    %v5625 = vrot.slane %v5616, %v5624
    %v5628 = vadd.f32 %v5613, %v5621
    %v5629 = vadd.f32 %v5614, %v5625
    %v5630 = vpack.c.bf16 %v5611, %v5611
    %v5631 = vpack.c.bf16 %v5612, %v5612
    %5632 = vmatprep.subr.bf16.mxu0 %v5313
    %5633 = vmatpush1.bf16.msra.mxu0 %v5312
    %5634 = vmatprep.subr.bf16.mxu0 %v5315
    %5635 = vmatpush1.bf16.msra.mxu0 %v5314
    %5636 = vmatprep.subr.bf16.mxu0 %v5317
    %5637 = vmatpush1.bf16.msra.mxu0 %v5316
    %5638 = vmatprep.subr.bf16.mxu0 %v5319
    %5639 = vmatpush1.bf16.msra.mxu0 %v5318
    %5640 = vmatprep.subr.bf16.mxu0 %v5321
    %5641 = vmatpush1.bf16.msra.mxu0 %v5320
    %5642 = vmatprep.subr.bf16.mxu0 %v5323
    %5643 = vmatpush1.bf16.msra.mxu0 %v5322
    %5644 = vmatprep.subr.bf16.mxu0 %v5325
    %5645 = vmatpush1.bf16.msra.mxu0 %v5324
    %5646 = vmatprep.subr.bf16.mxu0 %v5327
    %5647 = vmatpush1.bf16.msra.mxu0 %v5326
    %5648 = vmatprep.subr.bf16.mxu0 %v5329
    %5649 = vmatpush1.bf16.msra.mxu0 %v5328
    %5650 = vmatprep.subr.bf16.mxu0 %v5331
    %5651 = vmatpush1.bf16.msra.mxu0 %v5330
    %5652 = vmatprep.subr.bf16.mxu0 %v5333
    %5653 = vmatpush1.bf16.msra.mxu0 %v5332
    %5654 = vmatprep.subr.bf16.mxu0 %v5335
    %5655 = vmatpush1.bf16.msra.mxu0 %v5334
    %5656 = vmatprep.subr.bf16.mxu0 %v5337
    %5657 = vmatpush1.bf16.msra.mxu0 %v5336
    %5658 = vmatprep.subr.bf16.mxu0 %v5339
    %5659 = vmatpush1.bf16.msra.mxu0 %v5338
    %5660 = vmatprep.subr.bf16.mxu0 %v5341
    %5661 = vmatpush1.bf16.msra.mxu0 %v5340
    %5662 = vmatprep.subr.bf16.mxu0 %v5343
    %5663 = vmatpush1.bf16.msra.mxu0 %v5342
    %5664 = vmatprep.mubr.bf16.mxu0 %v5631
    %5665 = vmatmul.mubr.bf16.gmra.mrb[0].mxu0 %v5630
    %v5666 = vpop.f32.mrb[0].mxu0
    %v5667 = vadd.f32 0.0, %v5666
    %v5668 = vpop.f32.mrb[0].mxu0
    %v5669 = vadd.f32 0.0, %v5668
    %v5670 = vpop.f32.mrb[0].mxu0
    %v5671 = vpop.f32.mrb[0].mxu0
    %5672 = vdwg.mxu0
    %v5673 = vadd.f32 %v5628, %v5667
    %v5674 = vadd.f32 %v5629, %v5669
    %v5675 = vtanh.pop %v5673
    %v5676 = vtanh.pop %v5674
    %v5677 = vld [vmem:[#allocation4 + $0xa0] sm:$0xff]
    %v5678 = vld [vmem:[#allocation4 + $0xa8] sm:$0xff]
    %s5679 = scalar_lea.vmem %s8, 5
    %v5680 = vld [vmem:[%s5679] ss:$8 sm:$0x3]
    %v5682 = vlaneseq
    %v5683 = vshrl.u32 %v5682, 7
    %v5684 = vsub.s32 0, %v5683
    %v5685 = vrot.slane %v5680, %v5684
    %v5686 = vlaneseq
    %v5687 = vshrl.u32 %v5686, 7
    %v5688 = vsub.s32 1, %v5687
    %v5689 = vrot.slane %v5680, %v5688
    %v5692 = vadd.f32 %v5677, %v5685
    %v5693 = vadd.f32 %v5678, %v5689
    %v5694 = vpack.c.bf16 %v5675, %v5675
    %v5695 = vpack.c.bf16 %v5676, %v5676
    %5696 = vmatprep.subr.bf16.mxu0 %v5313
    %5697 = vmatpush1.bf16.msra.mxu0 %v5312
    %5698 = vmatprep.subr.bf16.mxu0 %v5315
    %5699 = vmatpush1.bf16.msra.mxu0 %v5314
    %5700 = vmatprep.subr.bf16.mxu0 %v5317
    %5701 = vmatpush1.bf16.msra.mxu0 %v5316
    %5702 = vmatprep.subr.bf16.mxu0 %v5319
    %5703 = vmatpush1.bf16.msra.mxu0 %v5318
    %5704 = vmatprep.subr.bf16.mxu0 %v5321
    %5705 = vmatpush1.bf16.msra.mxu0 %v5320
    %5706 = vmatprep.subr.bf16.mxu0 %v5323
    %5707 = vmatpush1.bf16.msra.mxu0 %v5322
    %5708 = vmatprep.subr.bf16.mxu0 %v5325
    %5709 = vmatpush1.bf16.msra.mxu0 %v5324
    %5710 = vmatprep.subr.bf16.mxu0 %v5327
    %5711 = vmatpush1.bf16.msra.mxu0 %v5326
    %5712 = vmatprep.subr.bf16.mxu0 %v5329
    %5713 = vmatpush1.bf16.msra.mxu0 %v5328
    %5714 = vmatprep.subr.bf16.mxu0 %v5331
    %5715 = vmatpush1.bf16.msra.mxu0 %v5330
    %5716 = vmatprep.subr.bf16.mxu0 %v5333
    %5717 = vmatpush1.bf16.msra.mxu0 %v5332
    %5718 = vmatprep.subr.bf16.mxu0 %v5335
    %5719 = vmatpush1.bf16.msra.mxu0 %v5334
    %5720 = vmatprep.subr.bf16.mxu0 %v5337
    %5721 = vmatpush1.bf16.msra.mxu0 %v5336
    %5722 = vmatprep.subr.bf16.mxu0 %v5339
    %5723 = vmatpush1.bf16.msra.mxu0 %v5338
    %5724 = vmatprep.subr.bf16.mxu0 %v5341
    %5725 = vmatpush1.bf16.msra.mxu0 %v5340
    %5726 = vmatprep.subr.bf16.mxu0 %v5343
    %5727 = vmatpush1.bf16.msra.mxu0 %v5342
    %5728 = vmatprep.mubr.bf16.mxu0 %v5695
    %5729 = vmatmul.mubr.bf16.gmra.mrb[0].mxu0 %v5694
    %v5730 = vpop.f32.mrb[0].mxu0
    %v5731 = vadd.f32 0.0, %v5730
    %v5732 = vpop.f32.mrb[0].mxu0
    %v5733 = vadd.f32 0.0, %v5732
    %v5734 = vpop.f32.mrb[0].mxu0
    %v5735 = vpop.f32.mrb[0].mxu0
    %5736 = vdwg.mxu0
    %v5737 = vadd.f32 %v5692, %v5731
    %v5738 = vadd.f32 %v5693, %v5733
    %v5739 = vtanh.pop %v5737
    %v5740 = vtanh.pop %v5738
    %v5741 = vld [vmem:[#allocation4 + $0xc0] sm:$0xff]
    %v5742 = vld [vmem:[#allocation4 + $0xc8] sm:$0xff]
    %s5743 = scalar_lea.vmem %s8, 6
    %v5744 = vld [vmem:[%s5743] ss:$8 sm:$0x3]
    %v5746 = vlaneseq
    %v5747 = vshrl.u32 %v5746, 7
    %v5748 = vsub.s32 0, %v5747
    %v5749 = vrot.slane %v5744, %v5748
    %v5750 = vlaneseq
    %v5751 = vshrl.u32 %v5750, 7
    %v5752 = vsub.s32 1, %v5751
    %v5753 = vrot.slane %v5744, %v5752
    %v5756 = vadd.f32 %v5741, %v5749
    %v5757 = vadd.f32 %v5742, %v5753
    %v5758 = vpack.c.bf16 %v5739, %v5739
    %v5759 = vpack.c.bf16 %v5740, %v5740
    %5760 = vmatprep.subr.bf16.mxu0 %v5313
    %5761 = vmatpush1.bf16.msra.mxu0 %v5312
    %5762 = vmatprep.subr.bf16.mxu0 %v5315
    %5763 = vmatpush1.bf16.msra.mxu0 %v5314
    %5764 = vmatprep.subr.bf16.mxu0 %v5317
    %5765 = vmatpush1.bf16.msra.mxu0 %v5316
    %5766 = vmatprep.subr.bf16.mxu0 %v5319
    %5767 = vmatpush1.bf16.msra.mxu0 %v5318
    %5768 = vmatprep.subr.bf16.mxu0 %v5321
    %5769 = vmatpush1.bf16.msra.mxu0 %v5320
    %5770 = vmatprep.subr.bf16.mxu0 %v5323
    %5771 = vmatpush1.bf16.msra.mxu0 %v5322
    %5772 = vmatprep.subr.bf16.mxu0 %v5325
    %5773 = vmatpush1.bf16.msra.mxu0 %v5324
    %5774 = vmatprep.subr.bf16.mxu0 %v5327
    %5775 = vmatpush1.bf16.msra.mxu0 %v5326
    %5776 = vmatprep.subr.bf16.mxu0 %v5329
    %5777 = vmatpush1.bf16.msra.mxu0 %v5328
    %5778 = vmatprep.subr.bf16.mxu0 %v5331
    %5779 = vmatpush1.bf16.msra.mxu0 %v5330
    %5780 = vmatprep.subr.bf16.mxu0 %v5333
    %5781 = vmatpush1.bf16.msra.mxu0 %v5332
    %5782 = vmatprep.subr.bf16.mxu0 %v5335
    %5783 = vmatpush1.bf16.msra.mxu0 %v5334
    %5784 = vmatprep.subr.bf16.mxu0 %v5337
    %5785 = vmatpush1.bf16.msra.mxu0 %v5336
    %5786 = vmatprep.subr.bf16.mxu0 %v5339
    %5787 = vmatpush1.bf16.msra.mxu0 %v5338
    %5788 = vmatprep.subr.bf16.mxu0 %v5341
    %5789 = vmatpush1.bf16.msra.mxu0 %v5340
    %5790 = vmatprep.subr.bf16.mxu0 %v5343
    %5791 = vmatpush1.bf16.msra.mxu0 %v5342
    %5792 = vmatprep.mubr.bf16.mxu0 %v5759
    %5793 = vmatmul.mubr.bf16.gmra.mrb[0].mxu0 %v5758
    %v5794 = vpop.f32.mrb[0].mxu0
    %v5795 = vadd.f32 0.0, %v5794
    %v5796 = vpop.f32.mrb[0].mxu0
    %v5797 = vadd.f32 0.0, %v5796
    %v5798 = vpop.f32.mrb[0].mxu0
    %v5799 = vpop.f32.mrb[0].mxu0
    %5800 = vdwg.mxu0
    %v5801 = vadd.f32 %v5756, %v5795
    %v5802 = vadd.f32 %v5757, %v5797
    %v5803 = vtanh.pop %v5801
    %v5804 = vtanh.pop %v5802
    %v5805 = vld [vmem:[#allocation4 + $0xe0] sm:$0xff]
    %v5806 = vld [vmem:[#allocation4 + $0xe8] sm:$0xff]
    %s5807 = scalar_lea.vmem %s8, 7
    %v5808 = vld [vmem:[%s5807] ss:$8 sm:$0x3]
    %v5810 = vlaneseq
    %v5811 = vshrl.u32 %v5810, 7
    %v5812 = vsub.s32 0, %v5811
    %v5813 = vrot.slane %v5808, %v5812
    %v5814 = vlaneseq
    %v5815 = vshrl.u32 %v5814, 7
    %v5816 = vsub.s32 1, %v5815
    %v5817 = vrot.slane %v5808, %v5816
    %v5820 = vadd.f32 %v5805, %v5813
    %v5821 = vadd.f32 %v5806, %v5817
    %v5822 = vpack.c.bf16 %v5803, %v5803
    %v5823 = vpack.c.bf16 %v5804, %v5804
    %5824 = vmatprep.subr.bf16.mxu0 %v5313
    %5825 = vmatpush1.bf16.msra.mxu0 %v5312
    %5826 = vmatprep.subr.bf16.mxu0 %v5315
    %5827 = vmatpush1.bf16.msra.mxu0 %v5314
    %5828 = vmatprep.subr.bf16.mxu0 %v5317
    %5829 = vmatpush1.bf16.msra.mxu0 %v5316
    %5830 = vmatprep.subr.bf16.mxu0 %v5319
    %5831 = vmatpush1.bf16.msra.mxu0 %v5318
    %5832 = vmatprep.subr.bf16.mxu0 %v5321
    %5833 = vmatpush1.bf16.msra.mxu0 %v5320
    %5834 = vmatprep.subr.bf16.mxu0 %v5323
    %5835 = vmatpush1.bf16.msra.mxu0 %v5322
    %5836 = vmatprep.subr.bf16.mxu0 %v5325
    %5837 = vmatpush1.bf16.msra.mxu0 %v5324
    %5838 = vmatprep.subr.bf16.mxu0 %v5327
    %5839 = vmatpush1.bf16.msra.mxu0 %v5326
    %5840 = vmatprep.subr.bf16.mxu0 %v5329
    %5841 = vmatpush1.bf16.msra.mxu0 %v5328
    %5842 = vmatprep.subr.bf16.mxu0 %v5331
    %5843 = vmatpush1.bf16.msra.mxu0 %v5330
    %5844 = vmatprep.subr.bf16.mxu0 %v5333
    %5845 = vmatpush1.bf16.msra.mxu0 %v5332
    %5846 = vmatprep.subr.bf16.mxu0 %v5335
    %5847 = vmatpush1.bf16.msra.mxu0 %v5334
    %5848 = vmatprep.subr.bf16.mxu0 %v5337
    %5849 = vmatpush1.bf16.msra.mxu0 %v5336
    %5850 = vmatprep.subr.bf16.mxu0 %v5339
    %5851 = vmatpush1.bf16.msra.mxu0 %v5338
    %5852 = vmatprep.subr.bf16.mxu0 %v5341
    %5853 = vmatpush1.bf16.msra.mxu0 %v5340
    %5854 = vmatprep.subr.bf16.mxu0 %v5343
    %5855 = vmatpush1.bf16.msra.mxu0 %v5342
    %5856 = vmatprep.mubr.bf16.mxu0 %v5823
    %5857 = vmatmul.mubr.bf16.gmra.mrb[0].mxu0 %v5822
    %v5858 = vpop.f32.mrb[0].mxu0
    %v5859 = vadd.f32 0.0, %v5858
    %v5860 = vpop.f32.mrb[0].mxu0
    %v5861 = vadd.f32 0.0, %v5860
    %v5862 = vpop.f32.mrb[0].mxu0
    %v5863 = vpop.f32.mrb[0].mxu0
    %5864 = vdwg.mxu0
    %v5865 = vadd.f32 %v5820, %v5859
    %v5866 = vadd.f32 %v5821, %v5861
    %v5867 = vtanh.pop %v5865
    %v5868 = vtanh.pop %v5866
    %v5869 = vld [vmem:[#allocation4 + $0x100] sm:$0xff]
    %v5870 = vld [vmem:[#allocation4 + $0x108] sm:$0xff]
    %s5871 = scalar_lea.vmem %s8, 32
    %v5872 = vld [vmem:[%s5871] ss:$8 sm:$0x3]
    %v5874 = vlaneseq
    %v5875 = vshrl.u32 %v5874, 7
    %v5876 = vsub.s32 0, %v5875
    %v5877 = vrot.slane %v5872, %v5876
    %v5878 = vlaneseq
    %v5879 = vshrl.u32 %v5878, 7
    %v5880 = vsub.s32 1, %v5879
    %v5881 = vrot.slane %v5872, %v5880
    %v5884 = vadd.f32 %v5869, %v5877
    %v5885 = vadd.f32 %v5870, %v5881
    %v5886 = vpack.c.bf16 %v5867, %v5867
    %v5887 = vpack.c.bf16 %v5868, %v5868
    %5888 = vmatprep.subr.bf16.mxu0 %v5313
    %5889 = vmatpush1.bf16.msra.mxu0 %v5312
    %5890 = vmatprep.subr.bf16.mxu0 %v5315
    %5891 = vmatpush1.bf16.msra.mxu0 %v5314
    %5892 = vmatprep.subr.bf16.mxu0 %v5317
    %5893 = vmatpush1.bf16.msra.mxu0 %v5316
    %5894 = vmatprep.subr.bf16.mxu0 %v5319
    %5895 = vmatpush1.bf16.msra.mxu0 %v5318
    %5896 = vmatprep.subr.bf16.mxu0 %v5321
    %5897 = vmatpush1.bf16.msra.mxu0 %v5320
    %5898 = vmatprep.subr.bf16.mxu0 %v5323
    %5899 = vmatpush1.bf16.msra.mxu0 %v5322
    %5900 = vmatprep.subr.bf16.mxu0 %v5325
    %5901 = vmatpush1.bf16.msra.mxu0 %v5324
    %5902 = vmatprep.subr.bf16.mxu0 %v5327
    %5903 = vmatpush1.bf16.msra.mxu0 %v5326
    %5904 = vmatprep.subr.bf16.mxu0 %v5329
    %5905 = vmatpush1.bf16.msra.mxu0 %v5328
    %5906 = vmatprep.subr.bf16.mxu0 %v5331
    %5907 = vmatpush1.bf16.msra.mxu0 %v5330
    %5908 = vmatprep.subr.bf16.mxu0 %v5333
    %5909 = vmatpush1.bf16.msra.mxu0 %v5332
    %5910 = vmatprep.subr.bf16.mxu0 %v5335
    %5911 = vmatpush1.bf16.msra.mxu0 %v5334
    %5912 = vmatprep.subr.bf16.mxu0 %v5337
    %5913 = vmatpush1.bf16.msra.mxu0 %v5336
    %5914 = vmatprep.subr.bf16.mxu0 %v5339
    %5915 = vmatpush1.bf16.msra.mxu0 %v5338
    %5916 = vmatprep.subr.bf16.mxu0 %v5341
    %5917 = vmatpush1.bf16.msra.mxu0 %v5340
    %5918 = vmatprep.subr.bf16.mxu0 %v5343
    %5919 = vmatpush1.bf16.msra.mxu0 %v5342
    %5920 = vmatprep.mubr.bf16.mxu0 %v5887
    %5921 = vmatmul.mubr.bf16.gmra.mrb[0].mxu0 %v5886
    %v5922 = vpop.f32.mrb[0].mxu0
    %v5923 = vadd.f32 0.0, %v5922
    %v5924 = vpop.f32.mrb[0].mxu0
    %v5925 = vadd.f32 0.0, %v5924
    %v5926 = vpop.f32.mrb[0].mxu0
    %v5927 = vpop.f32.mrb[0].mxu0
    %5928 = vdwg.mxu0
    %v5929 = vadd.f32 %v5884, %v5923
    %v5930 = vadd.f32 %v5885, %v5925
    %v5931 = vtanh.pop %v5929
    %v5932 = vtanh.pop %v5930
    %v5933 = vld [vmem:[#allocation4 + $0x120] sm:$0xff]
    %v5934 = vld [vmem:[#allocation4 + $0x128] sm:$0xff]
    %s5935 = scalar_lea.vmem %s8, 33
    %v5936 = vld [vmem:[%s5935] ss:$8 sm:$0x3]
    %v5938 = vlaneseq
    %v5939 = vshrl.u32 %v5938, 7
    %v5940 = vsub.s32 0, %v5939
    %v5941 = vrot.slane %v5936, %v5940
    %v5942 = vlaneseq
    %v5943 = vshrl.u32 %v5942, 7
    %v5944 = vsub.s32 1, %v5943
    %v5945 = vrot.slane %v5936, %v5944
    %v5948 = vadd.f32 %v5933, %v5941
    %v5949 = vadd.f32 %v5934, %v5945
    %v5950 = vpack.c.bf16 %v5931, %v5931
    %v5951 = vpack.c.bf16 %v5932, %v5932
    %5952 = vmatprep.subr.bf16.mxu0 %v5313
    %5953 = vmatpush1.bf16.msra.mxu0 %v5312
    %5954 = vmatprep.subr.bf16.mxu0 %v5315
    %5955 = vmatpush1.bf16.msra.mxu0 %v5314
    %5956 = vmatprep.subr.bf16.mxu0 %v5317
    %5957 = vmatpush1.bf16.msra.mxu0 %v5316
    %5958 = vmatprep.subr.bf16.mxu0 %v5319
    %5959 = vmatpush1.bf16.msra.mxu0 %v5318
    %5960 = vmatprep.subr.bf16.mxu0 %v5321
    %5961 = vmatpush1.bf16.msra.mxu0 %v5320
    %5962 = vmatprep.subr.bf16.mxu0 %v5323
    %5963 = vmatpush1.bf16.msra.mxu0 %v5322
    %5964 = vmatprep.subr.bf16.mxu0 %v5325
    %5965 = vmatpush1.bf16.msra.mxu0 %v5324
    %5966 = vmatprep.subr.bf16.mxu0 %v5327
    %5967 = vmatpush1.bf16.msra.mxu0 %v5326
    %5968 = vmatprep.subr.bf16.mxu0 %v5329
    %5969 = vmatpush1.bf16.msra.mxu0 %v5328
    %5970 = vmatprep.subr.bf16.mxu0 %v5331
    %5971 = vmatpush1.bf16.msra.mxu0 %v5330
    %5972 = vmatprep.subr.bf16.mxu0 %v5333
    %5973 = vmatpush1.bf16.msra.mxu0 %v5332
    %5974 = vmatprep.subr.bf16.mxu0 %v5335
    %5975 = vmatpush1.bf16.msra.mxu0 %v5334
    %5976 = vmatprep.subr.bf16.mxu0 %v5337
    %5977 = vmatpush1.bf16.msra.mxu0 %v5336
    %5978 = vmatprep.subr.bf16.mxu0 %v5339
    %5979 = vmatpush1.bf16.msra.mxu0 %v5338
    %5980 = vmatprep.subr.bf16.mxu0 %v5341
    %5981 = vmatpush1.bf16.msra.mxu0 %v5340
    %5982 = vmatprep.subr.bf16.mxu0 %v5343
    %5983 = vmatpush1.bf16.msra.mxu0 %v5342
    %5984 = vmatprep.mubr.bf16.mxu0 %v5951
    %5985 = vmatmul.mubr.bf16.gmra.mrb[0].mxu0 %v5950
    %v5986 = vpop.f32.mrb[0].mxu0
    %v5987 = vadd.f32 0.0, %v5986
    %v5988 = vpop.f32.mrb[0].mxu0
    %v5989 = vadd.f32 0.0, %v5988
    %v5990 = vpop.f32.mrb[0].mxu0
    %v5991 = vpop.f32.mrb[0].mxu0
    %5992 = vdwg.mxu0
    %v5993 = vadd.f32 %v5948, %v5987
    %v5994 = vadd.f32 %v5949, %v5989
    %v5995 = vtanh.pop %v5993
    %v5996 = vtanh.pop %v5994
    %v5997 = vld [vmem:[#allocation4 + $0x140] sm:$0xff]
    %v5998 = vld [vmem:[#allocation4 + $0x148] sm:$0xff]
    %s5999 = scalar_lea.vmem %s8, 34
    %v6000 = vld [vmem:[%s5999] ss:$8 sm:$0x3]
    %v6002 = vlaneseq
    %v6003 = vshrl.u32 %v6002, 7
    %v6004 = vsub.s32 0, %v6003
    %v6005 = vrot.slane %v6000, %v6004
    %v6006 = vlaneseq
    %v6007 = vshrl.u32 %v6006, 7
    %v6008 = vsub.s32 1, %v6007
    %v6009 = vrot.slane %v6000, %v6008
    %v6012 = vadd.f32 %v5997, %v6005
    %v6013 = vadd.f32 %v5998, %v6009
    %v6014 = vpack.c.bf16 %v5995, %v5995
    %v6015 = vpack.c.bf16 %v5996, %v5996
    %6016 = vmatprep.subr.bf16.mxu0 %v5313
    %6017 = vmatpush1.bf16.msra.mxu0 %v5312
    %6018 = vmatprep.subr.bf16.mxu0 %v5315
    %6019 = vmatpush1.bf16.msra.mxu0 %v5314
    %6020 = vmatprep.subr.bf16.mxu0 %v5317
    %6021 = vmatpush1.bf16.msra.mxu0 %v5316
    %6022 = vmatprep.subr.bf16.mxu0 %v5319
    %6023 = vmatpush1.bf16.msra.mxu0 %v5318
    %6024 = vmatprep.subr.bf16.mxu0 %v5321
    %6025 = vmatpush1.bf16.msra.mxu0 %v5320
    %6026 = vmatprep.subr.bf16.mxu0 %v5323
    %6027 = vmatpush1.bf16.msra.mxu0 %v5322
    %6028 = vmatprep.subr.bf16.mxu0 %v5325
    %6029 = vmatpush1.bf16.msra.mxu0 %v5324
    %6030 = vmatprep.subr.bf16.mxu0 %v5327
    %6031 = vmatpush1.bf16.msra.mxu0 %v5326
    %6032 = vmatprep.subr.bf16.mxu0 %v5329
    %6033 = vmatpush1.bf16.msra.mxu0 %v5328
    %6034 = vmatprep.subr.bf16.mxu0 %v5331
    %6035 = vmatpush1.bf16.msra.mxu0 %v5330
    %6036 = vmatprep.subr.bf16.mxu0 %v5333
    %6037 = vmatpush1.bf16.msra.mxu0 %v5332
    %6038 = vmatprep.subr.bf16.mxu0 %v5335
    %6039 = vmatpush1.bf16.msra.mxu0 %v5334
    %6040 = vmatprep.subr.bf16.mxu0 %v5337
    %6041 = vmatpush1.bf16.msra.mxu0 %v5336
    %6042 = vmatprep.subr.bf16.mxu0 %v5339
    %6043 = vmatpush1.bf16.msra.mxu0 %v5338
    %6044 = vmatprep.subr.bf16.mxu0 %v5341
    %6045 = vmatpush1.bf16.msra.mxu0 %v5340
    %6046 = vmatprep.subr.bf16.mxu0 %v5343
    %6047 = vmatpush1.bf16.msra.mxu0 %v5342
    %6048 = vmatprep.mubr.bf16.mxu0 %v6015
    %6049 = vmatmul.mubr.bf16.gmra.mrb[0].mxu0 %v6014
    %v6050 = vpop.f32.mrb[0].mxu0
    %v6051 = vadd.f32 0.0, %v6050
    %v6052 = vpop.f32.mrb[0].mxu0
    %v6053 = vadd.f32 0.0, %v6052
    %v6054 = vpop.f32.mrb[0].mxu0
    %v6055 = vpop.f32.mrb[0].mxu0
    %6056 = vdwg.mxu0
    %v6057 = vadd.f32 %v6012, %v6051
    %v6058 = vadd.f32 %v6013, %v6053
    %v6059 = vtanh.pop %v6057
    %v6060 = vtanh.pop %v6058
    %v6061 = vld [vmem:[#allocation4 + $0x160] sm:$0xff]
    %v6062 = vld [vmem:[#allocation4 + $0x168] sm:$0xff]
    %s6063 = scalar_lea.vmem %s8, 35
    %v6064 = vld [vmem:[%s6063] ss:$8 sm:$0x3]
    %v6066 = vlaneseq
    %v6067 = vshrl.u32 %v6066, 7
    %v6068 = vsub.s32 0, %v6067
    %v6069 = vrot.slane %v6064, %v6068
    %v6070 = vlaneseq
    %v6071 = vshrl.u32 %v6070, 7
    %v6072 = vsub.s32 1, %v6071
    %v6073 = vrot.slane %v6064, %v6072
    %v6076 = vadd.f32 %v6061, %v6069
    %v6077 = vadd.f32 %v6062, %v6073
    %v6078 = vpack.c.bf16 %v6059, %v6059
    %v6079 = vpack.c.bf16 %v6060, %v6060
    %6080 = vmatprep.subr.bf16.mxu0 %v5313
    %6081 = vmatpush1.bf16.msra.mxu0 %v5312
    %6082 = vmatprep.subr.bf16.mxu0 %v5315
    %6083 = vmatpush1.bf16.msra.mxu0 %v5314
    %6084 = vmatprep.subr.bf16.mxu0 %v5317
    %6085 = vmatpush1.bf16.msra.mxu0 %v5316
    %6086 = vmatprep.subr.bf16.mxu0 %v5319
    %6087 = vmatpush1.bf16.msra.mxu0 %v5318
    %6088 = vmatprep.subr.bf16.mxu0 %v5321
    %6089 = vmatpush1.bf16.msra.mxu0 %v5320
    %6090 = vmatprep.subr.bf16.mxu0 %v5323
    %6091 = vmatpush1.bf16.msra.mxu0 %v5322
    %6092 = vmatprep.subr.bf16.mxu0 %v5325
    %6093 = vmatpush1.bf16.msra.mxu0 %v5324
    %6094 = vmatprep.subr.bf16.mxu0 %v5327
    %6095 = vmatpush1.bf16.msra.mxu0 %v5326
    %6096 = vmatprep.subr.bf16.mxu0 %v5329
    %6097 = vmatpush1.bf16.msra.mxu0 %v5328
    %6098 = vmatprep.subr.bf16.mxu0 %v5331
    %6099 = vmatpush1.bf16.msra.mxu0 %v5330
    %6100 = vmatprep.subr.bf16.mxu0 %v5333
    %6101 = vmatpush1.bf16.msra.mxu0 %v5332
    %6102 = vmatprep.subr.bf16.mxu0 %v5335
    %6103 = vmatpush1.bf16.msra.mxu0 %v5334
    %6104 = vmatprep.subr.bf16.mxu0 %v5337
    %6105 = vmatpush1.bf16.msra.mxu0 %v5336
    %6106 = vmatprep.subr.bf16.mxu0 %v5339
    %6107 = vmatpush1.bf16.msra.mxu0 %v5338
    %6108 = vmatprep.subr.bf16.mxu0 %v5341
    %6109 = vmatpush1.bf16.msra.mxu0 %v5340
    %6110 = vmatprep.subr.bf16.mxu0 %v5343
    %6111 = vmatpush1.bf16.msra.mxu0 %v5342
    %6112 = vmatprep.mubr.bf16.mxu0 %v6079
    %6113 = vmatmul.mubr.bf16.gmra.mrb[0].mxu0 %v6078
    %v6114 = vpop.f32.mrb[0].mxu0
    %v6115 = vadd.f32 0.0, %v6114
    %v6116 = vpop.f32.mrb[0].mxu0
    %v6117 = vadd.f32 0.0, %v6116
    %v6118 = vpop.f32.mrb[0].mxu0
    %v6119 = vpop.f32.mrb[0].mxu0
    %6120 = vdwg.mxu0
    %v6121 = vadd.f32 %v6076, %v6115
    %v6122 = vadd.f32 %v6077, %v6117
    %v6123 = vtanh.pop %v6121
    %v6124 = vtanh.pop %v6122
    %v6125 = vld [vmem:[#allocation4 + $0x170] sm:$0xff]
    %v6126 = vld [vmem:[#allocation4 + $0x178] sm:$0xff]
    %s6127 = scalar_lea.vmem %s8, 51
    %v6128 = vld [vmem:[%s6127] ss:$8 sm:$0x3]
    %v6130 = vlaneseq
    %v6131 = vshrl.u32 %v6130, 7
    %v6132 = vsub.s32 0, %v6131
    %v6133 = vrot.slane %v6128, %v6132
    %v6134 = vlaneseq
    %v6135 = vshrl.u32 %v6134, 7
    %v6136 = vsub.s32 1, %v6135
    %v6137 = vrot.slane %v6128, %v6136
    %v6140 = vadd.f32 %v6125, %v6133
    %v6141 = vadd.f32 %v6126, %v6137
    %v6142 = vtanh.pop %v6140
    %v6143 = vtanh.pop %v6141
    %v6144 = vadd.f32 %v6123, %v6124
    %v6145 = vadd.f32 %v6142, %v6143
    %v6146 = vld [vmem:[#allocation5] sm:$0xff]
    %v6147 = vld [vmem:[%s12] sm:$0xf]
    %v6148 = vld [vmem:[%s12 + $0x4] sm:$0xf]
    %v6149 = vld [vmem:[%s12 + $0x8] sm:$0xf]
    %v6150 = vld [vmem:[%s12 + $0xc] sm:$0xf]
    %v6151 = vld [vmem:[%s12 + $0x10] sm:$0xf]
    %v6152 = vld [vmem:[%s12 + $0x14] sm:$0xf]
    %v6153 = vld [vmem:[%s12 + $0x18] sm:$0xf]
    %v6154 = vld [vmem:[%s12 + $0x1c] sm:$0xf]
    %v6155 = vld [vmem:[%s12 + $0x20] sm:$0xf]
    %v6156 = vld [vmem:[%s12 + $0x24] sm:$0xf]
    %v6157 = vld [vmem:[%s12 + $0x28] sm:$0xf]
    %v6158 = vld [vmem:[%s12 + $0x2c] sm:$0xf]
    %v6159 = vld [vmem:[%s12 + $0x30] sm:$0xf]
    %v6160 = vld [vmem:[%s12 + $0x34] sm:$0xf]
    %v6161 = vld [vmem:[%s12 + $0x38] sm:$0xf]
    %v6162 = vld [vmem:[%s12 + $0x3c] sm:$0xf]
    %v6179 = vunpack.c.l.b16 %v6147
    %v6180 = vunpack.c.l.b16 %v6148
    %v6181 = vunpack.c.l.b16 %v6149
    %v6182 = vunpack.c.l.b16 %v6150
    %v6183 = vunpack.c.l.b16 %v6151
    %v6184 = vunpack.c.l.b16 %v6152
    %v6185 = vunpack.c.l.b16 %v6153
    %v6186 = vunpack.c.l.b16 %v6154
    %v6187 = vunpack.c.l.b16 %v6155
    %v6188 = vunpack.c.l.b16 %v6156
    %v6189 = vunpack.c.l.b16 %v6157
    %v6190 = vunpack.c.l.b16 %v6158
    %v6191 = vunpack.c.l.b16 %v6159
    %v6192 = vunpack.c.l.b16 %v6160
    %v6193 = vunpack.c.l.b16 %v6161
    %v6194 = vunpack.c.l.b16 %v6162
    %v6195 = vpack.c.b16 %v6180, %v6179
    %v6196 = vpack.c.b16 %v6182, %v6181
    %v6197 = vpack.c.b16 %v6184, %v6183
    %v6198 = vpack.c.b16 %v6186, %v6185
    %v6199 = vpack.c.b16 %v6188, %v6187
    %v6200 = vpack.c.b16 %v6190, %v6189
    %v6201 = vpack.c.b16 %v6192, %v6191
    %v6202 = vpack.c.b16 %v6194, %v6193
    %6211 = vmatprep.subr.bf16.mxu0 0
    %6212 = vmatpush1.bf16.msra.mxu0 %v6195
    %6213 = vmatprep.subr.bf16.mxu0 0
    %6214 = vmatpush1.bf16.msra.mxu0 %v6196
    %6215 = vmatprep.subr.bf16.mxu0 0
    %6216 = vmatpush1.bf16.msra.mxu0 %v6197
    %6217 = vmatprep.subr.bf16.mxu0 0
    %6218 = vmatpush1.bf16.msra.mxu0 %v6198
    %6219 = vmatprep.subr.bf16.mxu0 0
    %6220 = vmatpush1.bf16.msra.mxu0 %v6199
    %6221 = vmatprep.subr.bf16.mxu0 0
    %6222 = vmatpush1.bf16.msra.mxu0 %v6200
    %6223 = vmatprep.subr.bf16.mxu0 0
    %6224 = vmatpush1.bf16.msra.mxu0 %v6201
    %6225 = vmatprep.subr.bf16.mxu0 0
    %6226 = vmatpush1.bf16.msra.mxu0 %v6202
    %6227 = vmatprep.subr.bf16.mxu0 0
    %6228 = vmatpush1.bf16.msra.mxu0 0
    %6229 = vmatprep.subr.bf16.mxu0 0
    %6230 = vmatpush1.bf16.msra.mxu0 0
    %6231 = vmatprep.subr.bf16.mxu0 0
    %6232 = vmatpush1.bf16.msra.mxu0 0
    %6233 = vmatprep.subr.bf16.mxu0 0
    %6234 = vmatpush1.bf16.msra.mxu0 0
    %6235 = vmatprep.subr.bf16.mxu0 0
    %6236 = vmatpush1.bf16.msra.mxu0 0
    %6237 = vmatprep.subr.bf16.mxu0 0
    %6238 = vmatpush1.bf16.msra.mxu0 0
    %6239 = vmatprep.subr.bf16.mxu0 0
    %6240 = vmatpush1.bf16.msra.mxu0 0
    %6241 = vmatprep.subr.bf16.mxu0 0
    %6242 = vmatpush1.bf16.msra.mxu0 0
    %6243 = vmatprep.mubr.bf16.mxu0 0
    %6244 = vmatmul.mubr.bf16.gmra.mrb[0].mxu0 0
    %v6245 = vpop.f32.mrb[0].mxu0
    %v6246 = vadd.f32 0.0, %v6245
    %v6247 = vpop.f32.mrb[0].mxu0
    %v6248 = vpop.f32.mrb[0].mxu0
    %v6249 = vpop.f32.mrb[0].mxu0
    %6250 = vdwg.mxu0
    %v6251 = vadd.f32 %v6146, %v6246
    %v6252 = vtanh.pop %v6251
    %v6253 = vld [vmem:[#allocation5 + $0x10] sm:$0xff]
    %v6254 = vpack.c.bf16 %v6252, %v6252
    %6255 = vmatprep.subr.bf16.mxu0 0
    %6256 = vmatpush1.bf16.msra.mxu0 %v6195
    %6257 = vmatprep.subr.bf16.mxu0 0
    %6258 = vmatpush1.bf16.msra.mxu0 %v6196
    %6259 = vmatprep.subr.bf16.mxu0 0
    %6260 = vmatpush1.bf16.msra.mxu0 %v6197
    %6261 = vmatprep.subr.bf16.mxu0 0
    %6262 = vmatpush1.bf16.msra.mxu0 %v6198
    %6263 = vmatprep.subr.bf16.mxu0 0
    %6264 = vmatpush1.bf16.msra.mxu0 %v6199
    %6265 = vmatprep.subr.bf16.mxu0 0
    %6266 = vmatpush1.bf16.msra.mxu0 %v6200
    %6267 = vmatprep.subr.bf16.mxu0 0
    %6268 = vmatpush1.bf16.msra.mxu0 %v6201
    %6269 = vmatprep.subr.bf16.mxu0 0
    %6270 = vmatpush1.bf16.msra.mxu0 %v6202
    %6271 = vmatprep.subr.bf16.mxu0 0
    %6272 = vmatpush1.bf16.msra.mxu0 0
    %6273 = vmatprep.subr.bf16.mxu0 0
    %6274 = vmatpush1.bf16.msra.mxu0 0
    %6275 = vmatprep.subr.bf16.mxu0 0
    %6276 = vmatpush1.bf16.msra.mxu0 0
    %6277 = vmatprep.subr.bf16.mxu0 0
    %6278 = vmatpush1.bf16.msra.mxu0 0
    %6279 = vmatprep.subr.bf16.mxu0 0
    %6280 = vmatpush1.bf16.msra.mxu0 0
    %6281 = vmatprep.subr.bf16.mxu0 0
    %6282 = vmatpush1.bf16.msra.mxu0 0
    %6283 = vmatprep.subr.bf16.mxu0 0
    %6284 = vmatpush1.bf16.msra.mxu0 0
    %6285 = vmatprep.subr.bf16.mxu0 0
    %6286 = vmatpush1.bf16.msra.mxu0 0
    %6287 = vmatprep.mubr.bf16.mxu0 0
    %6288 = vmatmul.mubr.bf16.gmra.mrb[0].mxu0 %v6254
    %v6289 = vpop.f32.mrb[0].mxu0
    %v6290 = vadd.f32 0.0, %v6289
    %v6291 = vpop.f32.mrb[0].mxu0
    %v6292 = vpop.f32.mrb[0].mxu0
    %v6293 = vpop.f32.mrb[0].mxu0
    %6294 = vdwg.mxu0
    %v6295 = vadd.f32 %v6253, %v6290
    %v6296 = vtanh.pop %v6295
    %v6297 = vld [vmem:[#allocation5 + $0x20] sm:$0xff]
    %v6298 = vpack.c.bf16 %v6296, %v6296
    %6299 = vmatprep.subr.bf16.mxu0 0
    %6300 = vmatpush1.bf16.msra.mxu0 %v6195
    %6301 = vmatprep.subr.bf16.mxu0 0
    %6302 = vmatpush1.bf16.msra.mxu0 %v6196
    %6303 = vmatprep.subr.bf16.mxu0 0
    %6304 = vmatpush1.bf16.msra.mxu0 %v6197
    %6305 = vmatprep.subr.bf16.mxu0 0
    %6306 = vmatpush1.bf16.msra.mxu0 %v6198
    %6307 = vmatprep.subr.bf16.mxu0 0
    %6308 = vmatpush1.bf16.msra.mxu0 %v6199
    %6309 = vmatprep.subr.bf16.mxu0 0
    %6310 = vmatpush1.bf16.msra.mxu0 %v6200
    %6311 = vmatprep.subr.bf16.mxu0 0
    %6312 = vmatpush1.bf16.msra.mxu0 %v6201
    %6313 = vmatprep.subr.bf16.mxu0 0
    %6314 = vmatpush1.bf16.msra.mxu0 %v6202
    %6315 = vmatprep.subr.bf16.mxu0 0
    %6316 = vmatpush1.bf16.msra.mxu0 0
    %6317 = vmatprep.subr.bf16.mxu0 0
    %6318 = vmatpush1.bf16.msra.mxu0 0
    %6319 = vmatprep.subr.bf16.mxu0 0
    %6320 = vmatpush1.bf16.msra.mxu0 0
    %6321 = vmatprep.subr.bf16.mxu0 0
    %6322 = vmatpush1.bf16.msra.mxu0 0
    %6323 = vmatprep.subr.bf16.mxu0 0
    %6324 = vmatpush1.bf16.msra.mxu0 0
    %6325 = vmatprep.subr.bf16.mxu0 0
    %6326 = vmatpush1.bf16.msra.mxu0 0
    %6327 = vmatprep.subr.bf16.mxu0 0
    %6328 = vmatpush1.bf16.msra.mxu0 0
    %6329 = vmatprep.subr.bf16.mxu0 0
    %6330 = vmatpush1.bf16.msra.mxu0 0
    %6331 = vmatprep.mubr.bf16.mxu0 0
    %6332 = vmatmul.mubr.bf16.gmra.mrb[0].mxu0 %v6298
    %v6333 = vpop.f32.mrb[0].mxu0
    %v6334 = vadd.f32 0.0, %v6333
    %v6335 = vpop.f32.mrb[0].mxu0
    %v6336 = vpop.f32.mrb[0].mxu0
    %v6337 = vpop.f32.mrb[0].mxu0
    %6338 = vdwg.mxu0
    %v6339 = vadd.f32 %v6297, %v6334
    %v6340 = vtanh.pop %v6339
    %v6341 = vld [vmem:[#allocation5 + $0x30] sm:$0xff]
    %v6342 = vpack.c.bf16 %v6340, %v6340
    %6343 = vmatprep.subr.bf16.mxu0 0
    %6344 = vmatpush1.bf16.msra.mxu0 %v6195
    %6345 = vmatprep.subr.bf16.mxu0 0
    %6346 = vmatpush1.bf16.msra.mxu0 %v6196
    %6347 = vmatprep.subr.bf16.mxu0 0
    %6348 = vmatpush1.bf16.msra.mxu0 %v6197
    %6349 = vmatprep.subr.bf16.mxu0 0
    %6350 = vmatpush1.bf16.msra.mxu0 %v6198
    %6351 = vmatprep.subr.bf16.mxu0 0
    %6352 = vmatpush1.bf16.msra.mxu0 %v6199
    %6353 = vmatprep.subr.bf16.mxu0 0
    %6354 = vmatpush1.bf16.msra.mxu0 %v6200
    %6355 = vmatprep.subr.bf16.mxu0 0
    %6356 = vmatpush1.bf16.msra.mxu0 %v6201
    %6357 = vmatprep.subr.bf16.mxu0 0
    %6358 = vmatpush1.bf16.msra.mxu0 %v6202
    %6359 = vmatprep.subr.bf16.mxu0 0
    %6360 = vmatpush1.bf16.msra.mxu0 0
    %6361 = vmatprep.subr.bf16.mxu0 0
    %6362 = vmatpush1.bf16.msra.mxu0 0
    %6363 = vmatprep.subr.bf16.mxu0 0
    %6364 = vmatpush1.bf16.msra.mxu0 0
    %6365 = vmatprep.subr.bf16.mxu0 0
    %6366 = vmatpush1.bf16.msra.mxu0 0
    %6367 = vmatprep.subr.bf16.mxu0 0
    %6368 = vmatpush1.bf16.msra.mxu0 0
    %6369 = vmatprep.subr.bf16.mxu0 0
    %6370 = vmatpush1.bf16.msra.mxu0 0
    %6371 = vmatprep.subr.bf16.mxu0 0
    %6372 = vmatpush1.bf16.msra.mxu0 0
    %6373 = vmatprep.subr.bf16.mxu0 0
    %6374 = vmatpush1.bf16.msra.mxu0 0
    %6375 = vmatprep.mubr.bf16.mxu0 0
    %6376 = vmatmul.mubr.bf16.gmra.mrb[0].mxu0 %v6342
    %v6377 = vpop.f32.mrb[0].mxu0
    %v6378 = vadd.f32 0.0, %v6377
    %v6379 = vpop.f32.mrb[0].mxu0
    %v6380 = vpop.f32.mrb[0].mxu0
    %v6381 = vpop.f32.mrb[0].mxu0
    %6382 = vdwg.mxu0
    %v6383 = vadd.f32 %v6341, %v6378
    %v6384 = vtanh.pop %v6383
    %v6385 = vld [vmem:[#allocation5 + $0x40] sm:$0xff]
    %v6386 = vpack.c.bf16 %v6384, %v6384
    %6387 = vmatprep.subr.bf16.mxu0 0
    %6388 = vmatpush1.bf16.msra.mxu0 %v6195
    %6389 = vmatprep.subr.bf16.mxu0 0
    %6390 = vmatpush1.bf16.msra.mxu0 %v6196
    %6391 = vmatprep.subr.bf16.mxu0 0
    %6392 = vmatpush1.bf16.msra.mxu0 %v6197
    %6393 = vmatprep.subr.bf16.mxu0 0
    %6394 = vmatpush1.bf16.msra.mxu0 %v6198
    %6395 = vmatprep.subr.bf16.mxu0 0
    %6396 = vmatpush1.bf16.msra.mxu0 %v6199
    %6397 = vmatprep.subr.bf16.mxu0 0
    %6398 = vmatpush1.bf16.msra.mxu0 %v6200
    %6399 = vmatprep.subr.bf16.mxu0 0
    %6400 = vmatpush1.bf16.msra.mxu0 %v6201
    %6401 = vmatprep.subr.bf16.mxu0 0
    %6402 = vmatpush1.bf16.msra.mxu0 %v6202
    %6403 = vmatprep.subr.bf16.mxu0 0
    %6404 = vmatpush1.bf16.msra.mxu0 0
    %6405 = vmatprep.subr.bf16.mxu0 0
    %6406 = vmatpush1.bf16.msra.mxu0 0
    %6407 = vmatprep.subr.bf16.mxu0 0
    %6408 = vmatpush1.bf16.msra.mxu0 0
    %6409 = vmatprep.subr.bf16.mxu0 0
    %6410 = vmatpush1.bf16.msra.mxu0 0
    %6411 = vmatprep.subr.bf16.mxu0 0
    %6412 = vmatpush1.bf16.msra.mxu0 0
    %6413 = vmatprep.subr.bf16.mxu0 0
    %6414 = vmatpush1.bf16.msra.mxu0 0
    %6415 = vmatprep.subr.bf16.mxu0 0
    %6416 = vmatpush1.bf16.msra.mxu0 0
    %6417 = vmatprep.subr.bf16.mxu0 0
    %6418 = vmatpush1.bf16.msra.mxu0 0
    %6419 = vmatprep.mubr.bf16.mxu0 0
    %6420 = vmatmul.mubr.bf16.gmra.mrb[0].mxu0 %v6386
    %v6421 = vpop.f32.mrb[0].mxu0
    %v6422 = vadd.f32 0.0, %v6421
    %v6423 = vpop.f32.mrb[0].mxu0
    %v6424 = vpop.f32.mrb[0].mxu0
    %v6425 = vpop.f32.mrb[0].mxu0
    %6426 = vdwg.mxu0
    %v6427 = vadd.f32 %v6385, %v6422
    %v6428 = vtanh.pop %v6427
    %v6429 = vld [vmem:[#allocation5 + $0x48] sm:$0xff]
    %v6430 = vtanh.pop %v6429
    %v6431 = vld [vmem:[#allocation6] sm:$0xff]
    %v6432 = vld [vmem:[%s15] sm:$0xf]
    %v6433 = vld [vmem:[%s15 + $0x4] sm:$0xf]
    %v6434 = vld [vmem:[%s15 + $0x8] sm:$0xf]
    %v6435 = vld [vmem:[%s15 + $0xc] sm:$0xf]
    %v6436 = vld [vmem:[%s15 + $0x10] sm:$0xf]
    %v6437 = vld [vmem:[%s15 + $0x14] sm:$0xf]
    %v6438 = vld [vmem:[%s15 + $0x18] sm:$0xf]
    %v6439 = vld [vmem:[%s15 + $0x1c] sm:$0xf]
    %v6440 = vld [vmem:[%s15 + $0x20] sm:$0xf]
    %v6441 = vld [vmem:[%s15 + $0x24] sm:$0xf]
    %v6442 = vld [vmem:[%s15 + $0x28] sm:$0xf]
    %v6443 = vld [vmem:[%s15 + $0x2c] sm:$0xf]
    %v6444 = vld [vmem:[%s15 + $0x30] sm:$0xf]
    %v6445 = vld [vmem:[%s15 + $0x34] sm:$0xf]
    %v6446 = vld [vmem:[%s15 + $0x38] sm:$0xf]
    %v6447 = vld [vmem:[%s15 + $0x3c] sm:$0xf]
    %v6464 = vunpack.c.l.b16 %v6432
    %v6465 = vunpack.c.l.b16 %v6433
    %v6466 = vunpack.c.l.b16 %v6434
    %v6467 = vunpack.c.l.b16 %v6435
    %v6468 = vunpack.c.l.b16 %v6436
    %v6469 = vunpack.c.l.b16 %v6437
    %v6470 = vunpack.c.l.b16 %v6438
    %v6471 = vunpack.c.l.b16 %v6439
    %v6472 = vunpack.c.l.b16 %v6440
    %v6473 = vunpack.c.l.b16 %v6441
    %v6474 = vunpack.c.l.b16 %v6442
    %v6475 = vunpack.c.l.b16 %v6443
    %v6476 = vunpack.c.l.b16 %v6444
    %v6477 = vunpack.c.l.b16 %v6445
    %v6478 = vunpack.c.l.b16 %v6446
    %v6479 = vunpack.c.l.b16 %v6447
    %v6480 = vpack.c.b16 %v6465, %v6464
    %v6481 = vpack.c.b16 %v6467, %v6466
    %v6482 = vpack.c.b16 %v6469, %v6468
    %v6483 = vpack.c.b16 %v6471, %v6470
    %v6484 = vpack.c.b16 %v6473, %v6472
    %v6485 = vpack.c.b16 %v6475, %v6474
    %v6486 = vpack.c.b16 %v6477, %v6476
    %v6487 = vpack.c.b16 %v6479, %v6478
    %6496 = vmatprep.subr.bf16.mxu0 0
    %6497 = vmatpush1.bf16.msra.mxu0 %v6480
    %6498 = vmatprep.subr.bf16.mxu0 0
    %6499 = vmatpush1.bf16.msra.mxu0 %v6481
    %6500 = vmatprep.subr.bf16.mxu0 0
    %6501 = vmatpush1.bf16.msra.mxu0 %v6482
    %6502 = vmatprep.subr.bf16.mxu0 0
    %6503 = vmatpush1.bf16.msra.mxu0 %v6483
    %6504 = vmatprep.subr.bf16.mxu0 0
    %6505 = vmatpush1.bf16.msra.mxu0 %v6484
    %6506 = vmatprep.subr.bf16.mxu0 0
    %6507 = vmatpush1.bf16.msra.mxu0 %v6485
    %6508 = vmatprep.subr.bf16.mxu0 0
    %6509 = vmatpush1.bf16.msra.mxu0 %v6486
    %6510 = vmatprep.subr.bf16.mxu0 0
    %6511 = vmatpush1.bf16.msra.mxu0 %v6487
    %6512 = vmatprep.subr.bf16.mxu0 0
    %6513 = vmatpush1.bf16.msra.mxu0 0
    %6514 = vmatprep.subr.bf16.mxu0 0
    %6515 = vmatpush1.bf16.msra.mxu0 0
    %6516 = vmatprep.subr.bf16.mxu0 0
    %6517 = vmatpush1.bf16.msra.mxu0 0
    %6518 = vmatprep.subr.bf16.mxu0 0
    %6519 = vmatpush1.bf16.msra.mxu0 0
    %6520 = vmatprep.subr.bf16.mxu0 0
    %6521 = vmatpush1.bf16.msra.mxu0 0
    %6522 = vmatprep.subr.bf16.mxu0 0
    %6523 = vmatpush1.bf16.msra.mxu0 0
    %6524 = vmatprep.subr.bf16.mxu0 0
    %6525 = vmatpush1.bf16.msra.mxu0 0
    %6526 = vmatprep.subr.bf16.mxu0 0
    %6527 = vmatpush1.bf16.msra.mxu0 0
    %6528 = vmatprep.mubr.bf16.mxu0 0
    %6529 = vmatmul.mubr.bf16.gmra.mrb[0].mxu0 0
    %v6530 = vpop.f32.mrb[0].mxu0
    %v6531 = vadd.f32 0.0, %v6530
    %v6532 = vpop.f32.mrb[0].mxu0
    %v6533 = vpop.f32.mrb[0].mxu0
    %v6534 = vpop.f32.mrb[0].mxu0
    %6535 = vdwg.mxu0
    %v6536 = vadd.f32 %v6431, %v6531
    %v6537 = vtanh.pop %v6536
    %v6538 = vld [vmem:[#allocation6 + $0x10] sm:$0xff]
    %v6539 = vpack.c.bf16 %v6537, %v6537
    %6540 = vmatprep.subr.bf16.mxu0 0
    %6541 = vmatpush1.bf16.msra.mxu0 %v6480
    %6542 = vmatprep.subr.bf16.mxu0 0
    %6543 = vmatpush1.bf16.msra.mxu0 %v6481
    %6544 = vmatprep.subr.bf16.mxu0 0
    %6545 = vmatpush1.bf16.msra.mxu0 %v6482
    %6546 = vmatprep.subr.bf16.mxu0 0
    %6547 = vmatpush1.bf16.msra.mxu0 %v6483
    %6548 = vmatprep.subr.bf16.mxu0 0
    %6549 = vmatpush1.bf16.msra.mxu0 %v6484
    %6550 = vmatprep.subr.bf16.mxu0 0
    %6551 = vmatpush1.bf16.msra.mxu0 %v6485
    %6552 = vmatprep.subr.bf16.mxu0 0
    %6553 = vmatpush1.bf16.msra.mxu0 %v6486
    %6554 = vmatprep.subr.bf16.mxu0 0
    %6555 = vmatpush1.bf16.msra.mxu0 %v6487
    %6556 = vmatprep.subr.bf16.mxu0 0
    %6557 = vmatpush1.bf16.msra.mxu0 0
    %6558 = vmatprep.subr.bf16.mxu0 0
    %6559 = vmatpush1.bf16.msra.mxu0 0
    %6560 = vmatprep.subr.bf16.mxu0 0
    %6561 = vmatpush1.bf16.msra.mxu0 0
    %6562 = vmatprep.subr.bf16.mxu0 0
    %6563 = vmatpush1.bf16.msra.mxu0 0
    %6564 = vmatprep.subr.bf16.mxu0 0
    %6565 = vmatpush1.bf16.msra.mxu0 0
    %6566 = vmatprep.subr.bf16.mxu0 0
    %6567 = vmatpush1.bf16.msra.mxu0 0
    %6568 = vmatprep.subr.bf16.mxu0 0
    %6569 = vmatpush1.bf16.msra.mxu0 0
    %6570 = vmatprep.subr.bf16.mxu0 0
    %6571 = vmatpush1.bf16.msra.mxu0 0
    %6572 = vmatprep.mubr.bf16.mxu0 0
    %6573 = vmatmul.mubr.bf16.gmra.mrb[0].mxu0 %v6539
    %v6574 = vpop.f32.mrb[0].mxu0
    %v6575 = vadd.f32 0.0, %v6574
    %v6576 = vpop.f32.mrb[0].mxu0
    %v6577 = vpop.f32.mrb[0].mxu0
    %v6578 = vpop.f32.mrb[0].mxu0
    %6579 = vdwg.mxu0
    %v6580 = vadd.f32 %v6538, %v6575
    %v6581 = vtanh.pop %v6580
    %v6582 = vld [vmem:[#allocation6 + $0x20] sm:$0xff]
    %v6583 = vpack.c.bf16 %v6581, %v6581
    %6584 = vmatprep.subr.bf16.mxu0 0
    %6585 = vmatpush1.bf16.msra.mxu0 %v6480
    %6586 = vmatprep.subr.bf16.mxu0 0
    %6587 = vmatpush1.bf16.msra.mxu0 %v6481
    %6588 = vmatprep.subr.bf16.mxu0 0
    %6589 = vmatpush1.bf16.msra.mxu0 %v6482
    %6590 = vmatprep.subr.bf16.mxu0 0
    %6591 = vmatpush1.bf16.msra.mxu0 %v6483
    %6592 = vmatprep.subr.bf16.mxu0 0
    %6593 = vmatpush1.bf16.msra.mxu0 %v6484
    %6594 = vmatprep.subr.bf16.mxu0 0
    %6595 = vmatpush1.bf16.msra.mxu0 %v6485
    %6596 = vmatprep.subr.bf16.mxu0 0
    %6597 = vmatpush1.bf16.msra.mxu0 %v6486
    %6598 = vmatprep.subr.bf16.mxu0 0
    %6599 = vmatpush1.bf16.msra.mxu0 %v6487
    %6600 = vmatprep.subr.bf16.mxu0 0
    %6601 = vmatpush1.bf16.msra.mxu0 0
    %6602 = vmatprep.subr.bf16.mxu0 0
    %6603 = vmatpush1.bf16.msra.mxu0 0
    %6604 = vmatprep.subr.bf16.mxu0 0
    %6605 = vmatpush1.bf16.msra.mxu0 0
    %6606 = vmatprep.subr.bf16.mxu0 0
    %6607 = vmatpush1.bf16.msra.mxu0 0
    %6608 = vmatprep.subr.bf16.mxu0 0
    %6609 = vmatpush1.bf16.msra.mxu0 0
    %6610 = vmatprep.subr.bf16.mxu0 0
    %6611 = vmatpush1.bf16.msra.mxu0 0
    %6612 = vmatprep.subr.bf16.mxu0 0
    %6613 = vmatpush1.bf16.msra.mxu0 0
    %6614 = vmatprep.subr.bf16.mxu0 0
    %6615 = vmatpush1.bf16.msra.mxu0 0
    %6616 = vmatprep.mubr.bf16.mxu0 0
    %6617 = vmatmul.mubr.bf16.gmra.mrb[0].mxu0 %v6583
    %v6618 = vpop.f32.mrb[0].mxu0
    %v6619 = vadd.f32 0.0, %v6618
    %v6620 = vpop.f32.mrb[0].mxu0
    %v6621 = vpop.f32.mrb[0].mxu0
    %v6622 = vpop.f32.mrb[0].mxu0
    %6623 = vdwg.mxu0
    %v6624 = vadd.f32 %v6582, %v6619
    %v6625 = vtanh.pop %v6624
    %v6626 = vld [vmem:[#allocation6 + $0x30] sm:$0xff]
    %v6627 = vpack.c.bf16 %v6625, %v6625
    %6628 = vmatprep.subr.bf16.mxu0 0
    %6629 = vmatpush1.bf16.msra.mxu0 %v6480
    %6630 = vmatprep.subr.bf16.mxu0 0
    %6631 = vmatpush1.bf16.msra.mxu0 %v6481
    %6632 = vmatprep.subr.bf16.mxu0 0
    %6633 = vmatpush1.bf16.msra.mxu0 %v6482
    %6634 = vmatprep.subr.bf16.mxu0 0
    %6635 = vmatpush1.bf16.msra.mxu0 %v6483
    %6636 = vmatprep.subr.bf16.mxu0 0
    %6637 = vmatpush1.bf16.msra.mxu0 %v6484
    %6638 = vmatprep.subr.bf16.mxu0 0
    %6639 = vmatpush1.bf16.msra.mxu0 %v6485
    %6640 = vmatprep.subr.bf16.mxu0 0
    %6641 = vmatpush1.bf16.msra.mxu0 %v6486
    %6642 = vmatprep.subr.bf16.mxu0 0
    %6643 = vmatpush1.bf16.msra.mxu0 %v6487
    %6644 = vmatprep.subr.bf16.mxu0 0
    %6645 = vmatpush1.bf16.msra.mxu0 0
    %6646 = vmatprep.subr.bf16.mxu0 0
    %6647 = vmatpush1.bf16.msra.mxu0 0
    %6648 = vmatprep.subr.bf16.mxu0 0
    %6649 = vmatpush1.bf16.msra.mxu0 0
    %6650 = vmatprep.subr.bf16.mxu0 0
    %6651 = vmatpush1.bf16.msra.mxu0 0
    %6652 = vmatprep.subr.bf16.mxu0 0
    %6653 = vmatpush1.bf16.msra.mxu0 0
    %6654 = vmatprep.subr.bf16.mxu0 0
    %6655 = vmatpush1.bf16.msra.mxu0 0
    %6656 = vmatprep.subr.bf16.mxu0 0
    %6657 = vmatpush1.bf16.msra.mxu0 0
    %6658 = vmatprep.subr.bf16.mxu0 0
    %6659 = vmatpush1.bf16.msra.mxu0 0
    %6660 = vmatprep.mubr.bf16.mxu0 0
    %6661 = vmatmul.mubr.bf16.gmra.mrb[0].mxu0 %v6627
    %v6662 = vpop.f32.mrb[0].mxu0
    %v6663 = vadd.f32 0.0, %v6662
    %v6664 = vpop.f32.mrb[0].mxu0
    %v6665 = vpop.f32.mrb[0].mxu0
    %v6666 = vpop.f32.mrb[0].mxu0
    %6667 = vdwg.mxu0
    %v6668 = vadd.f32 %v6626, %v6663
    %v6669 = vtanh.pop %v6668
    %v6670 = vld [vmem:[#allocation6 + $0x40] sm:$0xff]
    %v6671 = vpack.c.bf16 %v6669, %v6669
    %6672 = vmatprep.subr.bf16.mxu0 0
    %6673 = vmatpush1.bf16.msra.mxu0 %v6480
    %6674 = vmatprep.subr.bf16.mxu0 0
    %6675 = vmatpush1.bf16.msra.mxu0 %v6481
    %6676 = vmatprep.subr.bf16.mxu0 0
    %6677 = vmatpush1.bf16.msra.mxu0 %v6482
    %6678 = vmatprep.subr.bf16.mxu0 0
    %6679 = vmatpush1.bf16.msra.mxu0 %v6483
    %6680 = vmatprep.subr.bf16.mxu0 0
    %6681 = vmatpush1.bf16.msra.mxu0 %v6484
    %6682 = vmatprep.subr.bf16.mxu0 0
    %6683 = vmatpush1.bf16.msra.mxu0 %v6485
    %6684 = vmatprep.subr.bf16.mxu0 0
    %6685 = vmatpush1.bf16.msra.mxu0 %v6486
    %6686 = vmatprep.subr.bf16.mxu0 0
    %6687 = vmatpush1.bf16.msra.mxu0 %v6487
    %6688 = vmatprep.subr.bf16.mxu0 0
    %6689 = vmatpush1.bf16.msra.mxu0 0
    %6690 = vmatprep.subr.bf16.mxu0 0
    %6691 = vmatpush1.bf16.msra.mxu0 0
    %6692 = vmatprep.subr.bf16.mxu0 0
    %6693 = vmatpush1.bf16.msra.mxu0 0
    %6694 = vmatprep.subr.bf16.mxu0 0
    %6695 = vmatpush1.bf16.msra.mxu0 0
    %6696 = vmatprep.subr.bf16.mxu0 0
    %6697 = vmatpush1.bf16.msra.mxu0 0
    %6698 = vmatprep.subr.bf16.mxu0 0
    %6699 = vmatpush1.bf16.msra.mxu0 0
    %6700 = vmatprep.subr.bf16.mxu0 0
    %6701 = vmatpush1.bf16.msra.mxu0 0
    %6702 = vmatprep.subr.bf16.mxu0 0
    %6703 = vmatpush1.bf16.msra.mxu0 0
    %6704 = vmatprep.mubr.bf16.mxu0 0
    %6705 = vmatmul.mubr.bf16.gmra.mrb[0].mxu0 %v6671
    %v6706 = vpop.f32.mrb[0].mxu0
    %v6707 = vadd.f32 0.0, %v6706
    %v6708 = vpop.f32.mrb[0].mxu0
    %v6709 = vpop.f32.mrb[0].mxu0
    %v6710 = vpop.f32.mrb[0].mxu0
    %6711 = vdwg.mxu0
    %v6712 = vadd.f32 %v6670, %v6707
    %v6713 = vtanh.pop %v6712
    %v6714 = vld [vmem:[#allocation6 + $0x50] sm:$0xff]
    %v6715 = vpack.c.bf16 %v6713, %v6713
    %6716 = vmatprep.subr.bf16.mxu0 0
    %6717 = vmatpush1.bf16.msra.mxu0 %v6480
    %6718 = vmatprep.subr.bf16.mxu0 0
    %6719 = vmatpush1.bf16.msra.mxu0 %v6481
    %6720 = vmatprep.subr.bf16.mxu0 0
    %6721 = vmatpush1.bf16.msra.mxu0 %v6482
    %6722 = vmatprep.subr.bf16.mxu0 0
    %6723 = vmatpush1.bf16.msra.mxu0 %v6483
    %6724 = vmatprep.subr.bf16.mxu0 0
    %6725 = vmatpush1.bf16.msra.mxu0 %v6484
    %6726 = vmatprep.subr.bf16.mxu0 0
    %6727 = vmatpush1.bf16.msra.mxu0 %v6485
    %6728 = vmatprep.subr.bf16.mxu0 0
    %6729 = vmatpush1.bf16.msra.mxu0 %v6486
    %6730 = vmatprep.subr.bf16.mxu0 0
    %6731 = vmatpush1.bf16.msra.mxu0 %v6487
    %6732 = vmatprep.subr.bf16.mxu0 0
    %6733 = vmatpush1.bf16.msra.mxu0 0
    %6734 = vmatprep.subr.bf16.mxu0 0
    %6735 = vmatpush1.bf16.msra.mxu0 0
    %6736 = vmatprep.subr.bf16.mxu0 0
    %6737 = vmatpush1.bf16.msra.mxu0 0
    %6738 = vmatprep.subr.bf16.mxu0 0
    %6739 = vmatpush1.bf16.msra.mxu0 0
    %6740 = vmatprep.subr.bf16.mxu0 0
    %6741 = vmatpush1.bf16.msra.mxu0 0
    %6742 = vmatprep.subr.bf16.mxu0 0
    %6743 = vmatpush1.bf16.msra.mxu0 0
    %6744 = vmatprep.subr.bf16.mxu0 0
    %6745 = vmatpush1.bf16.msra.mxu0 0
    %6746 = vmatprep.subr.bf16.mxu0 0
    %6747 = vmatpush1.bf16.msra.mxu0 0
    %6748 = vmatprep.mubr.bf16.mxu0 0
    %6749 = vmatmul.mubr.bf16.gmra.mrb[0].mxu0 %v6715
    %v6750 = vpop.f32.mrb[0].mxu0
    %v6751 = vadd.f32 0.0, %v6750
    %v6752 = vpop.f32.mrb[0].mxu0
    %v6753 = vpop.f32.mrb[0].mxu0
    %v6754 = vpop.f32.mrb[0].mxu0
    %6755 = vdwg.mxu0
    %v6756 = vadd.f32 %v6714, %v6751
    %v6757 = vtanh.pop %v6756
    %v6758 = vld [vmem:[#allocation6 + $0x60] sm:$0xff]
    %v6759 = vpack.c.bf16 %v6757, %v6757
    %6760 = vmatprep.subr.bf16.mxu0 0
    %6761 = vmatpush1.bf16.msra.mxu0 %v6480
    %6762 = vmatprep.subr.bf16.mxu0 0
    %6763 = vmatpush1.bf16.msra.mxu0 %v6481
    %6764 = vmatprep.subr.bf16.mxu0 0
    %6765 = vmatpush1.bf16.msra.mxu0 %v6482
    %6766 = vmatprep.subr.bf16.mxu0 0
    %6767 = vmatpush1.bf16.msra.mxu0 %v6483
    %6768 = vmatprep.subr.bf16.mxu0 0
    %6769 = vmatpush1.bf16.msra.mxu0 %v6484
    %6770 = vmatprep.subr.bf16.mxu0 0
    %6771 = vmatpush1.bf16.msra.mxu0 %v6485
    %6772 = vmatprep.subr.bf16.mxu0 0
    %6773 = vmatpush1.bf16.msra.mxu0 %v6486
    %6774 = vmatprep.subr.bf16.mxu0 0
    %6775 = vmatpush1.bf16.msra.mxu0 %v6487
    %6776 = vmatprep.subr.bf16.mxu0 0
    %6777 = vmatpush1.bf16.msra.mxu0 0
    %6778 = vmatprep.subr.bf16.mxu0 0
    %6779 = vmatpush1.bf16.msra.mxu0 0
    %6780 = vmatprep.subr.bf16.mxu0 0
    %6781 = vmatpush1.bf16.msra.mxu0 0
    %6782 = vmatprep.subr.bf16.mxu0 0
    %6783 = vmatpush1.bf16.msra.mxu0 0
    %6784 = vmatprep.subr.bf16.mxu0 0
    %6785 = vmatpush1.bf16.msra.mxu0 0
    %6786 = vmatprep.subr.bf16.mxu0 0
    %6787 = vmatpush1.bf16.msra.mxu0 0
    %6788 = vmatprep.subr.bf16.mxu0 0
    %6789 = vmatpush1.bf16.msra.mxu0 0
    %6790 = vmatprep.subr.bf16.mxu0 0
    %6791 = vmatpush1.bf16.msra.mxu0 0
    %6792 = vmatprep.mubr.bf16.mxu0 0
    %6793 = vmatmul.mubr.bf16.gmra.mrb[0].mxu0 %v6759
    %v6794 = vpop.f32.mrb[0].mxu0
    %v6795 = vadd.f32 0.0, %v6794
    %v6796 = vpop.f32.mrb[0].mxu0
    %v6797 = vpop.f32.mrb[0].mxu0
    %v6798 = vpop.f32.mrb[0].mxu0
    %6799 = vdwg.mxu0
    %v6800 = vadd.f32 %v6758, %v6795
    %v6801 = vtanh.pop %v6800
    %v6802 = vld [vmem:[#allocation6 + $0x70] sm:$0xff]
    %v6803 = vpack.c.bf16 %v6801, %v6801
    %6804 = vmatprep.subr.bf16.mxu0 0
    %6805 = vmatpush1.bf16.msra.mxu0 %v6480
    %6806 = vmatprep.subr.bf16.mxu0 0
    %6807 = vmatpush1.bf16.msra.mxu0 %v6481
    %6808 = vmatprep.subr.bf16.mxu0 0
    %6809 = vmatpush1.bf16.msra.mxu0 %v6482
    %6810 = vmatprep.subr.bf16.mxu0 0
    %6811 = vmatpush1.bf16.msra.mxu0 %v6483
    %6812 = vmatprep.subr.bf16.mxu0 0
    %6813 = vmatpush1.bf16.msra.mxu0 %v6484
    %6814 = vmatprep.subr.bf16.mxu0 0
    %6815 = vmatpush1.bf16.msra.mxu0 %v6485
    %6816 = vmatprep.subr.bf16.mxu0 0
    %6817 = vmatpush1.bf16.msra.mxu0 %v6486
    %6818 = vmatprep.subr.bf16.mxu0 0
    %6819 = vmatpush1.bf16.msra.mxu0 %v6487
    %6820 = vmatprep.subr.bf16.mxu0 0
    %6821 = vmatpush1.bf16.msra.mxu0 0
    %6822 = vmatprep.subr.bf16.mxu0 0
    %6823 = vmatpush1.bf16.msra.mxu0 0
    %6824 = vmatprep.subr.bf16.mxu0 0
    %6825 = vmatpush1.bf16.msra.mxu0 0
    %6826 = vmatprep.subr.bf16.mxu0 0
    %6827 = vmatpush1.bf16.msra.mxu0 0
    %6828 = vmatprep.subr.bf16.mxu0 0
    %6829 = vmatpush1.bf16.msra.mxu0 0
    %6830 = vmatprep.subr.bf16.mxu0 0
    %6831 = vmatpush1.bf16.msra.mxu0 0
    %6832 = vmatprep.subr.bf16.mxu0 0
    %6833 = vmatpush1.bf16.msra.mxu0 0
    %6834 = vmatprep.subr.bf16.mxu0 0
    %6835 = vmatpush1.bf16.msra.mxu0 0
    %6836 = vmatprep.mubr.bf16.mxu0 0
    %6837 = vmatmul.mubr.bf16.gmra.mrb[0].mxu0 %v6803
    %v6838 = vpop.f32.mrb[0].mxu0
    %v6839 = vadd.f32 0.0, %v6838
    %v6840 = vpop.f32.mrb[0].mxu0
    %v6841 = vpop.f32.mrb[0].mxu0
    %v6842 = vpop.f32.mrb[0].mxu0
    %6843 = vdwg.mxu0
    %v6844 = vadd.f32 %v6802, %v6839
    %v6845 = vtanh.pop %v6844
    %v6846 = vld [vmem:[#allocation6 + $0x80] sm:$0xff]
    %v6847 = vpack.c.bf16 %v6845, %v6845
    %6848 = vmatprep.subr.bf16.mxu0 0
    %6849 = vmatpush1.bf16.msra.mxu0 %v6480
    %6850 = vmatprep.subr.bf16.mxu0 0
    %6851 = vmatpush1.bf16.msra.mxu0 %v6481
    %6852 = vmatprep.subr.bf16.mxu0 0
    %6853 = vmatpush1.bf16.msra.mxu0 %v6482
    %6854 = vmatprep.subr.bf16.mxu0 0
    %6855 = vmatpush1.bf16.msra.mxu0 %v6483
    %6856 = vmatprep.subr.bf16.mxu0 0
    %6857 = vmatpush1.bf16.msra.mxu0 %v6484
    %6858 = vmatprep.subr.bf16.mxu0 0
    %6859 = vmatpush1.bf16.msra.mxu0 %v6485
    %6860 = vmatprep.subr.bf16.mxu0 0
    %6861 = vmatpush1.bf16.msra.mxu0 %v6486
    %6862 = vmatprep.subr.bf16.mxu0 0
    %6863 = vmatpush1.bf16.msra.mxu0 %v6487
    %6864 = vmatprep.subr.bf16.mxu0 0
    %6865 = vmatpush1.bf16.msra.mxu0 0
    %6866 = vmatprep.subr.bf16.mxu0 0
    %6867 = vmatpush1.bf16.msra.mxu0 0
    %6868 = vmatprep.subr.bf16.mxu0 0
    %6869 = vmatpush1.bf16.msra.mxu0 0
    %6870 = vmatprep.subr.bf16.mxu0 0
    %6871 = vmatpush1.bf16.msra.mxu0 0
    %6872 = vmatprep.subr.bf16.mxu0 0
    %6873 = vmatpush1.bf16.msra.mxu0 0
    %6874 = vmatprep.subr.bf16.mxu0 0
    %6875 = vmatpush1.bf16.msra.mxu0 0
    %6876 = vmatprep.subr.bf16.mxu0 0
    %6877 = vmatpush1.bf16.msra.mxu0 0
    %6878 = vmatprep.subr.bf16.mxu0 0
    %6879 = vmatpush1.bf16.msra.mxu0 0
    %6880 = vmatprep.mubr.bf16.mxu0 0
    %6881 = vmatmul.mubr.bf16.gmra.mrb[0].mxu0 %v6847
    %v6882 = vpop.f32.mrb[0].mxu0
    %v6883 = vadd.f32 0.0, %v6882
    %v6884 = vpop.f32.mrb[0].mxu0
    %v6885 = vpop.f32.mrb[0].mxu0
    %v6886 = vpop.f32.mrb[0].mxu0
    %6887 = vdwg.mxu0
    %v6888 = vadd.f32 %v6846, %v6883
    %v6889 = vtanh.pop %v6888
    %v6890 = vld [vmem:[#allocation6 + $0x90] sm:$0xff]
    %v6891 = vpack.c.bf16 %v6889, %v6889
    %6892 = vmatprep.subr.bf16.mxu0 0
    %6893 = vmatpush1.bf16.msra.mxu0 %v6480
    %6894 = vmatprep.subr.bf16.mxu0 0
    %6895 = vmatpush1.bf16.msra.mxu0 %v6481
    %6896 = vmatprep.subr.bf16.mxu0 0
    %6897 = vmatpush1.bf16.msra.mxu0 %v6482
    %6898 = vmatprep.subr.bf16.mxu0 0
    %6899 = vmatpush1.bf16.msra.mxu0 %v6483
    %6900 = vmatprep.subr.bf16.mxu0 0
    %6901 = vmatpush1.bf16.msra.mxu0 %v6484
    %6902 = vmatprep.subr.bf16.mxu0 0
    %6903 = vmatpush1.bf16.msra.mxu0 %v6485
    %6904 = vmatprep.subr.bf16.mxu0 0
    %6905 = vmatpush1.bf16.msra.mxu0 %v6486
    %6906 = vmatprep.subr.bf16.mxu0 0
    %6907 = vmatpush1.bf16.msra.mxu0 %v6487
    %6908 = vmatprep.subr.bf16.mxu0 0
    %6909 = vmatpush1.bf16.msra.mxu0 0
    %6910 = vmatprep.subr.bf16.mxu0 0
    %6911 = vmatpush1.bf16.msra.mxu0 0
    %6912 = vmatprep.subr.bf16.mxu0 0
    %6913 = vmatpush1.bf16.msra.mxu0 0
    %6914 = vmatprep.subr.bf16.mxu0 0
    %6915 = vmatpush1.bf16.msra.mxu0 0
    %6916 = vmatprep.subr.bf16.mxu0 0
    %6917 = vmatpush1.bf16.msra.mxu0 0
    %6918 = vmatprep.subr.bf16.mxu0 0
    %6919 = vmatpush1.bf16.msra.mxu0 0
    %6920 = vmatprep.subr.bf16.mxu0 0
    %6921 = vmatpush1.bf16.msra.mxu0 0
    %6922 = vmatprep.subr.bf16.mxu0 0
    %6923 = vmatpush1.bf16.msra.mxu0 0
    %6924 = vmatprep.mubr.bf16.mxu0 0
    %6925 = vmatmul.mubr.bf16.gmra.mrb[0].mxu0 %v6891
    %v6926 = vpop.f32.mrb[0].mxu0
    %v6927 = vadd.f32 0.0, %v6926
    %v6928 = vpop.f32.mrb[0].mxu0
    %v6929 = vpop.f32.mrb[0].mxu0
    %v6930 = vpop.f32.mrb[0].mxu0
    %6931 = vdwg.mxu0
    %v6932 = vadd.f32 %v6890, %v6927
    %v6933 = vtanh.pop %v6932
    %v6934 = vld [vmem:[#allocation6 + $0xa0] sm:$0xff]
    %v6935 = vpack.c.bf16 %v6933, %v6933
    %6936 = vmatprep.subr.bf16.mxu0 0
    %6937 = vmatpush1.bf16.msra.mxu0 %v6480
    %6938 = vmatprep.subr.bf16.mxu0 0
    %6939 = vmatpush1.bf16.msra.mxu0 %v6481
    %6940 = vmatprep.subr.bf16.mxu0 0
    %6941 = vmatpush1.bf16.msra.mxu0 %v6482
    %6942 = vmatprep.subr.bf16.mxu0 0
    %6943 = vmatpush1.bf16.msra.mxu0 %v6483
    %6944 = vmatprep.subr.bf16.mxu0 0
    %6945 = vmatpush1.bf16.msra.mxu0 %v6484
    %6946 = vmatprep.subr.bf16.mxu0 0
    %6947 = vmatpush1.bf16.msra.mxu0 %v6485
    %6948 = vmatprep.subr.bf16.mxu0 0
    %6949 = vmatpush1.bf16.msra.mxu0 %v6486
    %6950 = vmatprep.subr.bf16.mxu0 0
    %6951 = vmatpush1.bf16.msra.mxu0 %v6487
    %6952 = vmatprep.subr.bf16.mxu0 0
    %6953 = vmatpush1.bf16.msra.mxu0 0
    %6954 = vmatprep.subr.bf16.mxu0 0
    %6955 = vmatpush1.bf16.msra.mxu0 0
    %6956 = vmatprep.subr.bf16.mxu0 0
    %6957 = vmatpush1.bf16.msra.mxu0 0
    %6958 = vmatprep.subr.bf16.mxu0 0
    %6959 = vmatpush1.bf16.msra.mxu0 0
    %6960 = vmatprep.subr.bf16.mxu0 0
    %6961 = vmatpush1.bf16.msra.mxu0 0
    %6962 = vmatprep.subr.bf16.mxu0 0
    %6963 = vmatpush1.bf16.msra.mxu0 0
    %6964 = vmatprep.subr.bf16.mxu0 0
    %6965 = vmatpush1.bf16.msra.mxu0 0
    %6966 = vmatprep.subr.bf16.mxu0 0
    %6967 = vmatpush1.bf16.msra.mxu0 0
    %6968 = vmatprep.mubr.bf16.mxu0 0
    %6969 = vmatmul.mubr.bf16.gmra.mrb[0].mxu0 %v6935
    %v6970 = vpop.f32.mrb[0].mxu0
    %v6971 = vadd.f32 0.0, %v6970
    %v6972 = vpop.f32.mrb[0].mxu0
    %v6973 = vpop.f32.mrb[0].mxu0
    %v6974 = vpop.f32.mrb[0].mxu0
    %6975 = vdwg.mxu0
    %v6976 = vadd.f32 %v6934, %v6971
    %v6977 = vtanh.pop %v6976
    %v6978 = vld [vmem:[#allocation6 + $0xb0] sm:$0xff]
    %v6979 = vpack.c.bf16 %v6977, %v6977
    %6980 = vmatprep.subr.bf16.mxu0 0
    %6981 = vmatpush1.bf16.msra.mxu0 %v6480
    %6982 = vmatprep.subr.bf16.mxu0 0
    %6983 = vmatpush1.bf16.msra.mxu0 %v6481
    %6984 = vmatprep.subr.bf16.mxu0 0
    %6985 = vmatpush1.bf16.msra.mxu0 %v6482
    %6986 = vmatprep.subr.bf16.mxu0 0
    %6987 = vmatpush1.bf16.msra.mxu0 %v6483
    %6988 = vmatprep.subr.bf16.mxu0 0
    %6989 = vmatpush1.bf16.msra.mxu0 %v6484
    %6990 = vmatprep.subr.bf16.mxu0 0
    %6991 = vmatpush1.bf16.msra.mxu0 %v6485
    %6992 = vmatprep.subr.bf16.mxu0 0
    %6993 = vmatpush1.bf16.msra.mxu0 %v6486
    %6994 = vmatprep.subr.bf16.mxu0 0
    %6995 = vmatpush1.bf16.msra.mxu0 %v6487
    %6996 = vmatprep.subr.bf16.mxu0 0
    %6997 = vmatpush1.bf16.msra.mxu0 0
    %6998 = vmatprep.subr.bf16.mxu0 0
    %6999 = vmatpush1.bf16.msra.mxu0 0
    %7000 = vmatprep.subr.bf16.mxu0 0
    %7001 = vmatpush1.bf16.msra.mxu0 0
    %7002 = vmatprep.subr.bf16.mxu0 0
    %7003 = vmatpush1.bf16.msra.mxu0 0
    %7004 = vmatprep.subr.bf16.mxu0 0
    %7005 = vmatpush1.bf16.msra.mxu0 0
    %7006 = vmatprep.subr.bf16.mxu0 0
    %7007 = vmatpush1.bf16.msra.mxu0 0
    %7008 = vmatprep.subr.bf16.mxu0 0
    %7009 = vmatpush1.bf16.msra.mxu0 0
    %7010 = vmatprep.subr.bf16.mxu0 0
    %7011 = vmatpush1.bf16.msra.mxu0 0
    %7012 = vmatprep.mubr.bf16.mxu0 0
    %7013 = vmatmul.mubr.bf16.gmra.mrb[0].mxu0 %v6979
    %v7014 = vpop.f32.mrb[0].mxu0
    %v7015 = vadd.f32 0.0, %v7014
    %v7016 = vpop.f32.mrb[0].mxu0
    %v7017 = vpop.f32.mrb[0].mxu0
    %v7018 = vpop.f32.mrb[0].mxu0
    %7019 = vdwg.mxu0
    %v7020 = vadd.f32 %v6978, %v7015
    %v7021 = vtanh.pop %v7020
    %v7022 = vld [vmem:[#allocation6 + $0xc0] sm:$0xff]
    %v7023 = vpack.c.bf16 %v7021, %v7021
    %7024 = vmatprep.subr.bf16.mxu0 0
    %7025 = vmatpush1.bf16.msra.mxu0 %v6480
    %7026 = vmatprep.subr.bf16.mxu0 0
    %7027 = vmatpush1.bf16.msra.mxu0 %v6481
    %7028 = vmatprep.subr.bf16.mxu0 0
    %7029 = vmatpush1.bf16.msra.mxu0 %v6482
    %7030 = vmatprep.subr.bf16.mxu0 0
    %7031 = vmatpush1.bf16.msra.mxu0 %v6483
    %7032 = vmatprep.subr.bf16.mxu0 0
    %7033 = vmatpush1.bf16.msra.mxu0 %v6484
    %7034 = vmatprep.subr.bf16.mxu0 0
    %7035 = vmatpush1.bf16.msra.mxu0 %v6485
    %7036 = vmatprep.subr.bf16.mxu0 0
    %7037 = vmatpush1.bf16.msra.mxu0 %v6486
    %7038 = vmatprep.subr.bf16.mxu0 0
    %7039 = vmatpush1.bf16.msra.mxu0 %v6487
    %7040 = vmatprep.subr.bf16.mxu0 0
    %7041 = vmatpush1.bf16.msra.mxu0 0
    %7042 = vmatprep.subr.bf16.mxu0 0
    %7043 = vmatpush1.bf16.msra.mxu0 0
    %7044 = vmatprep.subr.bf16.mxu0 0
    %7045 = vmatpush1.bf16.msra.mxu0 0
    %7046 = vmatprep.subr.bf16.mxu0 0
    %7047 = vmatpush1.bf16.msra.mxu0 0
    %7048 = vmatprep.subr.bf16.mxu0 0
    %7049 = vmatpush1.bf16.msra.mxu0 0
    %7050 = vmatprep.subr.bf16.mxu0 0
    %7051 = vmatpush1.bf16.msra.mxu0 0
    %7052 = vmatprep.subr.bf16.mxu0 0
    %7053 = vmatpush1.bf16.msra.mxu0 0
    %7054 = vmatprep.subr.bf16.mxu0 0
    %7055 = vmatpush1.bf16.msra.mxu0 0
    %7056 = vmatprep.mubr.bf16.mxu0 0
    %7057 = vmatmul.mubr.bf16.gmra.mrb[0].mxu0 %v7023
    %v7058 = vpop.f32.mrb[0].mxu0
    %v7059 = vadd.f32 0.0, %v7058
    %v7060 = vpop.f32.mrb[0].mxu0
    %v7061 = vpop.f32.mrb[0].mxu0
    %v7062 = vpop.f32.mrb[0].mxu0
    %7063 = vdwg.mxu0
    %v7064 = vadd.f32 %v7022, %v7059
    %v7065 = vtanh.pop %v7064
    %v7066 = vld [vmem:[#allocation6 + $0xd0] sm:$0xff]
    %v7067 = vpack.c.bf16 %v7065, %v7065
    %7068 = vmatprep.subr.bf16.mxu0 0
    %7069 = vmatpush1.bf16.msra.mxu0 %v6480
    %7070 = vmatprep.subr.bf16.mxu0 0
    %7071 = vmatpush1.bf16.msra.mxu0 %v6481
    %7072 = vmatprep.subr.bf16.mxu0 0
    %7073 = vmatpush1.bf16.msra.mxu0 %v6482
    %7074 = vmatprep.subr.bf16.mxu0 0
    %7075 = vmatpush1.bf16.msra.mxu0 %v6483
    %7076 = vmatprep.subr.bf16.mxu0 0
    %7077 = vmatpush1.bf16.msra.mxu0 %v6484
    %7078 = vmatprep.subr.bf16.mxu0 0
    %7079 = vmatpush1.bf16.msra.mxu0 %v6485
    %7080 = vmatprep.subr.bf16.mxu0 0
    %7081 = vmatpush1.bf16.msra.mxu0 %v6486
    %7082 = vmatprep.subr.bf16.mxu0 0
    %7083 = vmatpush1.bf16.msra.mxu0 %v6487
    %7084 = vmatprep.subr.bf16.mxu0 0
    %7085 = vmatpush1.bf16.msra.mxu0 0
    %7086 = vmatprep.subr.bf16.mxu0 0
    %7087 = vmatpush1.bf16.msra.mxu0 0
    %7088 = vmatprep.subr.bf16.mxu0 0
    %7089 = vmatpush1.bf16.msra.mxu0 0
    %7090 = vmatprep.subr.bf16.mxu0 0
    %7091 = vmatpush1.bf16.msra.mxu0 0
    %7092 = vmatprep.subr.bf16.mxu0 0
    %7093 = vmatpush1.bf16.msra.mxu0 0
    %7094 = vmatprep.subr.bf16.mxu0 0
    %7095 = vmatpush1.bf16.msra.mxu0 0
    %7096 = vmatprep.subr.bf16.mxu0 0
    %7097 = vmatpush1.bf16.msra.mxu0 0
    %7098 = vmatprep.subr.bf16.mxu0 0
    %7099 = vmatpush1.bf16.msra.mxu0 0
    %7100 = vmatprep.mubr.bf16.mxu0 0
    %7101 = vmatmul.mubr.bf16.gmra.mrb[0].mxu0 %v7067
    %v7102 = vpop.f32.mrb[0].mxu0
    %v7103 = vadd.f32 0.0, %v7102
    %v7104 = vpop.f32.mrb[0].mxu0
    %v7105 = vpop.f32.mrb[0].mxu0
    %v7106 = vpop.f32.mrb[0].mxu0
    %7107 = vdwg.mxu0
    %v7108 = vadd.f32 %v7066, %v7103
    %v7109 = vtanh.pop %v7108
    %v7110 = vld [vmem:[#allocation6 + $0xe0] sm:$0xff]
    %v7111 = vpack.c.bf16 %v7109, %v7109
    %7112 = vmatprep.subr.bf16.mxu0 0
    %7113 = vmatpush1.bf16.msra.mxu0 %v6480
    %7114 = vmatprep.subr.bf16.mxu0 0
    %7115 = vmatpush1.bf16.msra.mxu0 %v6481
    %7116 = vmatprep.subr.bf16.mxu0 0
    %7117 = vmatpush1.bf16.msra.mxu0 %v6482
    %7118 = vmatprep.subr.bf16.mxu0 0
    %7119 = vmatpush1.bf16.msra.mxu0 %v6483
    %7120 = vmatprep.subr.bf16.mxu0 0
    %7121 = vmatpush1.bf16.msra.mxu0 %v6484
    %7122 = vmatprep.subr.bf16.mxu0 0
    %7123 = vmatpush1.bf16.msra.mxu0 %v6485
    %7124 = vmatprep.subr.bf16.mxu0 0
    %7125 = vmatpush1.bf16.msra.mxu0 %v6486
    %7126 = vmatprep.subr.bf16.mxu0 0
    %7127 = vmatpush1.bf16.msra.mxu0 %v6487
    %7128 = vmatprep.subr.bf16.mxu0 0
    %7129 = vmatpush1.bf16.msra.mxu0 0
    %7130 = vmatprep.subr.bf16.mxu0 0
    %7131 = vmatpush1.bf16.msra.mxu0 0
    %7132 = vmatprep.subr.bf16.mxu0 0
    %7133 = vmatpush1.bf16.msra.mxu0 0
    %7134 = vmatprep.subr.bf16.mxu0 0
    %7135 = vmatpush1.bf16.msra.mxu0 0
    %7136 = vmatprep.subr.bf16.mxu0 0
    %7137 = vmatpush1.bf16.msra.mxu0 0
    %7138 = vmatprep.subr.bf16.mxu0 0
    %7139 = vmatpush1.bf16.msra.mxu0 0
    %7140 = vmatprep.subr.bf16.mxu0 0
    %7141 = vmatpush1.bf16.msra.mxu0 0
    %7142 = vmatprep.subr.bf16.mxu0 0
    %7143 = vmatpush1.bf16.msra.mxu0 0
    %7144 = vmatprep.mubr.bf16.mxu0 0
    %7145 = vmatmul.mubr.bf16.gmra.mrb[0].mxu0 %v7111
    %v7146 = vpop.f32.mrb[0].mxu0
    %v7147 = vadd.f32 0.0, %v7146
    %v7148 = vpop.f32.mrb[0].mxu0
    %v7149 = vpop.f32.mrb[0].mxu0
    %v7150 = vpop.f32.mrb[0].mxu0
    %7151 = vdwg.mxu0
    %v7152 = vadd.f32 %v7110, %v7147
    %v7153 = vtanh.pop %v7152
    %v7154 = vld [vmem:[#allocation6 + $0xf0] sm:$0xff]
    %v7155 = vpack.c.bf16 %v7153, %v7153
    %7156 = vmatprep.subr.bf16.mxu0 0
    %7157 = vmatpush1.bf16.msra.mxu0 %v6480
    %7158 = vmatprep.subr.bf16.mxu0 0
    %7159 = vmatpush1.bf16.msra.mxu0 %v6481
    %7160 = vmatprep.subr.bf16.mxu0 0
    %7161 = vmatpush1.bf16.msra.mxu0 %v6482
    %7162 = vmatprep.subr.bf16.mxu0 0
    %7163 = vmatpush1.bf16.msra.mxu0 %v6483
    %7164 = vmatprep.subr.bf16.mxu0 0
    %7165 = vmatpush1.bf16.msra.mxu0 %v6484
    %7166 = vmatprep.subr.bf16.mxu0 0
    %7167 = vmatpush1.bf16.msra.mxu0 %v6485
    %7168 = vmatprep.subr.bf16.mxu0 0
    %7169 = vmatpush1.bf16.msra.mxu0 %v6486
    %7170 = vmatprep.subr.bf16.mxu0 0
    %7171 = vmatpush1.bf16.msra.mxu0 %v6487
    %7172 = vmatprep.subr.bf16.mxu0 0
    %7173 = vmatpush1.bf16.msra.mxu0 0
    %7174 = vmatprep.subr.bf16.mxu0 0
    %7175 = vmatpush1.bf16.msra.mxu0 0
    %7176 = vmatprep.subr.bf16.mxu0 0
    %7177 = vmatpush1.bf16.msra.mxu0 0
    %7178 = vmatprep.subr.bf16.mxu0 0
    %7179 = vmatpush1.bf16.msra.mxu0 0
    %7180 = vmatprep.subr.bf16.mxu0 0
    %7181 = vmatpush1.bf16.msra.mxu0 0
    %7182 = vmatprep.subr.bf16.mxu0 0
    %7183 = vmatpush1.bf16.msra.mxu0 0
    %7184 = vmatprep.subr.bf16.mxu0 0
    %7185 = vmatpush1.bf16.msra.mxu0 0
    %7186 = vmatprep.subr.bf16.mxu0 0
    %7187 = vmatpush1.bf16.msra.mxu0 0
    %7188 = vmatprep.mubr.bf16.mxu0 0
    %7189 = vmatmul.mubr.bf16.gmra.mrb[0].mxu0 %v7155
    %v7190 = vpop.f32.mrb[0].mxu0
    %v7191 = vadd.f32 0.0, %v7190
    %v7192 = vpop.f32.mrb[0].mxu0
    %v7193 = vpop.f32.mrb[0].mxu0
    %v7194 = vpop.f32.mrb[0].mxu0
    %7195 = vdwg.mxu0
    %v7196 = vadd.f32 %v7154, %v7191
    %v7197 = vtanh.pop %v7196
    %v7198 = vld [vmem:[#allocation6 + $0x100] sm:$0xff]
    %v7199 = vpack.c.bf16 %v7197, %v7197
    %7200 = vmatprep.subr.bf16.mxu0 0
    %7201 = vmatpush1.bf16.msra.mxu0 %v6480
    %7202 = vmatprep.subr.bf16.mxu0 0
    %7203 = vmatpush1.bf16.msra.mxu0 %v6481
    %7204 = vmatprep.subr.bf16.mxu0 0
    %7205 = vmatpush1.bf16.msra.mxu0 %v6482
    %7206 = vmatprep.subr.bf16.mxu0 0
    %7207 = vmatpush1.bf16.msra.mxu0 %v6483
    %7208 = vmatprep.subr.bf16.mxu0 0
    %7209 = vmatpush1.bf16.msra.mxu0 %v6484
    %7210 = vmatprep.subr.bf16.mxu0 0
    %7211 = vmatpush1.bf16.msra.mxu0 %v6485
    %7212 = vmatprep.subr.bf16.mxu0 0
    %7213 = vmatpush1.bf16.msra.mxu0 %v6486
    %7214 = vmatprep.subr.bf16.mxu0 0
    %7215 = vmatpush1.bf16.msra.mxu0 %v6487
    %7216 = vmatprep.subr.bf16.mxu0 0
    %7217 = vmatpush1.bf16.msra.mxu0 0
    %7218 = vmatprep.subr.bf16.mxu0 0
    %7219 = vmatpush1.bf16.msra.mxu0 0
    %7220 = vmatprep.subr.bf16.mxu0 0
    %7221 = vmatpush1.bf16.msra.mxu0 0
    %7222 = vmatprep.subr.bf16.mxu0 0
    %7223 = vmatpush1.bf16.msra.mxu0 0
    %7224 = vmatprep.subr.bf16.mxu0 0
    %7225 = vmatpush1.bf16.msra.mxu0 0
    %7226 = vmatprep.subr.bf16.mxu0 0
    %7227 = vmatpush1.bf16.msra.mxu0 0
    %7228 = vmatprep.subr.bf16.mxu0 0
    %7229 = vmatpush1.bf16.msra.mxu0 0
    %7230 = vmatprep.subr.bf16.mxu0 0
    %7231 = vmatpush1.bf16.msra.mxu0 0
    %7232 = vmatprep.mubr.bf16.mxu0 0
    %7233 = vmatmul.mubr.bf16.gmra.mrb[0].mxu0 %v7199
    %v7234 = vpop.f32.mrb[0].mxu0
    %v7235 = vadd.f32 0.0, %v7234
    %v7236 = vpop.f32.mrb[0].mxu0
    %v7237 = vpop.f32.mrb[0].mxu0
    %v7238 = vpop.f32.mrb[0].mxu0
    %7239 = vdwg.mxu0
    %v7240 = vadd.f32 %v7198, %v7235
    %v7241 = vtanh.pop %v7240
    %v7242 = vld [vmem:[#allocation6 + $0x110] sm:$0xff]
    %v7243 = vpack.c.bf16 %v7241, %v7241
    %7244 = vmatprep.subr.bf16.mxu0 0
    %7245 = vmatpush1.bf16.msra.mxu0 %v6480
    %7246 = vmatprep.subr.bf16.mxu0 0
    %7247 = vmatpush1.bf16.msra.mxu0 %v6481
    %7248 = vmatprep.subr.bf16.mxu0 0
    %7249 = vmatpush1.bf16.msra.mxu0 %v6482
    %7250 = vmatprep.subr.bf16.mxu0 0
    %7251 = vmatpush1.bf16.msra.mxu0 %v6483
    %7252 = vmatprep.subr.bf16.mxu0 0
    %7253 = vmatpush1.bf16.msra.mxu0 %v6484
    %7254 = vmatprep.subr.bf16.mxu0 0
    %7255 = vmatpush1.bf16.msra.mxu0 %v6485
    %7256 = vmatprep.subr.bf16.mxu0 0
    %7257 = vmatpush1.bf16.msra.mxu0 %v6486
    %7258 = vmatprep.subr.bf16.mxu0 0
    %7259 = vmatpush1.bf16.msra.mxu0 %v6487
    %7260 = vmatprep.subr.bf16.mxu0 0
    %7261 = vmatpush1.bf16.msra.mxu0 0
    %7262 = vmatprep.subr.bf16.mxu0 0
    %7263 = vmatpush1.bf16.msra.mxu0 0
    %7264 = vmatprep.subr.bf16.mxu0 0
    %7265 = vmatpush1.bf16.msra.mxu0 0
    %7266 = vmatprep.subr.bf16.mxu0 0
    %7267 = vmatpush1.bf16.msra.mxu0 0
    %7268 = vmatprep.subr.bf16.mxu0 0
    %7269 = vmatpush1.bf16.msra.mxu0 0
    %7270 = vmatprep.subr.bf16.mxu0 0
    %7271 = vmatpush1.bf16.msra.mxu0 0
    %7272 = vmatprep.subr.bf16.mxu0 0
    %7273 = vmatpush1.bf16.msra.mxu0 0
    %7274 = vmatprep.subr.bf16.mxu0 0
    %7275 = vmatpush1.bf16.msra.mxu0 0
    %7276 = vmatprep.mubr.bf16.mxu0 0
    %7277 = vmatmul.mubr.bf16.gmra.mrb[0].mxu0 %v7243
    %v7278 = vpop.f32.mrb[0].mxu0
    %v7279 = vadd.f32 0.0, %v7278
    %v7280 = vpop.f32.mrb[0].mxu0
    %v7281 = vpop.f32.mrb[0].mxu0
    %v7282 = vpop.f32.mrb[0].mxu0
    %7283 = vdwg.mxu0
    %v7284 = vadd.f32 %v7242, %v7279
    %v7285 = vtanh.pop %v7284
    %v7286 = vld [vmem:[#allocation6 + $0x120] sm:$0xff]
    %v7287 = vpack.c.bf16 %v7285, %v7285
    %7288 = vmatprep.subr.bf16.mxu0 0
    %7289 = vmatpush1.bf16.msra.mxu0 %v6480
    %7290 = vmatprep.subr.bf16.mxu0 0
    %7291 = vmatpush1.bf16.msra.mxu0 %v6481
    %7292 = vmatprep.subr.bf16.mxu0 0
    %7293 = vmatpush1.bf16.msra.mxu0 %v6482
    %7294 = vmatprep.subr.bf16.mxu0 0
    %7295 = vmatpush1.bf16.msra.mxu0 %v6483
    %7296 = vmatprep.subr.bf16.mxu0 0
    %7297 = vmatpush1.bf16.msra.mxu0 %v6484
    %7298 = vmatprep.subr.bf16.mxu0 0
    %7299 = vmatpush1.bf16.msra.mxu0 %v6485
    %7300 = vmatprep.subr.bf16.mxu0 0
    %7301 = vmatpush1.bf16.msra.mxu0 %v6486
    %7302 = vmatprep.subr.bf16.mxu0 0
    %7303 = vmatpush1.bf16.msra.mxu0 %v6487
    %7304 = vmatprep.subr.bf16.mxu0 0
    %7305 = vmatpush1.bf16.msra.mxu0 0
    %7306 = vmatprep.subr.bf16.mxu0 0
    %7307 = vmatpush1.bf16.msra.mxu0 0
    %7308 = vmatprep.subr.bf16.mxu0 0
    %7309 = vmatpush1.bf16.msra.mxu0 0
    %7310 = vmatprep.subr.bf16.mxu0 0
    %7311 = vmatpush1.bf16.msra.mxu0 0
    %7312 = vmatprep.subr.bf16.mxu0 0
    %7313 = vmatpush1.bf16.msra.mxu0 0
    %7314 = vmatprep.subr.bf16.mxu0 0
    %7315 = vmatpush1.bf16.msra.mxu0 0
    %7316 = vmatprep.subr.bf16.mxu0 0
    %7317 = vmatpush1.bf16.msra.mxu0 0
    %7318 = vmatprep.subr.bf16.mxu0 0
    %7319 = vmatpush1.bf16.msra.mxu0 0
    %7320 = vmatprep.mubr.bf16.mxu0 0
    %7321 = vmatmul.mubr.bf16.gmra.mrb[0].mxu0 %v7287
    %v7322 = vpop.f32.mrb[0].mxu0
    %v7323 = vadd.f32 0.0, %v7322
    %v7324 = vpop.f32.mrb[0].mxu0
    %v7325 = vpop.f32.mrb[0].mxu0
    %v7326 = vpop.f32.mrb[0].mxu0
    %7327 = vdwg.mxu0
    %v7328 = vadd.f32 %v7286, %v7323
    %v7329 = vtanh.pop %v7328
    %v7330 = vld [vmem:[#allocation6 + $0x130] sm:$0xff]
    %v7331 = vpack.c.bf16 %v7329, %v7329
    %7332 = vmatprep.subr.bf16.mxu0 0
    %7333 = vmatpush1.bf16.msra.mxu0 %v6480
    %7334 = vmatprep.subr.bf16.mxu0 0
    %7335 = vmatpush1.bf16.msra.mxu0 %v6481
    %7336 = vmatprep.subr.bf16.mxu0 0
    %7337 = vmatpush1.bf16.msra.mxu0 %v6482
    %7338 = vmatprep.subr.bf16.mxu0 0
    %7339 = vmatpush1.bf16.msra.mxu0 %v6483
    %7340 = vmatprep.subr.bf16.mxu0 0
    %7341 = vmatpush1.bf16.msra.mxu0 %v6484
    %7342 = vmatprep.subr.bf16.mxu0 0
    %7343 = vmatpush1.bf16.msra.mxu0 %v6485
    %7344 = vmatprep.subr.bf16.mxu0 0
    %7345 = vmatpush1.bf16.msra.mxu0 %v6486
    %7346 = vmatprep.subr.bf16.mxu0 0
    %7347 = vmatpush1.bf16.msra.mxu0 %v6487
    %7348 = vmatprep.subr.bf16.mxu0 0
    %7349 = vmatpush1.bf16.msra.mxu0 0
    %7350 = vmatprep.subr.bf16.mxu0 0
    %7351 = vmatpush1.bf16.msra.mxu0 0
    %7352 = vmatprep.subr.bf16.mxu0 0
    %7353 = vmatpush1.bf16.msra.mxu0 0
    %7354 = vmatprep.subr.bf16.mxu0 0
    %7355 = vmatpush1.bf16.msra.mxu0 0
    %7356 = vmatprep.subr.bf16.mxu0 0
    %7357 = vmatpush1.bf16.msra.mxu0 0
    %7358 = vmatprep.subr.bf16.mxu0 0
    %7359 = vmatpush1.bf16.msra.mxu0 0
    %7360 = vmatprep.subr.bf16.mxu0 0
    %7361 = vmatpush1.bf16.msra.mxu0 0
    %7362 = vmatprep.subr.bf16.mxu0 0
    %7363 = vmatpush1.bf16.msra.mxu0 0
    %7364 = vmatprep.mubr.bf16.mxu0 0
    %7365 = vmatmul.mubr.bf16.gmra.mrb[0].mxu0 %v7331
    %v7366 = vpop.f32.mrb[0].mxu0
    %v7367 = vadd.f32 0.0, %v7366
    %v7368 = vpop.f32.mrb[0].mxu0
    %v7369 = vpop.f32.mrb[0].mxu0
    %v7370 = vpop.f32.mrb[0].mxu0
    %7371 = vdwg.mxu0
    %v7372 = vadd.f32 %v7330, %v7367
    %v7373 = vtanh.pop %v7372
    %v7374 = vld [vmem:[#allocation6 + $0x138] sm:$0xff]
    %v7375 = vtanh.pop %v7374
    %v7376 = vpack.c.bf16 %v6144, %v6144
    %v7377 = vpack.c.bf16 %v6145, %v6145
    %v7378 = vld [vmem:[%s16] sm:$0xf]
    %v7379 = vld [vmem:[%s16 + $0x4] sm:$0xf]
    %v7380 = vld [vmem:[%s16 + $0x8] sm:$0xf]
    %v7381 = vld [vmem:[%s16 + $0xc] sm:$0xf]
    %v7382 = vld [vmem:[%s16 + $0x10] sm:$0xf]
    %v7383 = vld [vmem:[%s16 + $0x14] sm:$0xf]
    %v7384 = vld [vmem:[%s16 + $0x18] sm:$0xf]
    %v7385 = vld [vmem:[%s16 + $0x1c] sm:$0xf]
    %v7386 = vld [vmem:[%s16 + $0x20] sm:$0xf]
    %v7387 = vld [vmem:[%s16 + $0x24] sm:$0xf]
    %v7388 = vld [vmem:[%s16 + $0x28] sm:$0xf]
    %v7389 = vld [vmem:[%s16 + $0x2c] sm:$0xf]
    %v7390 = vld [vmem:[%s16 + $0x30] sm:$0xf]
    %v7391 = vld [vmem:[%s16 + $0x34] sm:$0xf]
    %v7392 = vld [vmem:[%s16 + $0x38] sm:$0xf]
    %v7393 = vld [vmem:[%s16 + $0x3c] sm:$0xf]
    %v7394 = vld [vmem:[%s16 + $0x40] sm:$0xf]
    %v7395 = vld [vmem:[%s16 + $0x44] sm:$0xf]
    %v7396 = vld [vmem:[%s16 + $0x48] sm:$0xf]
    %v7397 = vld [vmem:[%s16 + $0x4c] sm:$0xf]
    %v7398 = vld [vmem:[%s16 + $0x50] sm:$0xf]
    %v7399 = vld [vmem:[%s16 + $0x54] sm:$0xf]
    %v7400 = vld [vmem:[%s16 + $0x58] sm:$0xf]
    %v7401 = vld [vmem:[%s16 + $0x5c] sm:$0xf]
    %v7402 = vld [vmem:[%s16 + $0x60] sm:$0xf]
    %v7403 = vld [vmem:[%s16 + $0x64] sm:$0xf]
    %v7404 = vld [vmem:[%s16 + $0x68] sm:$0xf]
    %v7405 = vld [vmem:[%s16 + $0x6c] sm:$0xf]
    %v7406 = vld [vmem:[%s16 + $0x70] sm:$0xf]
    %v7407 = vld [vmem:[%s16 + $0x74] sm:$0xf]
    %v7408 = vld [vmem:[%s16 + $0x78] sm:$0xf]
    %v7409 = vld [vmem:[%s16 + $0x7c] sm:$0xf]
    %v7410 = vpack.c.bf16 %v6428, %v6428
    %v7411 = vpack.c.bf16 %v6430, %v6430
    %v7412 = vld [vmem:[%s16 + $0x80] sm:$0xf]
    %v7413 = vld [vmem:[%s16 + $0x84] sm:$0xf]
    %v7414 = vld [vmem:[%s16 + $0x88] sm:$0xf]
    %v7415 = vld [vmem:[%s16 + $0x8c] sm:$0xf]
    %v7416 = vld [vmem:[%s16 + $0x90] sm:$0xf]
    %v7417 = vld [vmem:[%s16 + $0x94] sm:$0xf]
    %v7418 = vld [vmem:[%s16 + $0x98] sm:$0xf]
    %v7419 = vld [vmem:[%s16 + $0x9c] sm:$0xf]
    %v7420 = vld [vmem:[%s16 + $0xa0] sm:$0xf]
    %v7421 = vld [vmem:[%s16 + $0xa4] sm:$0xf]
    %v7422 = vld [vmem:[%s16 + $0xa8] sm:$0xf]
    %v7423 = vld [vmem:[%s16 + $0xac] sm:$0xf]
    %v7424 = vld [vmem:[%s16 + $0xb0] sm:$0xf]
    %v7425 = vld [vmem:[%s16 + $0xb4] sm:$0xf]
    %v7426 = vld [vmem:[%s16 + $0xb8] sm:$0xf]
    %v7427 = vld [vmem:[%s16 + $0xbc] sm:$0xf]
    %v7428 = vld [vmem:[%s16 + $0xc0] sm:$0xf]
    %v7429 = vld [vmem:[%s16 + $0xc4] sm:$0xf]
    %v7430 = vld [vmem:[%s16 + $0xc8] sm:$0xf]
    %v7431 = vld [vmem:[%s16 + $0xcc] sm:$0xf]
    %v7432 = vld [vmem:[%s16 + $0xd0] sm:$0xf]
    %v7433 = vld [vmem:[%s16 + $0xd4] sm:$0xf]
    %v7434 = vld [vmem:[%s16 + $0xd8] sm:$0xf]
    %v7435 = vld [vmem:[%s16 + $0xdc] sm:$0xf]
    %v7436 = vld [vmem:[%s16 + $0xe0] sm:$0xf]
    %v7437 = vld [vmem:[%s16 + $0xe4] sm:$0xf]
    %v7438 = vld [vmem:[%s16 + $0xe8] sm:$0xf]
    %v7439 = vld [vmem:[%s16 + $0xec] sm:$0xf]
    %v7440 = vld [vmem:[%s16 + $0xf0] sm:$0xf]
    %v7441 = vld [vmem:[%s16 + $0xf4] sm:$0xf]
    %v7442 = vld [vmem:[%s16 + $0xf8] sm:$0xf]
    %v7443 = vld [vmem:[%s16 + $0xfc] sm:$0xf]
    %v7476 = vunpack.c.l.b16 %v7412
    %v7477 = vunpack.c.l.b16 %v7413
    %v7478 = vunpack.c.l.b16 %v7414
    %v7479 = vunpack.c.l.b16 %v7415
    %v7480 = vunpack.c.l.b16 %v7416
    %v7481 = vunpack.c.l.b16 %v7417
    %v7482 = vunpack.c.l.b16 %v7418
    %v7483 = vunpack.c.l.b16 %v7419
    %v7484 = vunpack.c.l.b16 %v7420
    %v7485 = vunpack.c.l.b16 %v7421
    %v7486 = vunpack.c.l.b16 %v7422
    %v7487 = vunpack.c.l.b16 %v7423
    %v7488 = vunpack.c.l.b16 %v7424
    %v7489 = vunpack.c.l.b16 %v7425
    %v7490 = vunpack.c.l.b16 %v7426
    %v7491 = vunpack.c.l.b16 %v7427
    %v7492 = vunpack.c.l.b16 %v7428
    %v7493 = vunpack.c.l.b16 %v7429
    %v7494 = vunpack.c.l.b16 %v7430
    %v7495 = vunpack.c.l.b16 %v7431
    %v7496 = vunpack.c.l.b16 %v7432
    %v7497 = vunpack.c.l.b16 %v7433
    %v7498 = vunpack.c.l.b16 %v7434
    %v7499 = vunpack.c.l.b16 %v7435
    %v7500 = vunpack.c.l.b16 %v7436
    %v7501 = vunpack.c.l.b16 %v7437
    %v7502 = vunpack.c.l.b16 %v7438
    %v7503 = vunpack.c.l.b16 %v7439
    %v7504 = vunpack.c.l.b16 %v7440
    %v7505 = vunpack.c.l.b16 %v7441
    %v7506 = vunpack.c.l.b16 %v7442
    %v7507 = vunpack.c.l.b16 %v7443
    %v7508 = vpack.c.b16 %v7477, %v7476
    %v7509 = vpack.c.b16 %v7479, %v7478
    %v7510 = vpack.c.b16 %v7481, %v7480
    %v7511 = vpack.c.b16 %v7483, %v7482
    %v7512 = vpack.c.b16 %v7485, %v7484
    %v7513 = vpack.c.b16 %v7487, %v7486
    %v7514 = vpack.c.b16 %v7489, %v7488
    %v7515 = vpack.c.b16 %v7491, %v7490
    %v7516 = vpack.c.b16 %v7493, %v7492
    %v7517 = vpack.c.b16 %v7495, %v7494
    %v7518 = vpack.c.b16 %v7497, %v7496
    %v7519 = vpack.c.b16 %v7499, %v7498
    %v7520 = vpack.c.b16 %v7501, %v7500
    %v7521 = vpack.c.b16 %v7503, %v7502
    %v7522 = vpack.c.b16 %v7505, %v7504
    %v7523 = vpack.c.b16 %v7507, %v7506
    %7540 = vmatprep.subr.bf16.mxu0 0
    %7541 = vmatpush1.bf16.msra.mxu0 %v7508
    %7542 = vmatprep.subr.bf16.mxu0 0
    %7543 = vmatpush1.bf16.msra.mxu0 %v7509
    %7544 = vmatprep.subr.bf16.mxu0 0
    %7545 = vmatpush1.bf16.msra.mxu0 %v7510
    %7546 = vmatprep.subr.bf16.mxu0 0
    %7547 = vmatpush1.bf16.msra.mxu0 %v7511
    %7548 = vmatprep.subr.bf16.mxu0 0
    %7549 = vmatpush1.bf16.msra.mxu0 %v7512
    %7550 = vmatprep.subr.bf16.mxu0 0
    %7551 = vmatpush1.bf16.msra.mxu0 %v7513
    %7552 = vmatprep.subr.bf16.mxu0 0
    %7553 = vmatpush1.bf16.msra.mxu0 %v7514
    %7554 = vmatprep.subr.bf16.mxu0 0
    %7555 = vmatpush1.bf16.msra.mxu0 %v7515
    %7556 = vmatprep.subr.bf16.mxu0 0
    %7557 = vmatpush1.bf16.msra.mxu0 %v7516
    %7558 = vmatprep.subr.bf16.mxu0 0
    %7559 = vmatpush1.bf16.msra.mxu0 %v7517
    %7560 = vmatprep.subr.bf16.mxu0 0
    %7561 = vmatpush1.bf16.msra.mxu0 %v7518
    %7562 = vmatprep.subr.bf16.mxu0 0
    %7563 = vmatpush1.bf16.msra.mxu0 %v7519
    %7564 = vmatprep.subr.bf16.mxu0 0
    %7565 = vmatpush1.bf16.msra.mxu0 %v7520
    %7566 = vmatprep.subr.bf16.mxu0 0
    %7567 = vmatpush1.bf16.msra.mxu0 %v7521
    %7568 = vmatprep.subr.bf16.mxu0 0
    %7569 = vmatpush1.bf16.msra.mxu0 %v7522
    %7570 = vmatprep.subr.bf16.mxu0 0
    %7571 = vmatpush1.bf16.msra.mxu0 %v7523
    %7572 = vmatprep.mubr.bf16.mxu0 %v7411
    %7573 = vmatmul.mubr.bf16.gmra.mrb[0].mxu0 %v7410
    %v7574 = vpop.f32.mrb[0].mxu0
    %v7575 = vadd.f32 0.0, %v7574
    %v7576 = vpop.f32.mrb[0].mxu0
    %v7577 = vpop.f32.mrb[0].mxu0
    %v7578 = vpop.f32.mrb[0].mxu0
    %7579 = vdwg.mxu0
    %v7612 = vunpack.c.l.b16 %v7378
    %v7613 = vunpack.c.l.b16 %v7379
    %v7614 = vunpack.c.l.b16 %v7380
    %v7615 = vunpack.c.l.b16 %v7381
    %v7616 = vunpack.c.l.b16 %v7382
    %v7617 = vunpack.c.l.b16 %v7383
    %v7618 = vunpack.c.l.b16 %v7384
    %v7619 = vunpack.c.l.b16 %v7385
    %v7620 = vunpack.c.l.b16 %v7386
    %v7621 = vunpack.c.l.b16 %v7387
    %v7622 = vunpack.c.l.b16 %v7388
    %v7623 = vunpack.c.l.b16 %v7389
    %v7624 = vunpack.c.l.b16 %v7390
    %v7625 = vunpack.c.l.b16 %v7391
    %v7626 = vunpack.c.l.b16 %v7392
    %v7627 = vunpack.c.l.b16 %v7393
    %v7628 = vunpack.c.l.b16 %v7394
    %v7629 = vunpack.c.l.b16 %v7395
    %v7630 = vunpack.c.l.b16 %v7396
    %v7631 = vunpack.c.l.b16 %v7397
    %v7632 = vunpack.c.l.b16 %v7398
    %v7633 = vunpack.c.l.b16 %v7399
    %v7634 = vunpack.c.l.b16 %v7400
    %v7635 = vunpack.c.l.b16 %v7401
    %v7636 = vunpack.c.l.b16 %v7402
    %v7637 = vunpack.c.l.b16 %v7403
    %v7638 = vunpack.c.l.b16 %v7404
    %v7639 = vunpack.c.l.b16 %v7405
    %v7640 = vunpack.c.l.b16 %v7406
    %v7641 = vunpack.c.l.b16 %v7407
    %v7642 = vunpack.c.l.b16 %v7408
    %v7643 = vunpack.c.l.b16 %v7409
    %v7644 = vpack.c.b16 %v7613, %v7612
    %v7645 = vpack.c.b16 %v7615, %v7614
    %v7646 = vpack.c.b16 %v7617, %v7616
    %v7647 = vpack.c.b16 %v7619, %v7618
    %v7648 = vpack.c.b16 %v7621, %v7620
    %v7649 = vpack.c.b16 %v7623, %v7622
    %v7650 = vpack.c.b16 %v7625, %v7624
    %v7651 = vpack.c.b16 %v7627, %v7626
    %v7652 = vpack.c.b16 %v7629, %v7628
    %v7653 = vpack.c.b16 %v7631, %v7630
    %v7654 = vpack.c.b16 %v7633, %v7632
    %v7655 = vpack.c.b16 %v7635, %v7634
    %v7656 = vpack.c.b16 %v7637, %v7636
    %v7657 = vpack.c.b16 %v7639, %v7638
    %v7658 = vpack.c.b16 %v7641, %v7640
    %v7659 = vpack.c.b16 %v7643, %v7642
    %7676 = vmatprep.subr.bf16.mxu0 0
    %7677 = vmatpush1.bf16.msra.mxu0 %v7644
    %7678 = vmatprep.subr.bf16.mxu0 0
    %7679 = vmatpush1.bf16.msra.mxu0 %v7645
    %7680 = vmatprep.subr.bf16.mxu0 0
    %7681 = vmatpush1.bf16.msra.mxu0 %v7646
    %7682 = vmatprep.subr.bf16.mxu0 0
    %7683 = vmatpush1.bf16.msra.mxu0 %v7647
    %7684 = vmatprep.subr.bf16.mxu0 0
    %7685 = vmatpush1.bf16.msra.mxu0 %v7648
    %7686 = vmatprep.subr.bf16.mxu0 0
    %7687 = vmatpush1.bf16.msra.mxu0 %v7649
    %7688 = vmatprep.subr.bf16.mxu0 0
    %7689 = vmatpush1.bf16.msra.mxu0 %v7650
    %7690 = vmatprep.subr.bf16.mxu0 0
    %7691 = vmatpush1.bf16.msra.mxu0 %v7651
    %7692 = vmatprep.subr.bf16.mxu0 0
    %7693 = vmatpush1.bf16.msra.mxu0 %v7652
    %7694 = vmatprep.subr.bf16.mxu0 0
    %7695 = vmatpush1.bf16.msra.mxu0 %v7653
    %7696 = vmatprep.subr.bf16.mxu0 0
    %7697 = vmatpush1.bf16.msra.mxu0 %v7654
    %7698 = vmatprep.subr.bf16.mxu0 0
    %7699 = vmatpush1.bf16.msra.mxu0 %v7655
    %7700 = vmatprep.subr.bf16.mxu0 0
    %7701 = vmatpush1.bf16.msra.mxu0 %v7656
    %7702 = vmatprep.subr.bf16.mxu0 0
    %7703 = vmatpush1.bf16.msra.mxu0 %v7657
    %7704 = vmatprep.subr.bf16.mxu0 0
    %7705 = vmatpush1.bf16.msra.mxu0 %v7658
    %7706 = vmatprep.subr.bf16.mxu0 0
    %7707 = vmatpush1.bf16.msra.mxu0 %v7659
    %7708 = vmatprep.mubr.bf16.mxu0 %v7377
    %7709 = vmatmul.mubr.bf16.gmra.mrb[0].mxu0 %v7376
    %v7710 = vpop.f32.mrb[0].mxu0
    %v7711 = vadd.f32 %v7575, %v7710
    %v7712 = vpop.f32.mrb[0].mxu0
    %v7713 = vpop.f32.mrb[0].mxu0
    %v7714 = vpop.f32.mrb[0].mxu0
    %7715 = vdwg.mxu0
    %v7716 = vpack.c.bf16 %v7373, %v7373
    %v7717 = vpack.c.bf16 %v7375, %v7375
    %v7718 = vld [vmem:[%s16 + $0x100] sm:$0xf]
    %v7719 = vld [vmem:[%s16 + $0x104] sm:$0xf]
    %v7720 = vld [vmem:[%s16 + $0x108] sm:$0xf]
    %v7721 = vld [vmem:[%s16 + $0x10c] sm:$0xf]
    %v7722 = vld [vmem:[%s16 + $0x110] sm:$0xf]
    %v7723 = vld [vmem:[%s16 + $0x114] sm:$0xf]
    %v7724 = vld [vmem:[%s16 + $0x118] sm:$0xf]
    %v7725 = vld [vmem:[%s16 + $0x11c] sm:$0xf]
    %v7726 = vld [vmem:[%s16 + $0x120] sm:$0xf]
    %v7727 = vld [vmem:[%s16 + $0x124] sm:$0xf]
    %v7728 = vld [vmem:[%s16 + $0x128] sm:$0xf]
    %v7729 = vld [vmem:[%s16 + $0x12c] sm:$0xf]
    %v7730 = vld [vmem:[%s16 + $0x130] sm:$0xf]
    %v7731 = vld [vmem:[%s16 + $0x134] sm:$0xf]
    %v7732 = vld [vmem:[%s16 + $0x138] sm:$0xf]
    %v7733 = vld [vmem:[%s16 + $0x13c] sm:$0xf]
    %v7734 = vld [vmem:[%s16 + $0x140] sm:$0xf]
    %v7735 = vld [vmem:[%s16 + $0x144] sm:$0xf]
    %v7736 = vld [vmem:[%s16 + $0x148] sm:$0xf]
    %v7737 = vld [vmem:[%s16 + $0x14c] sm:$0xf]
    %v7738 = vld [vmem:[%s16 + $0x150] sm:$0xf]
    %v7739 = vld [vmem:[%s16 + $0x154] sm:$0xf]
    %v7740 = vld [vmem:[%s16 + $0x158] sm:$0xf]
    %v7741 = vld [vmem:[%s16 + $0x15c] sm:$0xf]
    %v7742 = vld [vmem:[%s16 + $0x160] sm:$0xf]
    %v7743 = vld [vmem:[%s16 + $0x164] sm:$0xf]
    %v7744 = vld [vmem:[%s16 + $0x168] sm:$0xf]
    %v7745 = vld [vmem:[%s16 + $0x16c] sm:$0xf]
    %v7746 = vld [vmem:[%s16 + $0x170] sm:$0xf]
    %v7747 = vld [vmem:[%s16 + $0x174] sm:$0xf]
    %v7748 = vld [vmem:[%s16 + $0x178] sm:$0xf]
    %v7749 = vld [vmem:[%s16 + $0x17c] sm:$0xf]
    %v7782 = vunpack.c.l.b16 %v7718
    %v7783 = vunpack.c.l.b16 %v7719
    %v7784 = vunpack.c.l.b16 %v7720
    %v7785 = vunpack.c.l.b16 %v7721
    %v7786 = vunpack.c.l.b16 %v7722
    %v7787 = vunpack.c.l.b16 %v7723
    %v7788 = vunpack.c.l.b16 %v7724
    %v7789 = vunpack.c.l.b16 %v7725
    %v7790 = vunpack.c.l.b16 %v7726
    %v7791 = vunpack.c.l.b16 %v7727
    %v7792 = vunpack.c.l.b16 %v7728
    %v7793 = vunpack.c.l.b16 %v7729
    %v7794 = vunpack.c.l.b16 %v7730
    %v7795 = vunpack.c.l.b16 %v7731
    %v7796 = vunpack.c.l.b16 %v7732
    %v7797 = vunpack.c.l.b16 %v7733
    %v7798 = vunpack.c.l.b16 %v7734
    %v7799 = vunpack.c.l.b16 %v7735
    %v7800 = vunpack.c.l.b16 %v7736
    %v7801 = vunpack.c.l.b16 %v7737
    %v7802 = vunpack.c.l.b16 %v7738
    %v7803 = vunpack.c.l.b16 %v7739
    %v7804 = vunpack.c.l.b16 %v7740
    %v7805 = vunpack.c.l.b16 %v7741
    %v7806 = vunpack.c.l.b16 %v7742
    %v7807 = vunpack.c.l.b16 %v7743
    %v7808 = vunpack.c.l.b16 %v7744
    %v7809 = vunpack.c.l.b16 %v7745
    %v7810 = vunpack.c.l.b16 %v7746
    %v7811 = vunpack.c.l.b16 %v7747
    %v7812 = vunpack.c.l.b16 %v7748
    %v7813 = vunpack.c.l.b16 %v7749
    %v7814 = vpack.c.b16 %v7783, %v7782
    %v7815 = vpack.c.b16 %v7785, %v7784
    %v7816 = vpack.c.b16 %v7787, %v7786
    %v7817 = vpack.c.b16 %v7789, %v7788
    %v7818 = vpack.c.b16 %v7791, %v7790
    %v7819 = vpack.c.b16 %v7793, %v7792
    %v7820 = vpack.c.b16 %v7795, %v7794
    %v7821 = vpack.c.b16 %v7797, %v7796
    %v7822 = vpack.c.b16 %v7799, %v7798
    %v7823 = vpack.c.b16 %v7801, %v7800
    %v7824 = vpack.c.b16 %v7803, %v7802
    %v7825 = vpack.c.b16 %v7805, %v7804
    %v7826 = vpack.c.b16 %v7807, %v7806
    %v7827 = vpack.c.b16 %v7809, %v7808
    %v7828 = vpack.c.b16 %v7811, %v7810
    %v7829 = vpack.c.b16 %v7813, %v7812
    %7846 = vmatprep.subr.bf16.mxu0 0
    %7847 = vmatpush1.bf16.msra.mxu0 %v7814
    %7848 = vmatprep.subr.bf16.mxu0 0
    %7849 = vmatpush1.bf16.msra.mxu0 %v7815
    %7850 = vmatprep.subr.bf16.mxu0 0
    %7851 = vmatpush1.bf16.msra.mxu0 %v7816
    %7852 = vmatprep.subr.bf16.mxu0 0
    %7853 = vmatpush1.bf16.msra.mxu0 %v7817
    %7854 = vmatprep.subr.bf16.mxu0 0
    %7855 = vmatpush1.bf16.msra.mxu0 %v7818
    %7856 = vmatprep.subr.bf16.mxu0 0
    %7857 = vmatpush1.bf16.msra.mxu0 %v7819
    %7858 = vmatprep.subr.bf16.mxu0 0
    %7859 = vmatpush1.bf16.msra.mxu0 %v7820
    %7860 = vmatprep.subr.bf16.mxu0 0
    %7861 = vmatpush1.bf16.msra.mxu0 %v7821
    %7862 = vmatprep.subr.bf16.mxu0 0
    %7863 = vmatpush1.bf16.msra.mxu0 %v7822
    %7864 = vmatprep.subr.bf16.mxu0 0
    %7865 = vmatpush1.bf16.msra.mxu0 %v7823
    %7866 = vmatprep.subr.bf16.mxu0 0
    %7867 = vmatpush1.bf16.msra.mxu0 %v7824
    %7868 = vmatprep.subr.bf16.mxu0 0
    %7869 = vmatpush1.bf16.msra.mxu0 %v7825
    %7870 = vmatprep.subr.bf16.mxu0 0
    %7871 = vmatpush1.bf16.msra.mxu0 %v7826
    %7872 = vmatprep.subr.bf16.mxu0 0
    %7873 = vmatpush1.bf16.msra.mxu0 %v7827
    %7874 = vmatprep.subr.bf16.mxu0 0
    %7875 = vmatpush1.bf16.msra.mxu0 %v7828
    %7876 = vmatprep.subr.bf16.mxu0 0
    %7877 = vmatpush1.bf16.msra.mxu0 %v7829
    %7878 = vmatprep.mubr.bf16.mxu0 %v7717
    %7879 = vmatmul.mubr.bf16.gmra.mrb[0].mxu0 %v7716
    %v7880 = vpop.f32.mrb[0].mxu0
    %v7881 = vadd.f32 0.0, %v7880
    %v7882 = vpop.f32.mrb[0].mxu0
    %v7883 = vpop.f32.mrb[0].mxu0
    %v7884 = vpop.f32.mrb[0].mxu0
    %7885 = vdwg.mxu0
    %v7886 = vadd.f32 %v7711, %v7881
    %v7887 = vld [vmem:[%s17] sm:$0x1]
    %v7889 = vlaneseq
    %v7890 = vshrl.u32 %v7889, 7
    %v7891 = vsub.s32 0, %v7890
    %v7892 = vrot.slane %v7887, %v7891
    %v7894 = vadd.f32 %v7886, %v7892
    %v7895 = vmax.f32 %v7894, 0.0
    %v7896 = vpack.c.bf16 %v7895, %v7895
    %v7897 = vld [vmem:[%s18] sm:$0xf]
    %v7898 = vld [vmem:[%s18 + $0x4] sm:$0xf]
    %v7899 = vld [vmem:[%s18 + $0x8] sm:$0xf]
    %v7900 = vld [vmem:[%s18 + $0xc] sm:$0xf]
    %v7901 = vld [vmem:[%s18 + $0x10] sm:$0xf]
    %v7902 = vld [vmem:[%s18 + $0x14] sm:$0xf]
    %v7903 = vld [vmem:[%s18 + $0x18] sm:$0xf]
    %v7904 = vld [vmem:[%s18 + $0x1c] sm:$0xf]
    %v7905 = vld [vmem:[%s18 + $0x20] sm:$0xf]
    %v7906 = vld [vmem:[%s18 + $0x24] sm:$0xf]
    %v7907 = vld [vmem:[%s18 + $0x28] sm:$0xf]
    %v7908 = vld [vmem:[%s18 + $0x2c] sm:$0xf]
    %v7909 = vld [vmem:[%s18 + $0x30] sm:$0xf]
    %v7910 = vld [vmem:[%s18 + $0x34] sm:$0xf]
    %v7911 = vld [vmem:[%s18 + $0x38] sm:$0xf]
    %v7912 = vld [vmem:[%s18 + $0x3c] sm:$0xf]
    %v7913 = vld [vmem:[%s19] sm:$0x1]
    %v7915 = vlaneseq
    %v7916 = vshrl.u32 %v7915, 7
    %v7917 = vsub.s32 0, %v7916
    %v7918 = vrot.slane %v7913, %v7917
    %v7936 = vunpack.c.l.b16 %v7897
    %v7937 = vunpack.c.l.b16 %v7898
    %v7938 = vunpack.c.l.b16 %v7899
    %v7939 = vunpack.c.l.b16 %v7900
    %v7940 = vunpack.c.l.b16 %v7901
    %v7941 = vunpack.c.l.b16 %v7902
    %v7942 = vunpack.c.l.b16 %v7903
    %v7943 = vunpack.c.l.b16 %v7904
    %v7944 = vunpack.c.l.b16 %v7905
    %v7945 = vunpack.c.l.b16 %v7906
    %v7946 = vunpack.c.l.b16 %v7907
    %v7947 = vunpack.c.l.b16 %v7908
    %v7948 = vunpack.c.l.b16 %v7909
    %v7949 = vunpack.c.l.b16 %v7910
    %v7950 = vunpack.c.l.b16 %v7911
    %v7951 = vunpack.c.l.b16 %v7912
    %v7952 = vpack.c.b16 %v7937, %v7936
    %v7953 = vpack.c.b16 %v7939, %v7938
    %v7954 = vpack.c.b16 %v7941, %v7940
    %v7955 = vpack.c.b16 %v7943, %v7942
    %v7956 = vpack.c.b16 %v7945, %v7944
    %v7957 = vpack.c.b16 %v7947, %v7946
    %v7958 = vpack.c.b16 %v7949, %v7948
    %v7959 = vpack.c.b16 %v7951, %v7950
    %7968 = vmatprep.subr.bf16.mxu0 0
    %7969 = vmatpush1.bf16.msra.mxu0 %v7952
    %7970 = vmatprep.subr.bf16.mxu0 0
    %7971 = vmatpush1.bf16.msra.mxu0 %v7953
    %7972 = vmatprep.subr.bf16.mxu0 0
    %7973 = vmatpush1.bf16.msra.mxu0 %v7954
    %7974 = vmatprep.subr.bf16.mxu0 0
    %7975 = vmatpush1.bf16.msra.mxu0 %v7955
    %7976 = vmatprep.subr.bf16.mxu0 0
    %7977 = vmatpush1.bf16.msra.mxu0 %v7956
    %7978 = vmatprep.subr.bf16.mxu0 0
    %7979 = vmatpush1.bf16.msra.mxu0 %v7957
    %7980 = vmatprep.subr.bf16.mxu0 0
    %7981 = vmatpush1.bf16.msra.mxu0 %v7958
    %7982 = vmatprep.subr.bf16.mxu0 0
    %7983 = vmatpush1.bf16.msra.mxu0 %v7959
    %7984 = vmatprep.subr.bf16.mxu0 0
    %7985 = vmatpush1.bf16.msra.mxu0 0
    %7986 = vmatprep.subr.bf16.mxu0 0
    %7987 = vmatpush1.bf16.msra.mxu0 0
    %7988 = vmatprep.subr.bf16.mxu0 0
    %7989 = vmatpush1.bf16.msra.mxu0 0
    %7990 = vmatprep.subr.bf16.mxu0 0
    %7991 = vmatpush1.bf16.msra.mxu0 0
    %7992 = vmatprep.subr.bf16.mxu0 0
    %7993 = vmatpush1.bf16.msra.mxu0 0
    %7994 = vmatprep.subr.bf16.mxu0 0
    %7995 = vmatpush1.bf16.msra.mxu0 0
    %7996 = vmatprep.subr.bf16.mxu0 0
    %7997 = vmatpush1.bf16.msra.mxu0 0
    %7998 = vmatprep.subr.bf16.mxu0 0
    %7999 = vmatpush1.bf16.msra.mxu0 0
    %8000 = vmatprep.mubr.bf16.mxu0 0
    %8001 = vmatmul.mubr.bf16.gmra.mrb[0].mxu0 %v7896
    %v8002 = vpop.f32.mrb[0].mxu0
    %v8003 = vadd.f32 %v7918, %v8002
    %v8004 = vpop.f32.mrb[0].mxu0
    %v8005 = vpop.f32.mrb[0].mxu0
    %v8006 = vpop.f32.mrb[0].mxu0
    %8007 = vdwg.mxu0
    %8008 = vmax.xlane.f32.xlu0 %v8003
    %v8009 = vpop.xlane.xlu0 %8008
    %v8010 = vsub.f32 %v8003, %v8009
    %v8011 = vmul.f32 %v8010, 1.442695
    %v8012 = vpow.pop %v8011
    %8013 = vadd.xlane.f32.xlu0 %v8012
    %v8014 = vpop.xlane.xlu0 %8013
    %v8015 = vrcp.pop %v8014
    %v8016 = vmul.f32 %v8012, %v8015
    %vm8017 = vcmask 15360
    %8018 = vst.msk [vmem:[%s20] sm:$0xff] %vm8017, %v8016
    // Predicated region
    $region86: #{tot_rnn_forward.1} parent=1 // pred_check
      _
    $region87: #{tot_rnn_forward.1} parent=1 // pred_check_branch
      %8020 = sbr.rel (0) target = $region89
    $region88: #{tot_rnn_forward.1} parent=1 // pred_region
      _
    $region89: #{tot_rnn_forward.1} parent=1 // pred_fallthru
      _
    // Predicated region
    $region90: #{tot_rnn_forward.1} parent=1 // pred_check
      _
    $region91: #{tot_rnn_forward.1} parent=1 // pred_check_branch
      %8022 = sbr.rel (0) target = $region93
    $region92: #{tot_rnn_forward.1} parent=1 // pred_region
      _
    $region93: #{tot_rnn_forward.1} parent=1 // pred_fallthru
      _
    %8023 = vsyncpa [#allocation8], 1

</llo_original>
